<compile_context>
chip_gen: v6e
topology: v6e:2x2x1
jax: 0.10.0
libtpu: 0.0.40
codegen_flags: <defaults>
</compile_context>

<pallas_src>
import functools

import jax
import jax.numpy as jnp
import numpy as np
from jax.experimental import pallas as pl
from jax.experimental.pallas import tpu as pltpu

BN_EPS = 1e-5
LANE = 128


def _round_up(x, m):
    return (x + m - 1) // m * m


# ---------------------------------------------------------------------------
# Kernel 1: fused 3x3 stride-1 conv (in-kernel im2col) + folded-BN affine
#           [+ residual] + optional ReLU, one image per grid step.
# ---------------------------------------------------------------------------
def _conv3x3_kernel(x_ref, w_ref, b_ref, *rest, Hi, Wi, apply_relu,
                    pad_output, has_res):
    if has_res:
        res_ref, o_ref, acc_ref = rest
    else:
        res_ref = None
        o_ref, acc_ref = rest

    wp2 = Wi + 2
    L = (Hi - 1) * wp2 + Wi            # flat extent covering all valid outputs

    # 9-tap accumulation on the MXU (bf16 operands, f32 accumulation).
    acc_ref[...] = jnp.dot(x_ref[0, pl.ds(0, L), :], w_ref[0],
                           preferred_element_type=jnp.float32)
    for t in range(1, 9):
        kh, kw = divmod(t, 3)
        off = kh * wp2 + kw
        acc_ref[...] += jnp.dot(x_ref[0, pl.ds(off, L), :], w_ref[t],
                                preferred_element_type=jnp.float32)

    bias = b_ref[...]                  # (1, Cout_p) f32

    if pad_output:
        # Emit the result already spatially zero-padded for the next conv.
        o_ref[...] = jnp.zeros(o_ref.shape, o_ref.dtype)
    ro = 1 if pad_output else 0

    # Epilogue (VPU, free under the DMA/MXU critical path): per output row,
    # bias (+residual) (+ReLU), store only the valid Wi columns.
    for ho in range(Hi):               # Ho == Hi for stride-1 / pad-1
        row = acc_ref[pl.ds(ho * wp2, Wi), :] + bias
        if has_res:
            row = row + res_ref[0, ho, :, :].astype(jnp.float32)
        if apply_relu:
            row = jnp.maximum(row, 0.0)
        o_ref[0, ro + ho, pl.ds(ro, Wi), :] = row.astype(o_ref.dtype)


def conv3x3_bn(x_flat, w_taps, bias, residual=None, *, Hi, Wi,
               apply_relu=True, pad_output=False, out_dtype=jnp.bfloat16):
    """Fused stride-1, pad-1 3x3 conv + BN affine (+residual) (+ReLU).

    x_flat : (N, (Hi+2)*(Wi+2), Cin_p) bf16  flat, spatially padded NHWC image
    w_taps : (9, Cin_p, Cout_p) bf16         BN scale folded in
    bias   : (1, Cout_p) f32
    residual: (N, Hi, Wi, Cout_p) bf16 or None
    returns: (N, Hi[+2], Wi[+2], Cout_p) out_dtype
    """
    N, P, cin_p = x_flat.shape
    assert P == (Hi + 2) * (Wi + 2)
    cout_p = w_taps.shape[-1]
    L = (Hi - 1) * (Wi + 2) + Wi
    oh = Hi + 2 if pad_output else Hi
    ow = Wi + 2 if pad_output else Wi

    in_specs = [
        pl.BlockSpec((1, P, cin_p), lambda n: (n, 0, 0)),       # one image/step
        pl.BlockSpec((9, cin_p, cout_p), lambda n: (0, 0, 0)),  # resident weights
        pl.BlockSpec((1, cout_p), lambda n: (0, 0)),            # resident bias
    ]
    args = [x_flat, w_taps, bias]
    if residual is not None:
        in_specs.append(pl.BlockSpec((1, Hi, Wi, cout_p),
                                     lambda n: (n, 0, 0, 0)))
        args.append(residual)

    kernel = functools.partial(
        _conv3x3_kernel, Hi=Hi, Wi=Wi, apply_relu=apply_relu,
        pad_output=pad_output, has_res=residual is not None)

    bytes_accessed = (x_flat.size * 2 + w_taps.size * 2 + bias.size * 4
                      + N * oh * ow * cout_p * jnp.dtype(out_dtype).itemsize
                      + (residual.size * 2 if residual is not None else 0))

    return pl.pallas_call(
        kernel,
        out_shape=jax.ShapeDtypeStruct((N, oh, ow, cout_p), out_dtype),
        grid=(N,),
        in_specs=in_specs,
        out_specs=pl.BlockSpec((1, oh, ow, cout_p), lambda n: (n, 0, 0, 0)),
        scratch_shapes=[pltpu.VMEM((L, cout_p), jnp.float32)],
        compiler_params=pltpu.CompilerParams(
            dimension_semantics=("parallel",)),
        cost_estimate=pl.CostEstimate(
            flops=int(2 * N * 9 * L * cin_p * cout_p),
            transcendentals=0,
            bytes_accessed=int(bytes_accessed)),
    )(*args)


# ---------------------------------------------------------------------------
# Kernel 2: 1x1 projection shortcut as matmul + folded-BN affine (no ReLU).
# ---------------------------------------------------------------------------
def _matmul_bn_kernel(x_ref, w_ref, b_ref, o_ref):
    acc = jnp.dot(x_ref[...], w_ref[...], preferred_element_type=jnp.float32)
    o_ref[...] = (acc + b_ref[...]).astype(o_ref.dtype)


def matmul_bn(x2d, w2d, bias, out_dtype=jnp.bfloat16, tm=256):
    M, cin_p = x2d.shape
    cout_p = w2d.shape[-1]
    tm = min(tm, _round_up(M, 8))
    Mp = _round_up(M, tm)
    xp = jnp.pad(x2d, ((0, Mp - M), (0, 0))) if Mp != M else x2d
    out = pl.pallas_call(
        _matmul_bn_kernel,
        out_shape=jax.ShapeDtypeStruct((Mp, cout_p), out_dtype),
        grid=(Mp // tm,),
        in_specs=[pl.BlockSpec((tm, cin_p), lambda i: (i, 0)),
                  pl.BlockSpec((cin_p, cout_p), lambda i: (0, 0)),
                  pl.BlockSpec((1, cout_p), lambda i: (0, 0))],
        out_specs=pl.BlockSpec((tm, cout_p), lambda i: (i, 0)),
        compiler_params=pltpu.CompilerParams(
            dimension_semantics=("parallel",)),
    )(xp, w2d, bias)
    return out if Mp == M else out[:M]


# ---------------------------------------------------------------------------
# One-time parameter preparation (hoisted out of the forward path).
# ---------------------------------------------------------------------------
def _bn_affine(bn):
    scale = bn["gamma"] * jax.lax.rsqrt(bn["var"] + BN_EPS)
    bias = bn["beta"] - bn["mean"] * scale
    return scale, bias


def _prep_conv3x3(w, scale, cin_p, cout_p):
    cout, cin = w.shape[0], w.shape[1]
    wt = jnp.transpose(w, (2, 3, 1, 0)).reshape(9, cin, cout)   # (t, ci, co)
    wt = wt * scale[None, None, :]
    wt = jnp.pad(wt, ((0, 0), (0, cin_p - cin), (0, cout_p - cout)))
    return wt.astype(jnp.bfloat16)


def _prep_conv1x1(w, scale, cin_p, cout_p):
    cout, cin = w.shape[0], w.shape[1]
    wm = w.reshape(cout, cin).T * scale[None, :]
    wm = jnp.pad(wm, ((0, cin_p - cin), (0, cout_p - cout)))
    return wm.astype(jnp.bfloat16)


def _prep_bias(bias, cp):
    return jnp.pad(bias, (0, cp - bias.shape[0])).reshape(1, cp).astype(jnp.float32)


def prepare_block_params(params, in_channels, out_channels, stride):
    cin_p = _round_up(in_channels, LANE)
    cp = _round_up(out_channels, LANE)
    s1, b1 = _bn_affine(params["bn1"])
    s2, b2 = _bn_affine(params["bn2"])
    prep = {
        "w1": _prep_conv3x3(params["w1"], s1, cin_p, cp),
        "b1": _prep_bias(b1, cp),
        "w2": _prep_conv3x3(params["w2"], s2, cp, cp),
        "b2": _prep_bias(b2, cp),
    }
    if stride != 1 or in_channels != out_channels:
        ss, bs = _bn_affine(params["bns"])
        prep["ws"] = _prep_conv1x1(params["ws"], ss, cin_p, cp)
        prep["bs"] = _prep_bias(bs, cp)
    return prep


def _nhwc_to_flat_padded(x_nhwc, cp):
    """One-pass spatial(+channel) zero-pad, then a free reshape to the flat
    (N, (H+2)*(W+2), cp) layout the conv kernel reads."""
    N, H, W, C = x_nhwc.shape
    xp = jnp.pad(x_nhwc, ((0, 0), (1, 1), (1, 1), (0, cp - C)))
    return xp.reshape(N, (H + 2) * (W + 2), cp)


# ---------------------------------------------------------------------------
# BasicBlock forward (NCHW in / NCHW out, matching PyTorch).
# ---------------------------------------------------------------------------
@functools.partial(jax.jit,
                   static_argnames=("stride", "in_channels", "out_channels"))
def basic_block_forward(x_nchw, prep, *, stride, in_channels, out_channels):
    cin_p = _round_up(in_channels, LANE)
    cp = _round_up(out_channels, LANE)

    x = jnp.transpose(x_nchw, (0, 2, 3, 1)).astype(jnp.bfloat16)   # NHWC bf16
    N, H, W, _ = x.shape
    Ho = (H - 1) // stride + 1
    Wo = (W - 1) // stride + 1

    # --- conv1 -> bn1 -> relu -------------------------------------------------
    x1f = _nhwc_to_flat_padded(x, cin_p)
    if stride == 1:
        y1p = conv3x3_bn(x1f, prep["w1"], prep["b1"], Hi=H, Wi=W,
                         apply_relu=True, pad_output=True,
                         out_dtype=jnp.bfloat16)
        x2f = y1p.reshape(N, (Ho + 2) * (Wo + 2), cp)       # free reshape
    else:
        # TODO(synk): true strided conv; computed at stride 1 then subsampled.
        y1 = conv3x3_bn(x1f, prep["w1"], prep["b1"], Hi=H, Wi=W,
                        apply_relu=True, pad_output=False,
                        out_dtype=jnp.bfloat16)
        y1 = y1[:, ::stride, ::stride, :]                    # (N, Ho, Wo, cp)
        x2f = _nhwc_to_flat_padded(y1, cp)

    # --- shortcut ---------------------------------------------------------------
    if stride != 1 or in_channels != out_channels:
        xs = x[:, ::stride, ::stride, :]                     # (N, Ho, Wo, Cin)
        xs = jnp.pad(xs, ((0, 0), (0, 0), (0, 0), (0, cin_p - in_channels)))
        res = matmul_bn(xs.reshape(N * Ho * Wo, cin_p), prep["ws"], prep["bs"],
                        out_dtype=jnp.bfloat16)
        res = res.reshape(N, Ho, Wo, cp)
    else:
        res = jnp.pad(x, ((0, 0), (0, 0), (0, 0), (0, cp - in_channels)))

    # --- conv2 -> bn2 -> (+shortcut) -> relu ------------------------------------
    y2 = conv3x3_bn(x2f, prep["w2"], prep["b2"], residual=res, Hi=Ho, Wi=Wo,
                    apply_relu=True, pad_output=False, out_dtype=jnp.float32)

    out = y2[:, :, :, :out_channels]
    return jnp.transpose(out, (0, 3, 1, 2))                  # NHWC -> NCHW


# ---------------------------------------------------------------------------
# Pure-JAX f32 reference (sanity check)
# ---------------------------------------------------------------------------
def _ref_forward(x, params, stride):
    def conv(x, w, s):
        return jax.lax.conv_general_dilated(
            x, w, window_strides=(s, s),
            padding=[(1, 1), (1, 1)] if w.shape[-1] == 3 else [(0, 0), (0, 0)],
            dimension_numbers=("NCHW", "OIHW", "NCHW"))

    def bn(x, p):
        sc = p["gamma"] / jnp.sqrt(p["var"] + BN_EPS)
        bi = p["beta"] - p["mean"] * sc
        return x * sc[None, :, None, None] + bi[None, :, None, None]

    out = jax.nn.relu(bn(conv(x, params["w1"], stride), params["bn1"]))
    out = bn(conv(out, params["w2"], 1), params["bn2"])
    if stride != 1 or params["w1"].shape[1] != params["w1"].shape[0]:
        sc = bn(conv(x, params["ws"], stride), params["bns"])
    else:
        sc = x
    return jax.nn.relu(out + sc)


def make_params(key, cin, cout):
    ks = jax.random.split(key, 8)

    def bn_params(k, c):
        k1, k2, k3 = jax.random.split(k, 3)
        return {
            "gamma": 1.0 + 0.1 * jax.random.normal(k1, (c,), jnp.float32),
            "beta": 0.1 * jax.random.normal(k2, (c,), jnp.float32),
            "mean": 0.1 * jax.random.normal(k3, (c,), jnp.float32),
            "var": jnp.ones((c,), jnp.float32),
        }

    return {
        "w1": 0.1 * jax.random.normal(ks[0], (cout, cin, 3, 3), jnp.float32),
        "bn1": bn_params(ks[1], cout),
        "w2": 0.1 * jax.random.normal(ks[2], (cout, cout, 3, 3), jnp.float32),
        "bn2": bn_params(ks[3], cout),
        "ws": 0.1 * jax.random.normal(ks[4], (cout, cin, 1, 1), jnp.float32),
        "bns": bn_params(ks[5], cout),
    }


if __name__ == "__main__":
    key = jax.random.PRNGKey(0)
    k_x1, k_p1, k_x2, k_p2 = jax.random.split(key, 4)

    # Case 1: downsampling block (stride 2, projection shortcut).
    N, Cin, H, W = 2, 4, 16, 16
    Cout, stride = 8, 2
    x = jax.random.normal(k_x1, (N, Cin, H, W), jnp.float32)
    params = make_params(k_p1, Cin, Cout)
    prep = prepare_block_params(params, Cin, Cout, stride)
    out = jax.block_until_ready(
        basic_block_forward(x, prep, stride=stride,
                            in_channels=Cin, out_channels=Cout))
    ref = jax.block_until_ready(_ref_forward(x, params, stride))
    np.testing.assert_allclose(np.asarray(out), np.asarray(ref),
                               rtol=3e-2, atol=3e-2)
    assert out.shape == (N, Cout, H // stride, W // stride)

    # Case 2: identity-shortcut block (stride 1, Cin == Cout).
    N2, C2, H2, W2 = 2, 8, 8, 8
    x2 = jax.random.normal(k_x2, (N2, C2, H2, W2), jnp.float32)
    params2 = make_params(k_p2, C2, C2)
    prep2 = prepare_block_params(params2, C2, C2, 1)
    out2 = jax.block_until_ready(
        basic_block_forward(x2, prep2, stride=1,
                            in_channels=C2, out_channels=C2))
    ref2 = jax.block_until_ready(_ref_forward(x2, params2, 1))
    np.testing.assert_allclose(np.asarray(out2), np.asarray(ref2),
                               rtol=3e-2, atol=3e-2)
    assert out2.shape == (N2, C2, H2, W2)

    print("KERNEL_OK")
</pallas_src>

<mosaic_0001>
module attributes {stable_mosaic.version = 11 : i64} {
  func.func @_matmul_bn_kernel(%arg0: i32, %arg1: memref<128x128xbf16, #tpu.memory_space<vmem>>, %arg2: memref<128x128xbf16, #tpu.memory_space<vmem>>, %arg3: memref<1x128xf32, #tpu.memory_space<vmem>>, %arg4: memref<128x128xbf16, #tpu.memory_space<vmem>>) attributes {dimension_semantics = [#tpu.dimension_semantics<parallel>], iteration_bounds = array<i64: 1>, scalar_prefetch = 0 : i64, scratch_operands = 0 : i64, tpu.core_type = #tpu.core_type<tc>, window_params = [{transform_indices = @transform_0, window_bounds = array<i64: 128, 128>}, {pipeline_mode = #tpu.pipeline_mode<synchronous>, transform_indices = @transform_1, window_bounds = array<i64: 128, 128>}, {pipeline_mode = #tpu.pipeline_mode<synchronous>, transform_indices = @transform_2, window_bounds = array<i64: 1, 128>}, {transform_indices = @transform_3, window_bounds = array<i64: 128, 128>}]} {
    %c0 = arith.constant 0 : index
    %c0_0 = arith.constant 0 : index
    %0 = vector.load %arg1[%c0, %c0_0] : memref<128x128xbf16, #tpu.memory_space<vmem>>, vector<128x128xbf16>
    %c0_1 = arith.constant 0 : index
    %c0_2 = arith.constant 0 : index
    %1 = vector.load %arg2[%c0_1, %c0_2] : memref<128x128xbf16, #tpu.memory_space<vmem>>, vector<128x128xbf16>
    %cst = arith.constant dense<0.000000e+00> : vector<128x128xf32>
    %2 = tpu.matmul %0, %1, %cst {dimension_numbers = #tpu.dot_dimension_numbers<[1], [0], [0], [1], [0, 0, 1, 1], [], []>} : vector<128x128xbf16>, vector<128x128xbf16>, vector<128x128xf32> -> vector<128x128xf32>
    %c0_3 = arith.constant 0 : index
    %c0_4 = arith.constant 0 : index
    %3 = vector.load %arg3[%c0_3, %c0_4] : memref<1x128xf32, #tpu.memory_space<vmem>>, vector<1x128xf32>
    %4 = vector.broadcast %3 : vector<1x128xf32> to vector<128x128xf32>
    %5 = arith.addf %2, %4 : vector<128x128xf32>
    %6 = arith.truncf %5 : vector<128x128xf32> to vector<128x128xbf16>
    %c0_5 = arith.constant 0 : index
    %c0_6 = arith.constant 0 : index
    %7 = vector.load %arg4[%c0_5, %c0_6] : memref<128x128xbf16, #tpu.memory_space<vmem>>, vector<128x128xbf16>
    tpu.vector_store %arg4[%c0_5, %c0_6], %6 {strides = array<i32>} : memref<128x128xbf16, #tpu.memory_space<vmem>>, vector<128x128xbf16>,
    return
  }
  func.func @transform_0(%arg0: i32) -> (i32, i32) {
    %c0_i32 = arith.constant 0 : i32
    %c0_i32_0 = arith.constant 0 : i32
    return %arg0, %c0_i32 : i32, i32
  }
  func.func @transform_1(%arg0: i32) -> (i32, i32) {
    %c0_i32 = arith.constant 0 : i32
    %c0_i32_0 = arith.constant 0 : i32
    %c0_i32_1 = arith.constant 0 : i32
    return %c0_i32, %c0_i32_0 : i32, i32
  }
  func.func @transform_2(%arg0: i32) -> (i32, i32) {
    %c0_i32 = arith.constant 0 : i32
    %c0_i32_0 = arith.constant 0 : i32
    %c0_i32_1 = arith.constant 0 : i32
    return %c0_i32, %c0_i32_0 : i32, i32
  }
  func.func @transform_3(%arg0: i32) -> (i32, i32) {
    %c0_i32 = arith.constant 0 : i32
    %c0_i32_0 = arith.constant 0 : i32
    return %arg0, %c0_i32 : i32, i32
  }
}

module attributes {stable_mosaic.version = 11 : i64} {
  func.func @_conv3x3_kernel(%arg0: i32, %arg1: memref<1x324x128xbf16, #tpu.memory_space<vmem>>, %arg2: memref<9x128x128xbf16, #tpu.memory_space<vmem>>, %arg3: memref<1x128xf32, #tpu.memory_space<vmem>>, %arg4: memref<1x16x16x128xbf16, #tpu.memory_space<vmem>>, %arg5: memref<286x128xf32, #tpu.memory_space<vmem>>) attributes {dimension_semantics = [#tpu.dimension_semantics<parallel>], iteration_bounds = array<i64: 2>, scalar_prefetch = 0 : i64, scratch_operands = 1 : i64, tpu.core_type = #tpu.core_type<tc>, window_params = [{transform_indices = @transform_0, window_bounds = array<i64: 1, 324, 128>}, {pipeline_mode = #tpu.pipeline_mode<synchronous>, transform_indices = @transform_1, window_bounds = array<i64: 9, 128, 128>}, {pipeline_mode = #tpu.pipeline_mode<synchronous>, transform_indices = @transform_2, window_bounds = array<i64: 1, 128>}, {transform_indices = @transform_3, window_bounds = array<i64: 1, 16, 16, 128>}]} {
    %c0 = arith.constant 0 : index
    %c0_0 = arith.constant 0 : index
    %c0_1 = arith.constant 0 : index
    %0 = vector.load %arg1[%c0, %c0_0, %c0_1] : memref<1x324x128xbf16, #tpu.memory_space<vmem>>, vector<1x286x128xbf16>
    %1 = vector.shape_cast %0 : vector<1x286x128xbf16> to vector<286x128xbf16>
    %c0_2 = arith.constant 0 : index
    %c0_3 = arith.constant 0 : index
    %c0_4 = arith.constant 0 : index
    %2 = vector.load %arg2[%c0_2, %c0_3, %c0_4] : memref<9x128x128xbf16, #tpu.memory_space<vmem>>, vector<1x128x128xbf16>
    %3 = vector.shape_cast %2 : vector<1x128x128xbf16> to vector<128x128xbf16>
    %cst = arith.constant dense<0.000000e+00> : vector<286x128xf32>
    %4 = tpu.matmul %1, %3, %cst {dimension_numbers = #tpu.dot_dimension_numbers<[1], [0], [0], [1], [0, 0, 1, 1], [], []>} : vector<286x128xbf16>, vector<128x128xbf16>, vector<286x128xf32> -> vector<286x128xf32>
    %c0_5 = arith.constant 0 : index
    %c0_6 = arith.constant 0 : index
    %5 = vector.load %arg5[%c0_5, %c0_6] : memref<286x128xf32, #tpu.memory_space<vmem>>, vector<286x128xf32>
    tpu.vector_store %arg5[%c0_5, %c0_6], %4 {strides = array<i32>} : memref<286x128xf32, #tpu.memory_space<vmem>>, vector<286x128xf32>,
    %c0_7 = arith.constant 0 : index
    %c0_8 = arith.constant 0 : index
    %6 = vector.load %arg5[%c0_7, %c0_8] : memref<286x128xf32, #tpu.memory_space<vmem>>, vector<286x128xf32>
    %c0_9 = arith.constant 0 : index
    %c1 = arith.constant 1 : index
    %c0_10 = arith.constant 0 : index
    %7 = vector.load %arg1[%c0_9, %c1, %c0_10] : memref<1x324x128xbf16, #tpu.memory_space<vmem>>, vector<1x286x128xbf16>
    %8 = vector.shape_cast %7 : vector<1x286x128xbf16> to vector<286x128xbf16>
    %c1_11 = arith.constant 1 : index
    %c0_12 = arith.constant 0 : index
    %c0_13 = arith.constant 0 : index
    %9 = vector.load %arg2[%c1_11, %c0_12, %c0_13] : memref<9x128x128xbf16, #tpu.memory_space<vmem>>, vector<1x128x128xbf16>
    %10 = vector.shape_cast %9 : vector<1x128x128xbf16> to vector<128x128xbf16>
    %cst_14 = arith.constant dense<0.000000e+00> : vector<286x128xf32>
    %11 = tpu.matmul %8, %10, %cst_14 {dimension_numbers = #tpu.dot_dimension_numbers<[1], [0], [0], [1], [0, 0, 1, 1], [], []>} : vector<286x128xbf16>, vector<128x128xbf16>, vector<286x128xf32> -> vector<286x128xf32>
    %12 = arith.addf %6, %11 : vector<286x128xf32>
    %c0_15 = arith.constant 0 : index
    %c0_16 = arith.constant 0 : index
    %13 = vector.load %arg5[%c0_15, %c0_16] : memref<286x128xf32, #tpu.memory_space<vmem>>, vector<286x128xf32>
    tpu.vector_store %arg5[%c0_15, %c0_16], %12 {strides = array<i32>} : memref<286x128xf32, #tpu.memory_space<vmem>>, vector<286x128xf32>,
    %c0_17 = arith.constant 0 : index
    %c0_18 = arith.constant 0 : index
    %14 = vector.load %arg5[%c0_17, %c0_18] : memref<286x128xf32, #tpu.memory_space<vmem>>, vector<286x128xf32>
    %c0_19 = arith.constant 0 : index
    %c2 = arith.constant 2 : index
    %c0_20 = arith.constant 0 : index
    %15 = vector.load %arg1[%c0_19, %c2, %c0_20] : memref<1x324x128xbf16, #tpu.memory_space<vmem>>, vector<1x286x128xbf16>
    %16 = vector.shape_cast %15 : vector<1x286x128xbf16> to vector<286x128xbf16>
    %c2_21 = arith.constant 2 : index
    %c0_22 = arith.constant 0 : index
    %c0_23 = arith.constant 0 : index
    %17 = vector.load %arg2[%c2_21, %c0_22, %c0_23] : memref<9x128x128xbf16, #tpu.memory_space<vmem>>, vector<1x128x128xbf16>
    %18 = vector.shape_cast %17 : vector<1x128x128xbf16> to vector<128x128xbf16>
    %cst_24 = arith.constant dense<0.000000e+00> : vector<286x128xf32>
    %19 = tpu.matmul %16, %18, %cst_24 {dimension_numbers = #tpu.dot_dimension_numbers<[1], [0], [0], [1], [0, 0, 1, 1], [], []>} : vector<286x128xbf16>, vector<128x128xbf16>, vector<286x128xf32> -> vector<286x128xf32>
    %20 = arith.addf %14, %19 : vector<286x128xf32>
    %c0_25 = arith.constant 0 : index
    %c0_26 = arith.constant 0 : index
    %21 = vector.load %arg5[%c0_25, %c0_26] : memref<286x128xf32, #tpu.memory_space<vmem>>, vector<286x128xf32>
    tpu.vector_store %arg5[%c0_25, %c0_26], %20 {strides = array<i32>} : memref<286x128xf32, #tpu.memory_space<vmem>>, vector<286x128xf32>,
    %c0_27 = arith.constant 0 : index
    %c0_28 = arith.constant 0 : index
    %22 = vector.load %arg5[%c0_27, %c0_28] : memref<286x128xf32, #tpu.memory_space<vmem>>, vector<286x128xf32>
    %c0_29 = arith.constant 0 : index
    %c18 = arith.constant 18 : index
    %c0_30 = arith.constant 0 : index
    %23 = vector.load %arg1[%c0_29, %c18, %c0_30] : memref<1x324x128xbf16, #tpu.memory_space<vmem>>, vector<1x286x128xbf16>
    %24 = vector.shape_cast %23 : vector<1x286x128xbf16> to vector<286x128xbf16>
    %c3 = arith.constant 3 : index
    %c0_31 = arith.constant 0 : index
    %c0_32 = arith.constant 0 : index
    %25 = vector.load %arg2[%c3, %c0_31, %c0_32] : memref<9x128x128xbf16, #tpu.memory_space<vmem>>, vector<1x128x128xbf16>
    %26 = vector.shape_cast %25 : vector<1x128x128xbf16> to vector<128x128xbf16>
    %cst_33 = arith.constant dense<0.000000e+00> : vector<286x128xf32>
    %27 = tpu.matmul %24, %26, %cst_33 {dimension_numbers = #tpu.dot_dimension_numbers<[1], [0], [0], [1], [0, 0, 1, 1], [], []>} : vector<286x128xbf16>, vector<128x128xbf16>, vector<286x128xf32> -> vector<286x128xf32>
    %28 = arith.addf %22, %27 : vector<286x128xf32>
    %c0_34 = arith.constant 0 : index
    %c0_35 = arith.constant 0 : index
    %29 = vector.load %arg5[%c0_34, %c0_35] : memref<286x128xf32, #tpu.memory_space<vmem>>, vector<286x128xf32>
    tpu.vector_store %arg5[%c0_34, %c0_35], %28 {strides = array<i32>} : memref<286x128xf32, #tpu.memory_space<vmem>>, vector<286x128xf32>,
    %c0_36 = arith.constant 0 : index
    %c0_37 = arith.constant 0 : index
    %30 = vector.load %arg5[%c0_36, %c0_37] : memref<286x128xf32, #tpu.memory_space<vmem>>, vector<286x128xf32>
    %c0_38 = arith.constant 0 : index
    %c19 = arith.constant 19 : index
    %c0_39 = arith.constant 0 : index
    %31 = vector.load %arg1[%c0_38, %c19, %c0_39] : memref<1x324x128xbf16, #tpu.memory_space<vmem>>, vector<1x286x128xbf16>
    %32 = vector.shape_cast %31 : vector<1x286x128xbf16> to vector<286x128xbf16>
    %c4 = arith.constant 4 : index
    %c0_40 = arith.constant 0 : index
    %c0_41 = arith.constant 0 : index
    %33 = vector.load %arg2[%c4, %c0_40, %c0_41] : memref<9x128x128xbf16, #tpu.memory_space<vmem>>, vector<1x128x128xbf16>
    %34 = vector.shape_cast %33 : vector<1x128x128xbf16> to vector<128x128xbf16>
    %cst_42 = arith.constant dense<0.000000e+00> : vector<286x128xf32>
    %35 = tpu.matmul %32, %34, %cst_42 {dimension_numbers = #tpu.dot_dimension_numbers<[1], [0], [0], [1], [0, 0, 1, 1], [], []>} : vector<286x128xbf16>, vector<128x128xbf16>, vector<286x128xf32> -> vector<286x128xf32>
    %36 = arith.addf %30, %35 : vector<286x128xf32>
    %c0_43 = arith.constant 0 : index
    %c0_44 = arith.constant 0 : index
    %37 = vector.load %arg5[%c0_43, %c0_44] : memref<286x128xf32, #tpu.memory_space<vmem>>, vector<286x128xf32>
    tpu.vector_store %arg5[%c0_43, %c0_44], %36 {strides = array<i32>} : memref<286x128xf32, #tpu.memory_space<vmem>>, vector<286x128xf32>,
    %c0_45 = arith.constant 0 : index
    %c0_46 = arith.constant 0 : index
    %38 = vector.load %arg5[%c0_45, %c0_46] : memref<286x128xf32, #tpu.memory_space<vmem>>, vector<286x128xf32>
    %c0_47 = arith.constant 0 : index
    %c20 = arith.constant 20 : index
    %c0_48 = arith.constant 0 : index
    %39 = vector.load %arg1[%c0_47, %c20, %c0_48] : memref<1x324x128xbf16, #tpu.memory_space<vmem>>, vector<1x286x128xbf16>
    %40 = vector.shape_cast %39 : vector<1x286x128xbf16> to vector<286x128xbf16>
    %c5 = arith.constant 5 : index
    %c0_49 = arith.constant 0 : index
    %c0_50 = arith.constant 0 : index
    %41 = vector.load %arg2[%c5, %c0_49, %c0_50] : memref<9x128x128xbf16, #tpu.memory_space<vmem>>, vector<1x128x128xbf16>
    %42 = vector.shape_cast %41 : vector<1x128x128xbf16> to vector<128x128xbf16>
    %cst_51 = arith.constant dense<0.000000e+00> : vector<286x128xf32>
    %43 = tpu.matmul %40, %42, %cst_51 {dimension_numbers = #tpu.dot_dimension_numbers<[1], [0], [0], [1], [0, 0, 1, 1], [], []>} : vector<286x128xbf16>, vector<128x128xbf16>, vector<286x128xf32> -> vector<286x128xf32>
    %44 = arith.addf %38, %43 : vector<286x128xf32>
    %c0_52 = arith.constant 0 : index
    %c0_53 = arith.constant 0 : index
    %45 = vector.load %arg5[%c0_52, %c0_53] : memref<286x128xf32, #tpu.memory_space<vmem>>, vector<286x128xf32>
    tpu.vector_store %arg5[%c0_52, %c0_53], %44 {strides = array<i32>} : memref<286x128xf32, #tpu.memory_space<vmem>>, vector<286x128xf32>,
    %c0_54 = arith.constant 0 : index
    %c0_55 = arith.constant 0 : index
    %46 = vector.load %arg5[%c0_54, %c0_55] : memref<286x128xf32, #tpu.memory_space<vmem>>, vector<286x128xf32>
    %c0_56 = arith.constant 0 : index
    %c36 = arith.constant 36 : index
    %c0_57 = arith.constant 0 : index
    %47 = vector.load %arg1[%c0_56, %c36, %c0_57] : memref<1x324x128xbf16, #tpu.memory_space<vmem>>, vector<1x286x128xbf16>
    %48 = vector.shape_cast %47 : vector<1x286x128xbf16> to vector<286x128xbf16>
    %c6 = arith.constant 6 : index
    %c0_58 = arith.constant 0 : index
    %c0_59 = arith.constant 0 : index
    %49 = vector.load %arg2[%c6, %c0_58, %c0_59] : memref<9x128x128xbf16, #tpu.memory_space<vmem>>, vector<1x128x128xbf16>
    %50 = vector.shape_cast %49 : vector<1x128x128xbf16> to vector<128x128xbf16>
    %cst_60 = arith.constant dense<0.000000e+00> : vector<286x128xf32>
    %51 = tpu.matmul %48, %50, %cst_60 {dimension_numbers = #tpu.dot_dimension_numbers<[1], [0], [0], [1], [0, 0, 1, 1], [], []>} : vector<286x128xbf16>, vector<128x128xbf16>, vector<286x128xf32> -> vector<286x128xf32>
    %52 = arith.addf %46, %51 : vector<286x128xf32>
    %c0_61 = arith.constant 0 : index
    %c0_62 = arith.constant 0 : index
    %53 = vector.load %arg5[%c0_61, %c0_62] : memref<286x128xf32, #tpu.memory_space<vmem>>, vector<286x128xf32>
    tpu.vector_store %arg5[%c0_61, %c0_62], %52 {strides = array<i32>} : memref<286x128xf32, #tpu.memory_space<vmem>>, vector<286x128xf32>,
    %c0_63 = arith.constant 0 : index
    %c0_64 = arith.constant 0 : index
    %54 = vector.load %arg5[%c0_63, %c0_64] : memref<286x128xf32, #tpu.memory_space<vmem>>, vector<286x128xf32>
    %c0_65 = arith.constant 0 : index
    %c37 = arith.constant 37 : index
    %c0_66 = arith.constant 0 : index
    %55 = vector.load %arg1[%c0_65, %c37, %c0_66] : memref<1x324x128xbf16, #tpu.memory_space<vmem>>, vector<1x286x128xbf16>
    %56 = vector.shape_cast %55 : vector<1x286x128xbf16> to vector<286x128xbf16>
    %c7 = arith.constant 7 : index
    %c0_67 = arith.constant 0 : index
    %c0_68 = arith.constant 0 : index
    %57 = vector.load %arg2[%c7, %c0_67, %c0_68] : memref<9x128x128xbf16, #tpu.memory_space<vmem>>, vector<1x128x128xbf16>
    %58 = vector.shape_cast %57 : vector<1x128x128xbf16> to vector<128x128xbf16>
    %cst_69 = arith.constant dense<0.000000e+00> : vector<286x128xf32>
    %59 = tpu.matmul %56, %58, %cst_69 {dimension_numbers = #tpu.dot_dimension_numbers<[1], [0], [0], [1], [0, 0, 1, 1], [], []>} : vector<286x128xbf16>, vector<128x128xbf16>, vector<286x128xf32> -> vector<286x128xf32>
    %60 = arith.addf %54, %59 : vector<286x128xf32>
    %c0_70 = arith.constant 0 : index
    %c0_71 = arith.constant 0 : index
    %61 = vector.load %arg5[%c0_70, %c0_71] : memref<286x128xf32, #tpu.memory_space<vmem>>, vector<286x128xf32>
    tpu.vector_store %arg5[%c0_70, %c0_71], %60 {strides = array<i32>} : memref<286x128xf32, #tpu.memory_space<vmem>>, vector<286x128xf32>,
    %c0_72 = arith.constant 0 : index
    %c0_73 = arith.constant 0 : index
    %62 = vector.load %arg5[%c0_72, %c0_73] : memref<286x128xf32, #tpu.memory_space<vmem>>, vector<286x128xf32>
    %c0_74 = arith.constant 0 : index
    %c38 = arith.constant 38 : index
    %c0_75 = arith.constant 0 : index
    %63 = vector.load %arg1[%c0_74, %c38, %c0_75] : memref<1x324x128xbf16, #tpu.memory_space<vmem>>, vector<1x286x128xbf16>
    %64 = vector.shape_cast %63 : vector<1x286x128xbf16> to vector<286x128xbf16>
    %c8 = arith.constant 8 : index
    %c0_76 = arith.constant 0 : index
    %c0_77 = arith.constant 0 : index
    %65 = vector.load %arg2[%c8, %c0_76, %c0_77] : memref<9x128x128xbf16, #tpu.memory_space<vmem>>, vector<1x128x128xbf16>
    %66 = vector.shape_cast %65 : vector<1x128x128xbf16> to vector<128x128xbf16>
    %cst_78 = arith.constant dense<0.000000e+00> : vector<286x128xf32>
    %67 = tpu.matmul %64, %66, %cst_78 {dimension_numbers = #tpu.dot_dimension_numbers<[1], [0], [0], [1], [0, 0, 1, 1], [], []>} : vector<286x128xbf16>, vector<128x128xbf16>, vector<286x128xf32> -> vector<286x128xf32>
    %68 = arith.addf %62, %67 : vector<286x128xf32>
    %c0_79 = arith.constant 0 : index
    %c0_80 = arith.constant 0 : index
    %69 = vector.load %arg5[%c0_79, %c0_80] : memref<286x128xf32, #tpu.memory_space<vmem>>, vector<286x128xf32>
    tpu.vector_store %arg5[%c0_79, %c0_80], %68 {strides = array<i32>} : memref<286x128xf32, #tpu.memory_space<vmem>>, vector<286x128xf32>,
    %c0_81 = arith.constant 0 : index
    %c0_82 = arith.constant 0 : index
    %70 = vector.load %arg3[%c0_81, %c0_82] : memref<1x128xf32, #tpu.memory_space<vmem>>, vector<1x128xf32>
    %c0_83 = arith.constant 0 : index
    %c0_84 = arith.constant 0 : index
    %71 = vector.load %arg5[%c0_83, %c0_84] : memref<286x128xf32, #tpu.memory_space<vmem>>, vector<16x128xf32>
    %72 = vector.broadcast %70 : vector<1x128xf32> to vector<16x128xf32>
    %73 = arith.addf %71, %72 : vector<16x128xf32>
    %cst_85 = arith.constant 0.000000e+00 : f32
    %74 = vector.broadcast %cst_85 : f32 to vector<16x128xf32>
    %75 = arith.maximumf %73, %74 : vector<16x128xf32>
    %76 = arith.truncf %75 : vector<16x128xf32> to vector<16x128xbf16>
    %c0_86 = arith.constant 0 : index
    %c0_87 = arith.constant 0 : index
    %c0_88 = arith.constant 0 : index
    %c0_89 = arith.constant 0 : index
    %77 = vector.load %arg4[%c0_86, %c0_87, %c0_88, %c0_89] : memref<1x16x16x128xbf16, #tpu.memory_space<vmem>>, vector<1x1x16x128xbf16>
    %78 = vector.shape_cast %77 : vector<1x1x16x128xbf16> to vector<16x128xbf16>
    %79 = vector.shape_cast %76 : vector<16x128xbf16> to vector<1x1x16x128xbf16>
    tpu.vector_store %arg4[%c0_86, %c0_87, %c0_88, %c0_89], %79 {strides = array<i32>} : memref<1x16x16x128xbf16, #tpu.memory_space<vmem>>, vector<1x1x16x128xbf16>,
    %c18_90 = arith.constant 18 : index
    %c0_91 = arith.constant 0 : index
    %80 = vector.load %arg5[%c18_90, %c0_91] : memref<286x128xf32, #tpu.memory_space<vmem>>, vector<16x128xf32>
    %81 = vector.broadcast %70 : vector<1x128xf32> to vector<16x128xf32>
    %82 = arith.addf %80, %81 : vector<16x128xf32>
    %cst_92 = arith.constant 0.000000e+00 : f32
    %83 = vector.broadcast %cst_92 : f32 to vector<16x128xf32>
    %84 = arith.maximumf %82, %83 : vector<16x128xf32>
    %85 = arith.truncf %84 : vector<16x128xf32> to vector<16x128xbf16>
    %c0_93 = arith.constant 0 : index
    %c1_94 = arith.constant 1 : index
    %c0_95 = arith.constant 0 : index
    %c0_96 = arith.constant 0 : index
    %86 = vector.load %arg4[%c0_93, %c1_94, %c0_95, %c0_96] : memref<1x16x16x128xbf16, #tpu.memory_space<vmem>>, vector<1x1x16x128xbf16>
    %87 = vector.shape_cast %86 : vector<1x1x16x128xbf16> to vector<16x128xbf16>
    %88 = vector.shape_cast %85 : vector<16x128xbf16> to vector<1x1x16x128xbf16>
    tpu.vector_store %arg4[%c0_93, %c1_94, %c0_95, %c0_96], %88 {strides = array<i32>} : memref<1x16x16x128xbf16, #tpu.memory_space<vmem>>, vector<1x1x16x128xbf16>,
    %c36_97 = arith.constant 36 : index
    %c0_98 = arith.constant 0 : index
    %89 = vector.load %arg5[%c36_97, %c0_98] : memref<286x128xf32, #tpu.memory_space<vmem>>, vector<16x128xf32>
    %90 = vector.broadcast %70 : vector<1x128xf32> to vector<16x128xf32>
    %91 = arith.addf %89, %90 : vector<16x128xf32>
    %cst_99 = arith.constant 0.000000e+00 : f32
    %92 = vector.broadcast %cst_99 : f32 to vector<16x128xf32>
    %93 = arith.maximumf %91, %92 : vector<16x128xf32>
    %94 = arith.truncf %93 : vector<16x128xf32> to vector<16x128xbf16>
    %c0_100 = arith.constant 0 : index
    %c2_101 = arith.constant 2 : index
    %c0_102 = arith.constant 0 : index
    %c0_103 = arith.constant 0 : index
    %95 = vector.load %arg4[%c0_100, %c2_101, %c0_102, %c0_103] : memref<1x16x16x128xbf16, #tpu.memory_space<vmem>>, vector<1x1x16x128xbf16>
    %96 = vector.shape_cast %95 : vector<1x1x16x128xbf16> to vector<16x128xbf16>
    %97 = vector.shape_cast %94 : vector<16x128xbf16> to vector<1x1x16x128xbf16>
    tpu.vector_store %arg4[%c0_100, %c2_101, %c0_102, %c0_103], %97 {strides = array<i32>} : memref<1x16x16x128xbf16, #tpu.memory_space<vmem>>, vector<1x1x16x128xbf16>,
    %c54 = arith.constant 54 : index
    %c0_104 = arith.constant 0 : index
    %98 = vector.load %arg5[%c54, %c0_104] : memref<286x128xf32, #tpu.memory_space<vmem>>, vector<16x128xf32>
    %99 = vector.broadcast %70 : vector<1x128xf32> to vector<16x128xf32>
    %100 = arith.addf %98, %99 : vector<16x128xf32>
    %cst_105 = arith.constant 0.000000e+00 : f32
    %101 = vector.broadcast %cst_105 : f32 to vector<16x128xf32>
    %102 = arith.maximumf %100, %101 : vector<16x128xf32>
    %103 = arith.truncf %102 : vector<16x128xf32> to vector<16x128xbf16>
    %c0_106 = arith.constant 0 : index
    %c3_107 = arith.constant 3 : index
    %c0_108 = arith.constant 0 : index
    %c0_109 = arith.constant 0 : index
    %104 = vector.load %arg4[%c0_106, %c3_107, %c0_108, %c0_109] : memref<1x16x16x128xbf16, #tpu.memory_space<vmem>>, vector<1x1x16x128xbf16>
    %105 = vector.shape_cast %104 : vector<1x1x16x128xbf16> to vector<16x128xbf16>
    %106 = vector.shape_cast %103 : vector<16x128xbf16> to vector<1x1x16x128xbf16>
    tpu.vector_store %arg4[%c0_106, %c3_107, %c0_108, %c0_109], %106 {strides = array<i32>} : memref<1x16x16x128xbf16, #tpu.memory_space<vmem>>, vector<1x1x16x128xbf16>,
    %c72 = arith.constant 72 : index
    %c0_110 = arith.constant 0 : index
    %107 = vector.load %arg5[%c72, %c0_110] : memref<286x128xf32, #tpu.memory_space<vmem>>, vector<16x128xf32>
    %108 = vector.broadcast %70 : vector<1x128xf32> to vector<16x128xf32>
    %109 = arith.addf %107, %108 : vector<16x128xf32>
    %cst_111 = arith.constant 0.000000e+00 : f32
    %110 = vector.broadcast %cst_111 : f32 to vector<16x128xf32>
    %111 = arith.maximumf %109, %110 : vector<16x128xf32>
    %112 = arith.truncf %111 : vector<16x128xf32> to vector<16x128xbf16>
    %c0_112 = arith.constant 0 : index
    %c4_113 = arith.constant 4 : index
    %c0_114 = arith.constant 0 : index
    %c0_115 = arith.constant 0 : index
    %113 = vector.load %arg4[%c0_112, %c4_113, %c0_114, %c0_115] : memref<1x16x16x128xbf16, #tpu.memory_space<vmem>>, vector<1x1x16x128xbf16>
    %114 = vector.shape_cast %113 : vector<1x1x16x128xbf16> to vector<16x128xbf16>
    %115 = vector.shape_cast %112 : vector<16x128xbf16> to vector<1x1x16x128xbf16>
    tpu.vector_store %arg4[%c0_112, %c4_113, %c0_114, %c0_115], %115 {strides = array<i32>} : memref<1x16x16x128xbf16, #tpu.memory_space<vmem>>, vector<1x1x16x128xbf16>,
    %c90 = arith.constant 90 : index
    %c0_116 = arith.constant 0 : index
    %116 = vector.load %arg5[%c90, %c0_116] : memref<286x128xf32, #tpu.memory_space<vmem>>, vector<16x128xf32>
    %117 = vector.broadcast %70 : vector<1x128xf32> to vector<16x128xf32>
    %118 = arith.addf %116, %117 : vector<16x128xf32>
    %cst_117 = arith.constant 0.000000e+00 : f32
    %119 = vector.broadcast %cst_117 : f32 to vector<16x128xf32>
    %120 = arith.maximumf %118, %119 : vector<16x128xf32>
    %121 = arith.truncf %120 : vector<16x128xf32> to vector<16x128xbf16>
    %c0_118 = arith.constant 0 : index
    %c5_119 = arith.constant 5 : index
    %c0_120 = arith.constant 0 : index
    %c0_121 = arith.constant 0 : index
    %122 = vector.load %arg4[%c0_118, %c5_119, %c0_120, %c0_121] : memref<1x16x16x128xbf16, #tpu.memory_space<vmem>>, vector<1x1x16x128xbf16>
    %123 = vector.shape_cast %122 : vector<1x1x16x128xbf16> to vector<16x128xbf16>
    %124 = vector.shape_cast %121 : vector<16x128xbf16> to vector<1x1x16x128xbf16>
    tpu.vector_store %arg4[%c0_118, %c5_119, %c0_120, %c0_121], %124 {strides = array<i32>} : memref<1x16x16x128xbf16, #tpu.memory_space<vmem>>, vector<1x1x16x128xbf16>,
    %c108 = arith.constant 108 : index
    %c0_122 = arith.constant 0 : index
    %125 = vector.load %arg5[%c108, %c0_122] : memref<286x128xf32, #tpu.memory_space<vmem>>, vector<16x128xf32>
    %126 = vector.broadcast %70 : vector<1x128xf32> to vector<16x128xf32>
    %127 = arith.addf %125, %126 : vector<16x128xf32>
    %cst_123 = arith.constant 0.000000e+00 : f32
    %128 = vector.broadcast %cst_123 : f32 to vector<16x128xf32>
    %129 = arith.maximumf %127, %128 : vector<16x128xf32>
    %130 = arith.truncf %129 : vector<16x128xf32> to vector<16x128xbf16>
    %c0_124 = arith.constant 0 : index
    %c6_125 = arith.constant 6 : index
    %c0_126 = arith.constant 0 : index
    %c0_127 = arith.constant 0 : index
    %131 = vector.load %arg4[%c0_124, %c6_125, %c0_126, %c0_127] : memref<1x16x16x128xbf16, #tpu.memory_space<vmem>>, vector<1x1x16x128xbf16>
    %132 = vector.shape_cast %131 : vector<1x1x16x128xbf16> to vector<16x128xbf16>
    %133 = vector.shape_cast %130 : vector<16x128xbf16> to vector<1x1x16x128xbf16>
    tpu.vector_store %arg4[%c0_124, %c6_125, %c0_126, %c0_127], %133 {strides = array<i32>} : memref<1x16x16x128xbf16, #tpu.memory_space<vmem>>, vector<1x1x16x128xbf16>,
    %c126 = arith.constant 126 : index
    %c0_128 = arith.constant 0 : index
    %134 = vector.load %arg5[%c126, %c0_128] : memref<286x128xf32, #tpu.memory_space<vmem>>, vector<16x128xf32>
    %135 = vector.broadcast %70 : vector<1x128xf32> to vector<16x128xf32>
    %136 = arith.addf %134, %135 : vector<16x128xf32>
    %cst_129 = arith.constant 0.000000e+00 : f32
    %137 = vector.broadcast %cst_129 : f32 to vector<16x128xf32>
    %138 = arith.maximumf %136, %137 : vector<16x128xf32>
    %139 = arith.truncf %138 : vector<16x128xf32> to vector<16x128xbf16>
    %c0_130 = arith.constant 0 : index
    %c7_131 = arith.constant 7 : index
    %c0_132 = arith.constant 0 : index
    %c0_133 = arith.constant 0 : index
    %140 = vector.load %arg4[%c0_130, %c7_131, %c0_132, %c0_133] : memref<1x16x16x128xbf16, #tpu.memory_space<vmem>>, vector<1x1x16x128xbf16>
    %141 = vector.shape_cast %140 : vector<1x1x16x128xbf16> to vector<16x128xbf16>
    %142 = vector.shape_cast %139 : vector<16x128xbf16> to vector<1x1x16x128xbf16>
    tpu.vector_store %arg4[%c0_130, %c7_131, %c0_132, %c0_133], %142 {strides = array<i32>} : memref<1x16x16x128xbf16, #tpu.memory_space<vmem>>, vector<1x1x16x128xbf16>,
    %c144 = arith.constant 144 : index
    %c0_134 = arith.constant 0 : index
    %143 = vector.load %arg5[%c144, %c0_134] : memref<286x128xf32, #tpu.memory_space<vmem>>, vector<16x128xf32>
    %144 = vector.broadcast %70 : vector<1x128xf32> to vector<16x128xf32>
    %145 = arith.addf %143, %144 : vector<16x128xf32>
    %cst_135 = arith.constant 0.000000e+00 : f32
    %146 = vector.broadcast %cst_135 : f32 to vector<16x128xf32>
    %147 = arith.maximumf %145, %146 : vector<16x128xf32>
    %148 = arith.truncf %147 : vector<16x128xf32> to vector<16x128xbf16>
    %c0_136 = arith.constant 0 : index
    %c8_137 = arith.constant 8 : index
    %c0_138 = arith.constant 0 : index
    %c0_139 = arith.constant 0 : index
    %149 = vector.load %arg4[%c0_136, %c8_137, %c0_138, %c0_139] : memref<1x16x16x128xbf16, #tpu.memory_space<vmem>>, vector<1x1x16x128xbf16>
    %150 = vector.shape_cast %149 : vector<1x1x16x128xbf16> to vector<16x128xbf16>
    %151 = vector.shape_cast %148 : vector<16x128xbf16> to vector<1x1x16x128xbf16>
    tpu.vector_store %arg4[%c0_136, %c8_137, %c0_138, %c0_139], %151 {strides = array<i32>} : memref<1x16x16x128xbf16, #tpu.memory_space<vmem>>, vector<1x1x16x128xbf16>,
    %c162 = arith.constant 162 : index
    %c0_140 = arith.constant 0 : index
    %152 = vector.load %arg5[%c162, %c0_140] : memref<286x128xf32, #tpu.memory_space<vmem>>, vector<16x128xf32>
    %153 = vector.broadcast %70 : vector<1x128xf32> to vector<16x128xf32>
    %154 = arith.addf %152, %153 : vector<16x128xf32>
    %cst_141 = arith.constant 0.000000e+00 : f32
    %155 = vector.broadcast %cst_141 : f32 to vector<16x128xf32>
    %156 = arith.maximumf %154, %155 : vector<16x128xf32>
    %157 = arith.truncf %156 : vector<16x128xf32> to vector<16x128xbf16>
    %c0_142 = arith.constant 0 : index
    %c9 = arith.constant 9 : index
    %c0_143 = arith.constant 0 : index
    %c0_144 = arith.constant 0 : index
    %158 = vector.load %arg4[%c0_142, %c9, %c0_143, %c0_144] : memref<1x16x16x128xbf16, #tpu.memory_space<vmem>>, vector<1x1x16x128xbf16>
    %159 = vector.shape_cast %158 : vector<1x1x16x128xbf16> to vector<16x128xbf16>
    %160 = vector.shape_cast %157 : vector<16x128xbf16> to vector<1x1x16x128xbf16>
    tpu.vector_store %arg4[%c0_142, %c9, %c0_143, %c0_144], %160 {strides = array<i32>} : memref<1x16x16x128xbf16, #tpu.memory_space<vmem>>, vector<1x1x16x128xbf16>,
    %c180 = arith.constant 180 : index
    %c0_145 = arith.constant 0 : index
    %161 = vector.load %arg5[%c180, %c0_145] : memref<286x128xf32, #tpu.memory_space<vmem>>, vector<16x128xf32>
    %162 = vector.broadcast %70 : vector<1x128xf32> to vector<16x128xf32>
    %163 = arith.addf %161, %162 : vector<16x128xf32>
    %cst_146 = arith.constant 0.000000e+00 : f32
    %164 = vector.broadcast %cst_146 : f32 to vector<16x128xf32>
    %165 = arith.maximumf %163, %164 : vector<16x128xf32>
    %166 = arith.truncf %165 : vector<16x128xf32> to vector<16x128xbf16>
    %c0_147 = arith.constant 0 : index
    %c10 = arith.constant 10 : index
    %c0_148 = arith.constant 0 : index
    %c0_149 = arith.constant 0 : index
    %167 = vector.load %arg4[%c0_147, %c10, %c0_148, %c0_149] : memref<1x16x16x128xbf16, #tpu.memory_space<vmem>>, vector<1x1x16x128xbf16>
    %168 = vector.shape_cast %167 : vector<1x1x16x128xbf16> to vector<16x128xbf16>
    %169 = vector.shape_cast %166 : vector<16x128xbf16> to vector<1x1x16x128xbf16>
    tpu.vector_store %arg4[%c0_147, %c10, %c0_148, %c0_149], %169 {strides = array<i32>} : memref<1x16x16x128xbf16, #tpu.memory_space<vmem>>, vector<1x1x16x128xbf16>,
    %c198 = arith.constant 198 : index
    %c0_150 = arith.constant 0 : index
    %170 = vector.load %arg5[%c198, %c0_150] : memref<286x128xf32, #tpu.memory_space<vmem>>, vector<16x128xf32>
    %171 = vector.broadcast %70 : vector<1x128xf32> to vector<16x128xf32>
    %172 = arith.addf %170, %171 : vector<16x128xf32>
    %cst_151 = arith.constant 0.000000e+00 : f32
    %173 = vector.broadcast %cst_151 : f32 to vector<16x128xf32>
    %174 = arith.maximumf %172, %173 : vector<16x128xf32>
    %175 = arith.truncf %174 : vector<16x128xf32> to vector<16x128xbf16>
    %c0_152 = arith.constant 0 : index
    %c11 = arith.constant 11 : index
    %c0_153 = arith.constant 0 : index
    %c0_154 = arith.constant 0 : index
    %176 = vector.load %arg4[%c0_152, %c11, %c0_153, %c0_154] : memref<1x16x16x128xbf16, #tpu.memory_space<vmem>>, vector<1x1x16x128xbf16>
    %177 = vector.shape_cast %176 : vector<1x1x16x128xbf16> to vector<16x128xbf16>
    %178 = vector.shape_cast %175 : vector<16x128xbf16> to vector<1x1x16x128xbf16>
    tpu.vector_store %arg4[%c0_152, %c11, %c0_153, %c0_154], %178 {strides = array<i32>} : memref<1x16x16x128xbf16, #tpu.memory_space<vmem>>, vector<1x1x16x128xbf16>,
    %c216 = arith.constant 216 : index
    %c0_155 = arith.constant 0 : index
    %179 = vector.load %arg5[%c216, %c0_155] : memref<286x128xf32, #tpu.memory_space<vmem>>, vector<16x128xf32>
    %180 = vector.broadcast %70 : vector<1x128xf32> to vector<16x128xf32>
    %181 = arith.addf %179, %180 : vector<16x128xf32>
    %cst_156 = arith.constant 0.000000e+00 : f32
    %182 = vector.broadcast %cst_156 : f32 to vector<16x128xf32>
    %183 = arith.maximumf %181, %182 : vector<16x128xf32>
    %184 = arith.truncf %183 : vector<16x128xf32> to vector<16x128xbf16>
    %c0_157 = arith.constant 0 : index
    %c12 = arith.constant 12 : index
    %c0_158 = arith.constant 0 : index
    %c0_159 = arith.constant 0 : index
    %185 = vector.load %arg4[%c0_157, %c12, %c0_158, %c0_159] : memref<1x16x16x128xbf16, #tpu.memory_space<vmem>>, vector<1x1x16x128xbf16>
    %186 = vector.shape_cast %185 : vector<1x1x16x128xbf16> to vector<16x128xbf16>
    %187 = vector.shape_cast %184 : vector<16x128xbf16> to vector<1x1x16x128xbf16>
    tpu.vector_store %arg4[%c0_157, %c12, %c0_158, %c0_159], %187 {strides = array<i32>} : memref<1x16x16x128xbf16, #tpu.memory_space<vmem>>, vector<1x1x16x128xbf16>,
    %c234 = arith.constant 234 : index
    %c0_160 = arith.constant 0 : index
    %188 = vector.load %arg5[%c234, %c0_160] : memref<286x128xf32, #tpu.memory_space<vmem>>, vector<16x128xf32>
    %189 = vector.broadcast %70 : vector<1x128xf32> to vector<16x128xf32>
    %190 = arith.addf %188, %189 : vector<16x128xf32>
    %cst_161 = arith.constant 0.000000e+00 : f32
    %191 = vector.broadcast %cst_161 : f32 to vector<16x128xf32>
    %192 = arith.maximumf %190, %191 : vector<16x128xf32>
    %193 = arith.truncf %192 : vector<16x128xf32> to vector<16x128xbf16>
    %c0_162 = arith.constant 0 : index
    %c13 = arith.constant 13 : index
    %c0_163 = arith.constant 0 : index
    %c0_164 = arith.constant 0 : index
    %194 = vector.load %arg4[%c0_162, %c13, %c0_163, %c0_164] : memref<1x16x16x128xbf16, #tpu.memory_space<vmem>>, vector<1x1x16x128xbf16>
    %195 = vector.shape_cast %194 : vector<1x1x16x128xbf16> to vector<16x128xbf16>
    %196 = vector.shape_cast %193 : vector<16x128xbf16> to vector<1x1x16x128xbf16>
    tpu.vector_store %arg4[%c0_162, %c13, %c0_163, %c0_164], %196 {strides = array<i32>} : memref<1x16x16x128xbf16, #tpu.memory_space<vmem>>, vector<1x1x16x128xbf16>,
    %c252 = arith.constant 252 : index
    %c0_165 = arith.constant 0 : index
    %197 = vector.load %arg5[%c252, %c0_165] : memref<286x128xf32, #tpu.memory_space<vmem>>, vector<16x128xf32>
    %198 = vector.broadcast %70 : vector<1x128xf32> to vector<16x128xf32>
    %199 = arith.addf %197, %198 : vector<16x128xf32>
    %cst_166 = arith.constant 0.000000e+00 : f32
    %200 = vector.broadcast %cst_166 : f32 to vector<16x128xf32>
    %201 = arith.maximumf %199, %200 : vector<16x128xf32>
    %202 = arith.truncf %201 : vector<16x128xf32> to vector<16x128xbf16>
    %c0_167 = arith.constant 0 : index
    %c14 = arith.constant 14 : index
    %c0_168 = arith.constant 0 : index
    %c0_169 = arith.constant 0 : index
    %203 = vector.load %arg4[%c0_167, %c14, %c0_168, %c0_169] : memref<1x16x16x128xbf16, #tpu.memory_space<vmem>>, vector<1x1x16x128xbf16>
    %204 = vector.shape_cast %203 : vector<1x1x16x128xbf16> to vector<16x128xbf16>
    %205 = vector.shape_cast %202 : vector<16x128xbf16> to vector<1x1x16x128xbf16>
    tpu.vector_store %arg4[%c0_167, %c14, %c0_168, %c0_169], %205 {strides = array<i32>} : memref<1x16x16x128xbf16, #tpu.memory_space<vmem>>, vector<1x1x16x128xbf16>,
    %c270 = arith.constant 270 : index
    %c0_170 = arith.constant 0 : index
    %206 = vector.load %arg5[%c270, %c0_170] : memref<286x128xf32, #tpu.memory_space<vmem>>, vector<16x128xf32>
    %207 = vector.broadcast %70 : vector<1x128xf32> to vector<16x128xf32>
    %208 = arith.addf %206, %207 : vector<16x128xf32>
    %cst_171 = arith.constant 0.000000e+00 : f32
    %209 = vector.broadcast %cst_171 : f32 to vector<16x128xf32>
    %210 = arith.maximumf %208, %209 : vector<16x128xf32>
    %211 = arith.truncf %210 : vector<16x128xf32> to vector<16x128xbf16>
    %c0_172 = arith.constant 0 : index
    %c15 = arith.constant 15 : index
    %c0_173 = arith.constant 0 : index
    %c0_174 = arith.constant 0 : index
    %212 = vector.load %arg4[%c0_172, %c15, %c0_173, %c0_174] : memref<1x16x16x128xbf16, #tpu.memory_space<vmem>>, vector<1x1x16x128xbf16>
    %213 = vector.shape_cast %212 : vector<1x1x16x128xbf16> to vector<16x128xbf16>
    %214 = vector.shape_cast %211 : vector<16x128xbf16> to vector<1x1x16x128xbf16>
    tpu.vector_store %arg4[%c0_172, %c15, %c0_173, %c0_174], %214 {strides = array<i32>} : memref<1x16x16x128xbf16, #tpu.memory_space<vmem>>, vector<1x1x16x128xbf16>,
    return
  }
  func.func @transform_0(%arg0: i32) -> (i32, i32, i32) {
    %c0_i32 = arith.constant 0 : i32
    %c0_i32_0 = arith.constant 0 : i32
    %c0_i32_1 = arith.constant 0 : i32
    return %arg0, %c0_i32, %c0_i32_0 : i32, i32, i32
  }
  func.func @transform_1(%arg0: i32) -> (i32, i32, i32) {
    %c0_i32 = arith.constant 0 : i32
    %c0_i32_0 = arith.constant 0 : i32
    %c0_i32_1 = arith.constant 0 : i32
    %c0_i32_2 = arith.constant 0 : i32
    return %c0_i32, %c0_i32_0, %c0_i32_1 : i32, i32, i32
  }
  func.func @transform_2(%arg0: i32) -> (i32, i32) {
    %c0_i32 = arith.constant 0 : i32
    %c0_i32_0 = arith.constant 0 : i32
    %c0_i32_1 = arith.constant 0 : i32
    return %c0_i32, %c0_i32_0 : i32, i32
  }
  func.func @transform_3(%arg0: i32) -> (i32, i32, i32, i32) {
    %c0_i32 = arith.constant 0 : i32
    %c0_i32_0 = arith.constant 0 : i32
    %c0_i32_1 = arith.constant 0 : i32
    %c0_i32_2 = arith.constant 0 : i32
    return %arg0, %c0_i32, %c0_i32_0, %c0_i32_1 : i32, i32, i32, i32
  }
}

module attributes {stable_mosaic.version = 11 : i64} {
  func.func @_conv3x3_kernel(%arg0: i32, %arg1: memref<1x100x128xbf16, #tpu.memory_space<vmem>>, %arg2: memref<9x128x128xbf16, #tpu.memory_space<vmem>>, %arg3: memref<1x128xf32, #tpu.memory_space<vmem>>, %arg4: memref<1x8x8x128xbf16, #tpu.memory_space<vmem>>, %arg5: memref<1x8x8x128xf32, #tpu.memory_space<vmem>>, %arg6: memref<78x128xf32, #tpu.memory_space<vmem>>) attributes {dimension_semantics = [#tpu.dimension_semantics<parallel>], iteration_bounds = array<i64: 2>, scalar_prefetch = 0 : i64, scratch_operands = 1 : i64, tpu.core_type = #tpu.core_type<tc>, window_params = [{transform_indices = @transform_0, window_bounds = array<i64: 1, 100, 128>}, {pipeline_mode = #tpu.pipeline_mode<synchronous>, transform_indices = @transform_1, window_bounds = array<i64: 9, 128, 128>}, {pipeline_mode = #tpu.pipeline_mode<synchronous>, transform_indices = @transform_2, window_bounds = array<i64: 1, 128>}, {transform_indices = @transform_3, window_bounds = array<i64: 1, 8, 8, 128>}, {transform_indices = @transform_4, window_bounds = array<i64: 1, 8, 8, 128>}]} {
    %c0 = arith.constant 0 : index
    %c0_0 = arith.constant 0 : index
    %c0_1 = arith.constant 0 : index
    %0 = vector.load %arg1[%c0, %c0_0, %c0_1] : memref<1x100x128xbf16, #tpu.memory_space<vmem>>, vector<1x78x128xbf16>
    %1 = vector.shape_cast %0 : vector<1x78x128xbf16> to vector<78x128xbf16>
    %c0_2 = arith.constant 0 : index
    %c0_3 = arith.constant 0 : index
    %c0_4 = arith.constant 0 : index
    %2 = vector.load %arg2[%c0_2, %c0_3, %c0_4] : memref<9x128x128xbf16, #tpu.memory_space<vmem>>, vector<1x128x128xbf16>
    %3 = vector.shape_cast %2 : vector<1x128x128xbf16> to vector<128x128xbf16>
    %cst = arith.constant dense<0.000000e+00> : vector<78x128xf32>
    %4 = tpu.matmul %1, %3, %cst {dimension_numbers = #tpu.dot_dimension_numbers<[1], [0], [0], [1], [0, 0, 1, 1], [], []>} : vector<78x128xbf16>, vector<128x128xbf16>, vector<78x128xf32> -> vector<78x128xf32>
    %c0_5 = arith.constant 0 : index
    %c0_6 = arith.constant 0 : index
    %5 = vector.load %arg6[%c0_5, %c0_6] : memref<78x128xf32, #tpu.memory_space<vmem>>, vector<78x128xf32>
    tpu.vector_store %arg6[%c0_5, %c0_6], %4 {strides = array<i32>} : memref<78x128xf32, #tpu.memory_space<vmem>>, vector<78x128xf32>,
    %c0_7 = arith.constant 0 : index
    %c0_8 = arith.constant 0 : index
    %6 = vector.load %arg6[%c0_7, %c0_8] : memref<78x128xf32, #tpu.memory_space<vmem>>, vector<78x128xf32>
    %c0_9 = arith.constant 0 : index
    %c1 = arith.constant 1 : index
    %c0_10 = arith.constant 0 : index
    %7 = vector.load %arg1[%c0_9, %c1, %c0_10] : memref<1x100x128xbf16, #tpu.memory_space<vmem>>, vector<1x78x128xbf16>
    %8 = vector.shape_cast %7 : vector<1x78x128xbf16> to vector<78x128xbf16>
    %c1_11 = arith.constant 1 : index
    %c0_12 = arith.constant 0 : index
    %c0_13 = arith.constant 0 : index
    %9 = vector.load %arg2[%c1_11, %c0_12, %c0_13] : memref<9x128x128xbf16, #tpu.memory_space<vmem>>, vector<1x128x128xbf16>
    %10 = vector.shape_cast %9 : vector<1x128x128xbf16> to vector<128x128xbf16>
    %cst_14 = arith.constant dense<0.000000e+00> : vector<78x128xf32>
    %11 = tpu.matmul %8, %10, %cst_14 {dimension_numbers = #tpu.dot_dimension_numbers<[1], [0], [0], [1], [0, 0, 1, 1], [], []>} : vector<78x128xbf16>, vector<128x128xbf16>, vector<78x128xf32> -> vector<78x128xf32>
    %12 = arith.addf %6, %11 : vector<78x128xf32>
    %c0_15 = arith.constant 0 : index
    %c0_16 = arith.constant 0 : index
    %13 = vector.load %arg6[%c0_15, %c0_16] : memref<78x128xf32, #tpu.memory_space<vmem>>, vector<78x128xf32>
    tpu.vector_store %arg6[%c0_15, %c0_16], %12 {strides = array<i32>} : memref<78x128xf32, #tpu.memory_space<vmem>>, vector<78x128xf32>,
    %c0_17 = arith.constant 0 : index
    %c0_18 = arith.constant 0 : index
    %14 = vector.load %arg6[%c0_17, %c0_18] : memref<78x128xf32, #tpu.memory_space<vmem>>, vector<78x128xf32>
    %c0_19 = arith.constant 0 : index
    %c2 = arith.constant 2 : index
    %c0_20 = arith.constant 0 : index
    %15 = vector.load %arg1[%c0_19, %c2, %c0_20] : memref<1x100x128xbf16, #tpu.memory_space<vmem>>, vector<1x78x128xbf16>
    %16 = vector.shape_cast %15 : vector<1x78x128xbf16> to vector<78x128xbf16>
    %c2_21 = arith.constant 2 : index
    %c0_22 = arith.constant 0 : index
    %c0_23 = arith.constant 0 : index
    %17 = vector.load %arg2[%c2_21, %c0_22, %c0_23] : memref<9x128x128xbf16, #tpu.memory_space<vmem>>, vector<1x128x128xbf16>
    %18 = vector.shape_cast %17 : vector<1x128x128xbf16> to vector<128x128xbf16>
    %cst_24 = arith.constant dense<0.000000e+00> : vector<78x128xf32>
    %19 = tpu.matmul %16, %18, %cst_24 {dimension_numbers = #tpu.dot_dimension_numbers<[1], [0], [0], [1], [0, 0, 1, 1], [], []>} : vector<78x128xbf16>, vector<128x128xbf16>, vector<78x128xf32> -> vector<78x128xf32>
    %20 = arith.addf %14, %19 : vector<78x128xf32>
    %c0_25 = arith.constant 0 : index
    %c0_26 = arith.constant 0 : index
    %21 = vector.load %arg6[%c0_25, %c0_26] : memref<78x128xf32, #tpu.memory_space<vmem>>, vector<78x128xf32>
    tpu.vector_store %arg6[%c0_25, %c0_26], %20 {strides = array<i32>} : memref<78x128xf32, #tpu.memory_space<vmem>>, vector<78x128xf32>,
    %c0_27 = arith.constant 0 : index
    %c0_28 = arith.constant 0 : index
    %22 = vector.load %arg6[%c0_27, %c0_28] : memref<78x128xf32, #tpu.memory_space<vmem>>, vector<78x128xf32>
    %c0_29 = arith.constant 0 : index
    %c10 = arith.constant 10 : index
    %c0_30 = arith.constant 0 : index
    %23 = vector.load %arg1[%c0_29, %c10, %c0_30] : memref<1x100x128xbf16, #tpu.memory_space<vmem>>, vector<1x78x128xbf16>
    %24 = vector.shape_cast %23 : vector<1x78x128xbf16> to vector<78x128xbf16>
    %c3 = arith.constant 3 : index
    %c0_31 = arith.constant 0 : index
    %c0_32 = arith.constant 0 : index
    %25 = vector.load %arg2[%c3, %c0_31, %c0_32] : memref<9x128x128xbf16, #tpu.memory_space<vmem>>, vector<1x128x128xbf16>
    %26 = vector.shape_cast %25 : vector<1x128x128xbf16> to vector<128x128xbf16>
    %cst_33 = arith.constant dense<0.000000e+00> : vector<78x128xf32>
    %27 = tpu.matmul %24, %26, %cst_33 {dimension_numbers = #tpu.dot_dimension_numbers<[1], [0], [0], [1], [0, 0, 1, 1], [], []>} : vector<78x128xbf16>, vector<128x128xbf16>, vector<78x128xf32> -> vector<78x128xf32>
    %28 = arith.addf %22, %27 : vector<78x128xf32>
    %c0_34 = arith.constant 0 : index
    %c0_35 = arith.constant 0 : index
    %29 = vector.load %arg6[%c0_34, %c0_35] : memref<78x128xf32, #tpu.memory_space<vmem>>, vector<78x128xf32>
    tpu.vector_store %arg6[%c0_34, %c0_35], %28 {strides = array<i32>} : memref<78x128xf32, #tpu.memory_space<vmem>>, vector<78x128xf32>,
    %c0_36 = arith.constant 0 : index
    %c0_37 = arith.constant 0 : index
    %30 = vector.load %arg6[%c0_36, %c0_37] : memref<78x128xf32, #tpu.memory_space<vmem>>, vector<78x128xf32>
    %c0_38 = arith.constant 0 : index
    %c11 = arith.constant 11 : index
    %c0_39 = arith.constant 0 : index
    %31 = vector.load %arg1[%c0_38, %c11, %c0_39] : memref<1x100x128xbf16, #tpu.memory_space<vmem>>, vector<1x78x128xbf16>
    %32 = vector.shape_cast %31 : vector<1x78x128xbf16> to vector<78x128xbf16>
    %c4 = arith.constant 4 : index
    %c0_40 = arith.constant 0 : index
    %c0_41 = arith.constant 0 : index
    %33 = vector.load %arg2[%c4, %c0_40, %c0_41] : memref<9x128x128xbf16, #tpu.memory_space<vmem>>, vector<1x128x128xbf16>
    %34 = vector.shape_cast %33 : vector<1x128x128xbf16> to vector<128x128xbf16>
    %cst_42 = arith.constant dense<0.000000e+00> : vector<78x128xf32>
    %35 = tpu.matmul %32, %34, %cst_42 {dimension_numbers = #tpu.dot_dimension_numbers<[1], [0], [0], [1], [0, 0, 1, 1], [], []>} : vector<78x128xbf16>, vector<128x128xbf16>, vector<78x128xf32> -> vector<78x128xf32>
    %36 = arith.addf %30, %35 : vector<78x128xf32>
    %c0_43 = arith.constant 0 : index
    %c0_44 = arith.constant 0 : index
    %37 = vector.load %arg6[%c0_43, %c0_44] : memref<78x128xf32, #tpu.memory_space<vmem>>, vector<78x128xf32>
    tpu.vector_store %arg6[%c0_43, %c0_44], %36 {strides = array<i32>} : memref<78x128xf32, #tpu.memory_space<vmem>>, vector<78x128xf32>,
    %c0_45 = arith.constant 0 : index
    %c0_46 = arith.constant 0 : index
    %38 = vector.load %arg6[%c0_45, %c0_46] : memref<78x128xf32, #tpu.memory_space<vmem>>, vector<78x128xf32>
    %c0_47 = arith.constant 0 : index
    %c12 = arith.constant 12 : index
    %c0_48 = arith.constant 0 : index
    %39 = vector.load %arg1[%c0_47, %c12, %c0_48] : memref<1x100x128xbf16, #tpu.memory_space<vmem>>, vector<1x78x128xbf16>
    %40 = vector.shape_cast %39 : vector<1x78x128xbf16> to vector<78x128xbf16>
    %c5 = arith.constant 5 : index
    %c0_49 = arith.constant 0 : index
    %c0_50 = arith.constant 0 : index
    %41 = vector.load %arg2[%c5, %c0_49, %c0_50] : memref<9x128x128xbf16, #tpu.memory_space<vmem>>, vector<1x128x128xbf16>
    %42 = vector.shape_cast %41 : vector<1x128x128xbf16> to vector<128x128xbf16>
    %cst_51 = arith.constant dense<0.000000e+00> : vector<78x128xf32>
    %43 = tpu.matmul %40, %42, %cst_51 {dimension_numbers = #tpu.dot_dimension_numbers<[1], [0], [0], [1], [0, 0, 1, 1], [], []>} : vector<78x128xbf16>, vector<128x128xbf16>, vector<78x128xf32> -> vector<78x128xf32>
    %44 = arith.addf %38, %43 : vector<78x128xf32>
    %c0_52 = arith.constant 0 : index
    %c0_53 = arith.constant 0 : index
    %45 = vector.load %arg6[%c0_52, %c0_53] : memref<78x128xf32, #tpu.memory_space<vmem>>, vector<78x128xf32>
    tpu.vector_store %arg6[%c0_52, %c0_53], %44 {strides = array<i32>} : memref<78x128xf32, #tpu.memory_space<vmem>>, vector<78x128xf32>,
    %c0_54 = arith.constant 0 : index
    %c0_55 = arith.constant 0 : index
    %46 = vector.load %arg6[%c0_54, %c0_55] : memref<78x128xf32, #tpu.memory_space<vmem>>, vector<78x128xf32>
    %c0_56 = arith.constant 0 : index
    %c20 = arith.constant 20 : index
    %c0_57 = arith.constant 0 : index
    %47 = vector.load %arg1[%c0_56, %c20, %c0_57] : memref<1x100x128xbf16, #tpu.memory_space<vmem>>, vector<1x78x128xbf16>
    %48 = vector.shape_cast %47 : vector<1x78x128xbf16> to vector<78x128xbf16>
    %c6 = arith.constant 6 : index
    %c0_58 = arith.constant 0 : index
    %c0_59 = arith.constant 0 : index
    %49 = vector.load %arg2[%c6, %c0_58, %c0_59] : memref<9x128x128xbf16, #tpu.memory_space<vmem>>, vector<1x128x128xbf16>
    %50 = vector.shape_cast %49 : vector<1x128x128xbf16> to vector<128x128xbf16>
    %cst_60 = arith.constant dense<0.000000e+00> : vector<78x128xf32>
    %51 = tpu.matmul %48, %50, %cst_60 {dimension_numbers = #tpu.dot_dimension_numbers<[1], [0], [0], [1], [0, 0, 1, 1], [], []>} : vector<78x128xbf16>, vector<128x128xbf16>, vector<78x128xf32> -> vector<78x128xf32>
    %52 = arith.addf %46, %51 : vector<78x128xf32>
    %c0_61 = arith.constant 0 : index
    %c0_62 = arith.constant 0 : index
    %53 = vector.load %arg6[%c0_61, %c0_62] : memref<78x128xf32, #tpu.memory_space<vmem>>, vector<78x128xf32>
    tpu.vector_store %arg6[%c0_61, %c0_62], %52 {strides = array<i32>} : memref<78x128xf32, #tpu.memory_space<vmem>>, vector<78x128xf32>,
    %c0_63 = arith.constant 0 : index
    %c0_64 = arith.constant 0 : index
    %54 = vector.load %arg6[%c0_63, %c0_64] : memref<78x128xf32, #tpu.memory_space<vmem>>, vector<78x128xf32>
    %c0_65 = arith.constant 0 : index
    %c21 = arith.constant 21 : index
    %c0_66 = arith.constant 0 : index
    %55 = vector.load %arg1[%c0_65, %c21, %c0_66] : memref<1x100x128xbf16, #tpu.memory_space<vmem>>, vector<1x78x128xbf16>
    %56 = vector.shape_cast %55 : vector<1x78x128xbf16> to vector<78x128xbf16>
    %c7 = arith.constant 7 : index
    %c0_67 = arith.constant 0 : index
    %c0_68 = arith.constant 0 : index
    %57 = vector.load %arg2[%c7, %c0_67, %c0_68] : memref<9x128x128xbf16, #tpu.memory_space<vmem>>, vector<1x128x128xbf16>
    %58 = vector.shape_cast %57 : vector<1x128x128xbf16> to vector<128x128xbf16>
    %cst_69 = arith.constant dense<0.000000e+00> : vector<78x128xf32>
    %59 = tpu.matmul %56, %58, %cst_69 {dimension_numbers = #tpu.dot_dimension_numbers<[1], [0], [0], [1], [0, 0, 1, 1], [], []>} : vector<78x128xbf16>, vector<128x128xbf16>, vector<78x128xf32> -> vector<78x128xf32>
    %60 = arith.addf %54, %59 : vector<78x128xf32>
    %c0_70 = arith.constant 0 : index
    %c0_71 = arith.constant 0 : index
    %61 = vector.load %arg6[%c0_70, %c0_71] : memref<78x128xf32, #tpu.memory_space<vmem>>, vector<78x128xf32>
    tpu.vector_store %arg6[%c0_70, %c0_71], %60 {strides = array<i32>} : memref<78x128xf32, #tpu.memory_space<vmem>>, vector<78x128xf32>,
    %c0_72 = arith.constant 0 : index
    %c0_73 = arith.constant 0 : index
    %62 = vector.load %arg6[%c0_72, %c0_73] : memref<78x128xf32, #tpu.memory_space<vmem>>, vector<78x128xf32>
    %c0_74 = arith.constant 0 : index
    %c22 = arith.constant 22 : index
    %c0_75 = arith.constant 0 : index
    %63 = vector.load %arg1[%c0_74, %c22, %c0_75] : memref<1x100x128xbf16, #tpu.memory_space<vmem>>, vector<1x78x128xbf16>
    %64 = vector.shape_cast %63 : vector<1x78x128xbf16> to vector<78x128xbf16>
    %c8 = arith.constant 8 : index
    %c0_76 = arith.constant 0 : index
    %c0_77 = arith.constant 0 : index
    %65 = vector.load %arg2[%c8, %c0_76, %c0_77] : memref<9x128x128xbf16, #tpu.memory_space<vmem>>, vector<1x128x128xbf16>
    %66 = vector.shape_cast %65 : vector<1x128x128xbf16> to vector<128x128xbf16>
    %cst_78 = arith.constant dense<0.000000e+00> : vector<78x128xf32>
    %67 = tpu.matmul %64, %66, %cst_78 {dimension_numbers = #tpu.dot_dimension_numbers<[1], [0], [0], [1], [0, 0, 1, 1], [], []>} : vector<78x128xbf16>, vector<128x128xbf16>, vector<78x128xf32> -> vector<78x128xf32>
    %68 = arith.addf %62, %67 : vector<78x128xf32>
    %c0_79 = arith.constant 0 : index
    %c0_80 = arith.constant 0 : index
    %69 = vector.load %arg6[%c0_79, %c0_80] : memref<78x128xf32, #tpu.memory_space<vmem>>, vector<78x128xf32>
    tpu.vector_store %arg6[%c0_79, %c0_80], %68 {strides = array<i32>} : memref<78x128xf32, #tpu.memory_space<vmem>>, vector<78x128xf32>,
    %c0_81 = arith.constant 0 : index
    %c0_82 = arith.constant 0 : index
    %70 = vector.load %arg3[%c0_81, %c0_82] : memref<1x128xf32, #tpu.memory_space<vmem>>, vector<1x128xf32>
    %c0_83 = arith.constant 0 : index
    %c0_84 = arith.constant 0 : index
    %71 = vector.load %arg6[%c0_83, %c0_84] : memref<78x128xf32, #tpu.memory_space<vmem>>, vector<8x128xf32>
    %72 = vector.broadcast %70 : vector<1x128xf32> to vector<8x128xf32>
    %73 = arith.addf %71, %72 : vector<8x128xf32>
    %c0_85 = arith.constant 0 : index
    %c0_86 = arith.constant 0 : index
    %c0_87 = arith.constant 0 : index
    %c0_88 = arith.constant 0 : index
    %74 = vector.load %arg4[%c0_85, %c0_86, %c0_87, %c0_88] : memref<1x8x8x128xbf16, #tpu.memory_space<vmem>>, vector<1x1x8x128xbf16>
    %75 = vector.shape_cast %74 : vector<1x1x8x128xbf16> to vector<8x128xbf16>
    %76 = arith.extf %75 : vector<8x128xbf16> to vector<8x128xf32>
    %77 = arith.addf %73, %76 : vector<8x128xf32>
    %cst_89 = arith.constant 0.000000e+00 : f32
    %78 = vector.broadcast %cst_89 : f32 to vector<8x128xf32>
    %79 = arith.maximumf %77, %78 : vector<8x128xf32>
    %c0_90 = arith.constant 0 : index
    %c0_91 = arith.constant 0 : index
    %c0_92 = arith.constant 0 : index
    %c0_93 = arith.constant 0 : index
    %80 = vector.load %arg5[%c0_90, %c0_91, %c0_92, %c0_93] : memref<1x8x8x128xf32, #tpu.memory_space<vmem>>, vector<1x1x8x128xf32>
    %81 = vector.shape_cast %80 : vector<1x1x8x128xf32> to vector<8x128xf32>
    %82 = vector.shape_cast %79 : vector<8x128xf32> to vector<1x1x8x128xf32>
    tpu.vector_store %arg5[%c0_90, %c0_91, %c0_92, %c0_93], %82 {strides = array<i32>} : memref<1x8x8x128xf32, #tpu.memory_space<vmem>>, vector<1x1x8x128xf32>,
    %c10_94 = arith.constant 10 : index
    %c0_95 = arith.constant 0 : index
    %83 = vector.load %arg6[%c10_94, %c0_95] : memref<78x128xf32, #tpu.memory_space<vmem>>, vector<8x128xf32>
    %84 = vector.broadcast %70 : vector<1x128xf32> to vector<8x128xf32>
    %85 = arith.addf %83, %84 : vector<8x128xf32>
    %c0_96 = arith.constant 0 : index
    %c1_97 = arith.constant 1 : index
    %c0_98 = arith.constant 0 : index
    %c0_99 = arith.constant 0 : index
    %86 = vector.load %arg4[%c0_96, %c1_97, %c0_98, %c0_99] : memref<1x8x8x128xbf16, #tpu.memory_space<vmem>>, vector<1x1x8x128xbf16>
    %87 = vector.shape_cast %86 : vector<1x1x8x128xbf16> to vector<8x128xbf16>
    %88 = arith.extf %87 : vector<8x128xbf16> to vector<8x128xf32>
    %89 = arith.addf %85, %88 : vector<8x128xf32>
    %cst_100 = arith.constant 0.000000e+00 : f32
    %90 = vector.broadcast %cst_100 : f32 to vector<8x128xf32>
    %91 = arith.maximumf %89, %90 : vector<8x128xf32>
    %c0_101 = arith.constant 0 : index
    %c1_102 = arith.constant 1 : index
    %c0_103 = arith.constant 0 : index
    %c0_104 = arith.constant 0 : index
    %92 = vector.load %arg5[%c0_101, %c1_102, %c0_103, %c0_104] : memref<1x8x8x128xf32, #tpu.memory_space<vmem>>, vector<1x1x8x128xf32>
    %93 = vector.shape_cast %92 : vector<1x1x8x128xf32> to vector<8x128xf32>
    %94 = vector.shape_cast %91 : vector<8x128xf32> to vector<1x1x8x128xf32>
    tpu.vector_store %arg5[%c0_101, %c1_102, %c0_103, %c0_104], %94 {strides = array<i32>} : memref<1x8x8x128xf32, #tpu.memory_space<vmem>>, vector<1x1x8x128xf32>,
    %c20_105 = arith.constant 20 : index
    %c0_106 = arith.constant 0 : index
    %95 = vector.load %arg6[%c20_105, %c0_106] : memref<78x128xf32, #tpu.memory_space<vmem>>, vector<8x128xf32>
    %96 = vector.broadcast %70 : vector<1x128xf32> to vector<8x128xf32>
    %97 = arith.addf %95, %96 : vector<8x128xf32>
    %c0_107 = arith.constant 0 : index
    %c2_108 = arith.constant 2 : index
    %c0_109 = arith.constant 0 : index
    %c0_110 = arith.constant 0 : index
    %98 = vector.load %arg4[%c0_107, %c2_108, %c0_109, %c0_110] : memref<1x8x8x128xbf16, #tpu.memory_space<vmem>>, vector<1x1x8x128xbf16>
    %99 = vector.shape_cast %98 : vector<1x1x8x128xbf16> to vector<8x128xbf16>
    %100 = arith.extf %99 : vector<8x128xbf16> to vector<8x128xf32>
    %101 = arith.addf %97, %100 : vector<8x128xf32>
    %cst_111 = arith.constant 0.000000e+00 : f32
    %102 = vector.broadcast %cst_111 : f32 to vector<8x128xf32>
    %103 = arith.maximumf %101, %102 : vector<8x128xf32>
    %c0_112 = arith.constant 0 : index
    %c2_113 = arith.constant 2 : index
    %c0_114 = arith.constant 0 : index
    %c0_115 = arith.constant 0 : index
    %104 = vector.load %arg5[%c0_112, %c2_113, %c0_114, %c0_115] : memref<1x8x8x128xf32, #tpu.memory_space<vmem>>, vector<1x1x8x128xf32>
    %105 = vector.shape_cast %104 : vector<1x1x8x128xf32> to vector<8x128xf32>
    %106 = vector.shape_cast %103 : vector<8x128xf32> to vector<1x1x8x128xf32>
    tpu.vector_store %arg5[%c0_112, %c2_113, %c0_114, %c0_115], %106 {strides = array<i32>} : memref<1x8x8x128xf32, #tpu.memory_space<vmem>>, vector<1x1x8x128xf32>,
    %c30 = arith.constant 30 : index
    %c0_116 = arith.constant 0 : index
    %107 = vector.load %arg6[%c30, %c0_116] : memref<78x128xf32, #tpu.memory_space<vmem>>, vector<8x128xf32>
    %108 = vector.broadcast %70 : vector<1x128xf32> to vector<8x128xf32>
    %109 = arith.addf %107, %108 : vector<8x128xf32>
    %c0_117 = arith.constant 0 : index
    %c3_118 = arith.constant 3 : index
    %c0_119 = arith.constant 0 : index
    %c0_120 = arith.constant 0 : index
    %110 = vector.load %arg4[%c0_117, %c3_118, %c0_119, %c0_120] : memref<1x8x8x128xbf16, #tpu.memory_space<vmem>>, vector<1x1x8x128xbf16>
    %111 = vector.shape_cast %110 : vector<1x1x8x128xbf16> to vector<8x128xbf16>
    %112 = arith.extf %111 : vector<8x128xbf16> to vector<8x128xf32>
    %113 = arith.addf %109, %112 : vector<8x128xf32>
    %cst_121 = arith.constant 0.000000e+00 : f32
    %114 = vector.broadcast %cst_121 : f32 to vector<8x128xf32>
    %115 = arith.maximumf %113, %114 : vector<8x128xf32>
    %c0_122 = arith.constant 0 : index
    %c3_123 = arith.constant 3 : index
    %c0_124 = arith.constant 0 : index
    %c0_125 = arith.constant 0 : index
    %116 = vector.load %arg5[%c0_122, %c3_123, %c0_124, %c0_125] : memref<1x8x8x128xf32, #tpu.memory_space<vmem>>, vector<1x1x8x128xf32>
    %117 = vector.shape_cast %116 : vector<1x1x8x128xf32> to vector<8x128xf32>
    %118 = vector.shape_cast %115 : vector<8x128xf32> to vector<1x1x8x128xf32>
    tpu.vector_store %arg5[%c0_122, %c3_123, %c0_124, %c0_125], %118 {strides = array<i32>} : memref<1x8x8x128xf32, #tpu.memory_space<vmem>>, vector<1x1x8x128xf32>,
    %c40 = arith.constant 40 : index
    %c0_126 = arith.constant 0 : index
    %119 = vector.load %arg6[%c40, %c0_126] : memref<78x128xf32, #tpu.memory_space<vmem>>, vector<8x128xf32>
    %120 = vector.broadcast %70 : vector<1x128xf32> to vector<8x128xf32>
    %121 = arith.addf %119, %120 : vector<8x128xf32>
    %c0_127 = arith.constant 0 : index
    %c4_128 = arith.constant 4 : index
    %c0_129 = arith.constant 0 : index
    %c0_130 = arith.constant 0 : index
    %122 = vector.load %arg4[%c0_127, %c4_128, %c0_129, %c0_130] : memref<1x8x8x128xbf16, #tpu.memory_space<vmem>>, vector<1x1x8x128xbf16>
    %123 = vector.shape_cast %122 : vector<1x1x8x128xbf16> to vector<8x128xbf16>
    %124 = arith.extf %123 : vector<8x128xbf16> to vector<8x128xf32>
    %125 = arith.addf %121, %124 : vector<8x128xf32>
    %cst_131 = arith.constant 0.000000e+00 : f32
    %126 = vector.broadcast %cst_131 : f32 to vector<8x128xf32>
    %127 = arith.maximumf %125, %126 : vector<8x128xf32>
    %c0_132 = arith.constant 0 : index
    %c4_133 = arith.constant 4 : index
    %c0_134 = arith.constant 0 : index
    %c0_135 = arith.constant 0 : index
    %128 = vector.load %arg5[%c0_132, %c4_133, %c0_134, %c0_135] : memref<1x8x8x128xf32, #tpu.memory_space<vmem>>, vector<1x1x8x128xf32>
    %129 = vector.shape_cast %128 : vector<1x1x8x128xf32> to vector<8x128xf32>
    %130 = vector.shape_cast %127 : vector<8x128xf32> to vector<1x1x8x128xf32>
    tpu.vector_store %arg5[%c0_132, %c4_133, %c0_134, %c0_135], %130 {strides = array<i32>} : memref<1x8x8x128xf32, #tpu.memory_space<vmem>>, vector<1x1x8x128xf32>,
    %c50 = arith.constant 50 : index
    %c0_136 = arith.constant 0 : index
    %131 = vector.load %arg6[%c50, %c0_136] : memref<78x128xf32, #tpu.memory_space<vmem>>, vector<8x128xf32>
    %132 = vector.broadcast %70 : vector<1x128xf32> to vector<8x128xf32>
    %133 = arith.addf %131, %132 : vector<8x128xf32>
    %c0_137 = arith.constant 0 : index
    %c5_138 = arith.constant 5 : index
    %c0_139 = arith.constant 0 : index
    %c0_140 = arith.constant 0 : index
    %134 = vector.load %arg4[%c0_137, %c5_138, %c0_139, %c0_140] : memref<1x8x8x128xbf16, #tpu.memory_space<vmem>>, vector<1x1x8x128xbf16>
    %135 = vector.shape_cast %134 : vector<1x1x8x128xbf16> to vector<8x128xbf16>
    %136 = arith.extf %135 : vector<8x128xbf16> to vector<8x128xf32>
    %137 = arith.addf %133, %136 : vector<8x128xf32>
    %cst_141 = arith.constant 0.000000e+00 : f32
    %138 = vector.broadcast %cst_141 : f32 to vector<8x128xf32>
    %139 = arith.maximumf %137, %138 : vector<8x128xf32>
    %c0_142 = arith.constant 0 : index
    %c5_143 = arith.constant 5 : index
    %c0_144 = arith.constant 0 : index
    %c0_145 = arith.constant 0 : index
    %140 = vector.load %arg5[%c0_142, %c5_143, %c0_144, %c0_145] : memref<1x8x8x128xf32, #tpu.memory_space<vmem>>, vector<1x1x8x128xf32>
    %141 = vector.shape_cast %140 : vector<1x1x8x128xf32> to vector<8x128xf32>
    %142 = vector.shape_cast %139 : vector<8x128xf32> to vector<1x1x8x128xf32>
    tpu.vector_store %arg5[%c0_142, %c5_143, %c0_144, %c0_145], %142 {strides = array<i32>} : memref<1x8x8x128xf32, #tpu.memory_space<vmem>>, vector<1x1x8x128xf32>,
    %c60 = arith.constant 60 : index
    %c0_146 = arith.constant 0 : index
    %143 = vector.load %arg6[%c60, %c0_146] : memref<78x128xf32, #tpu.memory_space<vmem>>, vector<8x128xf32>
    %144 = vector.broadcast %70 : vector<1x128xf32> to vector<8x128xf32>
    %145 = arith.addf %143, %144 : vector<8x128xf32>
    %c0_147 = arith.constant 0 : index
    %c6_148 = arith.constant 6 : index
    %c0_149 = arith.constant 0 : index
    %c0_150 = arith.constant 0 : index
    %146 = vector.load %arg4[%c0_147, %c6_148, %c0_149, %c0_150] : memref<1x8x8x128xbf16, #tpu.memory_space<vmem>>, vector<1x1x8x128xbf16>
    %147 = vector.shape_cast %146 : vector<1x1x8x128xbf16> to vector<8x128xbf16>
    %148 = arith.extf %147 : vector<8x128xbf16> to vector<8x128xf32>
    %149 = arith.addf %145, %148 : vector<8x128xf32>
    %cst_151 = arith.constant 0.000000e+00 : f32
    %150 = vector.broadcast %cst_151 : f32 to vector<8x128xf32>
    %151 = arith.maximumf %149, %150 : vector<8x128xf32>
    %c0_152 = arith.constant 0 : index
    %c6_153 = arith.constant 6 : index
    %c0_154 = arith.constant 0 : index
    %c0_155 = arith.constant 0 : index
    %152 = vector.load %arg5[%c0_152, %c6_153, %c0_154, %c0_155] : memref<1x8x8x128xf32, #tpu.memory_space<vmem>>, vector<1x1x8x128xf32>
    %153 = vector.shape_cast %152 : vector<1x1x8x128xf32> to vector<8x128xf32>
    %154 = vector.shape_cast %151 : vector<8x128xf32> to vector<1x1x8x128xf32>
    tpu.vector_store %arg5[%c0_152, %c6_153, %c0_154, %c0_155], %154 {strides = array<i32>} : memref<1x8x8x128xf32, #tpu.memory_space<vmem>>, vector<1x1x8x128xf32>,
    %c70 = arith.constant 70 : index
    %c0_156 = arith.constant 0 : index
    %155 = vector.load %arg6[%c70, %c0_156] : memref<78x128xf32, #tpu.memory_space<vmem>>, vector<8x128xf32>
    %156 = vector.broadcast %70 : vector<1x128xf32> to vector<8x128xf32>
    %157 = arith.addf %155, %156 : vector<8x128xf32>
    %c0_157 = arith.constant 0 : index
    %c7_158 = arith.constant 7 : index
    %c0_159 = arith.constant 0 : index
    %c0_160 = arith.constant 0 : index
    %158 = vector.load %arg4[%c0_157, %c7_158, %c0_159, %c0_160] : memref<1x8x8x128xbf16, #tpu.memory_space<vmem>>, vector<1x1x8x128xbf16>
    %159 = vector.shape_cast %158 : vector<1x1x8x128xbf16> to vector<8x128xbf16>
    %160 = arith.extf %159 : vector<8x128xbf16> to vector<8x128xf32>
    %161 = arith.addf %157, %160 : vector<8x128xf32>
    %cst_161 = arith.constant 0.000000e+00 : f32
    %162 = vector.broadcast %cst_161 : f32 to vector<8x128xf32>
    %163 = arith.maximumf %161, %162 : vector<8x128xf32>
    %c0_162 = arith.constant 0 : index
    %c7_163 = arith.constant 7 : index
    %c0_164 = arith.constant 0 : index
    %c0_165 = arith.constant 0 : index
    %164 = vector.load %arg5[%c0_162, %c7_163, %c0_164, %c0_165] : memref<1x8x8x128xf32, #tpu.memory_space<vmem>>, vector<1x1x8x128xf32>
    %165 = vector.shape_cast %164 : vector<1x1x8x128xf32> to vector<8x128xf32>
    %166 = vector.shape_cast %163 : vector<8x128xf32> to vector<1x1x8x128xf32>
    tpu.vector_store %arg5[%c0_162, %c7_163, %c0_164, %c0_165], %166 {strides = array<i32>} : memref<1x8x8x128xf32, #tpu.memory_space<vmem>>, vector<1x1x8x128xf32>,
    return
  }
  func.func @transform_0(%arg0: i32) -> (i32, i32, i32) {
    %c0_i32 = arith.constant 0 : i32
    %c0_i32_0 = arith.constant 0 : i32
    %c0_i32_1 = arith.constant 0 : i32
    return %arg0, %c0_i32, %c0_i32_0 : i32, i32, i32
  }
  func.func @transform_1(%arg0: i32) -> (i32, i32, i32) {
    %c0_i32 = arith.constant 0 : i32
    %c0_i32_0 = arith.constant 0 : i32
    %c0_i32_1 = arith.constant 0 : i32
    %c0_i32_2 = arith.constant 0 : i32
    return %c0_i32, %c0_i32_0, %c0_i32_1 : i32, i32, i32
  }
  func.func @transform_2(%arg0: i32) -> (i32, i32) {
    %c0_i32 = arith.constant 0 : i32
    %c0_i32_0 = arith.constant 0 : i32
    %c0_i32_1 = arith.constant 0 : i32
    return %c0_i32, %c0_i32_0 : i32, i32
  }
  func.func @transform_3(%arg0: i32) -> (i32, i32, i32, i32) {
    %c0_i32 = arith.constant 0 : i32
    %c0_i32_0 = arith.constant 0 : i32
    %c0_i32_1 = arith.constant 0 : i32
    %c0_i32_2 = arith.constant 0 : i32
    return %arg0, %c0_i32, %c0_i32_0, %c0_i32_1 : i32, i32, i32, i32
  }
  func.func @transform_4(%arg0: i32) -> (i32, i32, i32, i32) {
    %c0_i32 = arith.constant 0 : i32
    %c0_i32_0 = arith.constant 0 : i32
    %c0_i32_1 = arith.constant 0 : i32
    %c0_i32_2 = arith.constant 0 : i32
    return %arg0, %c0_i32, %c0_i32_0, %c0_i32_1 : i32, i32, i32, i32
  }
}

</mosaic_0001>

<llo_original>
// kernel: basic_block_forward.4
$region0: #{basic_block_forward.4}
  #allocation0 [shape = 'u32[]', space=smem, size = 0x4, offset = 0x4, fixed_abs, tag = 'smem constant byte address 0x4 - core index']
  #allocation1 [shape = 'u32[144,128]{1,0:T(1,128)}', space=vmem, size = 0x12000, scoped, tag = 'internal scratch']
  %s0 = inlined_call_operand.vmem [shape: bf16[128,128], index: 0, kind: input, shape index: {}]
  %s1 = inlined_call_operand.vmem [shape: bf16[128,128], index: 1, kind: input, shape index: {}]
  %s2 = inlined_call_operand.vmem [shape: f32[1,128], index: 2, kind: input, shape index: {}]
  %s3 = inlined_call_operand.vmem [shape: bf16[128,128], index: 3, kind: output, shape index: {}]
  %s4 = sld [smem:[#allocation0]]
  $region22: #{basic_block_forward.4} parent=0
    _
  %s6 = ssub.s32 1, %s4
  %s7 = scalar_select 0, %s6, %s4
  // Predicated region
  $region2: #{basic_block_forward.4} parent=0 // pred_check
    _
  $region3: #{basic_block_forward.4} parent=0 // pred_check_branch
    %9 = sbr.rel (0) target = $region5
  $region4: #{basic_block_forward.4} parent=0 // pred_region
    _
  $region5: #{basic_block_forward.4} parent=0 // pred_fallthru
    _
  // Predicated region
  $region6: #{basic_block_forward.4} parent=0 // pred_check
    _
  $region7: #{basic_block_forward.4} parent=0 // pred_check_branch
    %11 = sbr.rel (0) target = $region9
  $region8: #{basic_block_forward.4} parent=0 // pred_region
    _
  $region9: #{basic_block_forward.4} parent=0 // pred_fallthru
    _
  // Predicated region
  $region10: #{basic_block_forward.4} parent=0 // pred_check
    _
  $region11: #{basic_block_forward.4} parent=0 // pred_check_branch
    %13 = sbr.rel (0) target = $region13
  $region12: #{basic_block_forward.4} parent=0 // pred_region
    _
  $region13: #{basic_block_forward.4} parent=0 // pred_fallthru
    _
  %v15 = vld [vmem:[%s0] sm:$0xf]
  %v16 = vld [vmem:[%s0 + $0x4] sm:$0xf]
  %v17 = vld [vmem:[%s0 + $0x8] sm:$0xf]
  %v18 = vld [vmem:[%s0 + $0xc] sm:$0xf]
  %v19 = vld [vmem:[%s0 + $0x10] sm:$0xf]
  %v20 = vld [vmem:[%s0 + $0x14] sm:$0xf]
  %v21 = vld [vmem:[%s0 + $0x18] sm:$0xf]
  %v22 = vld [vmem:[%s0 + $0x1c] sm:$0xf]
  %v23 = vld [vmem:[%s0 + $0x20] sm:$0xf]
  %v24 = vld [vmem:[%s0 + $0x24] sm:$0xf]
  %v25 = vld [vmem:[%s0 + $0x28] sm:$0xf]
  %v26 = vld [vmem:[%s0 + $0x2c] sm:$0xf]
  %v27 = vld [vmem:[%s0 + $0x30] sm:$0xf]
  %v28 = vld [vmem:[%s0 + $0x34] sm:$0xf]
  %v29 = vld [vmem:[%s0 + $0x38] sm:$0xf]
  %v30 = vld [vmem:[%s0 + $0x3c] sm:$0xf]
  %v31 = vld [vmem:[%s1] sm:$0xf]
  %v32 = vld [vmem:[%s1 + $0x4] sm:$0xf]
  %v33 = vld [vmem:[%s1 + $0x8] sm:$0xf]
  %v34 = vld [vmem:[%s1 + $0xc] sm:$0xf]
  %v35 = vld [vmem:[%s1 + $0x10] sm:$0xf]
  %v36 = vld [vmem:[%s1 + $0x14] sm:$0xf]
  %v37 = vld [vmem:[%s1 + $0x18] sm:$0xf]
  %v38 = vld [vmem:[%s1 + $0x1c] sm:$0xf]
  %v39 = vld [vmem:[%s1 + $0x20] sm:$0xf]
  %v40 = vld [vmem:[%s1 + $0x24] sm:$0xf]
  %v41 = vld [vmem:[%s1 + $0x28] sm:$0xf]
  %v42 = vld [vmem:[%s1 + $0x2c] sm:$0xf]
  %v43 = vld [vmem:[%s1 + $0x30] sm:$0xf]
  %v44 = vld [vmem:[%s1 + $0x34] sm:$0xf]
  %v45 = vld [vmem:[%s1 + $0x38] sm:$0xf]
  %v46 = vld [vmem:[%s1 + $0x3c] sm:$0xf]
  %v47 = vld [vmem:[%s2] sm:$0x1]
  %v49 = vlaneseq
  %v50 = vshrl.u32 %v49, 7
  %v51 = vsub.s32 0, %v50
  %v52 = vrot.slane %v47, %v51
  %v70 = vunpack.c.l.b16 %v15
  %v71 = vunpack.c.l.b16 %v16
  %v72 = vunpack.c.l.b16 %v17
  %v73 = vunpack.c.l.b16 %v18
  %v74 = vunpack.c.l.b16 %v19
  %v75 = vunpack.c.l.b16 %v20
  %v76 = vunpack.c.l.b16 %v21
  %v77 = vunpack.c.l.b16 %v22
  %v78 = vunpack.c.l.b16 %v23
  %v79 = vunpack.c.l.b16 %v24
  %v80 = vunpack.c.l.b16 %v25
  %v81 = vunpack.c.l.b16 %v26
  %v82 = vunpack.c.l.b16 %v27
  %v83 = vunpack.c.l.b16 %v28
  %v84 = vunpack.c.l.b16 %v29
  %v85 = vunpack.c.l.b16 %v30
  %v86 = vpack.c.b16 %v71, %v70
  %v87 = vpack.c.b16 %v73, %v72
  %v88 = vpack.c.b16 %v75, %v74
  %v89 = vpack.c.b16 %v77, %v76
  %v90 = vpack.c.b16 %v79, %v78
  %v91 = vpack.c.b16 %v81, %v80
  %v92 = vpack.c.b16 %v83, %v82
  %v93 = vpack.c.b16 %v85, %v84
  %v118 = vunpack.c.l.b16 %v31
  %v119 = vunpack.c.l.b16 %v32
  %v120 = vunpack.c.l.b16 %v33
  %v121 = vunpack.c.l.b16 %v34
  %v122 = vunpack.c.l.b16 %v35
  %v123 = vunpack.c.l.b16 %v36
  %v124 = vunpack.c.l.b16 %v37
  %v125 = vunpack.c.l.b16 %v38
  %v126 = vunpack.c.l.b16 %v39
  %v127 = vunpack.c.l.b16 %v40
  %v128 = vunpack.c.l.b16 %v41
  %v129 = vunpack.c.l.b16 %v42
  %v130 = vunpack.c.l.b16 %v43
  %v131 = vunpack.c.l.b16 %v44
  %v132 = vunpack.c.l.b16 %v45
  %v133 = vunpack.c.l.b16 %v46
  %v134 = vpack.c.b16 %v119, %v118
  %v135 = vpack.c.b16 %v121, %v120
  %v136 = vpack.c.b16 %v123, %v122
  %v137 = vpack.c.b16 %v125, %v124
  %v138 = vpack.c.b16 %v127, %v126
  %v139 = vpack.c.b16 %v129, %v128
  %v140 = vpack.c.b16 %v131, %v130
  %v141 = vpack.c.b16 %v133, %v132
  %150 = vmatprep.subr.bf16.mxu0 0
  %151 = vmatpush1.bf16.msra.mxu0 %v141
  %152 = vmatprep.subr.bf16.mxu0 0
  %153 = vmatpush1.bf16.msra.mxu0 %v140
  %154 = vmatprep.subr.bf16.mxu0 0
  %155 = vmatpush1.bf16.msra.mxu0 %v139
  %156 = vmatprep.subr.bf16.mxu0 0
  %157 = vmatpush1.bf16.msra.mxu0 %v138
  %158 = vmatprep.subr.bf16.mxu0 0
  %159 = vmatpush1.bf16.msra.mxu0 %v137
  %160 = vmatprep.subr.bf16.mxu0 0
  %161 = vmatpush1.bf16.msra.mxu0 %v136
  %162 = vmatprep.subr.bf16.mxu0 0
  %163 = vmatpush1.bf16.msra.mxu0 %v135
  %164 = vmatprep.subr.bf16.mxu0 0
  %165 = vmatpush1.bf16.msra.mxu0 %v134
  %166 = vmatprep.subr.bf16.mxu0 0
  %167 = vmatpush2.bf16.msra.mxu0 0
  %168 = vmatprep.subr.bf16.mxu0 0
  %169 = vmatpush2.bf16.msra.mxu0 0
  %170 = vmatprep.subr.bf16.mxu0 0
  %171 = vmatpush2.bf16.msra.mxu0 0
  %172 = vmatprep.subr.bf16.mxu0 0
  %173 = vmatpush2.bf16.msra.mxu0 0
  %174 = vmatprep.subr.bf16.mxu0 0
  %175 = vmatpush2.bf16.msra.mxu0 0
  %176 = vmatprep.subr.bf16.mxu0 0
  %177 = vmatpush2.bf16.msra.mxu0 0
  %178 = vmatprep.subr.bf16.mxu0 0
  %179 = vmatpush2.bf16.msra.mxu0 0
  %180 = vmatprep.subr.bf16.mxu0 0
  %181 = vmatpush2.bf16.msra.mxu0 0
  %182 = vmatprep.mubr.bf16.mxu0 0
  %183 = vmatmul.mubr.bf16.gmra.mxu0 %v86
  %v184 = vpop.f32.mrf.mxu0
  %v185 = vadd.f32 %v52, %v184
  %v186 = vpop.f32.mrf.mxu0
  %v187 = vpop.f32.mrf.mxu0
  %v188 = vadd.f32 %v52, %v187
  %v189 = vpop.f32.mrf.mxu0
  %190 = vmatprep.mubr.bf16.mxu0 0
  %191 = vmatmul.mubr.bf16.gmra.mxu0 %v87
  %v192 = vpop.f32.mrf.mxu0
  %v193 = vadd.f32 %v52, %v192
  %v194 = vpop.f32.mrf.mxu0
  %v195 = vpop.f32.mrf.mxu0
  %v196 = vadd.f32 %v52, %v195
  %v197 = vpop.f32.mrf.mxu0
  %198 = vmatprep.mubr.bf16.mxu0 0
  %199 = vmatmul.mubr.bf16.gmra.mxu0 %v88
  %v200 = vpop.f32.mrf.mxu0
  %v201 = vadd.f32 %v52, %v200
  %v202 = vpop.f32.mrf.mxu0
  %v203 = vpop.f32.mrf.mxu0
  %v204 = vadd.f32 %v52, %v203
  %v205 = vpop.f32.mrf.mxu0
  %206 = vmatprep.mubr.bf16.mxu0 0
  %207 = vmatmul.mubr.bf16.gmra.mxu0 %v89
  %v208 = vpop.f32.mrf.mxu0
  %v209 = vadd.f32 %v52, %v208
  %v210 = vpop.f32.mrf.mxu0
  %v211 = vpop.f32.mrf.mxu0
  %v212 = vadd.f32 %v52, %v211
  %v213 = vpop.f32.mrf.mxu0
  %214 = vmatprep.mubr.bf16.mxu0 0
  %215 = vmatmul.mubr.bf16.gmra.mxu0 %v90
  %v216 = vpop.f32.mrf.mxu0
  %v217 = vadd.f32 %v52, %v216
  %v218 = vpop.f32.mrf.mxu0
  %v219 = vpop.f32.mrf.mxu0
  %v220 = vadd.f32 %v52, %v219
  %v221 = vpop.f32.mrf.mxu0
  %222 = vmatprep.mubr.bf16.mxu0 0
  %223 = vmatmul.mubr.bf16.gmra.mxu0 %v91
  %v224 = vpop.f32.mrf.mxu0
  %v225 = vadd.f32 %v52, %v224
  %v226 = vpop.f32.mrf.mxu0
  %v227 = vpop.f32.mrf.mxu0
  %v228 = vadd.f32 %v52, %v227
  %v229 = vpop.f32.mrf.mxu0
  %230 = vmatprep.mubr.bf16.mxu0 0
  %231 = vmatmul.mubr.bf16.gmra.mxu0 %v92
  %v232 = vpop.f32.mrf.mxu0
  %v233 = vadd.f32 %v52, %v232
  %v234 = vpop.f32.mrf.mxu0
  %v235 = vpop.f32.mrf.mxu0
  %v236 = vadd.f32 %v52, %v235
  %v237 = vpop.f32.mrf.mxu0
  %238 = vmatprep.mubr.bf16.mxu0 0
  %239 = vmatmul.mubr.bf16.gmra.mxu0 %v93
  %v240 = vpop.f32.mrf.mxu0
  %v241 = vadd.f32 %v52, %v240
  %v242 = vpop.f32.mrf.mxu0
  %v243 = vpop.f32.mrf.mxu0
  %v244 = vadd.f32 %v52, %v243
  %v245 = vpop.f32.mrf.mxu0
  %246 = vdwg.mxu0
  %v247 = vpack.c.bf16 %v188, %v185
  %v248 = vpack.c.bf16 %v196, %v193
  %v249 = vpack.c.bf16 %v204, %v201
  %v250 = vpack.c.bf16 %v212, %v209
  %v251 = vpack.c.bf16 %v220, %v217
  %v252 = vpack.c.bf16 %v228, %v225
  %v253 = vpack.c.bf16 %v236, %v233
  %v254 = vpack.c.bf16 %v244, %v241
  %v263 = vunpack.c.l.b16 %v247
  %v264 = vunpack.c.h.b16 %v247
  %v265 = vunpack.c.l.b16 %v248
  %v266 = vunpack.c.h.b16 %v248
  %v267 = vunpack.c.l.b16 %v249
  %v268 = vunpack.c.h.b16 %v249
  %v269 = vunpack.c.l.b16 %v250
  %v270 = vunpack.c.h.b16 %v250
  %v271 = vunpack.c.l.b16 %v251
  %v272 = vunpack.c.h.b16 %v251
  %v273 = vunpack.c.l.b16 %v252
  %v274 = vunpack.c.h.b16 %v252
  %v275 = vunpack.c.l.b16 %v253
  %v276 = vunpack.c.h.b16 %v253
  %v277 = vunpack.c.l.b16 %v254
  %v278 = vunpack.c.h.b16 %v254
  %v279 = vpack.c.b16 %v263, %v263
  %v280 = vpack.c.b16 %v264, %v264
  %v281 = vpack.c.b16 %v265, %v265
  %v282 = vpack.c.b16 %v266, %v266
  %v283 = vpack.c.b16 %v267, %v267
  %v284 = vpack.c.b16 %v268, %v268
  %v285 = vpack.c.b16 %v269, %v269
  %v286 = vpack.c.b16 %v270, %v270
  %v287 = vpack.c.b16 %v271, %v271
  %v288 = vpack.c.b16 %v272, %v272
  %v289 = vpack.c.b16 %v273, %v273
  %v290 = vpack.c.b16 %v274, %v274
  %v291 = vpack.c.b16 %v275, %v275
  %v292 = vpack.c.b16 %v276, %v276
  %v293 = vpack.c.b16 %v277, %v277
  %v294 = vpack.c.b16 %v278, %v278
  %311 = vst [vmem:[%s3] sm:$0xf] %v279
  %312 = vst [vmem:[%s3 + $0x4] sm:$0xf] %v280
  %313 = vst [vmem:[%s3 + $0x8] sm:$0xf] %v281
  %314 = vst [vmem:[%s3 + $0xc] sm:$0xf] %v282
  %315 = vst [vmem:[%s3 + $0x10] sm:$0xf] %v283
  %316 = vst [vmem:[%s3 + $0x14] sm:$0xf] %v284
  %317 = vst [vmem:[%s3 + $0x18] sm:$0xf] %v285
  %318 = vst [vmem:[%s3 + $0x1c] sm:$0xf] %v286
  %319 = vst [vmem:[%s3 + $0x20] sm:$0xf] %v287
  %320 = vst [vmem:[%s3 + $0x24] sm:$0xf] %v288
  %321 = vst [vmem:[%s3 + $0x28] sm:$0xf] %v289
  %322 = vst [vmem:[%s3 + $0x2c] sm:$0xf] %v290
  %323 = vst [vmem:[%s3 + $0x30] sm:$0xf] %v291
  %324 = vst [vmem:[%s3 + $0x34] sm:$0xf] %v292
  %325 = vst [vmem:[%s3 + $0x38] sm:$0xf] %v293
  %326 = vst [vmem:[%s3 + $0x3c] sm:$0xf] %v294
  // Predicated region
  $region14: #{basic_block_forward.4} parent=0 // pred_check
    _
  $region15: #{basic_block_forward.4} parent=0 // pred_check_branch
    %328 = sbr.rel (0) target = $region17
  $region16: #{basic_block_forward.4} parent=0 // pred_region
    _
  $region17: #{basic_block_forward.4} parent=0 // pred_fallthru
    _
  // Predicated region
  $region18: #{basic_block_forward.4} parent=0 // pred_check
    _
  $region19: #{basic_block_forward.4} parent=0 // pred_check_branch
    %330 = sbr.rel (0) target = $region21
  $region20: #{basic_block_forward.4} parent=0 // pred_region
    _
  $region21: #{basic_block_forward.4} parent=0 // pred_fallthru
    _

// kernel: basic_block_forward.5
$region0: #{basic_block_forward.5}
  #allocation0 [shape = 'u32[]', space=smem, size = 0x4, offset = 0x4, fixed_abs, tag = 'smem constant byte address 0x4 - core index']
  #allocation1 [shape = 'u32[144,128]{1,0:T(1,128)}', space=vmem, size = 0x12000, scoped, tag = 'internal scratch']
  #allocation2 [shape = 'f32[78,128]{1,0:T(8,128)}', space=vmem, size = 0xa000, scoped, tag = 'scratch operand']
  %s0 = inlined_call_operand.vmem [shape: bf16[2,100,128], index: 0, kind: input, shape index: {}]
  %s1 = inlined_call_operand.vmem [shape: bf16[9,128,128], index: 1, kind: input, shape index: {}]
  %s2 = inlined_call_operand.vmem [shape: f32[1,128], index: 2, kind: input, shape index: {}]
  %s3 = inlined_call_operand.vmem [shape: bf16[2,8,8,128], index: 3, kind: input, shape index: {}]
  %s4 = inlined_call_operand.vmem [shape: f32[2,8,8,128], index: 4, kind: output, shape index: {}]
  %s5 = sld [smem:[#allocation0]]
  $region49: #{basic_block_forward.5} parent=0
    _
  %s7 = ssub.s32 1, %s5
  %s8 = scalar_select 0, %s7, %s5
  loop: start=0, step=1, limit=4
  $region2: #{basic_block_forward.5} parent=0 // loop_pre_header
    _
  $region3: #{basic_block_forward.5} parent=0 // loop_header
    %s10 = sphi 0, %s14
    %p11 = scmp.ge.s32.totalorder %s10, 4
    %s20 = sphi 0, %s22
    %s23 = sphi 0, %s20
    %s24 = sphi 0, %s23
    %s40 = sphi 0, %s24
    %s44 = sphi 0, %s44
    %s46 = sphi 0, %s44
    %s47 = sphi 0, %s46
    %s61 = sphi 0, %s47
    %s65 = sphi 0, %s65
    %s67 = sphi 0, %s65
    %s68 = sphi 0, %s67
    %s82 = sphi 0, %s68
    %s88 = sphi 0, %s90
    %s91 = sphi 0, %s88
    %s92 = sphi 0, %s91
    %s108 = sphi 0, %s92
    %s114 = sphi 0, %s116
    %s117 = sphi 0, %s114
    %s118 = sphi 0, %s117
    %s134 = sphi 0, %s118
  $region4: #{basic_block_forward.5} parent=0 // loop_header_branch
    %13 = sbr.rel (%p11) target = $region8
  $region5: #{basic_block_forward.5} parent=0 // loop_body
    %s15 = ssub.s32 %s10, 1
    %s16 = ssub.s32 %s10, 2
    %s17 = sadd.s32 %s10, 1
    %s18 = ssub.s32 %s10, %s17
    %p19 = scmp.eq.s32.totalorder %s18, 0
    %s21 = sadd.s32 %s20, 1
    %s22 = scalar_select %p19, %s20, %s21
    %p25 = pneg %p19
    %p26 = scmp.eq.s32.totalorder %s10, 1
    %p27 = por %p25, %p26
    %p28 = scmp.ne.s32.totalorder %s20, %s23
    %p29 = scmp.eq.s32.totalorder %s10, 0
    %p30 = por %p28, %p29
    %p31 = scmp.ne.s32.totalorder %s20, %s23
    %p32 = scmp.eq.s32.totalorder %s15, 1
    %p33 = por %p31, %p32
    %p34 = scmp.ne.s32.totalorder %s23, %s24
    %p35 = scmp.eq.s32.totalorder %s15, 0
    %p36 = por %p34, %p35
    %p37 = scmp.ne.s32.totalorder %s23, %s24
    %p38 = scmp.eq.s32.totalorder %s16, 1
    %p39 = por %p37, %p38
    %p41 = scmp.ne.s32.totalorder %s24, %s40
    %p42 = scmp.eq.s32.totalorder %s16, 0
    %p43 = por %p41, %p42
    %s45 = sadd.s32 %s44, 1
    %p48 = scmp.eq.s32.totalorder %s10, 1
    %p49 = scmp.ne.s32.totalorder %s44, %s46
    %p50 = scmp.eq.s32.totalorder %s10, 0
    %p51 = por %p49, %p50
    %p52 = scmp.ne.s32.totalorder %s44, %s46
    %p53 = scmp.eq.s32.totalorder %s15, 1
    %p54 = por %p52, %p53
    %p55 = scmp.ne.s32.totalorder %s46, %s47
    %p56 = scmp.eq.s32.totalorder %s15, 0
    %p57 = por %p55, %p56
    %p58 = scmp.ne.s32.totalorder %s46, %s47
    %p59 = scmp.eq.s32.totalorder %s16, 1
    %p60 = por %p58, %p59
    %p62 = scmp.ne.s32.totalorder %s47, %s61
    %p63 = scmp.eq.s32.totalorder %s16, 0
    %p64 = por %p62, %p63
    %s66 = sadd.s32 %s65, 1
    %p69 = scmp.eq.s32.totalorder %s10, 1
    %p70 = scmp.ne.s32.totalorder %s65, %s67
    %p71 = scmp.eq.s32.totalorder %s10, 0
    %p72 = por %p70, %p71
    %p73 = scmp.ne.s32.totalorder %s65, %s67
    %p74 = scmp.eq.s32.totalorder %s15, 1
    %p75 = por %p73, %p74
    %p76 = scmp.ne.s32.totalorder %s67, %s68
    %p77 = scmp.eq.s32.totalorder %s15, 0
    %p78 = por %p76, %p77
    %p79 = scmp.ne.s32.totalorder %s67, %s68
    %p80 = scmp.eq.s32.totalorder %s16, 1
    %p81 = por %p79, %p80
    %p83 = scmp.ne.s32.totalorder %s68, %s82
    %p84 = scmp.eq.s32.totalorder %s16, 0
    %p85 = por %p83, %p84
    %s86 = ssub.s32 %s10, %s17
    %p87 = scmp.eq.s32.totalorder %s86, 0
    %s89 = sadd.s32 %s88, 1
    %s90 = scalar_select %p87, %s88, %s89
    %p93 = pneg %p87
    %p94 = scmp.eq.s32.totalorder %s10, 1
    %p95 = por %p93, %p94
    %p96 = scmp.ne.s32.totalorder %s88, %s91
    %p97 = scmp.eq.s32.totalorder %s10, 0
    %p98 = por %p96, %p97
    %p99 = scmp.ne.s32.totalorder %s88, %s91
    %p100 = scmp.eq.s32.totalorder %s15, 1
    %p101 = por %p99, %p100
    %p102 = scmp.ne.s32.totalorder %s91, %s92
    %p103 = scmp.eq.s32.totalorder %s15, 0
    %p104 = por %p102, %p103
    %p105 = scmp.ne.s32.totalorder %s91, %s92
    %p106 = scmp.eq.s32.totalorder %s16, 1
    %p107 = por %p105, %p106
    %p109 = scmp.ne.s32.totalorder %s92, %s108
    %p110 = scmp.eq.s32.totalorder %s16, 0
    %p111 = por %p109, %p110
    %s112 = ssub.s32 %s10, %s17
    %p113 = scmp.eq.s32.totalorder %s112, 0
    %s115 = sadd.s32 %s114, 1
    %s116 = scalar_select %p113, %s114, %s115
    %p119 = pneg %p113
    %p120 = scmp.eq.s32.totalorder %s10, 1
    %p121 = por %p119, %p120
    %p122 = scmp.ne.s32.totalorder %s114, %s117
    %p123 = scmp.eq.s32.totalorder %s10, 0
    %p124 = por %p122, %p123
    %p125 = scmp.ne.s32.totalorder %s114, %s117
    %p126 = scmp.eq.s32.totalorder %s15, 1
    %p127 = por %p125, %p126
    %p128 = scmp.ne.s32.totalorder %s117, %s118
    %p129 = scmp.eq.s32.totalorder %s15, 0
    %p130 = por %p128, %p129
    %p131 = scmp.ne.s32.totalorder %s117, %s118
    %p132 = scmp.eq.s32.totalorder %s16, 1
    %p133 = por %p131, %p132
    %p135 = scmp.ne.s32.totalorder %s118, %s134
    %p136 = scmp.eq.s32.totalorder %s16, 0
    %p137 = por %p135, %p136
    %p138 = scmp.le.s32.totalorder 1, %s10
    %p139 = scmp.lt.s32.totalorder %s10, 3
    %p140 = pnand %p138, %p139
    %p141 = pneg %p140
    // Predicated region
    $region9: #{basic_block_forward.5} parent=5 // pred_check
      _
    $region10: #{basic_block_forward.5} parent=5 // pred_check_branch
      %143 = sbr.rel (%p140) target = $region12
    $region11: #{basic_block_forward.5} parent=5 // pred_region
      %s144 = ssub.s32 %s10, 1
      // Predicated region
      $region13: #{basic_block_forward.5} parent=11 // pred_check
        %p145 = pneg %p57
      $region14: #{basic_block_forward.5} parent=11 // pred_check_branch
        %147 = sbr.rel (%p145) target = $region16
      $region15: #{basic_block_forward.5} parent=11 // pred_region
        _
      $region16: #{basic_block_forward.5} parent=11 // pred_fallthru
        _
      // Predicated region
      $region17: #{basic_block_forward.5} parent=11 // pred_check
        %p148 = pneg %p78
      $region18: #{basic_block_forward.5} parent=11 // pred_check_branch
        %150 = sbr.rel (%p148) target = $region20
      $region19: #{basic_block_forward.5} parent=11 // pred_region
        _
      $region20: #{basic_block_forward.5} parent=11 // pred_fallthru
        _
    $region12: #{basic_block_forward.5} parent=5 // pred_fallthru
      _
    %p151 = scmp.lt.s32.totalorder %s10, 2
    // Predicated region
    $region21: #{basic_block_forward.5} parent=5 // pred_check
      %p152 = pneg %p151
    $region22: #{basic_block_forward.5} parent=5 // pred_check_branch
      %154 = sbr.rel (%p152) target = $region24
    $region23: #{basic_block_forward.5} parent=5 // pred_region
      // Predicated region
      $region25: #{basic_block_forward.5} parent=23 // pred_check
        %p155 = pneg %p30
      $region26: #{basic_block_forward.5} parent=23 // pred_check_branch
        %157 = sbr.rel (%p155) target = $region28
      $region27: #{basic_block_forward.5} parent=23 // pred_region
        %p158 = scmp.lt.s32.totalorder %s10, 1
        %s159 = scalar_select %p158, %s10, 1
        %s160 = smul.addr %s159, 13
        %s161 = smul.addr %s160, 4
        %s162 = scalar_lea.vmem %s0, %s161
      $region28: #{basic_block_forward.5} parent=23 // pred_fallthru
        _
      // Predicated region
      $region29: #{basic_block_forward.5} parent=23 // pred_check
        %p163 = pneg %p98
      $region30: #{basic_block_forward.5} parent=23 // pred_check_branch
        %165 = sbr.rel (%p163) target = $region32
      $region31: #{basic_block_forward.5} parent=23 // pred_region
        %p166 = scmp.lt.s32.totalorder %s10, 1
        %s167 = scalar_select %p166, %s10, 1
        %s168 = smul.addr %s167, 8
        %s169 = smul.addr %s168, 4
        %s170 = scalar_lea.vmem %s3, %s169
      $region32: #{basic_block_forward.5} parent=23 // pred_fallthru
        _
    $region24: #{basic_block_forward.5} parent=5 // pred_fallthru
      _
    %p171 = scmp.le.s32.totalorder 1, %s10
    %p172 = scmp.lt.s32.totalorder %s10, 3
    %p173 = pnand %p171, %p172
    %p174 = pneg %p173
    // Predicated region
    $region33: #{basic_block_forward.5} parent=5 // pred_check
      _
    $region34: #{basic_block_forward.5} parent=5 // pred_check_branch
      %176 = sbr.rel (%p173) target = $region36
    $region35: #{basic_block_forward.5} parent=5 // pred_region
      %s177 = ssub.s32 %s10, 1
      %p178 = scmp.lt.s32.totalorder %s15, 1
      %s179 = scalar_select %p178, %s15, 1
      %s180 = smul.addr %s179, 13
      %s181 = smul.addr %s180, 4
      %s182 = scalar_lea.vmem %s0, %s181
      %p183 = pneg %p36
      %p184 = pneg %p33
      %p185 = pneg %p57
      %p186 = pneg %p54
      %p187 = pneg %p78
      %p188 = pneg %p75
      %p189 = scmp.lt.s32.totalorder %s15, 1
      %s190 = scalar_select %p189, %s15, 1
      %s191 = smul.addr %s190, 8
      %s192 = smul.addr %s191, 4
      %s193 = scalar_lea.vmem %s3, %s192
      %p194 = pneg %p104
      %p195 = pneg %p101
      %p196 = pneg %p130
      %p197 = pneg %p127
      %p198 = scmp.lt.s32.totalorder %s15, 1
      %s199 = scalar_select %p198, %s15, 1
      %s200 = smul.addr %s199, 8
      %s201 = smul.addr %s200, 8
      %s202 = scalar_lea.vmem %s4, %s201
      %p203 = scmp.lt.s32.totalorder %s15, 1
      %s204 = scalar_select %p203, %s15, 1
      %s205 = smul.addr %s204, 13
      %s206 = smul.addr %s205, 4
      %s207 = scalar_lea.vmem %s0, %s206
      %p208 = scmp.lt.s32.totalorder %s15, 1
      %s209 = scalar_select %p208, %s15, 1
      %s210 = smul.addr %s209, 8
      %s211 = smul.addr %s210, 4
      %s212 = scalar_lea.vmem %s3, %s211
      %p213 = scmp.lt.s32.totalorder %s15, 1
      %s214 = scalar_select %p213, %s15, 1
      %s215 = smul.addr %s214, 8
      %s216 = smul.addr %s215, 8
      %s217 = scalar_lea.vmem %s4, %s216
      %v219 = vld [vmem:[%s207] sm:$0xf]
      %v220 = vld [vmem:[%s207 + $0x4] sm:$0xf]
      %v221 = vld [vmem:[%s207 + $0x8] sm:$0xf]
      %v222 = vld [vmem:[%s207 + $0xc] sm:$0xf]
      %v223 = vld [vmem:[%s207 + $0x10] sm:$0xf]
      %v224 = vld [vmem:[%s207 + $0x14] sm:$0xf]
      %v225 = vld [vmem:[%s207 + $0x18] sm:$0xf]
      %v226 = vld [vmem:[%s207 + $0x1c] sm:$0xf]
      %v227 = vld [vmem:[%s207 + $0x20] sm:$0xf]
      %v228 = vld [vmem:[%s207 + $0x24] sm:$0x7]
      %v229 = vld [vmem:[%s1] sm:$0xf]
      %v230 = vld [vmem:[%s1 + $0x4] sm:$0xf]
      %v231 = vld [vmem:[%s1 + $0x8] sm:$0xf]
      %v232 = vld [vmem:[%s1 + $0xc] sm:$0xf]
      %v233 = vld [vmem:[%s1 + $0x10] sm:$0xf]
      %v234 = vld [vmem:[%s1 + $0x14] sm:$0xf]
      %v235 = vld [vmem:[%s1 + $0x18] sm:$0xf]
      %v236 = vld [vmem:[%s1 + $0x1c] sm:$0xf]
      %v237 = vld [vmem:[%s1 + $0x20] sm:$0xf]
      %v238 = vld [vmem:[%s1 + $0x24] sm:$0xf]
      %v239 = vld [vmem:[%s1 + $0x28] sm:$0xf]
      %v240 = vld [vmem:[%s1 + $0x2c] sm:$0xf]
      %v241 = vld [vmem:[%s1 + $0x30] sm:$0xf]
      %v242 = vld [vmem:[%s1 + $0x34] sm:$0xf]
      %v243 = vld [vmem:[%s1 + $0x38] sm:$0xf]
      %v244 = vld [vmem:[%s1 + $0x3c] sm:$0xf]
      %v255 = vunpack.c.l.b16 %v219
      %v256 = vunpack.c.l.b16 %v220
      %v257 = vunpack.c.l.b16 %v221
      %v258 = vunpack.c.l.b16 %v222
      %v259 = vunpack.c.l.b16 %v223
      %v260 = vunpack.c.l.b16 %v224
      %v261 = vunpack.c.l.b16 %v225
      %v262 = vunpack.c.l.b16 %v226
      %v263 = vunpack.c.l.b16 %v227
      %v264 = vunpack.c.l.b16 %v228
      %v265 = vpack.c.b16 %v256, %v255
      %v266 = vpack.c.b16 %v258, %v257
      %v267 = vpack.c.b16 %v260, %v259
      %v268 = vpack.c.b16 %v262, %v261
      %v269 = vpack.c.b16 %v264, %v263
      %v291 = vunpack.c.l.b16 %v229
      %v292 = vunpack.c.l.b16 %v230
      %v293 = vunpack.c.l.b16 %v231
      %v294 = vunpack.c.l.b16 %v232
      %v295 = vunpack.c.l.b16 %v233
      %v296 = vunpack.c.l.b16 %v234
      %v297 = vunpack.c.l.b16 %v235
      %v298 = vunpack.c.l.b16 %v236
      %v299 = vunpack.c.l.b16 %v237
      %v300 = vunpack.c.l.b16 %v238
      %v301 = vunpack.c.l.b16 %v239
      %v302 = vunpack.c.l.b16 %v240
      %v303 = vunpack.c.l.b16 %v241
      %v304 = vunpack.c.l.b16 %v242
      %v305 = vunpack.c.l.b16 %v243
      %v306 = vunpack.c.l.b16 %v244
      %v307 = vpack.c.b16 %v292, %v291
      %v308 = vpack.c.b16 %v294, %v293
      %v309 = vpack.c.b16 %v296, %v295
      %v310 = vpack.c.b16 %v298, %v297
      %v311 = vpack.c.b16 %v300, %v299
      %v312 = vpack.c.b16 %v302, %v301
      %v313 = vpack.c.b16 %v304, %v303
      %v314 = vpack.c.b16 %v306, %v305
      %323 = vmatprep.subr.bf16.mxu0 0
      %324 = vmatpush1.bf16.msra.mxu0 %v314
      %325 = vmatprep.subr.bf16.mxu0 0
      %326 = vmatpush1.bf16.msra.mxu0 %v313
      %327 = vmatprep.subr.bf16.mxu0 0
      %328 = vmatpush1.bf16.msra.mxu0 %v312
      %329 = vmatprep.subr.bf16.mxu0 0
      %330 = vmatpush1.bf16.msra.mxu0 %v311
      %331 = vmatprep.subr.bf16.mxu0 0
      %332 = vmatpush1.bf16.msra.mxu0 %v310
      %333 = vmatprep.subr.bf16.mxu0 0
      %334 = vmatpush1.bf16.msra.mxu0 %v309
      %335 = vmatprep.subr.bf16.mxu0 0
      %336 = vmatpush1.bf16.msra.mxu0 %v308
      %337 = vmatprep.subr.bf16.mxu0 0
      %338 = vmatpush1.bf16.msra.mxu0 %v307
      %339 = vmatprep.subr.bf16.mxu0 0
      %340 = vmatpush2.bf16.msra.mxu0 0
      %341 = vmatprep.subr.bf16.mxu0 0
      %342 = vmatpush2.bf16.msra.mxu0 0
      %343 = vmatprep.subr.bf16.mxu0 0
      %344 = vmatpush2.bf16.msra.mxu0 0
      %345 = vmatprep.subr.bf16.mxu0 0
      %346 = vmatpush2.bf16.msra.mxu0 0
      %347 = vmatprep.subr.bf16.mxu0 0
      %348 = vmatpush2.bf16.msra.mxu0 0
      %349 = vmatprep.subr.bf16.mxu0 0
      %350 = vmatpush2.bf16.msra.mxu0 0
      %351 = vmatprep.subr.bf16.mxu0 0
      %352 = vmatpush2.bf16.msra.mxu0 0
      %353 = vmatprep.subr.bf16.mxu0 0
      %354 = vmatpush2.bf16.msra.mxu0 0
      %355 = vmatprep.mubr.bf16.mxu0 0
      %356 = vmatmul.mubr.bf16.gmra.mxu0 %v265
      %v357 = vpop.f32.mrf.mxu0
      %v358 = vadd.f32 0.0, %v357
      %v359 = vpop.f32.mrf.mxu0
      %v360 = vpop.f32.mrf.mxu0
      %v361 = vadd.f32 0.0, %v360
      %v362 = vpop.f32.mrf.mxu0
      %363 = vmatprep.mubr.bf16.mxu0 0
      %364 = vmatmul.mubr.bf16.gmra.mxu0 %v266
      %v365 = vpop.f32.mrf.mxu0
      %v366 = vadd.f32 0.0, %v365
      %v367 = vpop.f32.mrf.mxu0
      %v368 = vpop.f32.mrf.mxu0
      %v369 = vadd.f32 0.0, %v368
      %v370 = vpop.f32.mrf.mxu0
      %371 = vmatprep.mubr.bf16.mxu0 0
      %372 = vmatmul.mubr.bf16.gmra.mxu0 %v267
      %v373 = vpop.f32.mrf.mxu0
      %v374 = vadd.f32 0.0, %v373
      %v375 = vpop.f32.mrf.mxu0
      %v376 = vpop.f32.mrf.mxu0
      %v377 = vadd.f32 0.0, %v376
      %v378 = vpop.f32.mrf.mxu0
      %379 = vmatprep.mubr.bf16.mxu0 0
      %380 = vmatmul.mubr.bf16.gmra.mxu0 %v268
      %v381 = vpop.f32.mrf.mxu0
      %v382 = vadd.f32 0.0, %v381
      %v383 = vpop.f32.mrf.mxu0
      %v384 = vpop.f32.mrf.mxu0
      %v385 = vadd.f32 0.0, %v384
      %v386 = vpop.f32.mrf.mxu0
      %387 = vmatprep.mubr.bf16.mxu0 0
      %388 = vmatmul.mubr.bf16.gmra.mxu0 %v269
      %v389 = vpop.f32.mrf.mxu0
      %v390 = vadd.f32 0.0, %v389
      %v391 = vpop.f32.mrf.mxu0
      %v392 = vpop.f32.mrf.mxu0
      %v393 = vadd.f32 0.0, %v392
      %v394 = vpop.f32.mrf.mxu0
      %395 = vdwg.mxu0
      %396 = vst [vmem:[#allocation2] sm:$0xff] %v358
      %397 = vst [vmem:[#allocation2 + $0x8] sm:$0xff] %v361
      %398 = vst [vmem:[#allocation2 + $0x10] sm:$0xff] %v366
      %399 = vst [vmem:[#allocation2 + $0x18] sm:$0xff] %v369
      %400 = vst [vmem:[#allocation2 + $0x20] sm:$0xff] %v374
      %401 = vst [vmem:[#allocation2 + $0x28] sm:$0xff] %v377
      %402 = vst [vmem:[#allocation2 + $0x30] sm:$0xff] %v382
      %403 = vst [vmem:[#allocation2 + $0x38] sm:$0xff] %v385
      %404 = vst [vmem:[#allocation2 + $0x40] sm:$0xff] %v390
      %405 = vst [vmem:[#allocation2 + $0x48] sm:$0x3f] %v393
      %v406 = vld [vmem:[#allocation2] sm:$0xff]
      %v407 = vld [vmem:[#allocation2 + $0x8] sm:$0xff]
      %v408 = vld [vmem:[#allocation2 + $0x10] sm:$0xff]
      %v409 = vld [vmem:[#allocation2 + $0x18] sm:$0xff]
      %v410 = vld [vmem:[#allocation2 + $0x20] sm:$0xff]
      %v411 = vld [vmem:[#allocation2 + $0x28] sm:$0xff]
      %v412 = vld [vmem:[#allocation2 + $0x30] sm:$0xff]
      %v413 = vld [vmem:[#allocation2 + $0x38] sm:$0xff]
      %v414 = vld [vmem:[#allocation2 + $0x40] sm:$0xff]
      %v415 = vld [vmem:[#allocation2 + $0x48] sm:$0x3f]
      %v416 = vld [vmem:[%s207] sm:$0xf]
      %v417 = vld [vmem:[%s207 + $0x4] sm:$0xf]
      %v418 = vld [vmem:[%s207 + $0x8] sm:$0xf]
      %v419 = vld [vmem:[%s207 + $0xc] sm:$0xf]
      %v420 = vld [vmem:[%s207 + $0x10] sm:$0xf]
      %v421 = vld [vmem:[%s207 + $0x14] sm:$0xf]
      %v422 = vld [vmem:[%s207 + $0x18] sm:$0xf]
      %v423 = vld [vmem:[%s207 + $0x1c] sm:$0xf]
      %v424 = vld [vmem:[%s207 + $0x20] sm:$0xf]
      %v425 = vld [vmem:[%s207 + $0x24] sm:$0xf]
      %s426 = scalar_lea.vmem %s1, 64
      %v427 = vld [vmem:[%s426] sm:$0xf]
      %v428 = vld [vmem:[%s426 + $0x4] sm:$0xf]
      %v429 = vld [vmem:[%s426 + $0x8] sm:$0xf]
      %v430 = vld [vmem:[%s426 + $0xc] sm:$0xf]
      %v431 = vld [vmem:[%s426 + $0x10] sm:$0xf]
      %v432 = vld [vmem:[%s426 + $0x14] sm:$0xf]
      %v433 = vld [vmem:[%s426 + $0x18] sm:$0xf]
      %v434 = vld [vmem:[%s426 + $0x1c] sm:$0xf]
      %v435 = vld [vmem:[%s426 + $0x20] sm:$0xf]
      %v436 = vld [vmem:[%s426 + $0x24] sm:$0xf]
      %v437 = vld [vmem:[%s426 + $0x28] sm:$0xf]
      %v438 = vld [vmem:[%s426 + $0x2c] sm:$0xf]
      %v439 = vld [vmem:[%s426 + $0x30] sm:$0xf]
      %v440 = vld [vmem:[%s426 + $0x34] sm:$0xf]
      %v441 = vld [vmem:[%s426 + $0x38] sm:$0xf]
      %v442 = vld [vmem:[%s426 + $0x3c] sm:$0xf]
      %v453 = vunpack.c.l.b16 %v416
      %v454 = vunpack.c.l.b16 %v417
      %v455 = vunpack.c.l.b16 %v418
      %v456 = vunpack.c.l.b16 %v419
      %v457 = vunpack.c.l.b16 %v420
      %v458 = vunpack.c.l.b16 %v421
      %v459 = vunpack.c.l.b16 %v422
      %v460 = vunpack.c.l.b16 %v423
      %v461 = vunpack.c.l.b16 %v424
      %v462 = vunpack.c.l.b16 %v425
      %v463 = vpack.c.b16 %v454, %v453
      %v464 = vpack.c.b16 %v456, %v455
      %v465 = vpack.c.b16 %v458, %v457
      %v466 = vpack.c.b16 %v460, %v459
      %v467 = vpack.c.b16 %v462, %v461
      %vm468 = vsmask.f32 7424
      %v470 = vshrl.u32 %v463, 16
      %v472 = vshll.u32 %v463, 16
      %v474 = vrot.slane %v472, 1
      %v475 = vor.u32 %v470, %v474
      %v477 = vshll.u32 %v464, 16
      %v479 = vrot.slane %v477, 1
      %v480 = vsel %vm468, %v475, %v479
      %v481 = vshrl.u32 %v464, 16
      %v483 = vor.u32 %v481, %v479
      %v485 = vshll.u32 %v465, 16
      %v487 = vrot.slane %v485, 1
      %v488 = vsel %vm468, %v483, %v487
      %v489 = vshrl.u32 %v465, 16
      %v491 = vor.u32 %v489, %v487
      %v493 = vshll.u32 %v466, 16
      %v495 = vrot.slane %v493, 1
      %v496 = vsel %vm468, %v491, %v495
      %v497 = vshrl.u32 %v466, 16
      %v499 = vor.u32 %v497, %v495
      %v501 = vshll.u32 %v467, 16
      %v503 = vrot.slane %v501, 1
      %v504 = vsel %vm468, %v499, %v503
      %v505 = vshrl.u32 %v467, 16
      %v507 = vor.u32 %v505, %v503
      %v529 = vunpack.c.l.b16 %v427
      %v530 = vunpack.c.l.b16 %v428
      %v531 = vunpack.c.l.b16 %v429
      %v532 = vunpack.c.l.b16 %v430
      %v533 = vunpack.c.l.b16 %v431
      %v534 = vunpack.c.l.b16 %v432
      %v535 = vunpack.c.l.b16 %v433
      %v536 = vunpack.c.l.b16 %v434
      %v537 = vunpack.c.l.b16 %v435
      %v538 = vunpack.c.l.b16 %v436
      %v539 = vunpack.c.l.b16 %v437
      %v540 = vunpack.c.l.b16 %v438
      %v541 = vunpack.c.l.b16 %v439
      %v542 = vunpack.c.l.b16 %v440
      %v543 = vunpack.c.l.b16 %v441
      %v544 = vunpack.c.l.b16 %v442
      %v545 = vpack.c.b16 %v530, %v529
      %v546 = vpack.c.b16 %v532, %v531
      %v547 = vpack.c.b16 %v534, %v533
      %v548 = vpack.c.b16 %v536, %v535
      %v549 = vpack.c.b16 %v538, %v537
      %v550 = vpack.c.b16 %v540, %v539
      %v551 = vpack.c.b16 %v542, %v541
      %v552 = vpack.c.b16 %v544, %v543
      %561 = vmatprep.subr.bf16.mxu0 0
      %562 = vmatpush1.bf16.msra.mxu0 %v552
      %563 = vmatprep.subr.bf16.mxu0 0
      %564 = vmatpush1.bf16.msra.mxu0 %v551
      %565 = vmatprep.subr.bf16.mxu0 0
      %566 = vmatpush1.bf16.msra.mxu0 %v550
      %567 = vmatprep.subr.bf16.mxu0 0
      %568 = vmatpush1.bf16.msra.mxu0 %v549
      %569 = vmatprep.subr.bf16.mxu0 0
      %570 = vmatpush1.bf16.msra.mxu0 %v548
      %571 = vmatprep.subr.bf16.mxu0 0
      %572 = vmatpush1.bf16.msra.mxu0 %v547
      %573 = vmatprep.subr.bf16.mxu0 0
      %574 = vmatpush1.bf16.msra.mxu0 %v546
      %575 = vmatprep.subr.bf16.mxu0 0
      %576 = vmatpush1.bf16.msra.mxu0 %v545
      %577 = vmatprep.subr.bf16.mxu0 0
      %578 = vmatpush2.bf16.msra.mxu0 0
      %579 = vmatprep.subr.bf16.mxu0 0
      %580 = vmatpush2.bf16.msra.mxu0 0
      %581 = vmatprep.subr.bf16.mxu0 0
      %582 = vmatpush2.bf16.msra.mxu0 0
      %583 = vmatprep.subr.bf16.mxu0 0
      %584 = vmatpush2.bf16.msra.mxu0 0
      %585 = vmatprep.subr.bf16.mxu0 0
      %586 = vmatpush2.bf16.msra.mxu0 0
      %587 = vmatprep.subr.bf16.mxu0 0
      %588 = vmatpush2.bf16.msra.mxu0 0
      %589 = vmatprep.subr.bf16.mxu0 0
      %590 = vmatpush2.bf16.msra.mxu0 0
      %591 = vmatprep.subr.bf16.mxu0 0
      %592 = vmatpush2.bf16.msra.mxu0 0
      %593 = vmatprep.mubr.bf16.mxu0 0
      %594 = vmatmul.mubr.bf16.gmra.mxu0 %v480
      %v595 = vpop.f32.mrf.mxu0
      %v596 = vadd.f32 0.0, %v595
      %v597 = vpop.f32.mrf.mxu0
      %v598 = vpop.f32.mrf.mxu0
      %v599 = vadd.f32 0.0, %v598
      %v600 = vpop.f32.mrf.mxu0
      %601 = vmatprep.mubr.bf16.mxu0 0
      %602 = vmatmul.mubr.bf16.gmra.mxu0 %v488
      %v603 = vpop.f32.mrf.mxu0
      %v604 = vadd.f32 0.0, %v603
      %v605 = vpop.f32.mrf.mxu0
      %v606 = vpop.f32.mrf.mxu0
      %v607 = vadd.f32 0.0, %v606
      %v608 = vpop.f32.mrf.mxu0
      %609 = vmatprep.mubr.bf16.mxu0 0
      %610 = vmatmul.mubr.bf16.gmra.mxu0 %v496
      %v611 = vpop.f32.mrf.mxu0
      %v612 = vadd.f32 0.0, %v611
      %v613 = vpop.f32.mrf.mxu0
      %v614 = vpop.f32.mrf.mxu0
      %v615 = vadd.f32 0.0, %v614
      %v616 = vpop.f32.mrf.mxu0
      %617 = vmatprep.mubr.bf16.mxu0 0
      %618 = vmatmul.mubr.bf16.gmra.mxu0 %v504
      %v619 = vpop.f32.mrf.mxu0
      %v620 = vadd.f32 0.0, %v619
      %v621 = vpop.f32.mrf.mxu0
      %v622 = vpop.f32.mrf.mxu0
      %v623 = vadd.f32 0.0, %v622
      %v624 = vpop.f32.mrf.mxu0
      %625 = vmatprep.mubr.bf16.mxu0 0
      %626 = vmatmul.mubr.bf16.gmra.mxu0 %v507
      %v627 = vpop.f32.mrf.mxu0
      %v628 = vadd.f32 0.0, %v627
      %v629 = vpop.f32.mrf.mxu0
      %v630 = vpop.f32.mrf.mxu0
      %v631 = vadd.f32 0.0, %v630
      %v632 = vpop.f32.mrf.mxu0
      %633 = vdwg.mxu0
      %v634 = vadd.f32 %v406, %v596
      %v635 = vadd.f32 %v407, %v599
      %v636 = vadd.f32 %v408, %v604
      %v637 = vadd.f32 %v409, %v607
      %v638 = vadd.f32 %v410, %v612
      %v639 = vadd.f32 %v411, %v615
      %v640 = vadd.f32 %v412, %v620
      %v641 = vadd.f32 %v413, %v623
      %v642 = vadd.f32 %v414, %v628
      %v643 = vadd.f32 %v415, %v631
      %644 = vst [vmem:[#allocation2] sm:$0xff] %v634
      %645 = vst [vmem:[#allocation2 + $0x8] sm:$0xff] %v635
      %646 = vst [vmem:[#allocation2 + $0x10] sm:$0xff] %v636
      %647 = vst [vmem:[#allocation2 + $0x18] sm:$0xff] %v637
      %648 = vst [vmem:[#allocation2 + $0x20] sm:$0xff] %v638
      %649 = vst [vmem:[#allocation2 + $0x28] sm:$0xff] %v639
      %650 = vst [vmem:[#allocation2 + $0x30] sm:$0xff] %v640
      %651 = vst [vmem:[#allocation2 + $0x38] sm:$0xff] %v641
      %652 = vst [vmem:[#allocation2 + $0x40] sm:$0xff] %v642
      %653 = vst [vmem:[#allocation2 + $0x48] sm:$0x3f] %v643
      %v654 = vld [vmem:[#allocation2] sm:$0xff]
      %v655 = vld [vmem:[#allocation2 + $0x8] sm:$0xff]
      %v656 = vld [vmem:[#allocation2 + $0x10] sm:$0xff]
      %v657 = vld [vmem:[#allocation2 + $0x18] sm:$0xff]
      %v658 = vld [vmem:[#allocation2 + $0x20] sm:$0xff]
      %v659 = vld [vmem:[#allocation2 + $0x28] sm:$0xff]
      %v660 = vld [vmem:[#allocation2 + $0x30] sm:$0xff]
      %v661 = vld [vmem:[#allocation2 + $0x38] sm:$0xff]
      %v662 = vld [vmem:[#allocation2 + $0x40] sm:$0xff]
      %v663 = vld [vmem:[#allocation2 + $0x48] sm:$0x3f]
      %v664 = vld [vmem:[%s207] sm:$0xe]
      %v665 = vld [vmem:[%s207 + $0x4] sm:$0xf]
      %v666 = vld [vmem:[%s207 + $0x8] sm:$0xf]
      %v667 = vld [vmem:[%s207 + $0xc] sm:$0xf]
      %v668 = vld [vmem:[%s207 + $0x10] sm:$0xf]
      %v669 = vld [vmem:[%s207 + $0x14] sm:$0xf]
      %v670 = vld [vmem:[%s207 + $0x18] sm:$0xf]
      %v671 = vld [vmem:[%s207 + $0x1c] sm:$0xf]
      %v672 = vld [vmem:[%s207 + $0x20] sm:$0xf]
      %v673 = vld [vmem:[%s207 + $0x24] sm:$0xf]
      %s674 = scalar_lea.vmem %s1, 128
      %v675 = vld [vmem:[%s674] sm:$0xf]
      %v676 = vld [vmem:[%s674 + $0x4] sm:$0xf]
      %v677 = vld [vmem:[%s674 + $0x8] sm:$0xf]
      %v678 = vld [vmem:[%s674 + $0xc] sm:$0xf]
      %v679 = vld [vmem:[%s674 + $0x10] sm:$0xf]
      %v680 = vld [vmem:[%s674 + $0x14] sm:$0xf]
      %v681 = vld [vmem:[%s674 + $0x18] sm:$0xf]
      %v682 = vld [vmem:[%s674 + $0x1c] sm:$0xf]
      %v683 = vld [vmem:[%s674 + $0x20] sm:$0xf]
      %v684 = vld [vmem:[%s674 + $0x24] sm:$0xf]
      %v685 = vld [vmem:[%s674 + $0x28] sm:$0xf]
      %v686 = vld [vmem:[%s674 + $0x2c] sm:$0xf]
      %v687 = vld [vmem:[%s674 + $0x30] sm:$0xf]
      %v688 = vld [vmem:[%s674 + $0x34] sm:$0xf]
      %v689 = vld [vmem:[%s674 + $0x38] sm:$0xf]
      %v690 = vld [vmem:[%s674 + $0x3c] sm:$0xf]
      %v701 = vunpack.c.l.b16 %v664
      %v702 = vunpack.c.l.b16 %v665
      %v703 = vunpack.c.l.b16 %v666
      %v704 = vunpack.c.l.b16 %v667
      %v705 = vunpack.c.l.b16 %v668
      %v706 = vunpack.c.l.b16 %v669
      %v707 = vunpack.c.l.b16 %v670
      %v708 = vunpack.c.l.b16 %v671
      %v709 = vunpack.c.l.b16 %v672
      %v710 = vunpack.c.l.b16 %v673
      %v711 = vpack.c.b16 %v702, %v701
      %v712 = vpack.c.b16 %v704, %v703
      %v713 = vpack.c.b16 %v706, %v705
      %v714 = vpack.c.b16 %v708, %v707
      %v715 = vpack.c.b16 %v710, %v709
      %vm716 = vcmask 1046528
      %v717 = vrot.slane %v711, 1
      %v718 = vrot.slane %v712, 1
      %v719 = vsel %vm716, %v717, %v718
      %v720 = vrot.slane %v713, 1
      %v721 = vsel %vm716, %v718, %v720
      %v722 = vrot.slane %v714, 1
      %v723 = vsel %vm716, %v720, %v722
      %v724 = vrot.slane %v715, 1
      %v725 = vsel %vm716, %v722, %v724
      %v747 = vunpack.c.l.b16 %v675
      %v748 = vunpack.c.l.b16 %v676
      %v749 = vunpack.c.l.b16 %v677
      %v750 = vunpack.c.l.b16 %v678
      %v751 = vunpack.c.l.b16 %v679
      %v752 = vunpack.c.l.b16 %v680
      %v753 = vunpack.c.l.b16 %v681
      %v754 = vunpack.c.l.b16 %v682
      %v755 = vunpack.c.l.b16 %v683
      %v756 = vunpack.c.l.b16 %v684
      %v757 = vunpack.c.l.b16 %v685
      %v758 = vunpack.c.l.b16 %v686
      %v759 = vunpack.c.l.b16 %v687
      %v760 = vunpack.c.l.b16 %v688
      %v761 = vunpack.c.l.b16 %v689
      %v762 = vunpack.c.l.b16 %v690
      %v763 = vpack.c.b16 %v748, %v747
      %v764 = vpack.c.b16 %v750, %v749
      %v765 = vpack.c.b16 %v752, %v751
      %v766 = vpack.c.b16 %v754, %v753
      %v767 = vpack.c.b16 %v756, %v755
      %v768 = vpack.c.b16 %v758, %v757
      %v769 = vpack.c.b16 %v760, %v759
      %v770 = vpack.c.b16 %v762, %v761
      %779 = vmatprep.subr.bf16.mxu0 0
      %780 = vmatpush1.bf16.msra.mxu0 %v770
      %781 = vmatprep.subr.bf16.mxu0 0
      %782 = vmatpush1.bf16.msra.mxu0 %v769
      %783 = vmatprep.subr.bf16.mxu0 0
      %784 = vmatpush1.bf16.msra.mxu0 %v768
      %785 = vmatprep.subr.bf16.mxu0 0
      %786 = vmatpush1.bf16.msra.mxu0 %v767
      %787 = vmatprep.subr.bf16.mxu0 0
      %788 = vmatpush1.bf16.msra.mxu0 %v766
      %789 = vmatprep.subr.bf16.mxu0 0
      %790 = vmatpush1.bf16.msra.mxu0 %v765
      %791 = vmatprep.subr.bf16.mxu0 0
      %792 = vmatpush1.bf16.msra.mxu0 %v764
      %793 = vmatprep.subr.bf16.mxu0 0
      %794 = vmatpush1.bf16.msra.mxu0 %v763
      %795 = vmatprep.subr.bf16.mxu0 0
      %796 = vmatpush2.bf16.msra.mxu0 0
      %797 = vmatprep.subr.bf16.mxu0 0
      %798 = vmatpush2.bf16.msra.mxu0 0
      %799 = vmatprep.subr.bf16.mxu0 0
      %800 = vmatpush2.bf16.msra.mxu0 0
      %801 = vmatprep.subr.bf16.mxu0 0
      %802 = vmatpush2.bf16.msra.mxu0 0
      %803 = vmatprep.subr.bf16.mxu0 0
      %804 = vmatpush2.bf16.msra.mxu0 0
      %805 = vmatprep.subr.bf16.mxu0 0
      %806 = vmatpush2.bf16.msra.mxu0 0
      %807 = vmatprep.subr.bf16.mxu0 0
      %808 = vmatpush2.bf16.msra.mxu0 0
      %809 = vmatprep.subr.bf16.mxu0 0
      %810 = vmatpush2.bf16.msra.mxu0 0
      %811 = vmatprep.mubr.bf16.mxu0 0
      %812 = vmatmul.mubr.bf16.gmra.mxu0 %v719
      %v813 = vpop.f32.mrf.mxu0
      %v814 = vadd.f32 0.0, %v813
      %v815 = vpop.f32.mrf.mxu0
      %v816 = vpop.f32.mrf.mxu0
      %v817 = vadd.f32 0.0, %v816
      %v818 = vpop.f32.mrf.mxu0
      %819 = vmatprep.mubr.bf16.mxu0 0
      %820 = vmatmul.mubr.bf16.gmra.mxu0 %v721
      %v821 = vpop.f32.mrf.mxu0
      %v822 = vadd.f32 0.0, %v821
      %v823 = vpop.f32.mrf.mxu0
      %v824 = vpop.f32.mrf.mxu0
      %v825 = vadd.f32 0.0, %v824
      %v826 = vpop.f32.mrf.mxu0
      %827 = vmatprep.mubr.bf16.mxu0 0
      %828 = vmatmul.mubr.bf16.gmra.mxu0 %v723
      %v829 = vpop.f32.mrf.mxu0
      %v830 = vadd.f32 0.0, %v829
      %v831 = vpop.f32.mrf.mxu0
      %v832 = vpop.f32.mrf.mxu0
      %v833 = vadd.f32 0.0, %v832
      %v834 = vpop.f32.mrf.mxu0
      %835 = vmatprep.mubr.bf16.mxu0 0
      %836 = vmatmul.mubr.bf16.gmra.mxu0 %v725
      %v837 = vpop.f32.mrf.mxu0
      %v838 = vadd.f32 0.0, %v837
      %v839 = vpop.f32.mrf.mxu0
      %v840 = vpop.f32.mrf.mxu0
      %v841 = vadd.f32 0.0, %v840
      %v842 = vpop.f32.mrf.mxu0
      %843 = vmatprep.mubr.bf16.mxu0 0
      %844 = vmatmul.mubr.bf16.gmra.mxu0 %v724
      %v845 = vpop.f32.mrf.mxu0
      %v846 = vadd.f32 0.0, %v845
      %v847 = vpop.f32.mrf.mxu0
      %v848 = vpop.f32.mrf.mxu0
      %v849 = vadd.f32 0.0, %v848
      %v850 = vpop.f32.mrf.mxu0
      %851 = vdwg.mxu0
      %v852 = vadd.f32 %v654, %v814
      %v853 = vadd.f32 %v655, %v817
      %v854 = vadd.f32 %v656, %v822
      %v855 = vadd.f32 %v657, %v825
      %v856 = vadd.f32 %v658, %v830
      %v857 = vadd.f32 %v659, %v833
      %v858 = vadd.f32 %v660, %v838
      %v859 = vadd.f32 %v661, %v841
      %v860 = vadd.f32 %v662, %v846
      %v861 = vadd.f32 %v663, %v849
      %862 = vst [vmem:[#allocation2] sm:$0xff] %v852
      %863 = vst [vmem:[#allocation2 + $0x8] sm:$0xff] %v853
      %864 = vst [vmem:[#allocation2 + $0x10] sm:$0xff] %v854
      %865 = vst [vmem:[#allocation2 + $0x18] sm:$0xff] %v855
      %866 = vst [vmem:[#allocation2 + $0x20] sm:$0xff] %v856
      %867 = vst [vmem:[#allocation2 + $0x28] sm:$0xff] %v857
      %868 = vst [vmem:[#allocation2 + $0x30] sm:$0xff] %v858
      %869 = vst [vmem:[#allocation2 + $0x38] sm:$0xff] %v859
      %870 = vst [vmem:[#allocation2 + $0x40] sm:$0xff] %v860
      %871 = vst [vmem:[#allocation2 + $0x48] sm:$0x3f] %v861
      %v872 = vld [vmem:[#allocation2] sm:$0xff]
      %v873 = vld [vmem:[#allocation2 + $0x8] sm:$0xff]
      %v874 = vld [vmem:[#allocation2 + $0x10] sm:$0xff]
      %v875 = vld [vmem:[#allocation2 + $0x18] sm:$0xff]
      %v876 = vld [vmem:[#allocation2 + $0x20] sm:$0xff]
      %v877 = vld [vmem:[#allocation2 + $0x28] sm:$0xff]
      %v878 = vld [vmem:[#allocation2 + $0x30] sm:$0xff]
      %v879 = vld [vmem:[#allocation2 + $0x38] sm:$0xff]
      %v880 = vld [vmem:[#allocation2 + $0x40] sm:$0xff]
      %v881 = vld [vmem:[#allocation2 + $0x48] sm:$0x3f]
      %v882 = vld [vmem:[%s207 + $0x4] sm:$0xe]
      %v883 = vld [vmem:[%s207 + $0x8] sm:$0xf]
      %v884 = vld [vmem:[%s207 + $0xc] sm:$0xf]
      %v885 = vld [vmem:[%s207 + $0x10] sm:$0xf]
      %v886 = vld [vmem:[%s207 + $0x14] sm:$0xf]
      %v887 = vld [vmem:[%s207 + $0x18] sm:$0xf]
      %v888 = vld [vmem:[%s207 + $0x1c] sm:$0xf]
      %v889 = vld [vmem:[%s207 + $0x20] sm:$0xf]
      %v890 = vld [vmem:[%s207 + $0x24] sm:$0xf]
      %v891 = vld [vmem:[%s207 + $0x28] sm:$0xf]
      %s892 = scalar_lea.vmem %s1, 192
      %v893 = vld [vmem:[%s892] sm:$0xf]
      %v894 = vld [vmem:[%s892 + $0x4] sm:$0xf]
      %v895 = vld [vmem:[%s892 + $0x8] sm:$0xf]
      %v896 = vld [vmem:[%s892 + $0xc] sm:$0xf]
      %v897 = vld [vmem:[%s892 + $0x10] sm:$0xf]
      %v898 = vld [vmem:[%s892 + $0x14] sm:$0xf]
      %v899 = vld [vmem:[%s892 + $0x18] sm:$0xf]
      %v900 = vld [vmem:[%s892 + $0x1c] sm:$0xf]
      %v901 = vld [vmem:[%s892 + $0x20] sm:$0xf]
      %v902 = vld [vmem:[%s892 + $0x24] sm:$0xf]
      %v903 = vld [vmem:[%s892 + $0x28] sm:$0xf]
      %v904 = vld [vmem:[%s892 + $0x2c] sm:$0xf]
      %v905 = vld [vmem:[%s892 + $0x30] sm:$0xf]
      %v906 = vld [vmem:[%s892 + $0x34] sm:$0xf]
      %v907 = vld [vmem:[%s892 + $0x38] sm:$0xf]
      %v908 = vld [vmem:[%s892 + $0x3c] sm:$0xf]
      %v919 = vunpack.c.l.b16 %v882
      %v920 = vunpack.c.l.b16 %v883
      %v921 = vunpack.c.l.b16 %v884
      %v922 = vunpack.c.l.b16 %v885
      %v923 = vunpack.c.l.b16 %v886
      %v924 = vunpack.c.l.b16 %v887
      %v925 = vunpack.c.l.b16 %v888
      %v926 = vunpack.c.l.b16 %v889
      %v927 = vunpack.c.l.b16 %v890
      %v928 = vunpack.c.l.b16 %v891
      %v929 = vpack.c.b16 %v920, %v919
      %v930 = vpack.c.b16 %v922, %v921
      %v931 = vpack.c.b16 %v924, %v923
      %v932 = vpack.c.b16 %v926, %v925
      %v933 = vpack.c.b16 %v928, %v927
      %v934 = vrot.slane %v929, 1
      %v935 = vrot.slane %v930, 1
      %v936 = vsel %vm716, %v934, %v935
      %v937 = vrot.slane %v931, 1
      %v938 = vsel %vm716, %v935, %v937
      %v939 = vrot.slane %v932, 1
      %v940 = vsel %vm716, %v937, %v939
      %v941 = vrot.slane %v933, 1
      %v942 = vsel %vm716, %v939, %v941
      %v964 = vunpack.c.l.b16 %v893
      %v965 = vunpack.c.l.b16 %v894
      %v966 = vunpack.c.l.b16 %v895
      %v967 = vunpack.c.l.b16 %v896
      %v968 = vunpack.c.l.b16 %v897
      %v969 = vunpack.c.l.b16 %v898
      %v970 = vunpack.c.l.b16 %v899
      %v971 = vunpack.c.l.b16 %v900
      %v972 = vunpack.c.l.b16 %v901
      %v973 = vunpack.c.l.b16 %v902
      %v974 = vunpack.c.l.b16 %v903
      %v975 = vunpack.c.l.b16 %v904
      %v976 = vunpack.c.l.b16 %v905
      %v977 = vunpack.c.l.b16 %v906
      %v978 = vunpack.c.l.b16 %v907
      %v979 = vunpack.c.l.b16 %v908
      %v980 = vpack.c.b16 %v965, %v964
      %v981 = vpack.c.b16 %v967, %v966
      %v982 = vpack.c.b16 %v969, %v968
      %v983 = vpack.c.b16 %v971, %v970
      %v984 = vpack.c.b16 %v973, %v972
      %v985 = vpack.c.b16 %v975, %v974
      %v986 = vpack.c.b16 %v977, %v976
      %v987 = vpack.c.b16 %v979, %v978
      %996 = vmatprep.subr.bf16.mxu0 0
      %997 = vmatpush1.bf16.msra.mxu0 %v987
      %998 = vmatprep.subr.bf16.mxu0 0
      %999 = vmatpush1.bf16.msra.mxu0 %v986
      %1000 = vmatprep.subr.bf16.mxu0 0
      %1001 = vmatpush1.bf16.msra.mxu0 %v985
      %1002 = vmatprep.subr.bf16.mxu0 0
      %1003 = vmatpush1.bf16.msra.mxu0 %v984
      %1004 = vmatprep.subr.bf16.mxu0 0
      %1005 = vmatpush1.bf16.msra.mxu0 %v983
      %1006 = vmatprep.subr.bf16.mxu0 0
      %1007 = vmatpush1.bf16.msra.mxu0 %v982
      %1008 = vmatprep.subr.bf16.mxu0 0
      %1009 = vmatpush1.bf16.msra.mxu0 %v981
      %1010 = vmatprep.subr.bf16.mxu0 0
      %1011 = vmatpush1.bf16.msra.mxu0 %v980
      %1012 = vmatprep.subr.bf16.mxu0 0
      %1013 = vmatpush2.bf16.msra.mxu0 0
      %1014 = vmatprep.subr.bf16.mxu0 0
      %1015 = vmatpush2.bf16.msra.mxu0 0
      %1016 = vmatprep.subr.bf16.mxu0 0
      %1017 = vmatpush2.bf16.msra.mxu0 0
      %1018 = vmatprep.subr.bf16.mxu0 0
      %1019 = vmatpush2.bf16.msra.mxu0 0
      %1020 = vmatprep.subr.bf16.mxu0 0
      %1021 = vmatpush2.bf16.msra.mxu0 0
      %1022 = vmatprep.subr.bf16.mxu0 0
      %1023 = vmatpush2.bf16.msra.mxu0 0
      %1024 = vmatprep.subr.bf16.mxu0 0
      %1025 = vmatpush2.bf16.msra.mxu0 0
      %1026 = vmatprep.subr.bf16.mxu0 0
      %1027 = vmatpush2.bf16.msra.mxu0 0
      %1028 = vmatprep.mubr.bf16.mxu0 0
      %1029 = vmatmul.mubr.bf16.gmra.mxu0 %v936
      %v1030 = vpop.f32.mrf.mxu0
      %v1031 = vadd.f32 0.0, %v1030
      %v1032 = vpop.f32.mrf.mxu0
      %v1033 = vpop.f32.mrf.mxu0
      %v1034 = vadd.f32 0.0, %v1033
      %v1035 = vpop.f32.mrf.mxu0
      %1036 = vmatprep.mubr.bf16.mxu0 0
      %1037 = vmatmul.mubr.bf16.gmra.mxu0 %v938
      %v1038 = vpop.f32.mrf.mxu0
      %v1039 = vadd.f32 0.0, %v1038
      %v1040 = vpop.f32.mrf.mxu0
      %v1041 = vpop.f32.mrf.mxu0
      %v1042 = vadd.f32 0.0, %v1041
      %v1043 = vpop.f32.mrf.mxu0
      %1044 = vmatprep.mubr.bf16.mxu0 0
      %1045 = vmatmul.mubr.bf16.gmra.mxu0 %v940
      %v1046 = vpop.f32.mrf.mxu0
      %v1047 = vadd.f32 0.0, %v1046
      %v1048 = vpop.f32.mrf.mxu0
      %v1049 = vpop.f32.mrf.mxu0
      %v1050 = vadd.f32 0.0, %v1049
      %v1051 = vpop.f32.mrf.mxu0
      %1052 = vmatprep.mubr.bf16.mxu0 0
      %1053 = vmatmul.mubr.bf16.gmra.mxu0 %v942
      %v1054 = vpop.f32.mrf.mxu0
      %v1055 = vadd.f32 0.0, %v1054
      %v1056 = vpop.f32.mrf.mxu0
      %v1057 = vpop.f32.mrf.mxu0
      %v1058 = vadd.f32 0.0, %v1057
      %v1059 = vpop.f32.mrf.mxu0
      %1060 = vmatprep.mubr.bf16.mxu0 0
      %1061 = vmatmul.mubr.bf16.gmra.mxu0 %v941
      %v1062 = vpop.f32.mrf.mxu0
      %v1063 = vadd.f32 0.0, %v1062
      %v1064 = vpop.f32.mrf.mxu0
      %v1065 = vpop.f32.mrf.mxu0
      %v1066 = vadd.f32 0.0, %v1065
      %v1067 = vpop.f32.mrf.mxu0
      %1068 = vdwg.mxu0
      %v1069 = vadd.f32 %v872, %v1031
      %v1070 = vadd.f32 %v873, %v1034
      %v1071 = vadd.f32 %v874, %v1039
      %v1072 = vadd.f32 %v875, %v1042
      %v1073 = vadd.f32 %v876, %v1047
      %v1074 = vadd.f32 %v877, %v1050
      %v1075 = vadd.f32 %v878, %v1055
      %v1076 = vadd.f32 %v879, %v1058
      %v1077 = vadd.f32 %v880, %v1063
      %v1078 = vadd.f32 %v881, %v1066
      %1079 = vst [vmem:[#allocation2] sm:$0xff] %v1069
      %1080 = vst [vmem:[#allocation2 + $0x8] sm:$0xff] %v1070
      %1081 = vst [vmem:[#allocation2 + $0x10] sm:$0xff] %v1071
      %1082 = vst [vmem:[#allocation2 + $0x18] sm:$0xff] %v1072
      %1083 = vst [vmem:[#allocation2 + $0x20] sm:$0xff] %v1073
      %1084 = vst [vmem:[#allocation2 + $0x28] sm:$0xff] %v1074
      %1085 = vst [vmem:[#allocation2 + $0x30] sm:$0xff] %v1075
      %1086 = vst [vmem:[#allocation2 + $0x38] sm:$0xff] %v1076
      %1087 = vst [vmem:[#allocation2 + $0x40] sm:$0xff] %v1077
      %1088 = vst [vmem:[#allocation2 + $0x48] sm:$0x3f] %v1078
      %v1089 = vld [vmem:[#allocation2] sm:$0xff]
      %v1090 = vld [vmem:[#allocation2 + $0x8] sm:$0xff]
      %v1091 = vld [vmem:[#allocation2 + $0x10] sm:$0xff]
      %v1092 = vld [vmem:[#allocation2 + $0x18] sm:$0xff]
      %v1093 = vld [vmem:[#allocation2 + $0x20] sm:$0xff]
      %v1094 = vld [vmem:[#allocation2 + $0x28] sm:$0xff]
      %v1095 = vld [vmem:[#allocation2 + $0x30] sm:$0xff]
      %v1096 = vld [vmem:[#allocation2 + $0x38] sm:$0xff]
      %v1097 = vld [vmem:[#allocation2 + $0x40] sm:$0xff]
      %v1098 = vld [vmem:[#allocation2 + $0x48] sm:$0x3f]
      %v1099 = vld [vmem:[%s207 + $0x4] sm:$0xe]
      %v1100 = vld [vmem:[%s207 + $0x8] sm:$0xf]
      %v1101 = vld [vmem:[%s207 + $0xc] sm:$0xf]
      %v1102 = vld [vmem:[%s207 + $0x10] sm:$0xf]
      %v1103 = vld [vmem:[%s207 + $0x14] sm:$0xf]
      %v1104 = vld [vmem:[%s207 + $0x18] sm:$0xf]
      %v1105 = vld [vmem:[%s207 + $0x1c] sm:$0xf]
      %v1106 = vld [vmem:[%s207 + $0x20] sm:$0xf]
      %v1107 = vld [vmem:[%s207 + $0x24] sm:$0xf]
      %v1108 = vld [vmem:[%s207 + $0x28] sm:$0xf]
      %v1109 = vld [vmem:[%s207 + $0x2c] sm:$0x1]
      %s1110 = scalar_lea.vmem %s1, 256
      %v1111 = vld [vmem:[%s1110] sm:$0xf]
      %v1112 = vld [vmem:[%s1110 + $0x4] sm:$0xf]
      %v1113 = vld [vmem:[%s1110 + $0x8] sm:$0xf]
      %v1114 = vld [vmem:[%s1110 + $0xc] sm:$0xf]
      %v1115 = vld [vmem:[%s1110 + $0x10] sm:$0xf]
      %v1116 = vld [vmem:[%s1110 + $0x14] sm:$0xf]
      %v1117 = vld [vmem:[%s1110 + $0x18] sm:$0xf]
      %v1118 = vld [vmem:[%s1110 + $0x1c] sm:$0xf]
      %v1119 = vld [vmem:[%s1110 + $0x20] sm:$0xf]
      %v1120 = vld [vmem:[%s1110 + $0x24] sm:$0xf]
      %v1121 = vld [vmem:[%s1110 + $0x28] sm:$0xf]
      %v1122 = vld [vmem:[%s1110 + $0x2c] sm:$0xf]
      %v1123 = vld [vmem:[%s1110 + $0x30] sm:$0xf]
      %v1124 = vld [vmem:[%s1110 + $0x34] sm:$0xf]
      %v1125 = vld [vmem:[%s1110 + $0x38] sm:$0xf]
      %v1126 = vld [vmem:[%s1110 + $0x3c] sm:$0xf]
      %v1138 = vunpack.c.l.b16 %v1099
      %v1139 = vunpack.c.l.b16 %v1100
      %v1140 = vunpack.c.l.b16 %v1101
      %v1141 = vunpack.c.l.b16 %v1102
      %v1142 = vunpack.c.l.b16 %v1103
      %v1143 = vunpack.c.l.b16 %v1104
      %v1144 = vunpack.c.l.b16 %v1105
      %v1145 = vunpack.c.l.b16 %v1106
      %v1146 = vunpack.c.l.b16 %v1107
      %v1147 = vunpack.c.l.b16 %v1108
      %v1148 = vunpack.c.l.b16 %v1109
      %v1149 = vpack.c.b16 %v1139, %v1138
      %v1150 = vpack.c.b16 %v1141, %v1140
      %v1151 = vpack.c.b16 %v1143, %v1142
      %v1152 = vpack.c.b16 %v1145, %v1144
      %v1153 = vpack.c.b16 %v1147, %v1146
      %v1154 = vpack.c.b16 %v1148, %v1148
      %vm1155 = vsmask.f32 6400
      %v1157 = vshrl.u32 %v1149, 16
      %v1159 = vrot.slane %v1157, 1
      %v1160 = vshll.u32 %v1149, 16
      %v1162 = vrot.slane %v1160, 2
      %v1163 = vor.u32 %v1159, %v1162
      %v1165 = vshrl.u32 %v1150, 16
      %v1167 = vrot.slane %v1165, 1
      %v1168 = vshll.u32 %v1150, 16
      %v1170 = vrot.slane %v1168, 2
      %v1171 = vor.u32 %v1167, %v1170
      %v1172 = vsel %vm1155, %v1163, %v1171
      %v1174 = vshrl.u32 %v1151, 16
      %v1176 = vrot.slane %v1174, 1
      %v1177 = vshll.u32 %v1151, 16
      %v1179 = vrot.slane %v1177, 2
      %v1180 = vor.u32 %v1176, %v1179
      %v1181 = vsel %vm1155, %v1171, %v1180
      %v1183 = vshrl.u32 %v1152, 16
      %v1185 = vrot.slane %v1183, 1
      %v1186 = vshll.u32 %v1152, 16
      %v1188 = vrot.slane %v1186, 2
      %v1189 = vor.u32 %v1185, %v1188
      %v1190 = vsel %vm1155, %v1180, %v1189
      %v1192 = vshrl.u32 %v1153, 16
      %v1194 = vrot.slane %v1192, 1
      %v1195 = vshll.u32 %v1153, 16
      %v1197 = vrot.slane %v1195, 2
      %v1198 = vor.u32 %v1194, %v1197
      %v1199 = vsel %vm1155, %v1189, %v1198
      %v1201 = vshll.u32 %v1154, 16
      %v1203 = vrot.slane %v1201, 2
      %v1204 = vsel %vm1155, %v1198, %v1203
      %v1226 = vunpack.c.l.b16 %v1111
      %v1227 = vunpack.c.l.b16 %v1112
      %v1228 = vunpack.c.l.b16 %v1113
      %v1229 = vunpack.c.l.b16 %v1114
      %v1230 = vunpack.c.l.b16 %v1115
      %v1231 = vunpack.c.l.b16 %v1116
      %v1232 = vunpack.c.l.b16 %v1117
      %v1233 = vunpack.c.l.b16 %v1118
      %v1234 = vunpack.c.l.b16 %v1119
      %v1235 = vunpack.c.l.b16 %v1120
      %v1236 = vunpack.c.l.b16 %v1121
      %v1237 = vunpack.c.l.b16 %v1122
      %v1238 = vunpack.c.l.b16 %v1123
      %v1239 = vunpack.c.l.b16 %v1124
      %v1240 = vunpack.c.l.b16 %v1125
      %v1241 = vunpack.c.l.b16 %v1126
      %v1242 = vpack.c.b16 %v1227, %v1226
      %v1243 = vpack.c.b16 %v1229, %v1228
      %v1244 = vpack.c.b16 %v1231, %v1230
      %v1245 = vpack.c.b16 %v1233, %v1232
      %v1246 = vpack.c.b16 %v1235, %v1234
      %v1247 = vpack.c.b16 %v1237, %v1236
      %v1248 = vpack.c.b16 %v1239, %v1238
      %v1249 = vpack.c.b16 %v1241, %v1240
      %1258 = vmatprep.subr.bf16.mxu0 0
      %1259 = vmatpush1.bf16.msra.mxu0 %v1249
      %1260 = vmatprep.subr.bf16.mxu0 0
      %1261 = vmatpush1.bf16.msra.mxu0 %v1248
      %1262 = vmatprep.subr.bf16.mxu0 0
      %1263 = vmatpush1.bf16.msra.mxu0 %v1247
      %1264 = vmatprep.subr.bf16.mxu0 0
      %1265 = vmatpush1.bf16.msra.mxu0 %v1246
      %1266 = vmatprep.subr.bf16.mxu0 0
      %1267 = vmatpush1.bf16.msra.mxu0 %v1245
      %1268 = vmatprep.subr.bf16.mxu0 0
      %1269 = vmatpush1.bf16.msra.mxu0 %v1244
      %1270 = vmatprep.subr.bf16.mxu0 0
      %1271 = vmatpush1.bf16.msra.mxu0 %v1243
      %1272 = vmatprep.subr.bf16.mxu0 0
      %1273 = vmatpush1.bf16.msra.mxu0 %v1242
      %1274 = vmatprep.subr.bf16.mxu0 0
      %1275 = vmatpush2.bf16.msra.mxu0 0
      %1276 = vmatprep.subr.bf16.mxu0 0
      %1277 = vmatpush2.bf16.msra.mxu0 0
      %1278 = vmatprep.subr.bf16.mxu0 0
      %1279 = vmatpush2.bf16.msra.mxu0 0
      %1280 = vmatprep.subr.bf16.mxu0 0
      %1281 = vmatpush2.bf16.msra.mxu0 0
      %1282 = vmatprep.subr.bf16.mxu0 0
      %1283 = vmatpush2.bf16.msra.mxu0 0
      %1284 = vmatprep.subr.bf16.mxu0 0
      %1285 = vmatpush2.bf16.msra.mxu0 0
      %1286 = vmatprep.subr.bf16.mxu0 0
      %1287 = vmatpush2.bf16.msra.mxu0 0
      %1288 = vmatprep.subr.bf16.mxu0 0
      %1289 = vmatpush2.bf16.msra.mxu0 0
      %1290 = vmatprep.mubr.bf16.mxu0 0
      %1291 = vmatmul.mubr.bf16.gmra.mxu0 %v1172
      %v1292 = vpop.f32.mrf.mxu0
      %v1293 = vadd.f32 0.0, %v1292
      %v1294 = vpop.f32.mrf.mxu0
      %v1295 = vpop.f32.mrf.mxu0
      %v1296 = vadd.f32 0.0, %v1295
      %v1297 = vpop.f32.mrf.mxu0
      %1298 = vmatprep.mubr.bf16.mxu0 0
      %1299 = vmatmul.mubr.bf16.gmra.mxu0 %v1181
      %v1300 = vpop.f32.mrf.mxu0
      %v1301 = vadd.f32 0.0, %v1300
      %v1302 = vpop.f32.mrf.mxu0
      %v1303 = vpop.f32.mrf.mxu0
      %v1304 = vadd.f32 0.0, %v1303
      %v1305 = vpop.f32.mrf.mxu0
      %1306 = vmatprep.mubr.bf16.mxu0 0
      %1307 = vmatmul.mubr.bf16.gmra.mxu0 %v1190
      %v1308 = vpop.f32.mrf.mxu0
      %v1309 = vadd.f32 0.0, %v1308
      %v1310 = vpop.f32.mrf.mxu0
      %v1311 = vpop.f32.mrf.mxu0
      %v1312 = vadd.f32 0.0, %v1311
      %v1313 = vpop.f32.mrf.mxu0
      %1314 = vmatprep.mubr.bf16.mxu0 0
      %1315 = vmatmul.mubr.bf16.gmra.mxu0 %v1199
      %v1316 = vpop.f32.mrf.mxu0
      %v1317 = vadd.f32 0.0, %v1316
      %v1318 = vpop.f32.mrf.mxu0
      %v1319 = vpop.f32.mrf.mxu0
      %v1320 = vadd.f32 0.0, %v1319
      %v1321 = vpop.f32.mrf.mxu0
      %1322 = vmatprep.mubr.bf16.mxu0 0
      %1323 = vmatmul.mubr.bf16.gmra.mxu0 %v1204
      %v1324 = vpop.f32.mrf.mxu0
      %v1325 = vadd.f32 0.0, %v1324
      %v1326 = vpop.f32.mrf.mxu0
      %v1327 = vpop.f32.mrf.mxu0
      %v1328 = vadd.f32 0.0, %v1327
      %v1329 = vpop.f32.mrf.mxu0
      %1330 = vdwg.mxu0
      %v1331 = vadd.f32 %v1089, %v1293
      %v1332 = vadd.f32 %v1090, %v1296
      %v1333 = vadd.f32 %v1091, %v1301
      %v1334 = vadd.f32 %v1092, %v1304
      %v1335 = vadd.f32 %v1093, %v1309
      %v1336 = vadd.f32 %v1094, %v1312
      %v1337 = vadd.f32 %v1095, %v1317
      %v1338 = vadd.f32 %v1096, %v1320
      %v1339 = vadd.f32 %v1097, %v1325
      %v1340 = vadd.f32 %v1098, %v1328
      %1341 = vst [vmem:[#allocation2] sm:$0xff] %v1331
      %1342 = vst [vmem:[#allocation2 + $0x8] sm:$0xff] %v1332
      %1343 = vst [vmem:[#allocation2 + $0x10] sm:$0xff] %v1333
      %1344 = vst [vmem:[#allocation2 + $0x18] sm:$0xff] %v1334
      %1345 = vst [vmem:[#allocation2 + $0x20] sm:$0xff] %v1335
      %1346 = vst [vmem:[#allocation2 + $0x28] sm:$0xff] %v1336
      %1347 = vst [vmem:[#allocation2 + $0x30] sm:$0xff] %v1337
      %1348 = vst [vmem:[#allocation2 + $0x38] sm:$0xff] %v1338
      %1349 = vst [vmem:[#allocation2 + $0x40] sm:$0xff] %v1339
      %1350 = vst [vmem:[#allocation2 + $0x48] sm:$0x3f] %v1340
      %v1351 = vld [vmem:[#allocation2] sm:$0xff]
      %v1352 = vld [vmem:[#allocation2 + $0x8] sm:$0xff]
      %v1353 = vld [vmem:[#allocation2 + $0x10] sm:$0xff]
      %v1354 = vld [vmem:[#allocation2 + $0x18] sm:$0xff]
      %v1355 = vld [vmem:[#allocation2 + $0x20] sm:$0xff]
      %v1356 = vld [vmem:[#allocation2 + $0x28] sm:$0xff]
      %v1357 = vld [vmem:[#allocation2 + $0x30] sm:$0xff]
      %v1358 = vld [vmem:[#allocation2 + $0x38] sm:$0xff]
      %v1359 = vld [vmem:[#allocation2 + $0x40] sm:$0xff]
      %v1360 = vld [vmem:[#allocation2 + $0x48] sm:$0x3f]
      %v1361 = vld [vmem:[%s207 + $0x4] sm:$0xc]
      %v1362 = vld [vmem:[%s207 + $0x8] sm:$0xf]
      %v1363 = vld [vmem:[%s207 + $0xc] sm:$0xf]
      %v1364 = vld [vmem:[%s207 + $0x10] sm:$0xf]
      %v1365 = vld [vmem:[%s207 + $0x14] sm:$0xf]
      %v1366 = vld [vmem:[%s207 + $0x18] sm:$0xf]
      %v1367 = vld [vmem:[%s207 + $0x1c] sm:$0xf]
      %v1368 = vld [vmem:[%s207 + $0x20] sm:$0xf]
      %v1369 = vld [vmem:[%s207 + $0x24] sm:$0xf]
      %v1370 = vld [vmem:[%s207 + $0x28] sm:$0xf]
      %v1371 = vld [vmem:[%s207 + $0x2c] sm:$0x1]
      %s1372 = scalar_lea.vmem %s1, 320
      %v1373 = vld [vmem:[%s1372] sm:$0xf]
      %v1374 = vld [vmem:[%s1372 + $0x4] sm:$0xf]
      %v1375 = vld [vmem:[%s1372 + $0x8] sm:$0xf]
      %v1376 = vld [vmem:[%s1372 + $0xc] sm:$0xf]
      %v1377 = vld [vmem:[%s1372 + $0x10] sm:$0xf]
      %v1378 = vld [vmem:[%s1372 + $0x14] sm:$0xf]
      %v1379 = vld [vmem:[%s1372 + $0x18] sm:$0xf]
      %v1380 = vld [vmem:[%s1372 + $0x1c] sm:$0xf]
      %v1381 = vld [vmem:[%s1372 + $0x20] sm:$0xf]
      %v1382 = vld [vmem:[%s1372 + $0x24] sm:$0xf]
      %v1383 = vld [vmem:[%s1372 + $0x28] sm:$0xf]
      %v1384 = vld [vmem:[%s1372 + $0x2c] sm:$0xf]
      %v1385 = vld [vmem:[%s1372 + $0x30] sm:$0xf]
      %v1386 = vld [vmem:[%s1372 + $0x34] sm:$0xf]
      %v1387 = vld [vmem:[%s1372 + $0x38] sm:$0xf]
      %v1388 = vld [vmem:[%s1372 + $0x3c] sm:$0xf]
      %v1400 = vunpack.c.l.b16 %v1361
      %v1401 = vunpack.c.l.b16 %v1362
      %v1402 = vunpack.c.l.b16 %v1363
      %v1403 = vunpack.c.l.b16 %v1364
      %v1404 = vunpack.c.l.b16 %v1365
      %v1405 = vunpack.c.l.b16 %v1366
      %v1406 = vunpack.c.l.b16 %v1367
      %v1407 = vunpack.c.l.b16 %v1368
      %v1408 = vunpack.c.l.b16 %v1369
      %v1409 = vunpack.c.l.b16 %v1370
      %v1410 = vunpack.c.l.b16 %v1371
      %v1411 = vpack.c.b16 %v1401, %v1400
      %v1412 = vpack.c.b16 %v1403, %v1402
      %v1413 = vpack.c.b16 %v1405, %v1404
      %v1414 = vpack.c.b16 %v1407, %v1406
      %v1415 = vpack.c.b16 %v1409, %v1408
      %v1416 = vpack.c.b16 %v1410, %v1410
      %vm1417 = vcmask 1045504
      %v1418 = vrot.slane %v1411, 2
      %v1419 = vrot.slane %v1412, 2
      %v1420 = vsel %vm1417, %v1418, %v1419
      %v1421 = vrot.slane %v1413, 2
      %v1422 = vsel %vm1417, %v1419, %v1421
      %v1423 = vrot.slane %v1414, 2
      %v1424 = vsel %vm1417, %v1421, %v1423
      %v1425 = vrot.slane %v1415, 2
      %v1426 = vsel %vm1417, %v1423, %v1425
      %v1427 = vrot.slane %v1416, 2
      %v1428 = vsel %vm1417, %v1425, %v1427
      %v1450 = vunpack.c.l.b16 %v1373
      %v1451 = vunpack.c.l.b16 %v1374
      %v1452 = vunpack.c.l.b16 %v1375
      %v1453 = vunpack.c.l.b16 %v1376
      %v1454 = vunpack.c.l.b16 %v1377
      %v1455 = vunpack.c.l.b16 %v1378
      %v1456 = vunpack.c.l.b16 %v1379
      %v1457 = vunpack.c.l.b16 %v1380
      %v1458 = vunpack.c.l.b16 %v1381
      %v1459 = vunpack.c.l.b16 %v1382
      %v1460 = vunpack.c.l.b16 %v1383
      %v1461 = vunpack.c.l.b16 %v1384
      %v1462 = vunpack.c.l.b16 %v1385
      %v1463 = vunpack.c.l.b16 %v1386
      %v1464 = vunpack.c.l.b16 %v1387
      %v1465 = vunpack.c.l.b16 %v1388
      %v1466 = vpack.c.b16 %v1451, %v1450
      %v1467 = vpack.c.b16 %v1453, %v1452
      %v1468 = vpack.c.b16 %v1455, %v1454
      %v1469 = vpack.c.b16 %v1457, %v1456
      %v1470 = vpack.c.b16 %v1459, %v1458
      %v1471 = vpack.c.b16 %v1461, %v1460
      %v1472 = vpack.c.b16 %v1463, %v1462
      %v1473 = vpack.c.b16 %v1465, %v1464
      %1482 = vmatprep.subr.bf16.mxu0 0
      %1483 = vmatpush1.bf16.msra.mxu0 %v1473
      %1484 = vmatprep.subr.bf16.mxu0 0
      %1485 = vmatpush1.bf16.msra.mxu0 %v1472
      %1486 = vmatprep.subr.bf16.mxu0 0
      %1487 = vmatpush1.bf16.msra.mxu0 %v1471
      %1488 = vmatprep.subr.bf16.mxu0 0
      %1489 = vmatpush1.bf16.msra.mxu0 %v1470
      %1490 = vmatprep.subr.bf16.mxu0 0
      %1491 = vmatpush1.bf16.msra.mxu0 %v1469
      %1492 = vmatprep.subr.bf16.mxu0 0
      %1493 = vmatpush1.bf16.msra.mxu0 %v1468
      %1494 = vmatprep.subr.bf16.mxu0 0
      %1495 = vmatpush1.bf16.msra.mxu0 %v1467
      %1496 = vmatprep.subr.bf16.mxu0 0
      %1497 = vmatpush1.bf16.msra.mxu0 %v1466
      %1498 = vmatprep.subr.bf16.mxu0 0
      %1499 = vmatpush2.bf16.msra.mxu0 0
      %1500 = vmatprep.subr.bf16.mxu0 0
      %1501 = vmatpush2.bf16.msra.mxu0 0
      %1502 = vmatprep.subr.bf16.mxu0 0
      %1503 = vmatpush2.bf16.msra.mxu0 0
      %1504 = vmatprep.subr.bf16.mxu0 0
      %1505 = vmatpush2.bf16.msra.mxu0 0
      %1506 = vmatprep.subr.bf16.mxu0 0
      %1507 = vmatpush2.bf16.msra.mxu0 0
      %1508 = vmatprep.subr.bf16.mxu0 0
      %1509 = vmatpush2.bf16.msra.mxu0 0
      %1510 = vmatprep.subr.bf16.mxu0 0
      %1511 = vmatpush2.bf16.msra.mxu0 0
      %1512 = vmatprep.subr.bf16.mxu0 0
      %1513 = vmatpush2.bf16.msra.mxu0 0
      %1514 = vmatprep.mubr.bf16.mxu0 0
      %1515 = vmatmul.mubr.bf16.gmra.mxu0 %v1420
      %v1516 = vpop.f32.mrf.mxu0
      %v1517 = vadd.f32 0.0, %v1516
      %v1518 = vpop.f32.mrf.mxu0
      %v1519 = vpop.f32.mrf.mxu0
      %v1520 = vadd.f32 0.0, %v1519
      %v1521 = vpop.f32.mrf.mxu0
      %1522 = vmatprep.mubr.bf16.mxu0 0
      %1523 = vmatmul.mubr.bf16.gmra.mxu0 %v1422
      %v1524 = vpop.f32.mrf.mxu0
      %v1525 = vadd.f32 0.0, %v1524
      %v1526 = vpop.f32.mrf.mxu0
      %v1527 = vpop.f32.mrf.mxu0
      %v1528 = vadd.f32 0.0, %v1527
      %v1529 = vpop.f32.mrf.mxu0
      %1530 = vmatprep.mubr.bf16.mxu0 0
      %1531 = vmatmul.mubr.bf16.gmra.mxu0 %v1424
      %v1532 = vpop.f32.mrf.mxu0
      %v1533 = vadd.f32 0.0, %v1532
      %v1534 = vpop.f32.mrf.mxu0
      %v1535 = vpop.f32.mrf.mxu0
      %v1536 = vadd.f32 0.0, %v1535
      %v1537 = vpop.f32.mrf.mxu0
      %1538 = vmatprep.mubr.bf16.mxu0 0
      %1539 = vmatmul.mubr.bf16.gmra.mxu0 %v1426
      %v1540 = vpop.f32.mrf.mxu0
      %v1541 = vadd.f32 0.0, %v1540
      %v1542 = vpop.f32.mrf.mxu0
      %v1543 = vpop.f32.mrf.mxu0
      %v1544 = vadd.f32 0.0, %v1543
      %v1545 = vpop.f32.mrf.mxu0
      %1546 = vmatprep.mubr.bf16.mxu0 0
      %1547 = vmatmul.mubr.bf16.gmra.mxu0 %v1428
      %v1548 = vpop.f32.mrf.mxu0
      %v1549 = vadd.f32 0.0, %v1548
      %v1550 = vpop.f32.mrf.mxu0
      %v1551 = vpop.f32.mrf.mxu0
      %v1552 = vadd.f32 0.0, %v1551
      %v1553 = vpop.f32.mrf.mxu0
      %1554 = vdwg.mxu0
      %v1555 = vadd.f32 %v1351, %v1517
      %v1556 = vadd.f32 %v1352, %v1520
      %v1557 = vadd.f32 %v1353, %v1525
      %v1558 = vadd.f32 %v1354, %v1528
      %v1559 = vadd.f32 %v1355, %v1533
      %v1560 = vadd.f32 %v1356, %v1536
      %v1561 = vadd.f32 %v1357, %v1541
      %v1562 = vadd.f32 %v1358, %v1544
      %v1563 = vadd.f32 %v1359, %v1549
      %v1564 = vadd.f32 %v1360, %v1552
      %1565 = vst [vmem:[#allocation2] sm:$0xff] %v1555
      %1566 = vst [vmem:[#allocation2 + $0x8] sm:$0xff] %v1556
      %1567 = vst [vmem:[#allocation2 + $0x10] sm:$0xff] %v1557
      %1568 = vst [vmem:[#allocation2 + $0x18] sm:$0xff] %v1558
      %1569 = vst [vmem:[#allocation2 + $0x20] sm:$0xff] %v1559
      %1570 = vst [vmem:[#allocation2 + $0x28] sm:$0xff] %v1560
      %1571 = vst [vmem:[#allocation2 + $0x30] sm:$0xff] %v1561
      %1572 = vst [vmem:[#allocation2 + $0x38] sm:$0xff] %v1562
      %1573 = vst [vmem:[#allocation2 + $0x40] sm:$0xff] %v1563
      %1574 = vst [vmem:[#allocation2 + $0x48] sm:$0x3f] %v1564
      %v1575 = vld [vmem:[#allocation2] sm:$0xff]
      %v1576 = vld [vmem:[#allocation2 + $0x8] sm:$0xff]
      %v1577 = vld [vmem:[#allocation2 + $0x10] sm:$0xff]
      %v1578 = vld [vmem:[#allocation2 + $0x18] sm:$0xff]
      %v1579 = vld [vmem:[#allocation2 + $0x20] sm:$0xff]
      %v1580 = vld [vmem:[#allocation2 + $0x28] sm:$0xff]
      %v1581 = vld [vmem:[#allocation2 + $0x30] sm:$0xff]
      %v1582 = vld [vmem:[#allocation2 + $0x38] sm:$0xff]
      %v1583 = vld [vmem:[#allocation2 + $0x40] sm:$0xff]
      %v1584 = vld [vmem:[#allocation2 + $0x48] sm:$0x3f]
      %v1585 = vld [vmem:[%s207 + $0x8] sm:$0xc]
      %v1586 = vld [vmem:[%s207 + $0xc] sm:$0xf]
      %v1587 = vld [vmem:[%s207 + $0x10] sm:$0xf]
      %v1588 = vld [vmem:[%s207 + $0x14] sm:$0xf]
      %v1589 = vld [vmem:[%s207 + $0x18] sm:$0xf]
      %v1590 = vld [vmem:[%s207 + $0x1c] sm:$0xf]
      %v1591 = vld [vmem:[%s207 + $0x20] sm:$0xf]
      %v1592 = vld [vmem:[%s207 + $0x24] sm:$0xf]
      %v1593 = vld [vmem:[%s207 + $0x28] sm:$0xf]
      %v1594 = vld [vmem:[%s207 + $0x2c] sm:$0xf]
      %v1595 = vld [vmem:[%s207 + $0x30] sm:$0x1]
      %s1596 = scalar_lea.vmem %s1, 384
      %v1597 = vld [vmem:[%s1596] sm:$0xf]
      %v1598 = vld [vmem:[%s1596 + $0x4] sm:$0xf]
      %v1599 = vld [vmem:[%s1596 + $0x8] sm:$0xf]
      %v1600 = vld [vmem:[%s1596 + $0xc] sm:$0xf]
      %v1601 = vld [vmem:[%s1596 + $0x10] sm:$0xf]
      %v1602 = vld [vmem:[%s1596 + $0x14] sm:$0xf]
      %v1603 = vld [vmem:[%s1596 + $0x18] sm:$0xf]
      %v1604 = vld [vmem:[%s1596 + $0x1c] sm:$0xf]
      %v1605 = vld [vmem:[%s1596 + $0x20] sm:$0xf]
      %v1606 = vld [vmem:[%s1596 + $0x24] sm:$0xf]
      %v1607 = vld [vmem:[%s1596 + $0x28] sm:$0xf]
      %v1608 = vld [vmem:[%s1596 + $0x2c] sm:$0xf]
      %v1609 = vld [vmem:[%s1596 + $0x30] sm:$0xf]
      %v1610 = vld [vmem:[%s1596 + $0x34] sm:$0xf]
      %v1611 = vld [vmem:[%s1596 + $0x38] sm:$0xf]
      %v1612 = vld [vmem:[%s1596 + $0x3c] sm:$0xf]
      %v1624 = vunpack.c.l.b16 %v1585
      %v1625 = vunpack.c.l.b16 %v1586
      %v1626 = vunpack.c.l.b16 %v1587
      %v1627 = vunpack.c.l.b16 %v1588
      %v1628 = vunpack.c.l.b16 %v1589
      %v1629 = vunpack.c.l.b16 %v1590
      %v1630 = vunpack.c.l.b16 %v1591
      %v1631 = vunpack.c.l.b16 %v1592
      %v1632 = vunpack.c.l.b16 %v1593
      %v1633 = vunpack.c.l.b16 %v1594
      %v1634 = vunpack.c.l.b16 %v1595
      %v1635 = vpack.c.b16 %v1625, %v1624
      %v1636 = vpack.c.b16 %v1627, %v1626
      %v1637 = vpack.c.b16 %v1629, %v1628
      %v1638 = vpack.c.b16 %v1631, %v1630
      %v1639 = vpack.c.b16 %v1633, %v1632
      %v1640 = vpack.c.b16 %v1634, %v1634
      %v1641 = vrot.slane %v1635, 2
      %v1642 = vrot.slane %v1636, 2
      %v1643 = vsel %vm1417, %v1641, %v1642
      %v1644 = vrot.slane %v1637, 2
      %v1645 = vsel %vm1417, %v1642, %v1644
      %v1646 = vrot.slane %v1638, 2
      %v1647 = vsel %vm1417, %v1644, %v1646
      %v1648 = vrot.slane %v1639, 2
      %v1649 = vsel %vm1417, %v1646, %v1648
      %v1650 = vrot.slane %v1640, 2
      %v1651 = vsel %vm1417, %v1648, %v1650
      %v1673 = vunpack.c.l.b16 %v1597
      %v1674 = vunpack.c.l.b16 %v1598
      %v1675 = vunpack.c.l.b16 %v1599
      %v1676 = vunpack.c.l.b16 %v1600
      %v1677 = vunpack.c.l.b16 %v1601
      %v1678 = vunpack.c.l.b16 %v1602
      %v1679 = vunpack.c.l.b16 %v1603
      %v1680 = vunpack.c.l.b16 %v1604
      %v1681 = vunpack.c.l.b16 %v1605
      %v1682 = vunpack.c.l.b16 %v1606
      %v1683 = vunpack.c.l.b16 %v1607
      %v1684 = vunpack.c.l.b16 %v1608
      %v1685 = vunpack.c.l.b16 %v1609
      %v1686 = vunpack.c.l.b16 %v1610
      %v1687 = vunpack.c.l.b16 %v1611
      %v1688 = vunpack.c.l.b16 %v1612
      %v1689 = vpack.c.b16 %v1674, %v1673
      %v1690 = vpack.c.b16 %v1676, %v1675
      %v1691 = vpack.c.b16 %v1678, %v1677
      %v1692 = vpack.c.b16 %v1680, %v1679
      %v1693 = vpack.c.b16 %v1682, %v1681
      %v1694 = vpack.c.b16 %v1684, %v1683
      %v1695 = vpack.c.b16 %v1686, %v1685
      %v1696 = vpack.c.b16 %v1688, %v1687
      %1705 = vmatprep.subr.bf16.mxu0 0
      %1706 = vmatpush1.bf16.msra.mxu0 %v1696
      %1707 = vmatprep.subr.bf16.mxu0 0
      %1708 = vmatpush1.bf16.msra.mxu0 %v1695
      %1709 = vmatprep.subr.bf16.mxu0 0
      %1710 = vmatpush1.bf16.msra.mxu0 %v1694
      %1711 = vmatprep.subr.bf16.mxu0 0
      %1712 = vmatpush1.bf16.msra.mxu0 %v1693
      %1713 = vmatprep.subr.bf16.mxu0 0
      %1714 = vmatpush1.bf16.msra.mxu0 %v1692
      %1715 = vmatprep.subr.bf16.mxu0 0
      %1716 = vmatpush1.bf16.msra.mxu0 %v1691
      %1717 = vmatprep.subr.bf16.mxu0 0
      %1718 = vmatpush1.bf16.msra.mxu0 %v1690
      %1719 = vmatprep.subr.bf16.mxu0 0
      %1720 = vmatpush1.bf16.msra.mxu0 %v1689
      %1721 = vmatprep.subr.bf16.mxu0 0
      %1722 = vmatpush2.bf16.msra.mxu0 0
      %1723 = vmatprep.subr.bf16.mxu0 0
      %1724 = vmatpush2.bf16.msra.mxu0 0
      %1725 = vmatprep.subr.bf16.mxu0 0
      %1726 = vmatpush2.bf16.msra.mxu0 0
      %1727 = vmatprep.subr.bf16.mxu0 0
      %1728 = vmatpush2.bf16.msra.mxu0 0
      %1729 = vmatprep.subr.bf16.mxu0 0
      %1730 = vmatpush2.bf16.msra.mxu0 0
      %1731 = vmatprep.subr.bf16.mxu0 0
      %1732 = vmatpush2.bf16.msra.mxu0 0
      %1733 = vmatprep.subr.bf16.mxu0 0
      %1734 = vmatpush2.bf16.msra.mxu0 0
      %1735 = vmatprep.subr.bf16.mxu0 0
      %1736 = vmatpush2.bf16.msra.mxu0 0
      %1737 = vmatprep.mubr.bf16.mxu0 0
      %1738 = vmatmul.mubr.bf16.gmra.mxu0 %v1643
      %v1739 = vpop.f32.mrf.mxu0
      %v1740 = vadd.f32 0.0, %v1739
      %v1741 = vpop.f32.mrf.mxu0
      %v1742 = vpop.f32.mrf.mxu0
      %v1743 = vadd.f32 0.0, %v1742
      %v1744 = vpop.f32.mrf.mxu0
      %1745 = vmatprep.mubr.bf16.mxu0 0
      %1746 = vmatmul.mubr.bf16.gmra.mxu0 %v1645
      %v1747 = vpop.f32.mrf.mxu0
      %v1748 = vadd.f32 0.0, %v1747
      %v1749 = vpop.f32.mrf.mxu0
      %v1750 = vpop.f32.mrf.mxu0
      %v1751 = vadd.f32 0.0, %v1750
      %v1752 = vpop.f32.mrf.mxu0
      %1753 = vmatprep.mubr.bf16.mxu0 0
      %1754 = vmatmul.mubr.bf16.gmra.mxu0 %v1647
      %v1755 = vpop.f32.mrf.mxu0
      %v1756 = vadd.f32 0.0, %v1755
      %v1757 = vpop.f32.mrf.mxu0
      %v1758 = vpop.f32.mrf.mxu0
      %v1759 = vadd.f32 0.0, %v1758
      %v1760 = vpop.f32.mrf.mxu0
      %1761 = vmatprep.mubr.bf16.mxu0 0
      %1762 = vmatmul.mubr.bf16.gmra.mxu0 %v1649
      %v1763 = vpop.f32.mrf.mxu0
      %v1764 = vadd.f32 0.0, %v1763
      %v1765 = vpop.f32.mrf.mxu0
      %v1766 = vpop.f32.mrf.mxu0
      %v1767 = vadd.f32 0.0, %v1766
      %v1768 = vpop.f32.mrf.mxu0
      %1769 = vmatprep.mubr.bf16.mxu0 0
      %1770 = vmatmul.mubr.bf16.gmra.mxu0 %v1651
      %v1771 = vpop.f32.mrf.mxu0
      %v1772 = vadd.f32 0.0, %v1771
      %v1773 = vpop.f32.mrf.mxu0
      %v1774 = vpop.f32.mrf.mxu0
      %v1775 = vadd.f32 0.0, %v1774
      %v1776 = vpop.f32.mrf.mxu0
      %1777 = vdwg.mxu0
      %v1778 = vadd.f32 %v1575, %v1740
      %v1779 = vadd.f32 %v1576, %v1743
      %v1780 = vadd.f32 %v1577, %v1748
      %v1781 = vadd.f32 %v1578, %v1751
      %v1782 = vadd.f32 %v1579, %v1756
      %v1783 = vadd.f32 %v1580, %v1759
      %v1784 = vadd.f32 %v1581, %v1764
      %v1785 = vadd.f32 %v1582, %v1767
      %v1786 = vadd.f32 %v1583, %v1772
      %v1787 = vadd.f32 %v1584, %v1775
      %1788 = vst [vmem:[#allocation2] sm:$0xff] %v1778
      %1789 = vst [vmem:[#allocation2 + $0x8] sm:$0xff] %v1779
      %1790 = vst [vmem:[#allocation2 + $0x10] sm:$0xff] %v1780
      %1791 = vst [vmem:[#allocation2 + $0x18] sm:$0xff] %v1781
      %1792 = vst [vmem:[#allocation2 + $0x20] sm:$0xff] %v1782
      %1793 = vst [vmem:[#allocation2 + $0x28] sm:$0xff] %v1783
      %1794 = vst [vmem:[#allocation2 + $0x30] sm:$0xff] %v1784
      %1795 = vst [vmem:[#allocation2 + $0x38] sm:$0xff] %v1785
      %1796 = vst [vmem:[#allocation2 + $0x40] sm:$0xff] %v1786
      %1797 = vst [vmem:[#allocation2 + $0x48] sm:$0x3f] %v1787
      %v1798 = vld [vmem:[#allocation2] sm:$0xff]
      %v1799 = vld [vmem:[#allocation2 + $0x8] sm:$0xff]
      %v1800 = vld [vmem:[#allocation2 + $0x10] sm:$0xff]
      %v1801 = vld [vmem:[#allocation2 + $0x18] sm:$0xff]
      %v1802 = vld [vmem:[#allocation2 + $0x20] sm:$0xff]
      %v1803 = vld [vmem:[#allocation2 + $0x28] sm:$0xff]
      %v1804 = vld [vmem:[#allocation2 + $0x30] sm:$0xff]
      %v1805 = vld [vmem:[#allocation2 + $0x38] sm:$0xff]
      %v1806 = vld [vmem:[#allocation2 + $0x40] sm:$0xff]
      %v1807 = vld [vmem:[#allocation2 + $0x48] sm:$0x3f]
      %v1808 = vld [vmem:[%s207 + $0x8] sm:$0xc]
      %v1809 = vld [vmem:[%s207 + $0xc] sm:$0xf]
      %v1810 = vld [vmem:[%s207 + $0x10] sm:$0xf]
      %v1811 = vld [vmem:[%s207 + $0x14] sm:$0xf]
      %v1812 = vld [vmem:[%s207 + $0x18] sm:$0xf]
      %v1813 = vld [vmem:[%s207 + $0x1c] sm:$0xf]
      %v1814 = vld [vmem:[%s207 + $0x20] sm:$0xf]
      %v1815 = vld [vmem:[%s207 + $0x24] sm:$0xf]
      %v1816 = vld [vmem:[%s207 + $0x28] sm:$0xf]
      %v1817 = vld [vmem:[%s207 + $0x2c] sm:$0xf]
      %v1818 = vld [vmem:[%s207 + $0x30] sm:$0x3]
      %s1819 = scalar_lea.vmem %s1, 448
      %v1820 = vld [vmem:[%s1819] sm:$0xf]
      %v1821 = vld [vmem:[%s1819 + $0x4] sm:$0xf]
      %v1822 = vld [vmem:[%s1819 + $0x8] sm:$0xf]
      %v1823 = vld [vmem:[%s1819 + $0xc] sm:$0xf]
      %v1824 = vld [vmem:[%s1819 + $0x10] sm:$0xf]
      %v1825 = vld [vmem:[%s1819 + $0x14] sm:$0xf]
      %v1826 = vld [vmem:[%s1819 + $0x18] sm:$0xf]
      %v1827 = vld [vmem:[%s1819 + $0x1c] sm:$0xf]
      %v1828 = vld [vmem:[%s1819 + $0x20] sm:$0xf]
      %v1829 = vld [vmem:[%s1819 + $0x24] sm:$0xf]
      %v1830 = vld [vmem:[%s1819 + $0x28] sm:$0xf]
      %v1831 = vld [vmem:[%s1819 + $0x2c] sm:$0xf]
      %v1832 = vld [vmem:[%s1819 + $0x30] sm:$0xf]
      %v1833 = vld [vmem:[%s1819 + $0x34] sm:$0xf]
      %v1834 = vld [vmem:[%s1819 + $0x38] sm:$0xf]
      %v1835 = vld [vmem:[%s1819 + $0x3c] sm:$0xf]
      %v1847 = vunpack.c.l.b16 %v1808
      %v1848 = vunpack.c.l.b16 %v1809
      %v1849 = vunpack.c.l.b16 %v1810
      %v1850 = vunpack.c.l.b16 %v1811
      %v1851 = vunpack.c.l.b16 %v1812
      %v1852 = vunpack.c.l.b16 %v1813
      %v1853 = vunpack.c.l.b16 %v1814
      %v1854 = vunpack.c.l.b16 %v1815
      %v1855 = vunpack.c.l.b16 %v1816
      %v1856 = vunpack.c.l.b16 %v1817
      %v1857 = vunpack.c.l.b16 %v1818
      %v1858 = vpack.c.b16 %v1848, %v1847
      %v1859 = vpack.c.b16 %v1850, %v1849
      %v1860 = vpack.c.b16 %v1852, %v1851
      %v1861 = vpack.c.b16 %v1854, %v1853
      %v1862 = vpack.c.b16 %v1856, %v1855
      %v1863 = vpack.c.b16 %v1857, %v1857
      %vm1864 = vsmask.f32 5376
      %v1866 = vshrl.u32 %v1858, 16
      %v1868 = vrot.slane %v1866, 2
      %v1869 = vshll.u32 %v1858, 16
      %v1871 = vrot.slane %v1869, 3
      %v1872 = vor.u32 %v1868, %v1871
      %v1874 = vshrl.u32 %v1859, 16
      %v1876 = vrot.slane %v1874, 2
      %v1877 = vshll.u32 %v1859, 16
      %v1879 = vrot.slane %v1877, 3
      %v1880 = vor.u32 %v1876, %v1879
      %v1881 = vsel %vm1864, %v1872, %v1880
      %v1883 = vshrl.u32 %v1860, 16
      %v1885 = vrot.slane %v1883, 2
      %v1886 = vshll.u32 %v1860, 16
      %v1888 = vrot.slane %v1886, 3
      %v1889 = vor.u32 %v1885, %v1888
      %v1890 = vsel %vm1864, %v1880, %v1889
      %v1892 = vshrl.u32 %v1861, 16
      %v1894 = vrot.slane %v1892, 2
      %v1895 = vshll.u32 %v1861, 16
      %v1897 = vrot.slane %v1895, 3
      %v1898 = vor.u32 %v1894, %v1897
      %v1899 = vsel %vm1864, %v1889, %v1898
      %v1901 = vshrl.u32 %v1862, 16
      %v1903 = vrot.slane %v1901, 2
      %v1904 = vshll.u32 %v1862, 16
      %v1906 = vrot.slane %v1904, 3
      %v1907 = vor.u32 %v1903, %v1906
      %v1908 = vsel %vm1864, %v1898, %v1907
      %v1910 = vshrl.u32 %v1863, 16
      %v1912 = vrot.slane %v1910, 2
      %v1913 = vshll.u32 %v1863, 16
      %v1915 = vrot.slane %v1913, 3
      %v1916 = vor.u32 %v1912, %v1915
      %v1917 = vsel %vm1864, %v1907, %v1916
      %v1939 = vunpack.c.l.b16 %v1820
      %v1940 = vunpack.c.l.b16 %v1821
      %v1941 = vunpack.c.l.b16 %v1822
      %v1942 = vunpack.c.l.b16 %v1823
      %v1943 = vunpack.c.l.b16 %v1824
      %v1944 = vunpack.c.l.b16 %v1825
      %v1945 = vunpack.c.l.b16 %v1826
      %v1946 = vunpack.c.l.b16 %v1827
      %v1947 = vunpack.c.l.b16 %v1828
      %v1948 = vunpack.c.l.b16 %v1829
      %v1949 = vunpack.c.l.b16 %v1830
      %v1950 = vunpack.c.l.b16 %v1831
      %v1951 = vunpack.c.l.b16 %v1832
      %v1952 = vunpack.c.l.b16 %v1833
      %v1953 = vunpack.c.l.b16 %v1834
      %v1954 = vunpack.c.l.b16 %v1835
      %v1955 = vpack.c.b16 %v1940, %v1939
      %v1956 = vpack.c.b16 %v1942, %v1941
      %v1957 = vpack.c.b16 %v1944, %v1943
      %v1958 = vpack.c.b16 %v1946, %v1945
      %v1959 = vpack.c.b16 %v1948, %v1947
      %v1960 = vpack.c.b16 %v1950, %v1949
      %v1961 = vpack.c.b16 %v1952, %v1951
      %v1962 = vpack.c.b16 %v1954, %v1953
      %1971 = vmatprep.subr.bf16.mxu0 0
      %1972 = vmatpush1.bf16.msra.mxu0 %v1962
      %1973 = vmatprep.subr.bf16.mxu0 0
      %1974 = vmatpush1.bf16.msra.mxu0 %v1961
      %1975 = vmatprep.subr.bf16.mxu0 0
      %1976 = vmatpush1.bf16.msra.mxu0 %v1960
      %1977 = vmatprep.subr.bf16.mxu0 0
      %1978 = vmatpush1.bf16.msra.mxu0 %v1959
      %1979 = vmatprep.subr.bf16.mxu0 0
      %1980 = vmatpush1.bf16.msra.mxu0 %v1958
      %1981 = vmatprep.subr.bf16.mxu0 0
      %1982 = vmatpush1.bf16.msra.mxu0 %v1957
      %1983 = vmatprep.subr.bf16.mxu0 0
      %1984 = vmatpush1.bf16.msra.mxu0 %v1956
      %1985 = vmatprep.subr.bf16.mxu0 0
      %1986 = vmatpush1.bf16.msra.mxu0 %v1955
      %1987 = vmatprep.subr.bf16.mxu0 0
      %1988 = vmatpush2.bf16.msra.mxu0 0
      %1989 = vmatprep.subr.bf16.mxu0 0
      %1990 = vmatpush2.bf16.msra.mxu0 0
      %1991 = vmatprep.subr.bf16.mxu0 0
      %1992 = vmatpush2.bf16.msra.mxu0 0
      %1993 = vmatprep.subr.bf16.mxu0 0
      %1994 = vmatpush2.bf16.msra.mxu0 0
      %1995 = vmatprep.subr.bf16.mxu0 0
      %1996 = vmatpush2.bf16.msra.mxu0 0
      %1997 = vmatprep.subr.bf16.mxu0 0
      %1998 = vmatpush2.bf16.msra.mxu0 0
      %1999 = vmatprep.subr.bf16.mxu0 0
      %2000 = vmatpush2.bf16.msra.mxu0 0
      %2001 = vmatprep.subr.bf16.mxu0 0
      %2002 = vmatpush2.bf16.msra.mxu0 0
      %2003 = vmatprep.mubr.bf16.mxu0 0
      %2004 = vmatmul.mubr.bf16.gmra.mxu0 %v1881
      %v2005 = vpop.f32.mrf.mxu0
      %v2006 = vadd.f32 0.0, %v2005
      %v2007 = vpop.f32.mrf.mxu0
      %v2008 = vpop.f32.mrf.mxu0
      %v2009 = vadd.f32 0.0, %v2008
      %v2010 = vpop.f32.mrf.mxu0
      %2011 = vmatprep.mubr.bf16.mxu0 0
      %2012 = vmatmul.mubr.bf16.gmra.mxu0 %v1890
      %v2013 = vpop.f32.mrf.mxu0
      %v2014 = vadd.f32 0.0, %v2013
      %v2015 = vpop.f32.mrf.mxu0
      %v2016 = vpop.f32.mrf.mxu0
      %v2017 = vadd.f32 0.0, %v2016
      %v2018 = vpop.f32.mrf.mxu0
      %2019 = vmatprep.mubr.bf16.mxu0 0
      %2020 = vmatmul.mubr.bf16.gmra.mxu0 %v1899
      %v2021 = vpop.f32.mrf.mxu0
      %v2022 = vadd.f32 0.0, %v2021
      %v2023 = vpop.f32.mrf.mxu0
      %v2024 = vpop.f32.mrf.mxu0
      %v2025 = vadd.f32 0.0, %v2024
      %v2026 = vpop.f32.mrf.mxu0
      %2027 = vmatprep.mubr.bf16.mxu0 0
      %2028 = vmatmul.mubr.bf16.gmra.mxu0 %v1908
      %v2029 = vpop.f32.mrf.mxu0
      %v2030 = vadd.f32 0.0, %v2029
      %v2031 = vpop.f32.mrf.mxu0
      %v2032 = vpop.f32.mrf.mxu0
      %v2033 = vadd.f32 0.0, %v2032
      %v2034 = vpop.f32.mrf.mxu0
      %2035 = vmatprep.mubr.bf16.mxu0 0
      %2036 = vmatmul.mubr.bf16.gmra.mxu0 %v1917
      %v2037 = vpop.f32.mrf.mxu0
      %v2038 = vadd.f32 0.0, %v2037
      %v2039 = vpop.f32.mrf.mxu0
      %v2040 = vpop.f32.mrf.mxu0
      %v2041 = vadd.f32 0.0, %v2040
      %v2042 = vpop.f32.mrf.mxu0
      %2043 = vdwg.mxu0
      %v2044 = vadd.f32 %v1798, %v2006
      %v2045 = vadd.f32 %v1799, %v2009
      %v2046 = vadd.f32 %v1800, %v2014
      %v2047 = vadd.f32 %v1801, %v2017
      %v2048 = vadd.f32 %v1802, %v2022
      %v2049 = vadd.f32 %v1803, %v2025
      %v2050 = vadd.f32 %v1804, %v2030
      %v2051 = vadd.f32 %v1805, %v2033
      %v2052 = vadd.f32 %v1806, %v2038
      %v2053 = vadd.f32 %v1807, %v2041
      %2054 = vst [vmem:[#allocation2] sm:$0xff] %v2044
      %2055 = vst [vmem:[#allocation2 + $0x8] sm:$0xff] %v2045
      %2056 = vst [vmem:[#allocation2 + $0x10] sm:$0xff] %v2046
      %2057 = vst [vmem:[#allocation2 + $0x18] sm:$0xff] %v2047
      %2058 = vst [vmem:[#allocation2 + $0x20] sm:$0xff] %v2048
      %2059 = vst [vmem:[#allocation2 + $0x28] sm:$0xff] %v2049
      %2060 = vst [vmem:[#allocation2 + $0x30] sm:$0xff] %v2050
      %2061 = vst [vmem:[#allocation2 + $0x38] sm:$0xff] %v2051
      %2062 = vst [vmem:[#allocation2 + $0x40] sm:$0xff] %v2052
      %2063 = vst [vmem:[#allocation2 + $0x48] sm:$0x3f] %v2053
      %v2064 = vld [vmem:[#allocation2] sm:$0xff]
      %v2065 = vld [vmem:[#allocation2 + $0x8] sm:$0xff]
      %v2066 = vld [vmem:[#allocation2 + $0x10] sm:$0xff]
      %v2067 = vld [vmem:[#allocation2 + $0x18] sm:$0xff]
      %v2068 = vld [vmem:[#allocation2 + $0x20] sm:$0xff]
      %v2069 = vld [vmem:[#allocation2 + $0x28] sm:$0xff]
      %v2070 = vld [vmem:[#allocation2 + $0x30] sm:$0xff]
      %v2071 = vld [vmem:[#allocation2 + $0x38] sm:$0xff]
      %v2072 = vld [vmem:[#allocation2 + $0x40] sm:$0xff]
      %v2073 = vld [vmem:[#allocation2 + $0x48] sm:$0x3f]
      %v2074 = vld [vmem:[%s207 + $0x8] sm:$0x8]
      %v2075 = vld [vmem:[%s207 + $0xc] sm:$0xf]
      %v2076 = vld [vmem:[%s207 + $0x10] sm:$0xf]
      %v2077 = vld [vmem:[%s207 + $0x14] sm:$0xf]
      %v2078 = vld [vmem:[%s207 + $0x18] sm:$0xf]
      %v2079 = vld [vmem:[%s207 + $0x1c] sm:$0xf]
      %v2080 = vld [vmem:[%s207 + $0x20] sm:$0xf]
      %v2081 = vld [vmem:[%s207 + $0x24] sm:$0xf]
      %v2082 = vld [vmem:[%s207 + $0x28] sm:$0xf]
      %v2083 = vld [vmem:[%s207 + $0x2c] sm:$0xf]
      %v2084 = vld [vmem:[%s207 + $0x30] sm:$0x3]
      %s2085 = scalar_lea.vmem %s1, 512
      %v2086 = vld [vmem:[%s2085] sm:$0xf]
      %v2087 = vld [vmem:[%s2085 + $0x4] sm:$0xf]
      %v2088 = vld [vmem:[%s2085 + $0x8] sm:$0xf]
      %v2089 = vld [vmem:[%s2085 + $0xc] sm:$0xf]
      %v2090 = vld [vmem:[%s2085 + $0x10] sm:$0xf]
      %v2091 = vld [vmem:[%s2085 + $0x14] sm:$0xf]
      %v2092 = vld [vmem:[%s2085 + $0x18] sm:$0xf]
      %v2093 = vld [vmem:[%s2085 + $0x1c] sm:$0xf]
      %v2094 = vld [vmem:[%s2085 + $0x20] sm:$0xf]
      %v2095 = vld [vmem:[%s2085 + $0x24] sm:$0xf]
      %v2096 = vld [vmem:[%s2085 + $0x28] sm:$0xf]
      %v2097 = vld [vmem:[%s2085 + $0x2c] sm:$0xf]
      %v2098 = vld [vmem:[%s2085 + $0x30] sm:$0xf]
      %v2099 = vld [vmem:[%s2085 + $0x34] sm:$0xf]
      %v2100 = vld [vmem:[%s2085 + $0x38] sm:$0xf]
      %v2101 = vld [vmem:[%s2085 + $0x3c] sm:$0xf]
      %v2113 = vunpack.c.l.b16 %v2074
      %v2114 = vunpack.c.l.b16 %v2075
      %v2115 = vunpack.c.l.b16 %v2076
      %v2116 = vunpack.c.l.b16 %v2077
      %v2117 = vunpack.c.l.b16 %v2078
      %v2118 = vunpack.c.l.b16 %v2079
      %v2119 = vunpack.c.l.b16 %v2080
      %v2120 = vunpack.c.l.b16 %v2081
      %v2121 = vunpack.c.l.b16 %v2082
      %v2122 = vunpack.c.l.b16 %v2083
      %v2123 = vunpack.c.l.b16 %v2084
      %v2124 = vpack.c.b16 %v2114, %v2113
      %v2125 = vpack.c.b16 %v2116, %v2115
      %v2126 = vpack.c.b16 %v2118, %v2117
      %v2127 = vpack.c.b16 %v2120, %v2119
      %v2128 = vpack.c.b16 %v2122, %v2121
      %v2129 = vpack.c.b16 %v2123, %v2123
      %vm2130 = vcmask 1044480
      %v2131 = vrot.slane %v2124, 3
      %v2132 = vrot.slane %v2125, 3
      %v2133 = vsel %vm2130, %v2131, %v2132
      %v2134 = vrot.slane %v2126, 3
      %v2135 = vsel %vm2130, %v2132, %v2134
      %v2136 = vrot.slane %v2127, 3
      %v2137 = vsel %vm2130, %v2134, %v2136
      %v2138 = vrot.slane %v2128, 3
      %v2139 = vsel %vm2130, %v2136, %v2138
      %v2140 = vrot.slane %v2129, 3
      %v2141 = vsel %vm2130, %v2138, %v2140
      %v2163 = vunpack.c.l.b16 %v2086
      %v2164 = vunpack.c.l.b16 %v2087
      %v2165 = vunpack.c.l.b16 %v2088
      %v2166 = vunpack.c.l.b16 %v2089
      %v2167 = vunpack.c.l.b16 %v2090
      %v2168 = vunpack.c.l.b16 %v2091
      %v2169 = vunpack.c.l.b16 %v2092
      %v2170 = vunpack.c.l.b16 %v2093
      %v2171 = vunpack.c.l.b16 %v2094
      %v2172 = vunpack.c.l.b16 %v2095
      %v2173 = vunpack.c.l.b16 %v2096
      %v2174 = vunpack.c.l.b16 %v2097
      %v2175 = vunpack.c.l.b16 %v2098
      %v2176 = vunpack.c.l.b16 %v2099
      %v2177 = vunpack.c.l.b16 %v2100
      %v2178 = vunpack.c.l.b16 %v2101
      %v2179 = vpack.c.b16 %v2164, %v2163
      %v2180 = vpack.c.b16 %v2166, %v2165
      %v2181 = vpack.c.b16 %v2168, %v2167
      %v2182 = vpack.c.b16 %v2170, %v2169
      %v2183 = vpack.c.b16 %v2172, %v2171
      %v2184 = vpack.c.b16 %v2174, %v2173
      %v2185 = vpack.c.b16 %v2176, %v2175
      %v2186 = vpack.c.b16 %v2178, %v2177
      %2195 = vmatprep.subr.bf16.mxu0 0
      %2196 = vmatpush1.bf16.msra.mxu0 %v2186
      %2197 = vmatprep.subr.bf16.mxu0 0
      %2198 = vmatpush1.bf16.msra.mxu0 %v2185
      %2199 = vmatprep.subr.bf16.mxu0 0
      %2200 = vmatpush1.bf16.msra.mxu0 %v2184
      %2201 = vmatprep.subr.bf16.mxu0 0
      %2202 = vmatpush1.bf16.msra.mxu0 %v2183
      %2203 = vmatprep.subr.bf16.mxu0 0
      %2204 = vmatpush1.bf16.msra.mxu0 %v2182
      %2205 = vmatprep.subr.bf16.mxu0 0
      %2206 = vmatpush1.bf16.msra.mxu0 %v2181
      %2207 = vmatprep.subr.bf16.mxu0 0
      %2208 = vmatpush1.bf16.msra.mxu0 %v2180
      %2209 = vmatprep.subr.bf16.mxu0 0
      %2210 = vmatpush1.bf16.msra.mxu0 %v2179
      %2211 = vmatprep.subr.bf16.mxu0 0
      %2212 = vmatpush2.bf16.msra.mxu0 0
      %2213 = vmatprep.subr.bf16.mxu0 0
      %2214 = vmatpush2.bf16.msra.mxu0 0
      %2215 = vmatprep.subr.bf16.mxu0 0
      %2216 = vmatpush2.bf16.msra.mxu0 0
      %2217 = vmatprep.subr.bf16.mxu0 0
      %2218 = vmatpush2.bf16.msra.mxu0 0
      %2219 = vmatprep.subr.bf16.mxu0 0
      %2220 = vmatpush2.bf16.msra.mxu0 0
      %2221 = vmatprep.subr.bf16.mxu0 0
      %2222 = vmatpush2.bf16.msra.mxu0 0
      %2223 = vmatprep.subr.bf16.mxu0 0
      %2224 = vmatpush2.bf16.msra.mxu0 0
      %2225 = vmatprep.subr.bf16.mxu0 0
      %2226 = vmatpush2.bf16.msra.mxu0 0
      %2227 = vmatprep.mubr.bf16.mxu0 0
      %2228 = vmatmul.mubr.bf16.gmra.mxu0 %v2133
      %v2229 = vpop.f32.mrf.mxu0
      %v2230 = vadd.f32 0.0, %v2229
      %v2231 = vpop.f32.mrf.mxu0
      %v2232 = vpop.f32.mrf.mxu0
      %v2233 = vadd.f32 0.0, %v2232
      %v2234 = vpop.f32.mrf.mxu0
      %2235 = vmatprep.mubr.bf16.mxu0 0
      %2236 = vmatmul.mubr.bf16.gmra.mxu0 %v2135
      %v2237 = vpop.f32.mrf.mxu0
      %v2238 = vadd.f32 0.0, %v2237
      %v2239 = vpop.f32.mrf.mxu0
      %v2240 = vpop.f32.mrf.mxu0
      %v2241 = vadd.f32 0.0, %v2240
      %v2242 = vpop.f32.mrf.mxu0
      %2243 = vmatprep.mubr.bf16.mxu0 0
      %2244 = vmatmul.mubr.bf16.gmra.mxu0 %v2137
      %v2245 = vpop.f32.mrf.mxu0
      %v2246 = vadd.f32 0.0, %v2245
      %v2247 = vpop.f32.mrf.mxu0
      %v2248 = vpop.f32.mrf.mxu0
      %v2249 = vadd.f32 0.0, %v2248
      %v2250 = vpop.f32.mrf.mxu0
      %2251 = vmatprep.mubr.bf16.mxu0 0
      %2252 = vmatmul.mubr.bf16.gmra.mxu0 %v2139
      %v2253 = vpop.f32.mrf.mxu0
      %v2254 = vadd.f32 0.0, %v2253
      %v2255 = vpop.f32.mrf.mxu0
      %v2256 = vpop.f32.mrf.mxu0
      %v2257 = vadd.f32 0.0, %v2256
      %v2258 = vpop.f32.mrf.mxu0
      %2259 = vmatprep.mubr.bf16.mxu0 0
      %2260 = vmatmul.mubr.bf16.gmra.mxu0 %v2141
      %v2261 = vpop.f32.mrf.mxu0
      %v2262 = vadd.f32 0.0, %v2261
      %v2263 = vpop.f32.mrf.mxu0
      %v2264 = vpop.f32.mrf.mxu0
      %v2265 = vadd.f32 0.0, %v2264
      %v2266 = vpop.f32.mrf.mxu0
      %2267 = vdwg.mxu0
      %v2268 = vadd.f32 %v2064, %v2230
      %v2269 = vadd.f32 %v2065, %v2233
      %v2270 = vadd.f32 %v2066, %v2238
      %v2271 = vadd.f32 %v2067, %v2241
      %v2272 = vadd.f32 %v2068, %v2246
      %v2273 = vadd.f32 %v2069, %v2249
      %v2274 = vadd.f32 %v2070, %v2254
      %v2275 = vadd.f32 %v2071, %v2257
      %v2276 = vadd.f32 %v2072, %v2262
      %v2277 = vadd.f32 %v2073, %v2265
      %2278 = vst [vmem:[#allocation2] sm:$0xff] %v2268
      %2279 = vst [vmem:[#allocation2 + $0x8] sm:$0xff] %v2269
      %2280 = vst [vmem:[#allocation2 + $0x10] sm:$0xff] %v2270
      %2281 = vst [vmem:[#allocation2 + $0x18] sm:$0xff] %v2271
      %2282 = vst [vmem:[#allocation2 + $0x20] sm:$0xff] %v2272
      %2283 = vst [vmem:[#allocation2 + $0x28] sm:$0xff] %v2273
      %2284 = vst [vmem:[#allocation2 + $0x30] sm:$0xff] %v2274
      %2285 = vst [vmem:[#allocation2 + $0x38] sm:$0xff] %v2275
      %2286 = vst [vmem:[#allocation2 + $0x40] sm:$0xff] %v2276
      %2287 = vst [vmem:[#allocation2 + $0x48] sm:$0x3f] %v2277
      %v2288 = vld [vmem:[%s2] sm:$0x1]
      %v2289 = vld [vmem:[#allocation2] sm:$0xff]
      %v2291 = vlaneseq
      %v2292 = vshrl.u32 %v2291, 7
      %v2293 = vsub.s32 0, %v2292
      %v2294 = vrot.slane %v2288, %v2293
      %v2296 = vadd.f32 %v2289, %v2294
      %v2297 = vld [vmem:[%s212] sm:$0xf]
      %v2298 = vunpack.c.l.bf16 %v2297
      %v2299 = vadd.f32 %v2296, %v2298
      %v2300 = vmax.f32 %v2299, 0.0
      %2301 = vst [vmem:[%s217] sm:$0xff] %v2300
      %v2302 = vld [vmem:[#allocation2 + $0xa] sm:$0xff]
      %v2303 = vadd.f32 %v2302, %v2294
      %s2304 = scalar_lea.vmem %s212, 4
      %v2305 = vld [vmem:[%s2304] sm:$0xf]
      %v2306 = vunpack.c.l.bf16 %v2305
      %v2307 = vadd.f32 %v2303, %v2306
      %v2308 = vmax.f32 %v2307, 0.0
      %s2309 = scalar_lea.vmem %s217, 8
      %2310 = vst [vmem:[%s2309] sm:$0xff] %v2308
      %v2311 = vld [vmem:[#allocation2 + $0x14] sm:$0xff]
      %v2312 = vadd.f32 %v2311, %v2294
      %s2313 = scalar_lea.vmem %s212, 8
      %v2314 = vld [vmem:[%s2313] sm:$0xf]
      %v2315 = vunpack.c.l.bf16 %v2314
      %v2316 = vadd.f32 %v2312, %v2315
      %v2317 = vmax.f32 %v2316, 0.0
      %s2318 = scalar_lea.vmem %s217, 16
      %2319 = vst [vmem:[%s2318] sm:$0xff] %v2317
      %v2320 = vld [vmem:[#allocation2 + $0x1e] sm:$0xff]
      %v2321 = vadd.f32 %v2320, %v2294
      %s2322 = scalar_lea.vmem %s212, 12
      %v2323 = vld [vmem:[%s2322] sm:$0xf]
      %v2324 = vunpack.c.l.bf16 %v2323
      %v2325 = vadd.f32 %v2321, %v2324
      %v2326 = vmax.f32 %v2325, 0.0
      %s2327 = scalar_lea.vmem %s217, 24
      %2328 = vst [vmem:[%s2327] sm:$0xff] %v2326
      %v2329 = vld [vmem:[#allocation2 + $0x28] sm:$0xff]
      %v2330 = vadd.f32 %v2329, %v2294
      %s2331 = scalar_lea.vmem %s212, 16
      %v2332 = vld [vmem:[%s2331] sm:$0xf]
      %v2333 = vunpack.c.l.bf16 %v2332
      %v2334 = vadd.f32 %v2330, %v2333
      %v2335 = vmax.f32 %v2334, 0.0
      %s2336 = scalar_lea.vmem %s217, 32
      %2337 = vst [vmem:[%s2336] sm:$0xff] %v2335
      %v2338 = vld [vmem:[#allocation2 + $0x32] sm:$0xff]
      %v2339 = vadd.f32 %v2338, %v2294
      %s2340 = scalar_lea.vmem %s212, 20
      %v2341 = vld [vmem:[%s2340] sm:$0xf]
      %v2342 = vunpack.c.l.bf16 %v2341
      %v2343 = vadd.f32 %v2339, %v2342
      %v2344 = vmax.f32 %v2343, 0.0
      %s2345 = scalar_lea.vmem %s217, 40
      %2346 = vst [vmem:[%s2345] sm:$0xff] %v2344
      %v2347 = vld [vmem:[#allocation2 + $0x3c] sm:$0xff]
      %v2348 = vadd.f32 %v2347, %v2294
      %s2349 = scalar_lea.vmem %s212, 24
      %v2350 = vld [vmem:[%s2349] sm:$0xf]
      %v2351 = vunpack.c.l.bf16 %v2350
      %v2352 = vadd.f32 %v2348, %v2351
      %v2353 = vmax.f32 %v2352, 0.0
      %s2354 = scalar_lea.vmem %s217, 48
      %2355 = vst [vmem:[%s2354] sm:$0xff] %v2353
      %v2356 = vld [vmem:[#allocation2 + $0x46] sm:$0xff]
      %v2357 = vadd.f32 %v2356, %v2294
      %s2358 = scalar_lea.vmem %s212, 28
      %v2359 = vld [vmem:[%s2358] sm:$0xf]
      %v2360 = vunpack.c.l.bf16 %v2359
      %v2361 = vadd.f32 %v2357, %v2360
      %v2362 = vmax.f32 %v2361, 0.0
      %s2363 = scalar_lea.vmem %s217, 56
      %2364 = vst [vmem:[%s2363] sm:$0xff] %v2362
      %p2365 = scmp.lt.s32.totalorder %s15, 1
      %s2366 = scalar_select %p2365, %s15, 1
      %s2367 = smul.addr %s2366, 8
      %s2368 = smul.addr %s2367, 8
      %s2369 = scalar_lea.vmem %s4, %s2368
      // Predicated region
      $region37: #{basic_block_forward.5} parent=35 // pred_check
        %p2370 = pneg %p127
      $region38: #{basic_block_forward.5} parent=35 // pred_check_branch
        %2372 = sbr.rel (%p2370) target = $region40
      $region39: #{basic_block_forward.5} parent=35 // pred_region
        _
      $region40: #{basic_block_forward.5} parent=35 // pred_fallthru
        _
    $region36: #{basic_block_forward.5} parent=5 // pred_fallthru
      _
    %p2373 = scmp.le.s32.totalorder 2, %s10
    // Predicated region
    $region41: #{basic_block_forward.5} parent=5 // pred_check
      %p2374 = pneg %p2373
    $region42: #{basic_block_forward.5} parent=5 // pred_check_branch
      %2376 = sbr.rel (%p2374) target = $region44
    $region43: #{basic_block_forward.5} parent=5 // pred_region
      %s2377 = ssub.s32 %s10, 2
      // Predicated region
      $region45: #{basic_block_forward.5} parent=43 // pred_check
        %p2378 = pneg %p133
      $region46: #{basic_block_forward.5} parent=43 // pred_check_branch
        %2380 = sbr.rel (%p2378) target = $region48
      $region47: #{basic_block_forward.5} parent=43 // pred_region
        %p2381 = scmp.lt.s32.totalorder %s16, 1
        %s2382 = scalar_select %p2381, %s16, 1
        %s2383 = smul.addr %s2382, 8
        %s2384 = smul.addr %s2383, 8
        %s2385 = scalar_lea.vmem %s4, %s2384
      $region48: #{basic_block_forward.5} parent=43 // pred_fallthru
        _
    $region44: #{basic_block_forward.5} parent=5 // pred_fallthru
      _
  $region6: #{basic_block_forward.5} parent=0 // loop_footer
    %s14 = sadd.s32 1, %s10
  $region7: #{basic_block_forward.5} parent=0 // loop_footer_branch
    %9 = sbr.rel target = $region3
  $region8: #{basic_block_forward.5} parent=0 // loop_exit
    _

// kernel: basic_block_forward.3
$region0: #{basic_block_forward.3}
  #allocation0 [shape = 'u32[]', space=smem, size = 0x4, offset = 0x4, fixed_abs, tag = 'smem constant byte address 0x4 - core index']
  #allocation1 [shape = 'u32[144,128]{1,0:T(1,128)}', space=vmem, size = 0x12000, scoped, tag = 'internal scratch']
  #allocation2 [shape = 'f32[286,128]{1,0:T(8,128)}', space=vmem, size = 0x24000, scoped, tag = 'scratch operand']
  %s0 = inlined_call_operand.vmem [shape: bf16[2,324,128], index: 0, kind: input, shape index: {}]
  %s1 = inlined_call_operand.vmem [shape: bf16[9,128,128], index: 1, kind: input, shape index: {}]
  %s2 = inlined_call_operand.vmem [shape: f32[1,128], index: 2, kind: input, shape index: {}]
  %s3 = inlined_call_operand.vmem [shape: bf16[2,16,16,128], index: 3, kind: output, shape index: {}]
  %s4 = sld [smem:[#allocation0]]
  $region45: #{basic_block_forward.3} parent=0
    _
  %s6 = ssub.s32 1, %s4
  %s7 = scalar_select 0, %s6, %s4
  loop: start=0, step=1, limit=4
  $region2: #{basic_block_forward.3} parent=0 // loop_pre_header
    _
  $region3: #{basic_block_forward.3} parent=0 // loop_header
    %s9 = sphi 0, %s13
    %p10 = scmp.ge.s32.totalorder %s9, 4
    %s19 = sphi 0, %s21
    %s22 = sphi 0, %s19
    %s23 = sphi 0, %s22
    %s39 = sphi 0, %s23
    %s43 = sphi 0, %s43
    %s45 = sphi 0, %s43
    %s46 = sphi 0, %s45
    %s60 = sphi 0, %s46
    %s64 = sphi 0, %s64
    %s66 = sphi 0, %s64
    %s67 = sphi 0, %s66
    %s81 = sphi 0, %s67
    %s87 = sphi 0, %s89
    %s90 = sphi 0, %s87
    %s91 = sphi 0, %s90
    %s107 = sphi 0, %s91
  $region4: #{basic_block_forward.3} parent=0 // loop_header_branch
    %12 = sbr.rel (%p10) target = $region8
  $region5: #{basic_block_forward.3} parent=0 // loop_body
    %s14 = ssub.s32 %s9, 1
    %s15 = ssub.s32 %s9, 2
    %s16 = sadd.s32 %s9, 1
    %s17 = ssub.s32 %s9, %s16
    %p18 = scmp.eq.s32.totalorder %s17, 0
    %s20 = sadd.s32 %s19, 1
    %s21 = scalar_select %p18, %s19, %s20
    %p24 = pneg %p18
    %p25 = scmp.eq.s32.totalorder %s9, 1
    %p26 = por %p24, %p25
    %p27 = scmp.ne.s32.totalorder %s19, %s22
    %p28 = scmp.eq.s32.totalorder %s9, 0
    %p29 = por %p27, %p28
    %p30 = scmp.ne.s32.totalorder %s19, %s22
    %p31 = scmp.eq.s32.totalorder %s14, 1
    %p32 = por %p30, %p31
    %p33 = scmp.ne.s32.totalorder %s22, %s23
    %p34 = scmp.eq.s32.totalorder %s14, 0
    %p35 = por %p33, %p34
    %p36 = scmp.ne.s32.totalorder %s22, %s23
    %p37 = scmp.eq.s32.totalorder %s15, 1
    %p38 = por %p36, %p37
    %p40 = scmp.ne.s32.totalorder %s23, %s39
    %p41 = scmp.eq.s32.totalorder %s15, 0
    %p42 = por %p40, %p41
    %s44 = sadd.s32 %s43, 1
    %p47 = scmp.eq.s32.totalorder %s9, 1
    %p48 = scmp.ne.s32.totalorder %s43, %s45
    %p49 = scmp.eq.s32.totalorder %s9, 0
    %p50 = por %p48, %p49
    %p51 = scmp.ne.s32.totalorder %s43, %s45
    %p52 = scmp.eq.s32.totalorder %s14, 1
    %p53 = por %p51, %p52
    %p54 = scmp.ne.s32.totalorder %s45, %s46
    %p55 = scmp.eq.s32.totalorder %s14, 0
    %p56 = por %p54, %p55
    %p57 = scmp.ne.s32.totalorder %s45, %s46
    %p58 = scmp.eq.s32.totalorder %s15, 1
    %p59 = por %p57, %p58
    %p61 = scmp.ne.s32.totalorder %s46, %s60
    %p62 = scmp.eq.s32.totalorder %s15, 0
    %p63 = por %p61, %p62
    %s65 = sadd.s32 %s64, 1
    %p68 = scmp.eq.s32.totalorder %s9, 1
    %p69 = scmp.ne.s32.totalorder %s64, %s66
    %p70 = scmp.eq.s32.totalorder %s9, 0
    %p71 = por %p69, %p70
    %p72 = scmp.ne.s32.totalorder %s64, %s66
    %p73 = scmp.eq.s32.totalorder %s14, 1
    %p74 = por %p72, %p73
    %p75 = scmp.ne.s32.totalorder %s66, %s67
    %p76 = scmp.eq.s32.totalorder %s14, 0
    %p77 = por %p75, %p76
    %p78 = scmp.ne.s32.totalorder %s66, %s67
    %p79 = scmp.eq.s32.totalorder %s15, 1
    %p80 = por %p78, %p79
    %p82 = scmp.ne.s32.totalorder %s67, %s81
    %p83 = scmp.eq.s32.totalorder %s15, 0
    %p84 = por %p82, %p83
    %s85 = ssub.s32 %s9, %s16
    %p86 = scmp.eq.s32.totalorder %s85, 0
    %s88 = sadd.s32 %s87, 1
    %s89 = scalar_select %p86, %s87, %s88
    %p92 = pneg %p86
    %p93 = scmp.eq.s32.totalorder %s9, 1
    %p94 = por %p92, %p93
    %p95 = scmp.ne.s32.totalorder %s87, %s90
    %p96 = scmp.eq.s32.totalorder %s9, 0
    %p97 = por %p95, %p96
    %p98 = scmp.ne.s32.totalorder %s87, %s90
    %p99 = scmp.eq.s32.totalorder %s14, 1
    %p100 = por %p98, %p99
    %p101 = scmp.ne.s32.totalorder %s90, %s91
    %p102 = scmp.eq.s32.totalorder %s14, 0
    %p103 = por %p101, %p102
    %p104 = scmp.ne.s32.totalorder %s90, %s91
    %p105 = scmp.eq.s32.totalorder %s15, 1
    %p106 = por %p104, %p105
    %p108 = scmp.ne.s32.totalorder %s91, %s107
    %p109 = scmp.eq.s32.totalorder %s15, 0
    %p110 = por %p108, %p109
    %p111 = scmp.le.s32.totalorder 1, %s9
    %p112 = scmp.lt.s32.totalorder %s9, 3
    %p113 = pnand %p111, %p112
    %p114 = pneg %p113
    // Predicated region
    $region9: #{basic_block_forward.3} parent=5 // pred_check
      _
    $region10: #{basic_block_forward.3} parent=5 // pred_check_branch
      %116 = sbr.rel (%p113) target = $region12
    $region11: #{basic_block_forward.3} parent=5 // pred_region
      %s117 = ssub.s32 %s9, 1
      // Predicated region
      $region13: #{basic_block_forward.3} parent=11 // pred_check
        %p118 = pneg %p56
      $region14: #{basic_block_forward.3} parent=11 // pred_check_branch
        %120 = sbr.rel (%p118) target = $region16
      $region15: #{basic_block_forward.3} parent=11 // pred_region
        _
      $region16: #{basic_block_forward.3} parent=11 // pred_fallthru
        _
      // Predicated region
      $region17: #{basic_block_forward.3} parent=11 // pred_check
        %p121 = pneg %p77
      $region18: #{basic_block_forward.3} parent=11 // pred_check_branch
        %123 = sbr.rel (%p121) target = $region20
      $region19: #{basic_block_forward.3} parent=11 // pred_region
        _
      $region20: #{basic_block_forward.3} parent=11 // pred_fallthru
        _
    $region12: #{basic_block_forward.3} parent=5 // pred_fallthru
      _
    %p124 = scmp.lt.s32.totalorder %s9, 2
    // Predicated region
    $region21: #{basic_block_forward.3} parent=5 // pred_check
      %p125 = pneg %p124
    $region22: #{basic_block_forward.3} parent=5 // pred_check_branch
      %127 = sbr.rel (%p125) target = $region24
    $region23: #{basic_block_forward.3} parent=5 // pred_region
      // Predicated region
      $region25: #{basic_block_forward.3} parent=23 // pred_check
        %p128 = pneg %p29
      $region26: #{basic_block_forward.3} parent=23 // pred_check_branch
        %130 = sbr.rel (%p128) target = $region28
      $region27: #{basic_block_forward.3} parent=23 // pred_region
        %p131 = scmp.lt.s32.totalorder %s9, 1
        %s132 = scalar_select %p131, %s9, 1
        %s133 = smul.addr %s132, 41
        %s134 = smul.addr %s133, 4
        %s135 = scalar_lea.vmem %s0, %s134
      $region28: #{basic_block_forward.3} parent=23 // pred_fallthru
        _
    $region24: #{basic_block_forward.3} parent=5 // pred_fallthru
      _
    %p136 = scmp.le.s32.totalorder 1, %s9
    %p137 = scmp.lt.s32.totalorder %s9, 3
    %p138 = pnand %p136, %p137
    %p139 = pneg %p138
    // Predicated region
    $region29: #{basic_block_forward.3} parent=5 // pred_check
      _
    $region30: #{basic_block_forward.3} parent=5 // pred_check_branch
      %141 = sbr.rel (%p138) target = $region32
    $region31: #{basic_block_forward.3} parent=5 // pred_region
      %s142 = ssub.s32 %s9, 1
      %p143 = scmp.lt.s32.totalorder %s14, 1
      %s144 = scalar_select %p143, %s14, 1
      %s145 = smul.addr %s144, 41
      %s146 = smul.addr %s145, 4
      %s147 = scalar_lea.vmem %s0, %s146
      %p148 = pneg %p35
      %p149 = pneg %p32
      %p150 = pneg %p56
      %p151 = pneg %p53
      %p152 = pneg %p77
      %p153 = pneg %p74
      %p154 = pneg %p103
      %p155 = pneg %p100
      %p156 = scmp.lt.s32.totalorder %s14, 1
      %s157 = scalar_select %p156, %s14, 1
      %s158 = smul.addr %s157, 32
      %s159 = smul.addr %s158, 4
      %s160 = scalar_lea.vmem %s3, %s159
      %p161 = scmp.lt.s32.totalorder %s14, 1
      %s162 = scalar_select %p161, %s14, 1
      %s163 = smul.addr %s162, 41
      %s164 = smul.addr %s163, 4
      %s165 = scalar_lea.vmem %s0, %s164
      %p166 = scmp.lt.s32.totalorder %s14, 1
      %s167 = scalar_select %p166, %s14, 1
      %s168 = smul.addr %s167, 32
      %s169 = smul.addr %s168, 4
      %s170 = scalar_lea.vmem %s3, %s169
      %v172 = vld [vmem:[%s165] sm:$0xf]
      %v173 = vld [vmem:[%s165 + $0x4] sm:$0xf]
      %v174 = vld [vmem:[%s165 + $0x8] sm:$0xf]
      %v175 = vld [vmem:[%s165 + $0xc] sm:$0xf]
      %v176 = vld [vmem:[%s165 + $0x10] sm:$0xf]
      %v177 = vld [vmem:[%s165 + $0x14] sm:$0xf]
      %v178 = vld [vmem:[%s165 + $0x18] sm:$0xf]
      %v179 = vld [vmem:[%s165 + $0x1c] sm:$0xf]
      %v180 = vld [vmem:[%s165 + $0x20] sm:$0xf]
      %v181 = vld [vmem:[%s165 + $0x24] sm:$0xf]
      %v182 = vld [vmem:[%s165 + $0x28] sm:$0xf]
      %v183 = vld [vmem:[%s165 + $0x2c] sm:$0xf]
      %v184 = vld [vmem:[%s165 + $0x30] sm:$0xf]
      %v185 = vld [vmem:[%s165 + $0x34] sm:$0xf]
      %v186 = vld [vmem:[%s165 + $0x38] sm:$0xf]
      %v187 = vld [vmem:[%s165 + $0x3c] sm:$0xf]
      %v188 = vld [vmem:[%s165 + $0x40] sm:$0xf]
      %v189 = vld [vmem:[%s165 + $0x44] sm:$0xf]
      %v190 = vld [vmem:[%s165 + $0x48] sm:$0xf]
      %v191 = vld [vmem:[%s165 + $0x4c] sm:$0xf]
      %v192 = vld [vmem:[%s165 + $0x50] sm:$0xf]
      %v193 = vld [vmem:[%s165 + $0x54] sm:$0xf]
      %v194 = vld [vmem:[%s165 + $0x58] sm:$0xf]
      %v195 = vld [vmem:[%s165 + $0x5c] sm:$0xf]
      %v196 = vld [vmem:[%s165 + $0x60] sm:$0xf]
      %v197 = vld [vmem:[%s165 + $0x64] sm:$0xf]
      %v198 = vld [vmem:[%s165 + $0x68] sm:$0xf]
      %v199 = vld [vmem:[%s165 + $0x6c] sm:$0xf]
      %v200 = vld [vmem:[%s165 + $0x70] sm:$0xf]
      %v201 = vld [vmem:[%s165 + $0x74] sm:$0xf]
      %v202 = vld [vmem:[%s165 + $0x78] sm:$0xf]
      %v203 = vld [vmem:[%s165 + $0x7c] sm:$0xf]
      %v204 = vld [vmem:[%s165 + $0x80] sm:$0xf]
      %v205 = vld [vmem:[%s165 + $0x84] sm:$0xf]
      %v206 = vld [vmem:[%s165 + $0x88] sm:$0xf]
      %v207 = vld [vmem:[%s165 + $0x8c] sm:$0x7]
      %v208 = vld [vmem:[%s1] sm:$0xf]
      %v209 = vld [vmem:[%s1 + $0x4] sm:$0xf]
      %v210 = vld [vmem:[%s1 + $0x8] sm:$0xf]
      %v211 = vld [vmem:[%s1 + $0xc] sm:$0xf]
      %v212 = vld [vmem:[%s1 + $0x10] sm:$0xf]
      %v213 = vld [vmem:[%s1 + $0x14] sm:$0xf]
      %v214 = vld [vmem:[%s1 + $0x18] sm:$0xf]
      %v215 = vld [vmem:[%s1 + $0x1c] sm:$0xf]
      %v216 = vld [vmem:[%s1 + $0x20] sm:$0xf]
      %v217 = vld [vmem:[%s1 + $0x24] sm:$0xf]
      %v218 = vld [vmem:[%s1 + $0x28] sm:$0xf]
      %v219 = vld [vmem:[%s1 + $0x2c] sm:$0xf]
      %v220 = vld [vmem:[%s1 + $0x30] sm:$0xf]
      %v221 = vld [vmem:[%s1 + $0x34] sm:$0xf]
      %v222 = vld [vmem:[%s1 + $0x38] sm:$0xf]
      %v223 = vld [vmem:[%s1 + $0x3c] sm:$0xf]
      %v260 = vunpack.c.l.b16 %v172
      %v261 = vunpack.c.l.b16 %v173
      %v262 = vunpack.c.l.b16 %v174
      %v263 = vunpack.c.l.b16 %v175
      %v264 = vunpack.c.l.b16 %v176
      %v265 = vunpack.c.l.b16 %v177
      %v266 = vunpack.c.l.b16 %v178
      %v267 = vunpack.c.l.b16 %v179
      %v268 = vunpack.c.l.b16 %v180
      %v269 = vunpack.c.l.b16 %v181
      %v270 = vunpack.c.l.b16 %v182
      %v271 = vunpack.c.l.b16 %v183
      %v272 = vunpack.c.l.b16 %v184
      %v273 = vunpack.c.l.b16 %v185
      %v274 = vunpack.c.l.b16 %v186
      %v275 = vunpack.c.l.b16 %v187
      %v276 = vunpack.c.l.b16 %v188
      %v277 = vunpack.c.l.b16 %v189
      %v278 = vunpack.c.l.b16 %v190
      %v279 = vunpack.c.l.b16 %v191
      %v280 = vunpack.c.l.b16 %v192
      %v281 = vunpack.c.l.b16 %v193
      %v282 = vunpack.c.l.b16 %v194
      %v283 = vunpack.c.l.b16 %v195
      %v284 = vunpack.c.l.b16 %v196
      %v285 = vunpack.c.l.b16 %v197
      %v286 = vunpack.c.l.b16 %v198
      %v287 = vunpack.c.l.b16 %v199
      %v288 = vunpack.c.l.b16 %v200
      %v289 = vunpack.c.l.b16 %v201
      %v290 = vunpack.c.l.b16 %v202
      %v291 = vunpack.c.l.b16 %v203
      %v292 = vunpack.c.l.b16 %v204
      %v293 = vunpack.c.l.b16 %v205
      %v294 = vunpack.c.l.b16 %v206
      %v295 = vunpack.c.l.b16 %v207
      %v296 = vpack.c.b16 %v261, %v260
      %v297 = vpack.c.b16 %v263, %v262
      %v298 = vpack.c.b16 %v265, %v264
      %v299 = vpack.c.b16 %v267, %v266
      %v300 = vpack.c.b16 %v269, %v268
      %v301 = vpack.c.b16 %v271, %v270
      %v302 = vpack.c.b16 %v273, %v272
      %v303 = vpack.c.b16 %v275, %v274
      %v304 = vpack.c.b16 %v277, %v276
      %v305 = vpack.c.b16 %v279, %v278
      %v306 = vpack.c.b16 %v281, %v280
      %v307 = vpack.c.b16 %v283, %v282
      %v308 = vpack.c.b16 %v285, %v284
      %v309 = vpack.c.b16 %v287, %v286
      %v310 = vpack.c.b16 %v289, %v288
      %v311 = vpack.c.b16 %v291, %v290
      %v312 = vpack.c.b16 %v293, %v292
      %v313 = vpack.c.b16 %v295, %v294
      %v348 = vunpack.c.l.b16 %v208
      %v349 = vunpack.c.l.b16 %v209
      %v350 = vunpack.c.l.b16 %v210
      %v351 = vunpack.c.l.b16 %v211
      %v352 = vunpack.c.l.b16 %v212
      %v353 = vunpack.c.l.b16 %v213
      %v354 = vunpack.c.l.b16 %v214
      %v355 = vunpack.c.l.b16 %v215
      %v356 = vunpack.c.l.b16 %v216
      %v357 = vunpack.c.l.b16 %v217
      %v358 = vunpack.c.l.b16 %v218
      %v359 = vunpack.c.l.b16 %v219
      %v360 = vunpack.c.l.b16 %v220
      %v361 = vunpack.c.l.b16 %v221
      %v362 = vunpack.c.l.b16 %v222
      %v363 = vunpack.c.l.b16 %v223
      %v364 = vpack.c.b16 %v349, %v348
      %v365 = vpack.c.b16 %v351, %v350
      %v366 = vpack.c.b16 %v353, %v352
      %v367 = vpack.c.b16 %v355, %v354
      %v368 = vpack.c.b16 %v357, %v356
      %v369 = vpack.c.b16 %v359, %v358
      %v370 = vpack.c.b16 %v361, %v360
      %v371 = vpack.c.b16 %v363, %v362
      %380 = vmatprep.subr.bf16.mxu0 0
      %381 = vmatpush1.bf16.msra.mxu0 %v371
      %382 = vmatprep.subr.bf16.mxu0 0
      %383 = vmatpush1.bf16.msra.mxu0 %v370
      %384 = vmatprep.subr.bf16.mxu0 0
      %385 = vmatpush1.bf16.msra.mxu0 %v369
      %386 = vmatprep.subr.bf16.mxu0 0
      %387 = vmatpush1.bf16.msra.mxu0 %v368
      %388 = vmatprep.subr.bf16.mxu0 0
      %389 = vmatpush1.bf16.msra.mxu0 %v367
      %390 = vmatprep.subr.bf16.mxu0 0
      %391 = vmatpush1.bf16.msra.mxu0 %v366
      %392 = vmatprep.subr.bf16.mxu0 0
      %393 = vmatpush1.bf16.msra.mxu0 %v365
      %394 = vmatprep.subr.bf16.mxu0 0
      %395 = vmatpush1.bf16.msra.mxu0 %v364
      %396 = vmatprep.subr.bf16.mxu0 0
      %397 = vmatpush2.bf16.msra.mxu0 0
      %398 = vmatprep.subr.bf16.mxu0 0
      %399 = vmatpush2.bf16.msra.mxu0 0
      %400 = vmatprep.subr.bf16.mxu0 0
      %401 = vmatpush2.bf16.msra.mxu0 0
      %402 = vmatprep.subr.bf16.mxu0 0
      %403 = vmatpush2.bf16.msra.mxu0 0
      %404 = vmatprep.subr.bf16.mxu0 0
      %405 = vmatpush2.bf16.msra.mxu0 0
      %406 = vmatprep.subr.bf16.mxu0 0
      %407 = vmatpush2.bf16.msra.mxu0 0
      %408 = vmatprep.subr.bf16.mxu0 0
      %409 = vmatpush2.bf16.msra.mxu0 0
      %410 = vmatprep.subr.bf16.mxu0 0
      %411 = vmatpush2.bf16.msra.mxu0 0
      %412 = vmatprep.mubr.bf16.mxu0 0
      %413 = vmatmul.mubr.bf16.gmra.mxu0 %v296
      %v414 = vpop.f32.mrf.mxu0
      %v415 = vadd.f32 0.0, %v414
      %v416 = vpop.f32.mrf.mxu0
      %v417 = vpop.f32.mrf.mxu0
      %v418 = vadd.f32 0.0, %v417
      %v419 = vpop.f32.mrf.mxu0
      %420 = vmatprep.mubr.bf16.mxu0 0
      %421 = vmatmul.mubr.bf16.gmra.mxu0 %v297
      %v422 = vpop.f32.mrf.mxu0
      %v423 = vadd.f32 0.0, %v422
      %v424 = vpop.f32.mrf.mxu0
      %v425 = vpop.f32.mrf.mxu0
      %v426 = vadd.f32 0.0, %v425
      %v427 = vpop.f32.mrf.mxu0
      %428 = vmatprep.mubr.bf16.mxu0 0
      %429 = vmatmul.mubr.bf16.gmra.mxu0 %v298
      %v430 = vpop.f32.mrf.mxu0
      %v431 = vadd.f32 0.0, %v430
      %v432 = vpop.f32.mrf.mxu0
      %v433 = vpop.f32.mrf.mxu0
      %v434 = vadd.f32 0.0, %v433
      %v435 = vpop.f32.mrf.mxu0
      %436 = vmatprep.mubr.bf16.mxu0 0
      %437 = vmatmul.mubr.bf16.gmra.mxu0 %v299
      %v438 = vpop.f32.mrf.mxu0
      %v439 = vadd.f32 0.0, %v438
      %v440 = vpop.f32.mrf.mxu0
      %v441 = vpop.f32.mrf.mxu0
      %v442 = vadd.f32 0.0, %v441
      %v443 = vpop.f32.mrf.mxu0
      %444 = vmatprep.mubr.bf16.mxu0 0
      %445 = vmatmul.mubr.bf16.gmra.mxu0 %v300
      %v446 = vpop.f32.mrf.mxu0
      %v447 = vadd.f32 0.0, %v446
      %v448 = vpop.f32.mrf.mxu0
      %v449 = vpop.f32.mrf.mxu0
      %v450 = vadd.f32 0.0, %v449
      %v451 = vpop.f32.mrf.mxu0
      %452 = vmatprep.mubr.bf16.mxu0 0
      %453 = vmatmul.mubr.bf16.gmra.mxu0 %v301
      %v454 = vpop.f32.mrf.mxu0
      %v455 = vadd.f32 0.0, %v454
      %v456 = vpop.f32.mrf.mxu0
      %v457 = vpop.f32.mrf.mxu0
      %v458 = vadd.f32 0.0, %v457
      %v459 = vpop.f32.mrf.mxu0
      %460 = vmatprep.mubr.bf16.mxu0 0
      %461 = vmatmul.mubr.bf16.gmra.mxu0 %v302
      %v462 = vpop.f32.mrf.mxu0
      %v463 = vadd.f32 0.0, %v462
      %v464 = vpop.f32.mrf.mxu0
      %v465 = vpop.f32.mrf.mxu0
      %v466 = vadd.f32 0.0, %v465
      %v467 = vpop.f32.mrf.mxu0
      %468 = vmatprep.mubr.bf16.mxu0 0
      %469 = vmatmul.mubr.bf16.gmra.mxu0 %v303
      %v470 = vpop.f32.mrf.mxu0
      %v471 = vadd.f32 0.0, %v470
      %v472 = vpop.f32.mrf.mxu0
      %v473 = vpop.f32.mrf.mxu0
      %v474 = vadd.f32 0.0, %v473
      %v475 = vpop.f32.mrf.mxu0
      %476 = vmatprep.mubr.bf16.mxu0 0
      %477 = vmatmul.mubr.bf16.gmra.mxu0 %v304
      %v478 = vpop.f32.mrf.mxu0
      %v479 = vadd.f32 0.0, %v478
      %v480 = vpop.f32.mrf.mxu0
      %v481 = vpop.f32.mrf.mxu0
      %v482 = vadd.f32 0.0, %v481
      %v483 = vpop.f32.mrf.mxu0
      %484 = vmatprep.mubr.bf16.mxu0 0
      %485 = vmatmul.mubr.bf16.gmra.mxu0 %v305
      %v486 = vpop.f32.mrf.mxu0
      %v487 = vadd.f32 0.0, %v486
      %v488 = vpop.f32.mrf.mxu0
      %v489 = vpop.f32.mrf.mxu0
      %v490 = vadd.f32 0.0, %v489
      %v491 = vpop.f32.mrf.mxu0
      %492 = vmatprep.mubr.bf16.mxu0 0
      %493 = vmatmul.mubr.bf16.gmra.mxu0 %v306
      %v494 = vpop.f32.mrf.mxu0
      %v495 = vadd.f32 0.0, %v494
      %v496 = vpop.f32.mrf.mxu0
      %v497 = vpop.f32.mrf.mxu0
      %v498 = vadd.f32 0.0, %v497
      %v499 = vpop.f32.mrf.mxu0
      %500 = vmatprep.mubr.bf16.mxu0 0
      %501 = vmatmul.mubr.bf16.gmra.mxu0 %v307
      %v502 = vpop.f32.mrf.mxu0
      %v503 = vadd.f32 0.0, %v502
      %v504 = vpop.f32.mrf.mxu0
      %v505 = vpop.f32.mrf.mxu0
      %v506 = vadd.f32 0.0, %v505
      %v507 = vpop.f32.mrf.mxu0
      %508 = vmatprep.mubr.bf16.mxu0 0
      %509 = vmatmul.mubr.bf16.gmra.mxu0 %v308
      %v510 = vpop.f32.mrf.mxu0
      %v511 = vadd.f32 0.0, %v510
      %v512 = vpop.f32.mrf.mxu0
      %v513 = vpop.f32.mrf.mxu0
      %v514 = vadd.f32 0.0, %v513
      %v515 = vpop.f32.mrf.mxu0
      %516 = vmatprep.mubr.bf16.mxu0 0
      %517 = vmatmul.mubr.bf16.gmra.mxu0 %v309
      %v518 = vpop.f32.mrf.mxu0
      %v519 = vadd.f32 0.0, %v518
      %v520 = vpop.f32.mrf.mxu0
      %v521 = vpop.f32.mrf.mxu0
      %v522 = vadd.f32 0.0, %v521
      %v523 = vpop.f32.mrf.mxu0
      %524 = vmatprep.mubr.bf16.mxu0 0
      %525 = vmatmul.mubr.bf16.gmra.mxu0 %v310
      %v526 = vpop.f32.mrf.mxu0
      %v527 = vadd.f32 0.0, %v526
      %v528 = vpop.f32.mrf.mxu0
      %v529 = vpop.f32.mrf.mxu0
      %v530 = vadd.f32 0.0, %v529
      %v531 = vpop.f32.mrf.mxu0
      %532 = vmatprep.mubr.bf16.mxu0 0
      %533 = vmatmul.mubr.bf16.gmra.mxu0 %v311
      %v534 = vpop.f32.mrf.mxu0
      %v535 = vadd.f32 0.0, %v534
      %v536 = vpop.f32.mrf.mxu0
      %v537 = vpop.f32.mrf.mxu0
      %v538 = vadd.f32 0.0, %v537
      %v539 = vpop.f32.mrf.mxu0
      %540 = vmatprep.mubr.bf16.mxu0 0
      %541 = vmatmul.mubr.bf16.gmra.mxu0 %v312
      %v542 = vpop.f32.mrf.mxu0
      %v543 = vadd.f32 0.0, %v542
      %v544 = vpop.f32.mrf.mxu0
      %v545 = vpop.f32.mrf.mxu0
      %v546 = vadd.f32 0.0, %v545
      %v547 = vpop.f32.mrf.mxu0
      %548 = vmatprep.mubr.bf16.mxu0 0
      %549 = vmatmul.mubr.bf16.gmra.mxu0 %v313
      %v550 = vpop.f32.mrf.mxu0
      %v551 = vadd.f32 0.0, %v550
      %v552 = vpop.f32.mrf.mxu0
      %v553 = vpop.f32.mrf.mxu0
      %v554 = vadd.f32 0.0, %v553
      %v555 = vpop.f32.mrf.mxu0
      %556 = vdwg.mxu0
      %557 = vst [vmem:[#allocation2] sm:$0xff] %v415
      %558 = vst [vmem:[#allocation2 + $0x8] sm:$0xff] %v418
      %559 = vst [vmem:[#allocation2 + $0x10] sm:$0xff] %v423
      %560 = vst [vmem:[#allocation2 + $0x18] sm:$0xff] %v426
      %561 = vst [vmem:[#allocation2 + $0x20] sm:$0xff] %v431
      %562 = vst [vmem:[#allocation2 + $0x28] sm:$0xff] %v434
      %563 = vst [vmem:[#allocation2 + $0x30] sm:$0xff] %v439
      %564 = vst [vmem:[#allocation2 + $0x38] sm:$0xff] %v442
      %565 = vst [vmem:[#allocation2 + $0x40] sm:$0xff] %v447
      %566 = vst [vmem:[#allocation2 + $0x48] sm:$0xff] %v450
      %567 = vst [vmem:[#allocation2 + $0x50] sm:$0xff] %v455
      %568 = vst [vmem:[#allocation2 + $0x58] sm:$0xff] %v458
      %569 = vst [vmem:[#allocation2 + $0x60] sm:$0xff] %v463
      %570 = vst [vmem:[#allocation2 + $0x68] sm:$0xff] %v466
      %571 = vst [vmem:[#allocation2 + $0x70] sm:$0xff] %v471
      %572 = vst [vmem:[#allocation2 + $0x78] sm:$0xff] %v474
      %573 = vst [vmem:[#allocation2 + $0x80] sm:$0xff] %v479
      %574 = vst [vmem:[#allocation2 + $0x88] sm:$0xff] %v482
      %575 = vst [vmem:[#allocation2 + $0x90] sm:$0xff] %v487
      %576 = vst [vmem:[#allocation2 + $0x98] sm:$0xff] %v490
      %577 = vst [vmem:[#allocation2 + $0xa0] sm:$0xff] %v495
      %578 = vst [vmem:[#allocation2 + $0xa8] sm:$0xff] %v498
      %579 = vst [vmem:[#allocation2 + $0xb0] sm:$0xff] %v503
      %580 = vst [vmem:[#allocation2 + $0xb8] sm:$0xff] %v506
      %581 = vst [vmem:[#allocation2 + $0xc0] sm:$0xff] %v511
      %582 = vst [vmem:[#allocation2 + $0xc8] sm:$0xff] %v514
      %583 = vst [vmem:[#allocation2 + $0xd0] sm:$0xff] %v519
      %584 = vst [vmem:[#allocation2 + $0xd8] sm:$0xff] %v522
      %585 = vst [vmem:[#allocation2 + $0xe0] sm:$0xff] %v527
      %586 = vst [vmem:[#allocation2 + $0xe8] sm:$0xff] %v530
      %587 = vst [vmem:[#allocation2 + $0xf0] sm:$0xff] %v535
      %588 = vst [vmem:[#allocation2 + $0xf8] sm:$0xff] %v538
      %589 = vst [vmem:[#allocation2 + $0x100] sm:$0xff] %v543
      %590 = vst [vmem:[#allocation2 + $0x108] sm:$0xff] %v546
      %591 = vst [vmem:[#allocation2 + $0x110] sm:$0xff] %v551
      %592 = vst [vmem:[#allocation2 + $0x118] sm:$0x3f] %v554
      %v593 = vld [vmem:[#allocation2] sm:$0xff]
      %v594 = vld [vmem:[#allocation2 + $0x8] sm:$0xff]
      %v595 = vld [vmem:[#allocation2 + $0x10] sm:$0xff]
      %v596 = vld [vmem:[#allocation2 + $0x18] sm:$0xff]
      %v597 = vld [vmem:[#allocation2 + $0x20] sm:$0xff]
      %v598 = vld [vmem:[#allocation2 + $0x28] sm:$0xff]
      %v599 = vld [vmem:[#allocation2 + $0x30] sm:$0xff]
      %v600 = vld [vmem:[#allocation2 + $0x38] sm:$0xff]
      %v601 = vld [vmem:[#allocation2 + $0x40] sm:$0xff]
      %v602 = vld [vmem:[#allocation2 + $0x48] sm:$0xff]
      %v603 = vld [vmem:[#allocation2 + $0x50] sm:$0xff]
      %v604 = vld [vmem:[#allocation2 + $0x58] sm:$0xff]
      %v605 = vld [vmem:[#allocation2 + $0x60] sm:$0xff]
      %v606 = vld [vmem:[#allocation2 + $0x68] sm:$0xff]
      %v607 = vld [vmem:[#allocation2 + $0x70] sm:$0xff]
      %v608 = vld [vmem:[#allocation2 + $0x78] sm:$0xff]
      %v609 = vld [vmem:[#allocation2 + $0x80] sm:$0xff]
      %v610 = vld [vmem:[#allocation2 + $0x88] sm:$0xff]
      %v611 = vld [vmem:[#allocation2 + $0x90] sm:$0xff]
      %v612 = vld [vmem:[#allocation2 + $0x98] sm:$0xff]
      %v613 = vld [vmem:[#allocation2 + $0xa0] sm:$0xff]
      %v614 = vld [vmem:[#allocation2 + $0xa8] sm:$0xff]
      %v615 = vld [vmem:[#allocation2 + $0xb0] sm:$0xff]
      %v616 = vld [vmem:[#allocation2 + $0xb8] sm:$0xff]
      %v617 = vld [vmem:[#allocation2 + $0xc0] sm:$0xff]
      %v618 = vld [vmem:[#allocation2 + $0xc8] sm:$0xff]
      %v619 = vld [vmem:[#allocation2 + $0xd0] sm:$0xff]
      %v620 = vld [vmem:[#allocation2 + $0xd8] sm:$0xff]
      %v621 = vld [vmem:[#allocation2 + $0xe0] sm:$0xff]
      %v622 = vld [vmem:[#allocation2 + $0xe8] sm:$0xff]
      %v623 = vld [vmem:[#allocation2 + $0xf0] sm:$0xff]
      %v624 = vld [vmem:[#allocation2 + $0xf8] sm:$0xff]
      %v625 = vld [vmem:[#allocation2 + $0x100] sm:$0xff]
      %v626 = vld [vmem:[#allocation2 + $0x108] sm:$0xff]
      %v627 = vld [vmem:[#allocation2 + $0x110] sm:$0xff]
      %v628 = vld [vmem:[#allocation2 + $0x118] sm:$0x3f]
      %v629 = vld [vmem:[%s165] sm:$0xf]
      %v630 = vld [vmem:[%s165 + $0x4] sm:$0xf]
      %v631 = vld [vmem:[%s165 + $0x8] sm:$0xf]
      %v632 = vld [vmem:[%s165 + $0xc] sm:$0xf]
      %v633 = vld [vmem:[%s165 + $0x10] sm:$0xf]
      %v634 = vld [vmem:[%s165 + $0x14] sm:$0xf]
      %v635 = vld [vmem:[%s165 + $0x18] sm:$0xf]
      %v636 = vld [vmem:[%s165 + $0x1c] sm:$0xf]
      %v637 = vld [vmem:[%s165 + $0x20] sm:$0xf]
      %v638 = vld [vmem:[%s165 + $0x24] sm:$0xf]
      %v639 = vld [vmem:[%s165 + $0x28] sm:$0xf]
      %v640 = vld [vmem:[%s165 + $0x2c] sm:$0xf]
      %v641 = vld [vmem:[%s165 + $0x30] sm:$0xf]
      %v642 = vld [vmem:[%s165 + $0x34] sm:$0xf]
      %v643 = vld [vmem:[%s165 + $0x38] sm:$0xf]
      %v644 = vld [vmem:[%s165 + $0x3c] sm:$0xf]
      %v645 = vld [vmem:[%s165 + $0x40] sm:$0xf]
      %v646 = vld [vmem:[%s165 + $0x44] sm:$0xf]
      %v647 = vld [vmem:[%s165 + $0x48] sm:$0xf]
      %v648 = vld [vmem:[%s165 + $0x4c] sm:$0xf]
      %v649 = vld [vmem:[%s165 + $0x50] sm:$0xf]
      %v650 = vld [vmem:[%s165 + $0x54] sm:$0xf]
      %v651 = vld [vmem:[%s165 + $0x58] sm:$0xf]
      %v652 = vld [vmem:[%s165 + $0x5c] sm:$0xf]
      %v653 = vld [vmem:[%s165 + $0x60] sm:$0xf]
      %v654 = vld [vmem:[%s165 + $0x64] sm:$0xf]
      %v655 = vld [vmem:[%s165 + $0x68] sm:$0xf]
      %v656 = vld [vmem:[%s165 + $0x6c] sm:$0xf]
      %v657 = vld [vmem:[%s165 + $0x70] sm:$0xf]
      %v658 = vld [vmem:[%s165 + $0x74] sm:$0xf]
      %v659 = vld [vmem:[%s165 + $0x78] sm:$0xf]
      %v660 = vld [vmem:[%s165 + $0x7c] sm:$0xf]
      %v661 = vld [vmem:[%s165 + $0x80] sm:$0xf]
      %v662 = vld [vmem:[%s165 + $0x84] sm:$0xf]
      %v663 = vld [vmem:[%s165 + $0x88] sm:$0xf]
      %v664 = vld [vmem:[%s165 + $0x8c] sm:$0xf]
      %s665 = scalar_lea.vmem %s1, 64
      %v666 = vld [vmem:[%s665] sm:$0xf]
      %v667 = vld [vmem:[%s665 + $0x4] sm:$0xf]
      %v668 = vld [vmem:[%s665 + $0x8] sm:$0xf]
      %v669 = vld [vmem:[%s665 + $0xc] sm:$0xf]
      %v670 = vld [vmem:[%s665 + $0x10] sm:$0xf]
      %v671 = vld [vmem:[%s665 + $0x14] sm:$0xf]
      %v672 = vld [vmem:[%s665 + $0x18] sm:$0xf]
      %v673 = vld [vmem:[%s665 + $0x1c] sm:$0xf]
      %v674 = vld [vmem:[%s665 + $0x20] sm:$0xf]
      %v675 = vld [vmem:[%s665 + $0x24] sm:$0xf]
      %v676 = vld [vmem:[%s665 + $0x28] sm:$0xf]
      %v677 = vld [vmem:[%s665 + $0x2c] sm:$0xf]
      %v678 = vld [vmem:[%s665 + $0x30] sm:$0xf]
      %v679 = vld [vmem:[%s665 + $0x34] sm:$0xf]
      %v680 = vld [vmem:[%s665 + $0x38] sm:$0xf]
      %v681 = vld [vmem:[%s665 + $0x3c] sm:$0xf]
      %v718 = vunpack.c.l.b16 %v629
      %v719 = vunpack.c.l.b16 %v630
      %v720 = vunpack.c.l.b16 %v631
      %v721 = vunpack.c.l.b16 %v632
      %v722 = vunpack.c.l.b16 %v633
      %v723 = vunpack.c.l.b16 %v634
      %v724 = vunpack.c.l.b16 %v635
      %v725 = vunpack.c.l.b16 %v636
      %v726 = vunpack.c.l.b16 %v637
      %v727 = vunpack.c.l.b16 %v638
      %v728 = vunpack.c.l.b16 %v639
      %v729 = vunpack.c.l.b16 %v640
      %v730 = vunpack.c.l.b16 %v641
      %v731 = vunpack.c.l.b16 %v642
      %v732 = vunpack.c.l.b16 %v643
      %v733 = vunpack.c.l.b16 %v644
      %v734 = vunpack.c.l.b16 %v645
      %v735 = vunpack.c.l.b16 %v646
      %v736 = vunpack.c.l.b16 %v647
      %v737 = vunpack.c.l.b16 %v648
      %v738 = vunpack.c.l.b16 %v649
      %v739 = vunpack.c.l.b16 %v650
      %v740 = vunpack.c.l.b16 %v651
      %v741 = vunpack.c.l.b16 %v652
      %v742 = vunpack.c.l.b16 %v653
      %v743 = vunpack.c.l.b16 %v654
      %v744 = vunpack.c.l.b16 %v655
      %v745 = vunpack.c.l.b16 %v656
      %v746 = vunpack.c.l.b16 %v657
      %v747 = vunpack.c.l.b16 %v658
      %v748 = vunpack.c.l.b16 %v659
      %v749 = vunpack.c.l.b16 %v660
      %v750 = vunpack.c.l.b16 %v661
      %v751 = vunpack.c.l.b16 %v662
      %v752 = vunpack.c.l.b16 %v663
      %v753 = vunpack.c.l.b16 %v664
      %v754 = vpack.c.b16 %v719, %v718
      %v755 = vpack.c.b16 %v721, %v720
      %v756 = vpack.c.b16 %v723, %v722
      %v757 = vpack.c.b16 %v725, %v724
      %v758 = vpack.c.b16 %v727, %v726
      %v759 = vpack.c.b16 %v729, %v728
      %v760 = vpack.c.b16 %v731, %v730
      %v761 = vpack.c.b16 %v733, %v732
      %v762 = vpack.c.b16 %v735, %v734
      %v763 = vpack.c.b16 %v737, %v736
      %v764 = vpack.c.b16 %v739, %v738
      %v765 = vpack.c.b16 %v741, %v740
      %v766 = vpack.c.b16 %v743, %v742
      %v767 = vpack.c.b16 %v745, %v744
      %v768 = vpack.c.b16 %v747, %v746
      %v769 = vpack.c.b16 %v749, %v748
      %v770 = vpack.c.b16 %v751, %v750
      %v771 = vpack.c.b16 %v753, %v752
      %vm772 = vsmask.f32 7424
      %v774 = vshrl.u32 %v754, 16
      %v776 = vshll.u32 %v754, 16
      %v778 = vrot.slane %v776, 1
      %v779 = vor.u32 %v774, %v778
      %v781 = vshll.u32 %v755, 16
      %v783 = vrot.slane %v781, 1
      %v784 = vsel %vm772, %v779, %v783
      %v785 = vshrl.u32 %v755, 16
      %v787 = vor.u32 %v785, %v783
      %v789 = vshll.u32 %v756, 16
      %v791 = vrot.slane %v789, 1
      %v792 = vsel %vm772, %v787, %v791
      %v793 = vshrl.u32 %v756, 16
      %v795 = vor.u32 %v793, %v791
      %v797 = vshll.u32 %v757, 16
      %v799 = vrot.slane %v797, 1
      %v800 = vsel %vm772, %v795, %v799
      %v801 = vshrl.u32 %v757, 16
      %v803 = vor.u32 %v801, %v799
      %v805 = vshll.u32 %v758, 16
      %v807 = vrot.slane %v805, 1
      %v808 = vsel %vm772, %v803, %v807
      %v809 = vshrl.u32 %v758, 16
      %v811 = vor.u32 %v809, %v807
      %v813 = vshll.u32 %v759, 16
      %v815 = vrot.slane %v813, 1
      %v816 = vsel %vm772, %v811, %v815
      %v817 = vshrl.u32 %v759, 16
      %v819 = vor.u32 %v817, %v815
      %v821 = vshll.u32 %v760, 16
      %v823 = vrot.slane %v821, 1
      %v824 = vsel %vm772, %v819, %v823
      %v825 = vshrl.u32 %v760, 16
      %v827 = vor.u32 %v825, %v823
      %v829 = vshll.u32 %v761, 16
      %v831 = vrot.slane %v829, 1
      %v832 = vsel %vm772, %v827, %v831
      %v833 = vshrl.u32 %v761, 16
      %v835 = vor.u32 %v833, %v831
      %v837 = vshll.u32 %v762, 16
      %v839 = vrot.slane %v837, 1
      %v840 = vsel %vm772, %v835, %v839
      %v841 = vshrl.u32 %v762, 16
      %v843 = vor.u32 %v841, %v839
      %v845 = vshll.u32 %v763, 16
      %v847 = vrot.slane %v845, 1
      %v848 = vsel %vm772, %v843, %v847
      %v849 = vshrl.u32 %v763, 16
      %v851 = vor.u32 %v849, %v847
      %v853 = vshll.u32 %v764, 16
      %v855 = vrot.slane %v853, 1
      %v856 = vsel %vm772, %v851, %v855
      %v857 = vshrl.u32 %v764, 16
      %v859 = vor.u32 %v857, %v855
      %v861 = vshll.u32 %v765, 16
      %v863 = vrot.slane %v861, 1
      %v864 = vsel %vm772, %v859, %v863
      %v865 = vshrl.u32 %v765, 16
      %v867 = vor.u32 %v865, %v863
      %v869 = vshll.u32 %v766, 16
      %v871 = vrot.slane %v869, 1
      %v872 = vsel %vm772, %v867, %v871
      %v873 = vshrl.u32 %v766, 16
      %v875 = vor.u32 %v873, %v871
      %v877 = vshll.u32 %v767, 16
      %v879 = vrot.slane %v877, 1
      %v880 = vsel %vm772, %v875, %v879
      %v881 = vshrl.u32 %v767, 16
      %v883 = vor.u32 %v881, %v879
      %v885 = vshll.u32 %v768, 16
      %v887 = vrot.slane %v885, 1
      %v888 = vsel %vm772, %v883, %v887
      %v889 = vshrl.u32 %v768, 16
      %v891 = vor.u32 %v889, %v887
      %v893 = vshll.u32 %v769, 16
      %v895 = vrot.slane %v893, 1
      %v896 = vsel %vm772, %v891, %v895
      %v897 = vshrl.u32 %v769, 16
      %v899 = vor.u32 %v897, %v895
      %v901 = vshll.u32 %v770, 16
      %v903 = vrot.slane %v901, 1
      %v904 = vsel %vm772, %v899, %v903
      %v905 = vshrl.u32 %v770, 16
      %v907 = vor.u32 %v905, %v903
      %v909 = vshll.u32 %v771, 16
      %v911 = vrot.slane %v909, 1
      %v912 = vsel %vm772, %v907, %v911
      %v913 = vshrl.u32 %v771, 16
      %v915 = vor.u32 %v913, %v911
      %v950 = vunpack.c.l.b16 %v666
      %v951 = vunpack.c.l.b16 %v667
      %v952 = vunpack.c.l.b16 %v668
      %v953 = vunpack.c.l.b16 %v669
      %v954 = vunpack.c.l.b16 %v670
      %v955 = vunpack.c.l.b16 %v671
      %v956 = vunpack.c.l.b16 %v672
      %v957 = vunpack.c.l.b16 %v673
      %v958 = vunpack.c.l.b16 %v674
      %v959 = vunpack.c.l.b16 %v675
      %v960 = vunpack.c.l.b16 %v676
      %v961 = vunpack.c.l.b16 %v677
      %v962 = vunpack.c.l.b16 %v678
      %v963 = vunpack.c.l.b16 %v679
      %v964 = vunpack.c.l.b16 %v680
      %v965 = vunpack.c.l.b16 %v681
      %v966 = vpack.c.b16 %v951, %v950
      %v967 = vpack.c.b16 %v953, %v952
      %v968 = vpack.c.b16 %v955, %v954
      %v969 = vpack.c.b16 %v957, %v956
      %v970 = vpack.c.b16 %v959, %v958
      %v971 = vpack.c.b16 %v961, %v960
      %v972 = vpack.c.b16 %v963, %v962
      %v973 = vpack.c.b16 %v965, %v964
      %982 = vmatprep.subr.bf16.mxu0 0
      %983 = vmatpush1.bf16.msra.mxu0 %v973
      %984 = vmatprep.subr.bf16.mxu0 0
      %985 = vmatpush1.bf16.msra.mxu0 %v972
      %986 = vmatprep.subr.bf16.mxu0 0
      %987 = vmatpush1.bf16.msra.mxu0 %v971
      %988 = vmatprep.subr.bf16.mxu0 0
      %989 = vmatpush1.bf16.msra.mxu0 %v970
      %990 = vmatprep.subr.bf16.mxu0 0
      %991 = vmatpush1.bf16.msra.mxu0 %v969
      %992 = vmatprep.subr.bf16.mxu0 0
      %993 = vmatpush1.bf16.msra.mxu0 %v968
      %994 = vmatprep.subr.bf16.mxu0 0
      %995 = vmatpush1.bf16.msra.mxu0 %v967
      %996 = vmatprep.subr.bf16.mxu0 0
      %997 = vmatpush1.bf16.msra.mxu0 %v966
      %998 = vmatprep.subr.bf16.mxu0 0
      %999 = vmatpush2.bf16.msra.mxu0 0
      %1000 = vmatprep.subr.bf16.mxu0 0
      %1001 = vmatpush2.bf16.msra.mxu0 0
      %1002 = vmatprep.subr.bf16.mxu0 0
      %1003 = vmatpush2.bf16.msra.mxu0 0
      %1004 = vmatprep.subr.bf16.mxu0 0
      %1005 = vmatpush2.bf16.msra.mxu0 0
      %1006 = vmatprep.subr.bf16.mxu0 0
      %1007 = vmatpush2.bf16.msra.mxu0 0
      %1008 = vmatprep.subr.bf16.mxu0 0
      %1009 = vmatpush2.bf16.msra.mxu0 0
      %1010 = vmatprep.subr.bf16.mxu0 0
      %1011 = vmatpush2.bf16.msra.mxu0 0
      %1012 = vmatprep.subr.bf16.mxu0 0
      %1013 = vmatpush2.bf16.msra.mxu0 0
      %1014 = vmatprep.mubr.bf16.mxu0 0
      %1015 = vmatmul.mubr.bf16.gmra.mxu0 %v784
      %v1016 = vpop.f32.mrf.mxu0
      %v1017 = vadd.f32 0.0, %v1016
      %v1018 = vpop.f32.mrf.mxu0
      %v1019 = vpop.f32.mrf.mxu0
      %v1020 = vadd.f32 0.0, %v1019
      %v1021 = vpop.f32.mrf.mxu0
      %1022 = vmatprep.mubr.bf16.mxu0 0
      %1023 = vmatmul.mubr.bf16.gmra.mxu0 %v792
      %v1024 = vpop.f32.mrf.mxu0
      %v1025 = vadd.f32 0.0, %v1024
      %v1026 = vpop.f32.mrf.mxu0
      %v1027 = vpop.f32.mrf.mxu0
      %v1028 = vadd.f32 0.0, %v1027
      %v1029 = vpop.f32.mrf.mxu0
      %1030 = vmatprep.mubr.bf16.mxu0 0
      %1031 = vmatmul.mubr.bf16.gmra.mxu0 %v800
      %v1032 = vpop.f32.mrf.mxu0
      %v1033 = vadd.f32 0.0, %v1032
      %v1034 = vpop.f32.mrf.mxu0
      %v1035 = vpop.f32.mrf.mxu0
      %v1036 = vadd.f32 0.0, %v1035
      %v1037 = vpop.f32.mrf.mxu0
      %1038 = vmatprep.mubr.bf16.mxu0 0
      %1039 = vmatmul.mubr.bf16.gmra.mxu0 %v808
      %v1040 = vpop.f32.mrf.mxu0
      %v1041 = vadd.f32 0.0, %v1040
      %v1042 = vpop.f32.mrf.mxu0
      %v1043 = vpop.f32.mrf.mxu0
      %v1044 = vadd.f32 0.0, %v1043
      %v1045 = vpop.f32.mrf.mxu0
      %1046 = vmatprep.mubr.bf16.mxu0 0
      %1047 = vmatmul.mubr.bf16.gmra.mxu0 %v816
      %v1048 = vpop.f32.mrf.mxu0
      %v1049 = vadd.f32 0.0, %v1048
      %v1050 = vpop.f32.mrf.mxu0
      %v1051 = vpop.f32.mrf.mxu0
      %v1052 = vadd.f32 0.0, %v1051
      %v1053 = vpop.f32.mrf.mxu0
      %1054 = vmatprep.mubr.bf16.mxu0 0
      %1055 = vmatmul.mubr.bf16.gmra.mxu0 %v824
      %v1056 = vpop.f32.mrf.mxu0
      %v1057 = vadd.f32 0.0, %v1056
      %v1058 = vpop.f32.mrf.mxu0
      %v1059 = vpop.f32.mrf.mxu0
      %v1060 = vadd.f32 0.0, %v1059
      %v1061 = vpop.f32.mrf.mxu0
      %1062 = vmatprep.mubr.bf16.mxu0 0
      %1063 = vmatmul.mubr.bf16.gmra.mxu0 %v832
      %v1064 = vpop.f32.mrf.mxu0
      %v1065 = vadd.f32 0.0, %v1064
      %v1066 = vpop.f32.mrf.mxu0
      %v1067 = vpop.f32.mrf.mxu0
      %v1068 = vadd.f32 0.0, %v1067
      %v1069 = vpop.f32.mrf.mxu0
      %1070 = vmatprep.mubr.bf16.mxu0 0
      %1071 = vmatmul.mubr.bf16.gmra.mxu0 %v840
      %v1072 = vpop.f32.mrf.mxu0
      %v1073 = vadd.f32 0.0, %v1072
      %v1074 = vpop.f32.mrf.mxu0
      %v1075 = vpop.f32.mrf.mxu0
      %v1076 = vadd.f32 0.0, %v1075
      %v1077 = vpop.f32.mrf.mxu0
      %1078 = vmatprep.mubr.bf16.mxu0 0
      %1079 = vmatmul.mubr.bf16.gmra.mxu0 %v848
      %v1080 = vpop.f32.mrf.mxu0
      %v1081 = vadd.f32 0.0, %v1080
      %v1082 = vpop.f32.mrf.mxu0
      %v1083 = vpop.f32.mrf.mxu0
      %v1084 = vadd.f32 0.0, %v1083
      %v1085 = vpop.f32.mrf.mxu0
      %1086 = vmatprep.mubr.bf16.mxu0 0
      %1087 = vmatmul.mubr.bf16.gmra.mxu0 %v856
      %v1088 = vpop.f32.mrf.mxu0
      %v1089 = vadd.f32 0.0, %v1088
      %v1090 = vpop.f32.mrf.mxu0
      %v1091 = vpop.f32.mrf.mxu0
      %v1092 = vadd.f32 0.0, %v1091
      %v1093 = vpop.f32.mrf.mxu0
      %1094 = vmatprep.mubr.bf16.mxu0 0
      %1095 = vmatmul.mubr.bf16.gmra.mxu0 %v864
      %v1096 = vpop.f32.mrf.mxu0
      %v1097 = vadd.f32 0.0, %v1096
      %v1098 = vpop.f32.mrf.mxu0
      %v1099 = vpop.f32.mrf.mxu0
      %v1100 = vadd.f32 0.0, %v1099
      %v1101 = vpop.f32.mrf.mxu0
      %1102 = vmatprep.mubr.bf16.mxu0 0
      %1103 = vmatmul.mubr.bf16.gmra.mxu0 %v872
      %v1104 = vpop.f32.mrf.mxu0
      %v1105 = vadd.f32 0.0, %v1104
      %v1106 = vpop.f32.mrf.mxu0
      %v1107 = vpop.f32.mrf.mxu0
      %v1108 = vadd.f32 0.0, %v1107
      %v1109 = vpop.f32.mrf.mxu0
      %1110 = vmatprep.mubr.bf16.mxu0 0
      %1111 = vmatmul.mubr.bf16.gmra.mxu0 %v880
      %v1112 = vpop.f32.mrf.mxu0
      %v1113 = vadd.f32 0.0, %v1112
      %v1114 = vpop.f32.mrf.mxu0
      %v1115 = vpop.f32.mrf.mxu0
      %v1116 = vadd.f32 0.0, %v1115
      %v1117 = vpop.f32.mrf.mxu0
      %1118 = vmatprep.mubr.bf16.mxu0 0
      %1119 = vmatmul.mubr.bf16.gmra.mxu0 %v888
      %v1120 = vpop.f32.mrf.mxu0
      %v1121 = vadd.f32 0.0, %v1120
      %v1122 = vpop.f32.mrf.mxu0
      %v1123 = vpop.f32.mrf.mxu0
      %v1124 = vadd.f32 0.0, %v1123
      %v1125 = vpop.f32.mrf.mxu0
      %1126 = vmatprep.mubr.bf16.mxu0 0
      %1127 = vmatmul.mubr.bf16.gmra.mxu0 %v896
      %v1128 = vpop.f32.mrf.mxu0
      %v1129 = vadd.f32 0.0, %v1128
      %v1130 = vpop.f32.mrf.mxu0
      %v1131 = vpop.f32.mrf.mxu0
      %v1132 = vadd.f32 0.0, %v1131
      %v1133 = vpop.f32.mrf.mxu0
      %1134 = vmatprep.mubr.bf16.mxu0 0
      %1135 = vmatmul.mubr.bf16.gmra.mxu0 %v904
      %v1136 = vpop.f32.mrf.mxu0
      %v1137 = vadd.f32 0.0, %v1136
      %v1138 = vpop.f32.mrf.mxu0
      %v1139 = vpop.f32.mrf.mxu0
      %v1140 = vadd.f32 0.0, %v1139
      %v1141 = vpop.f32.mrf.mxu0
      %1142 = vmatprep.mubr.bf16.mxu0 0
      %1143 = vmatmul.mubr.bf16.gmra.mxu0 %v912
      %v1144 = vpop.f32.mrf.mxu0
      %v1145 = vadd.f32 0.0, %v1144
      %v1146 = vpop.f32.mrf.mxu0
      %v1147 = vpop.f32.mrf.mxu0
      %v1148 = vadd.f32 0.0, %v1147
      %v1149 = vpop.f32.mrf.mxu0
      %1150 = vmatprep.mubr.bf16.mxu0 0
      %1151 = vmatmul.mubr.bf16.gmra.mxu0 %v915
      %v1152 = vpop.f32.mrf.mxu0
      %v1153 = vadd.f32 0.0, %v1152
      %v1154 = vpop.f32.mrf.mxu0
      %v1155 = vpop.f32.mrf.mxu0
      %v1156 = vadd.f32 0.0, %v1155
      %v1157 = vpop.f32.mrf.mxu0
      %1158 = vdwg.mxu0
      %v1159 = vadd.f32 %v593, %v1017
      %v1160 = vadd.f32 %v594, %v1020
      %v1161 = vadd.f32 %v595, %v1025
      %v1162 = vadd.f32 %v596, %v1028
      %v1163 = vadd.f32 %v597, %v1033
      %v1164 = vadd.f32 %v598, %v1036
      %v1165 = vadd.f32 %v599, %v1041
      %v1166 = vadd.f32 %v600, %v1044
      %v1167 = vadd.f32 %v601, %v1049
      %v1168 = vadd.f32 %v602, %v1052
      %v1169 = vadd.f32 %v603, %v1057
      %v1170 = vadd.f32 %v604, %v1060
      %v1171 = vadd.f32 %v605, %v1065
      %v1172 = vadd.f32 %v606, %v1068
      %v1173 = vadd.f32 %v607, %v1073
      %v1174 = vadd.f32 %v608, %v1076
      %v1175 = vadd.f32 %v609, %v1081
      %v1176 = vadd.f32 %v610, %v1084
      %v1177 = vadd.f32 %v611, %v1089
      %v1178 = vadd.f32 %v612, %v1092
      %v1179 = vadd.f32 %v613, %v1097
      %v1180 = vadd.f32 %v614, %v1100
      %v1181 = vadd.f32 %v615, %v1105
      %v1182 = vadd.f32 %v616, %v1108
      %v1183 = vadd.f32 %v617, %v1113
      %v1184 = vadd.f32 %v618, %v1116
      %v1185 = vadd.f32 %v619, %v1121
      %v1186 = vadd.f32 %v620, %v1124
      %v1187 = vadd.f32 %v621, %v1129
      %v1188 = vadd.f32 %v622, %v1132
      %v1189 = vadd.f32 %v623, %v1137
      %v1190 = vadd.f32 %v624, %v1140
      %v1191 = vadd.f32 %v625, %v1145
      %v1192 = vadd.f32 %v626, %v1148
      %v1193 = vadd.f32 %v627, %v1153
      %v1194 = vadd.f32 %v628, %v1156
      %1195 = vst [vmem:[#allocation2] sm:$0xff] %v1159
      %1196 = vst [vmem:[#allocation2 + $0x8] sm:$0xff] %v1160
      %1197 = vst [vmem:[#allocation2 + $0x10] sm:$0xff] %v1161
      %1198 = vst [vmem:[#allocation2 + $0x18] sm:$0xff] %v1162
      %1199 = vst [vmem:[#allocation2 + $0x20] sm:$0xff] %v1163
      %1200 = vst [vmem:[#allocation2 + $0x28] sm:$0xff] %v1164
      %1201 = vst [vmem:[#allocation2 + $0x30] sm:$0xff] %v1165
      %1202 = vst [vmem:[#allocation2 + $0x38] sm:$0xff] %v1166
      %1203 = vst [vmem:[#allocation2 + $0x40] sm:$0xff] %v1167
      %1204 = vst [vmem:[#allocation2 + $0x48] sm:$0xff] %v1168
      %1205 = vst [vmem:[#allocation2 + $0x50] sm:$0xff] %v1169
      %1206 = vst [vmem:[#allocation2 + $0x58] sm:$0xff] %v1170
      %1207 = vst [vmem:[#allocation2 + $0x60] sm:$0xff] %v1171
      %1208 = vst [vmem:[#allocation2 + $0x68] sm:$0xff] %v1172
      %1209 = vst [vmem:[#allocation2 + $0x70] sm:$0xff] %v1173
      %1210 = vst [vmem:[#allocation2 + $0x78] sm:$0xff] %v1174
      %1211 = vst [vmem:[#allocation2 + $0x80] sm:$0xff] %v1175
      %1212 = vst [vmem:[#allocation2 + $0x88] sm:$0xff] %v1176
      %1213 = vst [vmem:[#allocation2 + $0x90] sm:$0xff] %v1177
      %1214 = vst [vmem:[#allocation2 + $0x98] sm:$0xff] %v1178
      %1215 = vst [vmem:[#allocation2 + $0xa0] sm:$0xff] %v1179
      %1216 = vst [vmem:[#allocation2 + $0xa8] sm:$0xff] %v1180
      %1217 = vst [vmem:[#allocation2 + $0xb0] sm:$0xff] %v1181
      %1218 = vst [vmem:[#allocation2 + $0xb8] sm:$0xff] %v1182
      %1219 = vst [vmem:[#allocation2 + $0xc0] sm:$0xff] %v1183
      %1220 = vst [vmem:[#allocation2 + $0xc8] sm:$0xff] %v1184
      %1221 = vst [vmem:[#allocation2 + $0xd0] sm:$0xff] %v1185
      %1222 = vst [vmem:[#allocation2 + $0xd8] sm:$0xff] %v1186
      %1223 = vst [vmem:[#allocation2 + $0xe0] sm:$0xff] %v1187
      %1224 = vst [vmem:[#allocation2 + $0xe8] sm:$0xff] %v1188
      %1225 = vst [vmem:[#allocation2 + $0xf0] sm:$0xff] %v1189
      %1226 = vst [vmem:[#allocation2 + $0xf8] sm:$0xff] %v1190
      %1227 = vst [vmem:[#allocation2 + $0x100] sm:$0xff] %v1191
      %1228 = vst [vmem:[#allocation2 + $0x108] sm:$0xff] %v1192
      %1229 = vst [vmem:[#allocation2 + $0x110] sm:$0xff] %v1193
      %1230 = vst [vmem:[#allocation2 + $0x118] sm:$0x3f] %v1194
      %v1231 = vld [vmem:[#allocation2] sm:$0xff]
      %v1232 = vld [vmem:[#allocation2 + $0x8] sm:$0xff]
      %v1233 = vld [vmem:[#allocation2 + $0x10] sm:$0xff]
      %v1234 = vld [vmem:[#allocation2 + $0x18] sm:$0xff]
      %v1235 = vld [vmem:[#allocation2 + $0x20] sm:$0xff]
      %v1236 = vld [vmem:[#allocation2 + $0x28] sm:$0xff]
      %v1237 = vld [vmem:[#allocation2 + $0x30] sm:$0xff]
      %v1238 = vld [vmem:[#allocation2 + $0x38] sm:$0xff]
      %v1239 = vld [vmem:[#allocation2 + $0x40] sm:$0xff]
      %v1240 = vld [vmem:[#allocation2 + $0x48] sm:$0xff]
      %v1241 = vld [vmem:[#allocation2 + $0x50] sm:$0xff]
      %v1242 = vld [vmem:[#allocation2 + $0x58] sm:$0xff]
      %v1243 = vld [vmem:[#allocation2 + $0x60] sm:$0xff]
      %v1244 = vld [vmem:[#allocation2 + $0x68] sm:$0xff]
      %v1245 = vld [vmem:[#allocation2 + $0x70] sm:$0xff]
      %v1246 = vld [vmem:[#allocation2 + $0x78] sm:$0xff]
      %v1247 = vld [vmem:[#allocation2 + $0x80] sm:$0xff]
      %v1248 = vld [vmem:[#allocation2 + $0x88] sm:$0xff]
      %v1249 = vld [vmem:[#allocation2 + $0x90] sm:$0xff]
      %v1250 = vld [vmem:[#allocation2 + $0x98] sm:$0xff]
      %v1251 = vld [vmem:[#allocation2 + $0xa0] sm:$0xff]
      %v1252 = vld [vmem:[#allocation2 + $0xa8] sm:$0xff]
      %v1253 = vld [vmem:[#allocation2 + $0xb0] sm:$0xff]
      %v1254 = vld [vmem:[#allocation2 + $0xb8] sm:$0xff]
      %v1255 = vld [vmem:[#allocation2 + $0xc0] sm:$0xff]
      %v1256 = vld [vmem:[#allocation2 + $0xc8] sm:$0xff]
      %v1257 = vld [vmem:[#allocation2 + $0xd0] sm:$0xff]
      %v1258 = vld [vmem:[#allocation2 + $0xd8] sm:$0xff]
      %v1259 = vld [vmem:[#allocation2 + $0xe0] sm:$0xff]
      %v1260 = vld [vmem:[#allocation2 + $0xe8] sm:$0xff]
      %v1261 = vld [vmem:[#allocation2 + $0xf0] sm:$0xff]
      %v1262 = vld [vmem:[#allocation2 + $0xf8] sm:$0xff]
      %v1263 = vld [vmem:[#allocation2 + $0x100] sm:$0xff]
      %v1264 = vld [vmem:[#allocation2 + $0x108] sm:$0xff]
      %v1265 = vld [vmem:[#allocation2 + $0x110] sm:$0xff]
      %v1266 = vld [vmem:[#allocation2 + $0x118] sm:$0x3f]
      %v1267 = vld [vmem:[%s165] sm:$0xe]
      %v1268 = vld [vmem:[%s165 + $0x4] sm:$0xf]
      %v1269 = vld [vmem:[%s165 + $0x8] sm:$0xf]
      %v1270 = vld [vmem:[%s165 + $0xc] sm:$0xf]
      %v1271 = vld [vmem:[%s165 + $0x10] sm:$0xf]
      %v1272 = vld [vmem:[%s165 + $0x14] sm:$0xf]
      %v1273 = vld [vmem:[%s165 + $0x18] sm:$0xf]
      %v1274 = vld [vmem:[%s165 + $0x1c] sm:$0xf]
      %v1275 = vld [vmem:[%s165 + $0x20] sm:$0xf]
      %v1276 = vld [vmem:[%s165 + $0x24] sm:$0xf]
      %v1277 = vld [vmem:[%s165 + $0x28] sm:$0xf]
      %v1278 = vld [vmem:[%s165 + $0x2c] sm:$0xf]
      %v1279 = vld [vmem:[%s165 + $0x30] sm:$0xf]
      %v1280 = vld [vmem:[%s165 + $0x34] sm:$0xf]
      %v1281 = vld [vmem:[%s165 + $0x38] sm:$0xf]
      %v1282 = vld [vmem:[%s165 + $0x3c] sm:$0xf]
      %v1283 = vld [vmem:[%s165 + $0x40] sm:$0xf]
      %v1284 = vld [vmem:[%s165 + $0x44] sm:$0xf]
      %v1285 = vld [vmem:[%s165 + $0x48] sm:$0xf]
      %v1286 = vld [vmem:[%s165 + $0x4c] sm:$0xf]
      %v1287 = vld [vmem:[%s165 + $0x50] sm:$0xf]
      %v1288 = vld [vmem:[%s165 + $0x54] sm:$0xf]
      %v1289 = vld [vmem:[%s165 + $0x58] sm:$0xf]
      %v1290 = vld [vmem:[%s165 + $0x5c] sm:$0xf]
      %v1291 = vld [vmem:[%s165 + $0x60] sm:$0xf]
      %v1292 = vld [vmem:[%s165 + $0x64] sm:$0xf]
      %v1293 = vld [vmem:[%s165 + $0x68] sm:$0xf]
      %v1294 = vld [vmem:[%s165 + $0x6c] sm:$0xf]
      %v1295 = vld [vmem:[%s165 + $0x70] sm:$0xf]
      %v1296 = vld [vmem:[%s165 + $0x74] sm:$0xf]
      %v1297 = vld [vmem:[%s165 + $0x78] sm:$0xf]
      %v1298 = vld [vmem:[%s165 + $0x7c] sm:$0xf]
      %v1299 = vld [vmem:[%s165 + $0x80] sm:$0xf]
      %v1300 = vld [vmem:[%s165 + $0x84] sm:$0xf]
      %v1301 = vld [vmem:[%s165 + $0x88] sm:$0xf]
      %v1302 = vld [vmem:[%s165 + $0x8c] sm:$0xf]
      %s1303 = scalar_lea.vmem %s1, 128
      %v1304 = vld [vmem:[%s1303] sm:$0xf]
      %v1305 = vld [vmem:[%s1303 + $0x4] sm:$0xf]
      %v1306 = vld [vmem:[%s1303 + $0x8] sm:$0xf]
      %v1307 = vld [vmem:[%s1303 + $0xc] sm:$0xf]
      %v1308 = vld [vmem:[%s1303 + $0x10] sm:$0xf]
      %v1309 = vld [vmem:[%s1303 + $0x14] sm:$0xf]
      %v1310 = vld [vmem:[%s1303 + $0x18] sm:$0xf]
      %v1311 = vld [vmem:[%s1303 + $0x1c] sm:$0xf]
      %v1312 = vld [vmem:[%s1303 + $0x20] sm:$0xf]
      %v1313 = vld [vmem:[%s1303 + $0x24] sm:$0xf]
      %v1314 = vld [vmem:[%s1303 + $0x28] sm:$0xf]
      %v1315 = vld [vmem:[%s1303 + $0x2c] sm:$0xf]
      %v1316 = vld [vmem:[%s1303 + $0x30] sm:$0xf]
      %v1317 = vld [vmem:[%s1303 + $0x34] sm:$0xf]
      %v1318 = vld [vmem:[%s1303 + $0x38] sm:$0xf]
      %v1319 = vld [vmem:[%s1303 + $0x3c] sm:$0xf]
      %v1356 = vunpack.c.l.b16 %v1267
      %v1357 = vunpack.c.l.b16 %v1268
      %v1358 = vunpack.c.l.b16 %v1269
      %v1359 = vunpack.c.l.b16 %v1270
      %v1360 = vunpack.c.l.b16 %v1271
      %v1361 = vunpack.c.l.b16 %v1272
      %v1362 = vunpack.c.l.b16 %v1273
      %v1363 = vunpack.c.l.b16 %v1274
      %v1364 = vunpack.c.l.b16 %v1275
      %v1365 = vunpack.c.l.b16 %v1276
      %v1366 = vunpack.c.l.b16 %v1277
      %v1367 = vunpack.c.l.b16 %v1278
      %v1368 = vunpack.c.l.b16 %v1279
      %v1369 = vunpack.c.l.b16 %v1280
      %v1370 = vunpack.c.l.b16 %v1281
      %v1371 = vunpack.c.l.b16 %v1282
      %v1372 = vunpack.c.l.b16 %v1283
      %v1373 = vunpack.c.l.b16 %v1284
      %v1374 = vunpack.c.l.b16 %v1285
      %v1375 = vunpack.c.l.b16 %v1286
      %v1376 = vunpack.c.l.b16 %v1287
      %v1377 = vunpack.c.l.b16 %v1288
      %v1378 = vunpack.c.l.b16 %v1289
      %v1379 = vunpack.c.l.b16 %v1290
      %v1380 = vunpack.c.l.b16 %v1291
      %v1381 = vunpack.c.l.b16 %v1292
      %v1382 = vunpack.c.l.b16 %v1293
      %v1383 = vunpack.c.l.b16 %v1294
      %v1384 = vunpack.c.l.b16 %v1295
      %v1385 = vunpack.c.l.b16 %v1296
      %v1386 = vunpack.c.l.b16 %v1297
      %v1387 = vunpack.c.l.b16 %v1298
      %v1388 = vunpack.c.l.b16 %v1299
      %v1389 = vunpack.c.l.b16 %v1300
      %v1390 = vunpack.c.l.b16 %v1301
      %v1391 = vunpack.c.l.b16 %v1302
      %v1392 = vpack.c.b16 %v1357, %v1356
      %v1393 = vpack.c.b16 %v1359, %v1358
      %v1394 = vpack.c.b16 %v1361, %v1360
      %v1395 = vpack.c.b16 %v1363, %v1362
      %v1396 = vpack.c.b16 %v1365, %v1364
      %v1397 = vpack.c.b16 %v1367, %v1366
      %v1398 = vpack.c.b16 %v1369, %v1368
      %v1399 = vpack.c.b16 %v1371, %v1370
      %v1400 = vpack.c.b16 %v1373, %v1372
      %v1401 = vpack.c.b16 %v1375, %v1374
      %v1402 = vpack.c.b16 %v1377, %v1376
      %v1403 = vpack.c.b16 %v1379, %v1378
      %v1404 = vpack.c.b16 %v1381, %v1380
      %v1405 = vpack.c.b16 %v1383, %v1382
      %v1406 = vpack.c.b16 %v1385, %v1384
      %v1407 = vpack.c.b16 %v1387, %v1386
      %v1408 = vpack.c.b16 %v1389, %v1388
      %v1409 = vpack.c.b16 %v1391, %v1390
      %vm1410 = vcmask 1046528
      %v1411 = vrot.slane %v1392, 1
      %v1412 = vrot.slane %v1393, 1
      %v1413 = vsel %vm1410, %v1411, %v1412
      %v1414 = vrot.slane %v1394, 1
      %v1415 = vsel %vm1410, %v1412, %v1414
      %v1416 = vrot.slane %v1395, 1
      %v1417 = vsel %vm1410, %v1414, %v1416
      %v1418 = vrot.slane %v1396, 1
      %v1419 = vsel %vm1410, %v1416, %v1418
      %v1420 = vrot.slane %v1397, 1
      %v1421 = vsel %vm1410, %v1418, %v1420
      %v1422 = vrot.slane %v1398, 1
      %v1423 = vsel %vm1410, %v1420, %v1422
      %v1424 = vrot.slane %v1399, 1
      %v1425 = vsel %vm1410, %v1422, %v1424
      %v1426 = vrot.slane %v1400, 1
      %v1427 = vsel %vm1410, %v1424, %v1426
      %v1428 = vrot.slane %v1401, 1
      %v1429 = vsel %vm1410, %v1426, %v1428
      %v1430 = vrot.slane %v1402, 1
      %v1431 = vsel %vm1410, %v1428, %v1430
      %v1432 = vrot.slane %v1403, 1
      %v1433 = vsel %vm1410, %v1430, %v1432
      %v1434 = vrot.slane %v1404, 1
      %v1435 = vsel %vm1410, %v1432, %v1434
      %v1436 = vrot.slane %v1405, 1
      %v1437 = vsel %vm1410, %v1434, %v1436
      %v1438 = vrot.slane %v1406, 1
      %v1439 = vsel %vm1410, %v1436, %v1438
      %v1440 = vrot.slane %v1407, 1
      %v1441 = vsel %vm1410, %v1438, %v1440
      %v1442 = vrot.slane %v1408, 1
      %v1443 = vsel %vm1410, %v1440, %v1442
      %v1444 = vrot.slane %v1409, 1
      %v1445 = vsel %vm1410, %v1442, %v1444
      %v1480 = vunpack.c.l.b16 %v1304
      %v1481 = vunpack.c.l.b16 %v1305
      %v1482 = vunpack.c.l.b16 %v1306
      %v1483 = vunpack.c.l.b16 %v1307
      %v1484 = vunpack.c.l.b16 %v1308
      %v1485 = vunpack.c.l.b16 %v1309
      %v1486 = vunpack.c.l.b16 %v1310
      %v1487 = vunpack.c.l.b16 %v1311
      %v1488 = vunpack.c.l.b16 %v1312
      %v1489 = vunpack.c.l.b16 %v1313
      %v1490 = vunpack.c.l.b16 %v1314
      %v1491 = vunpack.c.l.b16 %v1315
      %v1492 = vunpack.c.l.b16 %v1316
      %v1493 = vunpack.c.l.b16 %v1317
      %v1494 = vunpack.c.l.b16 %v1318
      %v1495 = vunpack.c.l.b16 %v1319
      %v1496 = vpack.c.b16 %v1481, %v1480
      %v1497 = vpack.c.b16 %v1483, %v1482
      %v1498 = vpack.c.b16 %v1485, %v1484
      %v1499 = vpack.c.b16 %v1487, %v1486
      %v1500 = vpack.c.b16 %v1489, %v1488
      %v1501 = vpack.c.b16 %v1491, %v1490
      %v1502 = vpack.c.b16 %v1493, %v1492
      %v1503 = vpack.c.b16 %v1495, %v1494
      %1512 = vmatprep.subr.bf16.mxu0 0
      %1513 = vmatpush1.bf16.msra.mxu0 %v1503
      %1514 = vmatprep.subr.bf16.mxu0 0
      %1515 = vmatpush1.bf16.msra.mxu0 %v1502
      %1516 = vmatprep.subr.bf16.mxu0 0
      %1517 = vmatpush1.bf16.msra.mxu0 %v1501
      %1518 = vmatprep.subr.bf16.mxu0 0
      %1519 = vmatpush1.bf16.msra.mxu0 %v1500
      %1520 = vmatprep.subr.bf16.mxu0 0
      %1521 = vmatpush1.bf16.msra.mxu0 %v1499
      %1522 = vmatprep.subr.bf16.mxu0 0
      %1523 = vmatpush1.bf16.msra.mxu0 %v1498
      %1524 = vmatprep.subr.bf16.mxu0 0
      %1525 = vmatpush1.bf16.msra.mxu0 %v1497
      %1526 = vmatprep.subr.bf16.mxu0 0
      %1527 = vmatpush1.bf16.msra.mxu0 %v1496
      %1528 = vmatprep.subr.bf16.mxu0 0
      %1529 = vmatpush2.bf16.msra.mxu0 0
      %1530 = vmatprep.subr.bf16.mxu0 0
      %1531 = vmatpush2.bf16.msra.mxu0 0
      %1532 = vmatprep.subr.bf16.mxu0 0
      %1533 = vmatpush2.bf16.msra.mxu0 0
      %1534 = vmatprep.subr.bf16.mxu0 0
      %1535 = vmatpush2.bf16.msra.mxu0 0
      %1536 = vmatprep.subr.bf16.mxu0 0
      %1537 = vmatpush2.bf16.msra.mxu0 0
      %1538 = vmatprep.subr.bf16.mxu0 0
      %1539 = vmatpush2.bf16.msra.mxu0 0
      %1540 = vmatprep.subr.bf16.mxu0 0
      %1541 = vmatpush2.bf16.msra.mxu0 0
      %1542 = vmatprep.subr.bf16.mxu0 0
      %1543 = vmatpush2.bf16.msra.mxu0 0
      %1544 = vmatprep.mubr.bf16.mxu0 0
      %1545 = vmatmul.mubr.bf16.gmra.mxu0 %v1413
      %v1546 = vpop.f32.mrf.mxu0
      %v1547 = vadd.f32 0.0, %v1546
      %v1548 = vpop.f32.mrf.mxu0
      %v1549 = vpop.f32.mrf.mxu0
      %v1550 = vadd.f32 0.0, %v1549
      %v1551 = vpop.f32.mrf.mxu0
      %1552 = vmatprep.mubr.bf16.mxu0 0
      %1553 = vmatmul.mubr.bf16.gmra.mxu0 %v1415
      %v1554 = vpop.f32.mrf.mxu0
      %v1555 = vadd.f32 0.0, %v1554
      %v1556 = vpop.f32.mrf.mxu0
      %v1557 = vpop.f32.mrf.mxu0
      %v1558 = vadd.f32 0.0, %v1557
      %v1559 = vpop.f32.mrf.mxu0
      %1560 = vmatprep.mubr.bf16.mxu0 0
      %1561 = vmatmul.mubr.bf16.gmra.mxu0 %v1417
      %v1562 = vpop.f32.mrf.mxu0
      %v1563 = vadd.f32 0.0, %v1562
      %v1564 = vpop.f32.mrf.mxu0
      %v1565 = vpop.f32.mrf.mxu0
      %v1566 = vadd.f32 0.0, %v1565
      %v1567 = vpop.f32.mrf.mxu0
      %1568 = vmatprep.mubr.bf16.mxu0 0
      %1569 = vmatmul.mubr.bf16.gmra.mxu0 %v1419
      %v1570 = vpop.f32.mrf.mxu0
      %v1571 = vadd.f32 0.0, %v1570
      %v1572 = vpop.f32.mrf.mxu0
      %v1573 = vpop.f32.mrf.mxu0
      %v1574 = vadd.f32 0.0, %v1573
      %v1575 = vpop.f32.mrf.mxu0
      %1576 = vmatprep.mubr.bf16.mxu0 0
      %1577 = vmatmul.mubr.bf16.gmra.mxu0 %v1421
      %v1578 = vpop.f32.mrf.mxu0
      %v1579 = vadd.f32 0.0, %v1578
      %v1580 = vpop.f32.mrf.mxu0
      %v1581 = vpop.f32.mrf.mxu0
      %v1582 = vadd.f32 0.0, %v1581
      %v1583 = vpop.f32.mrf.mxu0
      %1584 = vmatprep.mubr.bf16.mxu0 0
      %1585 = vmatmul.mubr.bf16.gmra.mxu0 %v1423
      %v1586 = vpop.f32.mrf.mxu0
      %v1587 = vadd.f32 0.0, %v1586
      %v1588 = vpop.f32.mrf.mxu0
      %v1589 = vpop.f32.mrf.mxu0
      %v1590 = vadd.f32 0.0, %v1589
      %v1591 = vpop.f32.mrf.mxu0
      %1592 = vmatprep.mubr.bf16.mxu0 0
      %1593 = vmatmul.mubr.bf16.gmra.mxu0 %v1425
      %v1594 = vpop.f32.mrf.mxu0
      %v1595 = vadd.f32 0.0, %v1594
      %v1596 = vpop.f32.mrf.mxu0
      %v1597 = vpop.f32.mrf.mxu0
      %v1598 = vadd.f32 0.0, %v1597
      %v1599 = vpop.f32.mrf.mxu0
      %1600 = vmatprep.mubr.bf16.mxu0 0
      %1601 = vmatmul.mubr.bf16.gmra.mxu0 %v1427
      %v1602 = vpop.f32.mrf.mxu0
      %v1603 = vadd.f32 0.0, %v1602
      %v1604 = vpop.f32.mrf.mxu0
      %v1605 = vpop.f32.mrf.mxu0
      %v1606 = vadd.f32 0.0, %v1605
      %v1607 = vpop.f32.mrf.mxu0
      %1608 = vmatprep.mubr.bf16.mxu0 0
      %1609 = vmatmul.mubr.bf16.gmra.mxu0 %v1429
      %v1610 = vpop.f32.mrf.mxu0
      %v1611 = vadd.f32 0.0, %v1610
      %v1612 = vpop.f32.mrf.mxu0
      %v1613 = vpop.f32.mrf.mxu0
      %v1614 = vadd.f32 0.0, %v1613
      %v1615 = vpop.f32.mrf.mxu0
      %1616 = vmatprep.mubr.bf16.mxu0 0
      %1617 = vmatmul.mubr.bf16.gmra.mxu0 %v1431
      %v1618 = vpop.f32.mrf.mxu0
      %v1619 = vadd.f32 0.0, %v1618
      %v1620 = vpop.f32.mrf.mxu0
      %v1621 = vpop.f32.mrf.mxu0
      %v1622 = vadd.f32 0.0, %v1621
      %v1623 = vpop.f32.mrf.mxu0
      %1624 = vmatprep.mubr.bf16.mxu0 0
      %1625 = vmatmul.mubr.bf16.gmra.mxu0 %v1433
      %v1626 = vpop.f32.mrf.mxu0
      %v1627 = vadd.f32 0.0, %v1626
      %v1628 = vpop.f32.mrf.mxu0
      %v1629 = vpop.f32.mrf.mxu0
      %v1630 = vadd.f32 0.0, %v1629
      %v1631 = vpop.f32.mrf.mxu0
      %1632 = vmatprep.mubr.bf16.mxu0 0
      %1633 = vmatmul.mubr.bf16.gmra.mxu0 %v1435
      %v1634 = vpop.f32.mrf.mxu0
      %v1635 = vadd.f32 0.0, %v1634
      %v1636 = vpop.f32.mrf.mxu0
      %v1637 = vpop.f32.mrf.mxu0
      %v1638 = vadd.f32 0.0, %v1637
      %v1639 = vpop.f32.mrf.mxu0
      %1640 = vmatprep.mubr.bf16.mxu0 0
      %1641 = vmatmul.mubr.bf16.gmra.mxu0 %v1437
      %v1642 = vpop.f32.mrf.mxu0
      %v1643 = vadd.f32 0.0, %v1642
      %v1644 = vpop.f32.mrf.mxu0
      %v1645 = vpop.f32.mrf.mxu0
      %v1646 = vadd.f32 0.0, %v1645
      %v1647 = vpop.f32.mrf.mxu0
      %1648 = vmatprep.mubr.bf16.mxu0 0
      %1649 = vmatmul.mubr.bf16.gmra.mxu0 %v1439
      %v1650 = vpop.f32.mrf.mxu0
      %v1651 = vadd.f32 0.0, %v1650
      %v1652 = vpop.f32.mrf.mxu0
      %v1653 = vpop.f32.mrf.mxu0
      %v1654 = vadd.f32 0.0, %v1653
      %v1655 = vpop.f32.mrf.mxu0
      %1656 = vmatprep.mubr.bf16.mxu0 0
      %1657 = vmatmul.mubr.bf16.gmra.mxu0 %v1441
      %v1658 = vpop.f32.mrf.mxu0
      %v1659 = vadd.f32 0.0, %v1658
      %v1660 = vpop.f32.mrf.mxu0
      %v1661 = vpop.f32.mrf.mxu0
      %v1662 = vadd.f32 0.0, %v1661
      %v1663 = vpop.f32.mrf.mxu0
      %1664 = vmatprep.mubr.bf16.mxu0 0
      %1665 = vmatmul.mubr.bf16.gmra.mxu0 %v1443
      %v1666 = vpop.f32.mrf.mxu0
      %v1667 = vadd.f32 0.0, %v1666
      %v1668 = vpop.f32.mrf.mxu0
      %v1669 = vpop.f32.mrf.mxu0
      %v1670 = vadd.f32 0.0, %v1669
      %v1671 = vpop.f32.mrf.mxu0
      %1672 = vmatprep.mubr.bf16.mxu0 0
      %1673 = vmatmul.mubr.bf16.gmra.mxu0 %v1445
      %v1674 = vpop.f32.mrf.mxu0
      %v1675 = vadd.f32 0.0, %v1674
      %v1676 = vpop.f32.mrf.mxu0
      %v1677 = vpop.f32.mrf.mxu0
      %v1678 = vadd.f32 0.0, %v1677
      %v1679 = vpop.f32.mrf.mxu0
      %1680 = vmatprep.mubr.bf16.mxu0 0
      %1681 = vmatmul.mubr.bf16.gmra.mxu0 %v1444
      %v1682 = vpop.f32.mrf.mxu0
      %v1683 = vadd.f32 0.0, %v1682
      %v1684 = vpop.f32.mrf.mxu0
      %v1685 = vpop.f32.mrf.mxu0
      %v1686 = vadd.f32 0.0, %v1685
      %v1687 = vpop.f32.mrf.mxu0
      %1688 = vdwg.mxu0
      %v1689 = vadd.f32 %v1231, %v1547
      %v1690 = vadd.f32 %v1232, %v1550
      %v1691 = vadd.f32 %v1233, %v1555
      %v1692 = vadd.f32 %v1234, %v1558
      %v1693 = vadd.f32 %v1235, %v1563
      %v1694 = vadd.f32 %v1236, %v1566
      %v1695 = vadd.f32 %v1237, %v1571
      %v1696 = vadd.f32 %v1238, %v1574
      %v1697 = vadd.f32 %v1239, %v1579
      %v1698 = vadd.f32 %v1240, %v1582
      %v1699 = vadd.f32 %v1241, %v1587
      %v1700 = vadd.f32 %v1242, %v1590
      %v1701 = vadd.f32 %v1243, %v1595
      %v1702 = vadd.f32 %v1244, %v1598
      %v1703 = vadd.f32 %v1245, %v1603
      %v1704 = vadd.f32 %v1246, %v1606
      %v1705 = vadd.f32 %v1247, %v1611
      %v1706 = vadd.f32 %v1248, %v1614
      %v1707 = vadd.f32 %v1249, %v1619
      %v1708 = vadd.f32 %v1250, %v1622
      %v1709 = vadd.f32 %v1251, %v1627
      %v1710 = vadd.f32 %v1252, %v1630
      %v1711 = vadd.f32 %v1253, %v1635
      %v1712 = vadd.f32 %v1254, %v1638
      %v1713 = vadd.f32 %v1255, %v1643
      %v1714 = vadd.f32 %v1256, %v1646
      %v1715 = vadd.f32 %v1257, %v1651
      %v1716 = vadd.f32 %v1258, %v1654
      %v1717 = vadd.f32 %v1259, %v1659
      %v1718 = vadd.f32 %v1260, %v1662
      %v1719 = vadd.f32 %v1261, %v1667
      %v1720 = vadd.f32 %v1262, %v1670
      %v1721 = vadd.f32 %v1263, %v1675
      %v1722 = vadd.f32 %v1264, %v1678
      %v1723 = vadd.f32 %v1265, %v1683
      %v1724 = vadd.f32 %v1266, %v1686
      %1725 = vst [vmem:[#allocation2] sm:$0xff] %v1689
      %1726 = vst [vmem:[#allocation2 + $0x8] sm:$0xff] %v1690
      %1727 = vst [vmem:[#allocation2 + $0x10] sm:$0xff] %v1691
      %1728 = vst [vmem:[#allocation2 + $0x18] sm:$0xff] %v1692
      %1729 = vst [vmem:[#allocation2 + $0x20] sm:$0xff] %v1693
      %1730 = vst [vmem:[#allocation2 + $0x28] sm:$0xff] %v1694
      %1731 = vst [vmem:[#allocation2 + $0x30] sm:$0xff] %v1695
      %1732 = vst [vmem:[#allocation2 + $0x38] sm:$0xff] %v1696
      %1733 = vst [vmem:[#allocation2 + $0x40] sm:$0xff] %v1697
      %1734 = vst [vmem:[#allocation2 + $0x48] sm:$0xff] %v1698
      %1735 = vst [vmem:[#allocation2 + $0x50] sm:$0xff] %v1699
      %1736 = vst [vmem:[#allocation2 + $0x58] sm:$0xff] %v1700
      %1737 = vst [vmem:[#allocation2 + $0x60] sm:$0xff] %v1701
      %1738 = vst [vmem:[#allocation2 + $0x68] sm:$0xff] %v1702
      %1739 = vst [vmem:[#allocation2 + $0x70] sm:$0xff] %v1703
      %1740 = vst [vmem:[#allocation2 + $0x78] sm:$0xff] %v1704
      %1741 = vst [vmem:[#allocation2 + $0x80] sm:$0xff] %v1705
      %1742 = vst [vmem:[#allocation2 + $0x88] sm:$0xff] %v1706
      %1743 = vst [vmem:[#allocation2 + $0x90] sm:$0xff] %v1707
      %1744 = vst [vmem:[#allocation2 + $0x98] sm:$0xff] %v1708
      %1745 = vst [vmem:[#allocation2 + $0xa0] sm:$0xff] %v1709
      %1746 = vst [vmem:[#allocation2 + $0xa8] sm:$0xff] %v1710
      %1747 = vst [vmem:[#allocation2 + $0xb0] sm:$0xff] %v1711
      %1748 = vst [vmem:[#allocation2 + $0xb8] sm:$0xff] %v1712
      %1749 = vst [vmem:[#allocation2 + $0xc0] sm:$0xff] %v1713
      %1750 = vst [vmem:[#allocation2 + $0xc8] sm:$0xff] %v1714
      %1751 = vst [vmem:[#allocation2 + $0xd0] sm:$0xff] %v1715
      %1752 = vst [vmem:[#allocation2 + $0xd8] sm:$0xff] %v1716
      %1753 = vst [vmem:[#allocation2 + $0xe0] sm:$0xff] %v1717
      %1754 = vst [vmem:[#allocation2 + $0xe8] sm:$0xff] %v1718
      %1755 = vst [vmem:[#allocation2 + $0xf0] sm:$0xff] %v1719
      %1756 = vst [vmem:[#allocation2 + $0xf8] sm:$0xff] %v1720
      %1757 = vst [vmem:[#allocation2 + $0x100] sm:$0xff] %v1721
      %1758 = vst [vmem:[#allocation2 + $0x108] sm:$0xff] %v1722
      %1759 = vst [vmem:[#allocation2 + $0x110] sm:$0xff] %v1723
      %1760 = vst [vmem:[#allocation2 + $0x118] sm:$0x3f] %v1724
      %v1761 = vld [vmem:[#allocation2] sm:$0xff]
      %v1762 = vld [vmem:[#allocation2 + $0x8] sm:$0xff]
      %v1763 = vld [vmem:[#allocation2 + $0x10] sm:$0xff]
      %v1764 = vld [vmem:[#allocation2 + $0x18] sm:$0xff]
      %v1765 = vld [vmem:[#allocation2 + $0x20] sm:$0xff]
      %v1766 = vld [vmem:[#allocation2 + $0x28] sm:$0xff]
      %v1767 = vld [vmem:[#allocation2 + $0x30] sm:$0xff]
      %v1768 = vld [vmem:[#allocation2 + $0x38] sm:$0xff]
      %v1769 = vld [vmem:[#allocation2 + $0x40] sm:$0xff]
      %v1770 = vld [vmem:[#allocation2 + $0x48] sm:$0xff]
      %v1771 = vld [vmem:[#allocation2 + $0x50] sm:$0xff]
      %v1772 = vld [vmem:[#allocation2 + $0x58] sm:$0xff]
      %v1773 = vld [vmem:[#allocation2 + $0x60] sm:$0xff]
      %v1774 = vld [vmem:[#allocation2 + $0x68] sm:$0xff]
      %v1775 = vld [vmem:[#allocation2 + $0x70] sm:$0xff]
      %v1776 = vld [vmem:[#allocation2 + $0x78] sm:$0xff]
      %v1777 = vld [vmem:[#allocation2 + $0x80] sm:$0xff]
      %v1778 = vld [vmem:[#allocation2 + $0x88] sm:$0xff]
      %v1779 = vld [vmem:[#allocation2 + $0x90] sm:$0xff]
      %v1780 = vld [vmem:[#allocation2 + $0x98] sm:$0xff]
      %v1781 = vld [vmem:[#allocation2 + $0xa0] sm:$0xff]
      %v1782 = vld [vmem:[#allocation2 + $0xa8] sm:$0xff]
      %v1783 = vld [vmem:[#allocation2 + $0xb0] sm:$0xff]
      %v1784 = vld [vmem:[#allocation2 + $0xb8] sm:$0xff]
      %v1785 = vld [vmem:[#allocation2 + $0xc0] sm:$0xff]
      %v1786 = vld [vmem:[#allocation2 + $0xc8] sm:$0xff]
      %v1787 = vld [vmem:[#allocation2 + $0xd0] sm:$0xff]
      %v1788 = vld [vmem:[#allocation2 + $0xd8] sm:$0xff]
      %v1789 = vld [vmem:[#allocation2 + $0xe0] sm:$0xff]
      %v1790 = vld [vmem:[#allocation2 + $0xe8] sm:$0xff]
      %v1791 = vld [vmem:[#allocation2 + $0xf0] sm:$0xff]
      %v1792 = vld [vmem:[#allocation2 + $0xf8] sm:$0xff]
      %v1793 = vld [vmem:[#allocation2 + $0x100] sm:$0xff]
      %v1794 = vld [vmem:[#allocation2 + $0x108] sm:$0xff]
      %v1795 = vld [vmem:[#allocation2 + $0x110] sm:$0xff]
      %v1796 = vld [vmem:[#allocation2 + $0x118] sm:$0x3f]
      %v1797 = vld [vmem:[%s165 + $0x8] sm:$0xe]
      %v1798 = vld [vmem:[%s165 + $0xc] sm:$0xf]
      %v1799 = vld [vmem:[%s165 + $0x10] sm:$0xf]
      %v1800 = vld [vmem:[%s165 + $0x14] sm:$0xf]
      %v1801 = vld [vmem:[%s165 + $0x18] sm:$0xf]
      %v1802 = vld [vmem:[%s165 + $0x1c] sm:$0xf]
      %v1803 = vld [vmem:[%s165 + $0x20] sm:$0xf]
      %v1804 = vld [vmem:[%s165 + $0x24] sm:$0xf]
      %v1805 = vld [vmem:[%s165 + $0x28] sm:$0xf]
      %v1806 = vld [vmem:[%s165 + $0x2c] sm:$0xf]
      %v1807 = vld [vmem:[%s165 + $0x30] sm:$0xf]
      %v1808 = vld [vmem:[%s165 + $0x34] sm:$0xf]
      %v1809 = vld [vmem:[%s165 + $0x38] sm:$0xf]
      %v1810 = vld [vmem:[%s165 + $0x3c] sm:$0xf]
      %v1811 = vld [vmem:[%s165 + $0x40] sm:$0xf]
      %v1812 = vld [vmem:[%s165 + $0x44] sm:$0xf]
      %v1813 = vld [vmem:[%s165 + $0x48] sm:$0xf]
      %v1814 = vld [vmem:[%s165 + $0x4c] sm:$0xf]
      %v1815 = vld [vmem:[%s165 + $0x50] sm:$0xf]
      %v1816 = vld [vmem:[%s165 + $0x54] sm:$0xf]
      %v1817 = vld [vmem:[%s165 + $0x58] sm:$0xf]
      %v1818 = vld [vmem:[%s165 + $0x5c] sm:$0xf]
      %v1819 = vld [vmem:[%s165 + $0x60] sm:$0xf]
      %v1820 = vld [vmem:[%s165 + $0x64] sm:$0xf]
      %v1821 = vld [vmem:[%s165 + $0x68] sm:$0xf]
      %v1822 = vld [vmem:[%s165 + $0x6c] sm:$0xf]
      %v1823 = vld [vmem:[%s165 + $0x70] sm:$0xf]
      %v1824 = vld [vmem:[%s165 + $0x74] sm:$0xf]
      %v1825 = vld [vmem:[%s165 + $0x78] sm:$0xf]
      %v1826 = vld [vmem:[%s165 + $0x7c] sm:$0xf]
      %v1827 = vld [vmem:[%s165 + $0x80] sm:$0xf]
      %v1828 = vld [vmem:[%s165 + $0x84] sm:$0xf]
      %v1829 = vld [vmem:[%s165 + $0x88] sm:$0xf]
      %v1830 = vld [vmem:[%s165 + $0x8c] sm:$0xf]
      %v1831 = vld [vmem:[%s165 + $0x90] sm:$0xf]
      %v1832 = vld [vmem:[%s165 + $0x94] sm:$0xf]
      %s1833 = scalar_lea.vmem %s1, 192
      %v1834 = vld [vmem:[%s1833] sm:$0xf]
      %v1835 = vld [vmem:[%s1833 + $0x4] sm:$0xf]
      %v1836 = vld [vmem:[%s1833 + $0x8] sm:$0xf]
      %v1837 = vld [vmem:[%s1833 + $0xc] sm:$0xf]
      %v1838 = vld [vmem:[%s1833 + $0x10] sm:$0xf]
      %v1839 = vld [vmem:[%s1833 + $0x14] sm:$0xf]
      %v1840 = vld [vmem:[%s1833 + $0x18] sm:$0xf]
      %v1841 = vld [vmem:[%s1833 + $0x1c] sm:$0xf]
      %v1842 = vld [vmem:[%s1833 + $0x20] sm:$0xf]
      %v1843 = vld [vmem:[%s1833 + $0x24] sm:$0xf]
      %v1844 = vld [vmem:[%s1833 + $0x28] sm:$0xf]
      %v1845 = vld [vmem:[%s1833 + $0x2c] sm:$0xf]
      %v1846 = vld [vmem:[%s1833 + $0x30] sm:$0xf]
      %v1847 = vld [vmem:[%s1833 + $0x34] sm:$0xf]
      %v1848 = vld [vmem:[%s1833 + $0x38] sm:$0xf]
      %v1849 = vld [vmem:[%s1833 + $0x3c] sm:$0xf]
      %v1886 = vunpack.c.l.b16 %v1797
      %v1887 = vunpack.c.l.b16 %v1798
      %v1888 = vunpack.c.l.b16 %v1799
      %v1889 = vunpack.c.l.b16 %v1800
      %v1890 = vunpack.c.l.b16 %v1801
      %v1891 = vunpack.c.l.b16 %v1802
      %v1892 = vunpack.c.l.b16 %v1803
      %v1893 = vunpack.c.l.b16 %v1804
      %v1894 = vunpack.c.l.b16 %v1805
      %v1895 = vunpack.c.l.b16 %v1806
      %v1896 = vunpack.c.l.b16 %v1807
      %v1897 = vunpack.c.l.b16 %v1808
      %v1898 = vunpack.c.l.b16 %v1809
      %v1899 = vunpack.c.l.b16 %v1810
      %v1900 = vunpack.c.l.b16 %v1811
      %v1901 = vunpack.c.l.b16 %v1812
      %v1902 = vunpack.c.l.b16 %v1813
      %v1903 = vunpack.c.l.b16 %v1814
      %v1904 = vunpack.c.l.b16 %v1815
      %v1905 = vunpack.c.l.b16 %v1816
      %v1906 = vunpack.c.l.b16 %v1817
      %v1907 = vunpack.c.l.b16 %v1818
      %v1908 = vunpack.c.l.b16 %v1819
      %v1909 = vunpack.c.l.b16 %v1820
      %v1910 = vunpack.c.l.b16 %v1821
      %v1911 = vunpack.c.l.b16 %v1822
      %v1912 = vunpack.c.l.b16 %v1823
      %v1913 = vunpack.c.l.b16 %v1824
      %v1914 = vunpack.c.l.b16 %v1825
      %v1915 = vunpack.c.l.b16 %v1826
      %v1916 = vunpack.c.l.b16 %v1827
      %v1917 = vunpack.c.l.b16 %v1828
      %v1918 = vunpack.c.l.b16 %v1829
      %v1919 = vunpack.c.l.b16 %v1830
      %v1920 = vunpack.c.l.b16 %v1831
      %v1921 = vunpack.c.l.b16 %v1832
      %v1922 = vpack.c.b16 %v1887, %v1886
      %v1923 = vpack.c.b16 %v1889, %v1888
      %v1924 = vpack.c.b16 %v1891, %v1890
      %v1925 = vpack.c.b16 %v1893, %v1892
      %v1926 = vpack.c.b16 %v1895, %v1894
      %v1927 = vpack.c.b16 %v1897, %v1896
      %v1928 = vpack.c.b16 %v1899, %v1898
      %v1929 = vpack.c.b16 %v1901, %v1900
      %v1930 = vpack.c.b16 %v1903, %v1902
      %v1931 = vpack.c.b16 %v1905, %v1904
      %v1932 = vpack.c.b16 %v1907, %v1906
      %v1933 = vpack.c.b16 %v1909, %v1908
      %v1934 = vpack.c.b16 %v1911, %v1910
      %v1935 = vpack.c.b16 %v1913, %v1912
      %v1936 = vpack.c.b16 %v1915, %v1914
      %v1937 = vpack.c.b16 %v1917, %v1916
      %v1938 = vpack.c.b16 %v1919, %v1918
      %v1939 = vpack.c.b16 %v1921, %v1920
      %v1940 = vrot.slane %v1922, 1
      %v1941 = vrot.slane %v1923, 1
      %v1942 = vsel %vm1410, %v1940, %v1941
      %v1943 = vrot.slane %v1924, 1
      %v1944 = vsel %vm1410, %v1941, %v1943
      %v1945 = vrot.slane %v1925, 1
      %v1946 = vsel %vm1410, %v1943, %v1945
      %v1947 = vrot.slane %v1926, 1
      %v1948 = vsel %vm1410, %v1945, %v1947
      %v1949 = vrot.slane %v1927, 1
      %v1950 = vsel %vm1410, %v1947, %v1949
      %v1951 = vrot.slane %v1928, 1
      %v1952 = vsel %vm1410, %v1949, %v1951
      %v1953 = vrot.slane %v1929, 1
      %v1954 = vsel %vm1410, %v1951, %v1953
      %v1955 = vrot.slane %v1930, 1
      %v1956 = vsel %vm1410, %v1953, %v1955
      %v1957 = vrot.slane %v1931, 1
      %v1958 = vsel %vm1410, %v1955, %v1957
      %v1959 = vrot.slane %v1932, 1
      %v1960 = vsel %vm1410, %v1957, %v1959
      %v1961 = vrot.slane %v1933, 1
      %v1962 = vsel %vm1410, %v1959, %v1961
      %v1963 = vrot.slane %v1934, 1
      %v1964 = vsel %vm1410, %v1961, %v1963
      %v1965 = vrot.slane %v1935, 1
      %v1966 = vsel %vm1410, %v1963, %v1965
      %v1967 = vrot.slane %v1936, 1
      %v1968 = vsel %vm1410, %v1965, %v1967
      %v1969 = vrot.slane %v1937, 1
      %v1970 = vsel %vm1410, %v1967, %v1969
      %v1971 = vrot.slane %v1938, 1
      %v1972 = vsel %vm1410, %v1969, %v1971
      %v1973 = vrot.slane %v1939, 1
      %v1974 = vsel %vm1410, %v1971, %v1973
      %v2009 = vunpack.c.l.b16 %v1834
      %v2010 = vunpack.c.l.b16 %v1835
      %v2011 = vunpack.c.l.b16 %v1836
      %v2012 = vunpack.c.l.b16 %v1837
      %v2013 = vunpack.c.l.b16 %v1838
      %v2014 = vunpack.c.l.b16 %v1839
      %v2015 = vunpack.c.l.b16 %v1840
      %v2016 = vunpack.c.l.b16 %v1841
      %v2017 = vunpack.c.l.b16 %v1842
      %v2018 = vunpack.c.l.b16 %v1843
      %v2019 = vunpack.c.l.b16 %v1844
      %v2020 = vunpack.c.l.b16 %v1845
      %v2021 = vunpack.c.l.b16 %v1846
      %v2022 = vunpack.c.l.b16 %v1847
      %v2023 = vunpack.c.l.b16 %v1848
      %v2024 = vunpack.c.l.b16 %v1849
      %v2025 = vpack.c.b16 %v2010, %v2009
      %v2026 = vpack.c.b16 %v2012, %v2011
      %v2027 = vpack.c.b16 %v2014, %v2013
      %v2028 = vpack.c.b16 %v2016, %v2015
      %v2029 = vpack.c.b16 %v2018, %v2017
      %v2030 = vpack.c.b16 %v2020, %v2019
      %v2031 = vpack.c.b16 %v2022, %v2021
      %v2032 = vpack.c.b16 %v2024, %v2023
      %2041 = vmatprep.subr.bf16.mxu0 0
      %2042 = vmatpush1.bf16.msra.mxu0 %v2032
      %2043 = vmatprep.subr.bf16.mxu0 0
      %2044 = vmatpush1.bf16.msra.mxu0 %v2031
      %2045 = vmatprep.subr.bf16.mxu0 0
      %2046 = vmatpush1.bf16.msra.mxu0 %v2030
      %2047 = vmatprep.subr.bf16.mxu0 0
      %2048 = vmatpush1.bf16.msra.mxu0 %v2029
      %2049 = vmatprep.subr.bf16.mxu0 0
      %2050 = vmatpush1.bf16.msra.mxu0 %v2028
      %2051 = vmatprep.subr.bf16.mxu0 0
      %2052 = vmatpush1.bf16.msra.mxu0 %v2027
      %2053 = vmatprep.subr.bf16.mxu0 0
      %2054 = vmatpush1.bf16.msra.mxu0 %v2026
      %2055 = vmatprep.subr.bf16.mxu0 0
      %2056 = vmatpush1.bf16.msra.mxu0 %v2025
      %2057 = vmatprep.subr.bf16.mxu0 0
      %2058 = vmatpush2.bf16.msra.mxu0 0
      %2059 = vmatprep.subr.bf16.mxu0 0
      %2060 = vmatpush2.bf16.msra.mxu0 0
      %2061 = vmatprep.subr.bf16.mxu0 0
      %2062 = vmatpush2.bf16.msra.mxu0 0
      %2063 = vmatprep.subr.bf16.mxu0 0
      %2064 = vmatpush2.bf16.msra.mxu0 0
      %2065 = vmatprep.subr.bf16.mxu0 0
      %2066 = vmatpush2.bf16.msra.mxu0 0
      %2067 = vmatprep.subr.bf16.mxu0 0
      %2068 = vmatpush2.bf16.msra.mxu0 0
      %2069 = vmatprep.subr.bf16.mxu0 0
      %2070 = vmatpush2.bf16.msra.mxu0 0
      %2071 = vmatprep.subr.bf16.mxu0 0
      %2072 = vmatpush2.bf16.msra.mxu0 0
      %2073 = vmatprep.mubr.bf16.mxu0 0
      %2074 = vmatmul.mubr.bf16.gmra.mxu0 %v1942
      %v2075 = vpop.f32.mrf.mxu0
      %v2076 = vadd.f32 0.0, %v2075
      %v2077 = vpop.f32.mrf.mxu0
      %v2078 = vpop.f32.mrf.mxu0
      %v2079 = vadd.f32 0.0, %v2078
      %v2080 = vpop.f32.mrf.mxu0
      %2081 = vmatprep.mubr.bf16.mxu0 0
      %2082 = vmatmul.mubr.bf16.gmra.mxu0 %v1944
      %v2083 = vpop.f32.mrf.mxu0
      %v2084 = vadd.f32 0.0, %v2083
      %v2085 = vpop.f32.mrf.mxu0
      %v2086 = vpop.f32.mrf.mxu0
      %v2087 = vadd.f32 0.0, %v2086
      %v2088 = vpop.f32.mrf.mxu0
      %2089 = vmatprep.mubr.bf16.mxu0 0
      %2090 = vmatmul.mubr.bf16.gmra.mxu0 %v1946
      %v2091 = vpop.f32.mrf.mxu0
      %v2092 = vadd.f32 0.0, %v2091
      %v2093 = vpop.f32.mrf.mxu0
      %v2094 = vpop.f32.mrf.mxu0
      %v2095 = vadd.f32 0.0, %v2094
      %v2096 = vpop.f32.mrf.mxu0
      %2097 = vmatprep.mubr.bf16.mxu0 0
      %2098 = vmatmul.mubr.bf16.gmra.mxu0 %v1948
      %v2099 = vpop.f32.mrf.mxu0
      %v2100 = vadd.f32 0.0, %v2099
      %v2101 = vpop.f32.mrf.mxu0
      %v2102 = vpop.f32.mrf.mxu0
      %v2103 = vadd.f32 0.0, %v2102
      %v2104 = vpop.f32.mrf.mxu0
      %2105 = vmatprep.mubr.bf16.mxu0 0
      %2106 = vmatmul.mubr.bf16.gmra.mxu0 %v1950
      %v2107 = vpop.f32.mrf.mxu0
      %v2108 = vadd.f32 0.0, %v2107
      %v2109 = vpop.f32.mrf.mxu0
      %v2110 = vpop.f32.mrf.mxu0
      %v2111 = vadd.f32 0.0, %v2110
      %v2112 = vpop.f32.mrf.mxu0
      %2113 = vmatprep.mubr.bf16.mxu0 0
      %2114 = vmatmul.mubr.bf16.gmra.mxu0 %v1952
      %v2115 = vpop.f32.mrf.mxu0
      %v2116 = vadd.f32 0.0, %v2115
      %v2117 = vpop.f32.mrf.mxu0
      %v2118 = vpop.f32.mrf.mxu0
      %v2119 = vadd.f32 0.0, %v2118
      %v2120 = vpop.f32.mrf.mxu0
      %2121 = vmatprep.mubr.bf16.mxu0 0
      %2122 = vmatmul.mubr.bf16.gmra.mxu0 %v1954
      %v2123 = vpop.f32.mrf.mxu0
      %v2124 = vadd.f32 0.0, %v2123
      %v2125 = vpop.f32.mrf.mxu0
      %v2126 = vpop.f32.mrf.mxu0
      %v2127 = vadd.f32 0.0, %v2126
      %v2128 = vpop.f32.mrf.mxu0
      %2129 = vmatprep.mubr.bf16.mxu0 0
      %2130 = vmatmul.mubr.bf16.gmra.mxu0 %v1956
      %v2131 = vpop.f32.mrf.mxu0
      %v2132 = vadd.f32 0.0, %v2131
      %v2133 = vpop.f32.mrf.mxu0
      %v2134 = vpop.f32.mrf.mxu0
      %v2135 = vadd.f32 0.0, %v2134
      %v2136 = vpop.f32.mrf.mxu0
      %2137 = vmatprep.mubr.bf16.mxu0 0
      %2138 = vmatmul.mubr.bf16.gmra.mxu0 %v1958
      %v2139 = vpop.f32.mrf.mxu0
      %v2140 = vadd.f32 0.0, %v2139
      %v2141 = vpop.f32.mrf.mxu0
      %v2142 = vpop.f32.mrf.mxu0
      %v2143 = vadd.f32 0.0, %v2142
      %v2144 = vpop.f32.mrf.mxu0
      %2145 = vmatprep.mubr.bf16.mxu0 0
      %2146 = vmatmul.mubr.bf16.gmra.mxu0 %v1960
      %v2147 = vpop.f32.mrf.mxu0
      %v2148 = vadd.f32 0.0, %v2147
      %v2149 = vpop.f32.mrf.mxu0
      %v2150 = vpop.f32.mrf.mxu0
      %v2151 = vadd.f32 0.0, %v2150
      %v2152 = vpop.f32.mrf.mxu0
      %2153 = vmatprep.mubr.bf16.mxu0 0
      %2154 = vmatmul.mubr.bf16.gmra.mxu0 %v1962
      %v2155 = vpop.f32.mrf.mxu0
      %v2156 = vadd.f32 0.0, %v2155
      %v2157 = vpop.f32.mrf.mxu0
      %v2158 = vpop.f32.mrf.mxu0
      %v2159 = vadd.f32 0.0, %v2158
      %v2160 = vpop.f32.mrf.mxu0
      %2161 = vmatprep.mubr.bf16.mxu0 0
      %2162 = vmatmul.mubr.bf16.gmra.mxu0 %v1964
      %v2163 = vpop.f32.mrf.mxu0
      %v2164 = vadd.f32 0.0, %v2163
      %v2165 = vpop.f32.mrf.mxu0
      %v2166 = vpop.f32.mrf.mxu0
      %v2167 = vadd.f32 0.0, %v2166
      %v2168 = vpop.f32.mrf.mxu0
      %2169 = vmatprep.mubr.bf16.mxu0 0
      %2170 = vmatmul.mubr.bf16.gmra.mxu0 %v1966
      %v2171 = vpop.f32.mrf.mxu0
      %v2172 = vadd.f32 0.0, %v2171
      %v2173 = vpop.f32.mrf.mxu0
      %v2174 = vpop.f32.mrf.mxu0
      %v2175 = vadd.f32 0.0, %v2174
      %v2176 = vpop.f32.mrf.mxu0
      %2177 = vmatprep.mubr.bf16.mxu0 0
      %2178 = vmatmul.mubr.bf16.gmra.mxu0 %v1968
      %v2179 = vpop.f32.mrf.mxu0
      %v2180 = vadd.f32 0.0, %v2179
      %v2181 = vpop.f32.mrf.mxu0
      %v2182 = vpop.f32.mrf.mxu0
      %v2183 = vadd.f32 0.0, %v2182
      %v2184 = vpop.f32.mrf.mxu0
      %2185 = vmatprep.mubr.bf16.mxu0 0
      %2186 = vmatmul.mubr.bf16.gmra.mxu0 %v1970
      %v2187 = vpop.f32.mrf.mxu0
      %v2188 = vadd.f32 0.0, %v2187
      %v2189 = vpop.f32.mrf.mxu0
      %v2190 = vpop.f32.mrf.mxu0
      %v2191 = vadd.f32 0.0, %v2190
      %v2192 = vpop.f32.mrf.mxu0
      %2193 = vmatprep.mubr.bf16.mxu0 0
      %2194 = vmatmul.mubr.bf16.gmra.mxu0 %v1972
      %v2195 = vpop.f32.mrf.mxu0
      %v2196 = vadd.f32 0.0, %v2195
      %v2197 = vpop.f32.mrf.mxu0
      %v2198 = vpop.f32.mrf.mxu0
      %v2199 = vadd.f32 0.0, %v2198
      %v2200 = vpop.f32.mrf.mxu0
      %2201 = vmatprep.mubr.bf16.mxu0 0
      %2202 = vmatmul.mubr.bf16.gmra.mxu0 %v1974
      %v2203 = vpop.f32.mrf.mxu0
      %v2204 = vadd.f32 0.0, %v2203
      %v2205 = vpop.f32.mrf.mxu0
      %v2206 = vpop.f32.mrf.mxu0
      %v2207 = vadd.f32 0.0, %v2206
      %v2208 = vpop.f32.mrf.mxu0
      %2209 = vmatprep.mubr.bf16.mxu0 0
      %2210 = vmatmul.mubr.bf16.gmra.mxu0 %v1973
      %v2211 = vpop.f32.mrf.mxu0
      %v2212 = vadd.f32 0.0, %v2211
      %v2213 = vpop.f32.mrf.mxu0
      %v2214 = vpop.f32.mrf.mxu0
      %v2215 = vadd.f32 0.0, %v2214
      %v2216 = vpop.f32.mrf.mxu0
      %2217 = vdwg.mxu0
      %v2218 = vadd.f32 %v1761, %v2076
      %v2219 = vadd.f32 %v1762, %v2079
      %v2220 = vadd.f32 %v1763, %v2084
      %v2221 = vadd.f32 %v1764, %v2087
      %v2222 = vadd.f32 %v1765, %v2092
      %v2223 = vadd.f32 %v1766, %v2095
      %v2224 = vadd.f32 %v1767, %v2100
      %v2225 = vadd.f32 %v1768, %v2103
      %v2226 = vadd.f32 %v1769, %v2108
      %v2227 = vadd.f32 %v1770, %v2111
      %v2228 = vadd.f32 %v1771, %v2116
      %v2229 = vadd.f32 %v1772, %v2119
      %v2230 = vadd.f32 %v1773, %v2124
      %v2231 = vadd.f32 %v1774, %v2127
      %v2232 = vadd.f32 %v1775, %v2132
      %v2233 = vadd.f32 %v1776, %v2135
      %v2234 = vadd.f32 %v1777, %v2140
      %v2235 = vadd.f32 %v1778, %v2143
      %v2236 = vadd.f32 %v1779, %v2148
      %v2237 = vadd.f32 %v1780, %v2151
      %v2238 = vadd.f32 %v1781, %v2156
      %v2239 = vadd.f32 %v1782, %v2159
      %v2240 = vadd.f32 %v1783, %v2164
      %v2241 = vadd.f32 %v1784, %v2167
      %v2242 = vadd.f32 %v1785, %v2172
      %v2243 = vadd.f32 %v1786, %v2175
      %v2244 = vadd.f32 %v1787, %v2180
      %v2245 = vadd.f32 %v1788, %v2183
      %v2246 = vadd.f32 %v1789, %v2188
      %v2247 = vadd.f32 %v1790, %v2191
      %v2248 = vadd.f32 %v1791, %v2196
      %v2249 = vadd.f32 %v1792, %v2199
      %v2250 = vadd.f32 %v1793, %v2204
      %v2251 = vadd.f32 %v1794, %v2207
      %v2252 = vadd.f32 %v1795, %v2212
      %v2253 = vadd.f32 %v1796, %v2215
      %2254 = vst [vmem:[#allocation2] sm:$0xff] %v2218
      %2255 = vst [vmem:[#allocation2 + $0x8] sm:$0xff] %v2219
      %2256 = vst [vmem:[#allocation2 + $0x10] sm:$0xff] %v2220
      %2257 = vst [vmem:[#allocation2 + $0x18] sm:$0xff] %v2221
      %2258 = vst [vmem:[#allocation2 + $0x20] sm:$0xff] %v2222
      %2259 = vst [vmem:[#allocation2 + $0x28] sm:$0xff] %v2223
      %2260 = vst [vmem:[#allocation2 + $0x30] sm:$0xff] %v2224
      %2261 = vst [vmem:[#allocation2 + $0x38] sm:$0xff] %v2225
      %2262 = vst [vmem:[#allocation2 + $0x40] sm:$0xff] %v2226
      %2263 = vst [vmem:[#allocation2 + $0x48] sm:$0xff] %v2227
      %2264 = vst [vmem:[#allocation2 + $0x50] sm:$0xff] %v2228
      %2265 = vst [vmem:[#allocation2 + $0x58] sm:$0xff] %v2229
      %2266 = vst [vmem:[#allocation2 + $0x60] sm:$0xff] %v2230
      %2267 = vst [vmem:[#allocation2 + $0x68] sm:$0xff] %v2231
      %2268 = vst [vmem:[#allocation2 + $0x70] sm:$0xff] %v2232
      %2269 = vst [vmem:[#allocation2 + $0x78] sm:$0xff] %v2233
      %2270 = vst [vmem:[#allocation2 + $0x80] sm:$0xff] %v2234
      %2271 = vst [vmem:[#allocation2 + $0x88] sm:$0xff] %v2235
      %2272 = vst [vmem:[#allocation2 + $0x90] sm:$0xff] %v2236
      %2273 = vst [vmem:[#allocation2 + $0x98] sm:$0xff] %v2237
      %2274 = vst [vmem:[#allocation2 + $0xa0] sm:$0xff] %v2238
      %2275 = vst [vmem:[#allocation2 + $0xa8] sm:$0xff] %v2239
      %2276 = vst [vmem:[#allocation2 + $0xb0] sm:$0xff] %v2240
      %2277 = vst [vmem:[#allocation2 + $0xb8] sm:$0xff] %v2241
      %2278 = vst [vmem:[#allocation2 + $0xc0] sm:$0xff] %v2242
      %2279 = vst [vmem:[#allocation2 + $0xc8] sm:$0xff] %v2243
      %2280 = vst [vmem:[#allocation2 + $0xd0] sm:$0xff] %v2244
      %2281 = vst [vmem:[#allocation2 + $0xd8] sm:$0xff] %v2245
      %2282 = vst [vmem:[#allocation2 + $0xe0] sm:$0xff] %v2246
      %2283 = vst [vmem:[#allocation2 + $0xe8] sm:$0xff] %v2247
      %2284 = vst [vmem:[#allocation2 + $0xf0] sm:$0xff] %v2248
      %2285 = vst [vmem:[#allocation2 + $0xf8] sm:$0xff] %v2249
      %2286 = vst [vmem:[#allocation2 + $0x100] sm:$0xff] %v2250
      %2287 = vst [vmem:[#allocation2 + $0x108] sm:$0xff] %v2251
      %2288 = vst [vmem:[#allocation2 + $0x110] sm:$0xff] %v2252
      %2289 = vst [vmem:[#allocation2 + $0x118] sm:$0x3f] %v2253
      %v2290 = vld [vmem:[#allocation2] sm:$0xff]
      %v2291 = vld [vmem:[#allocation2 + $0x8] sm:$0xff]
      %v2292 = vld [vmem:[#allocation2 + $0x10] sm:$0xff]
      %v2293 = vld [vmem:[#allocation2 + $0x18] sm:$0xff]
      %v2294 = vld [vmem:[#allocation2 + $0x20] sm:$0xff]
      %v2295 = vld [vmem:[#allocation2 + $0x28] sm:$0xff]
      %v2296 = vld [vmem:[#allocation2 + $0x30] sm:$0xff]
      %v2297 = vld [vmem:[#allocation2 + $0x38] sm:$0xff]
      %v2298 = vld [vmem:[#allocation2 + $0x40] sm:$0xff]
      %v2299 = vld [vmem:[#allocation2 + $0x48] sm:$0xff]
      %v2300 = vld [vmem:[#allocation2 + $0x50] sm:$0xff]
      %v2301 = vld [vmem:[#allocation2 + $0x58] sm:$0xff]
      %v2302 = vld [vmem:[#allocation2 + $0x60] sm:$0xff]
      %v2303 = vld [vmem:[#allocation2 + $0x68] sm:$0xff]
      %v2304 = vld [vmem:[#allocation2 + $0x70] sm:$0xff]
      %v2305 = vld [vmem:[#allocation2 + $0x78] sm:$0xff]
      %v2306 = vld [vmem:[#allocation2 + $0x80] sm:$0xff]
      %v2307 = vld [vmem:[#allocation2 + $0x88] sm:$0xff]
      %v2308 = vld [vmem:[#allocation2 + $0x90] sm:$0xff]
      %v2309 = vld [vmem:[#allocation2 + $0x98] sm:$0xff]
      %v2310 = vld [vmem:[#allocation2 + $0xa0] sm:$0xff]
      %v2311 = vld [vmem:[#allocation2 + $0xa8] sm:$0xff]
      %v2312 = vld [vmem:[#allocation2 + $0xb0] sm:$0xff]
      %v2313 = vld [vmem:[#allocation2 + $0xb8] sm:$0xff]
      %v2314 = vld [vmem:[#allocation2 + $0xc0] sm:$0xff]
      %v2315 = vld [vmem:[#allocation2 + $0xc8] sm:$0xff]
      %v2316 = vld [vmem:[#allocation2 + $0xd0] sm:$0xff]
      %v2317 = vld [vmem:[#allocation2 + $0xd8] sm:$0xff]
      %v2318 = vld [vmem:[#allocation2 + $0xe0] sm:$0xff]
      %v2319 = vld [vmem:[#allocation2 + $0xe8] sm:$0xff]
      %v2320 = vld [vmem:[#allocation2 + $0xf0] sm:$0xff]
      %v2321 = vld [vmem:[#allocation2 + $0xf8] sm:$0xff]
      %v2322 = vld [vmem:[#allocation2 + $0x100] sm:$0xff]
      %v2323 = vld [vmem:[#allocation2 + $0x108] sm:$0xff]
      %v2324 = vld [vmem:[#allocation2 + $0x110] sm:$0xff]
      %v2325 = vld [vmem:[#allocation2 + $0x118] sm:$0x3f]
      %v2326 = vld [vmem:[%s165 + $0x8] sm:$0xe]
      %v2327 = vld [vmem:[%s165 + $0xc] sm:$0xf]
      %v2328 = vld [vmem:[%s165 + $0x10] sm:$0xf]
      %v2329 = vld [vmem:[%s165 + $0x14] sm:$0xf]
      %v2330 = vld [vmem:[%s165 + $0x18] sm:$0xf]
      %v2331 = vld [vmem:[%s165 + $0x1c] sm:$0xf]
      %v2332 = vld [vmem:[%s165 + $0x20] sm:$0xf]
      %v2333 = vld [vmem:[%s165 + $0x24] sm:$0xf]
      %v2334 = vld [vmem:[%s165 + $0x28] sm:$0xf]
      %v2335 = vld [vmem:[%s165 + $0x2c] sm:$0xf]
      %v2336 = vld [vmem:[%s165 + $0x30] sm:$0xf]
      %v2337 = vld [vmem:[%s165 + $0x34] sm:$0xf]
      %v2338 = vld [vmem:[%s165 + $0x38] sm:$0xf]
      %v2339 = vld [vmem:[%s165 + $0x3c] sm:$0xf]
      %v2340 = vld [vmem:[%s165 + $0x40] sm:$0xf]
      %v2341 = vld [vmem:[%s165 + $0x44] sm:$0xf]
      %v2342 = vld [vmem:[%s165 + $0x48] sm:$0xf]
      %v2343 = vld [vmem:[%s165 + $0x4c] sm:$0xf]
      %v2344 = vld [vmem:[%s165 + $0x50] sm:$0xf]
      %v2345 = vld [vmem:[%s165 + $0x54] sm:$0xf]
      %v2346 = vld [vmem:[%s165 + $0x58] sm:$0xf]
      %v2347 = vld [vmem:[%s165 + $0x5c] sm:$0xf]
      %v2348 = vld [vmem:[%s165 + $0x60] sm:$0xf]
      %v2349 = vld [vmem:[%s165 + $0x64] sm:$0xf]
      %v2350 = vld [vmem:[%s165 + $0x68] sm:$0xf]
      %v2351 = vld [vmem:[%s165 + $0x6c] sm:$0xf]
      %v2352 = vld [vmem:[%s165 + $0x70] sm:$0xf]
      %v2353 = vld [vmem:[%s165 + $0x74] sm:$0xf]
      %v2354 = vld [vmem:[%s165 + $0x78] sm:$0xf]
      %v2355 = vld [vmem:[%s165 + $0x7c] sm:$0xf]
      %v2356 = vld [vmem:[%s165 + $0x80] sm:$0xf]
      %v2357 = vld [vmem:[%s165 + $0x84] sm:$0xf]
      %v2358 = vld [vmem:[%s165 + $0x88] sm:$0xf]
      %v2359 = vld [vmem:[%s165 + $0x8c] sm:$0xf]
      %v2360 = vld [vmem:[%s165 + $0x90] sm:$0xf]
      %v2361 = vld [vmem:[%s165 + $0x94] sm:$0xf]
      %v2362 = vld [vmem:[%s165 + $0x98] sm:$0x1]
      %s2363 = scalar_lea.vmem %s1, 256
      %v2364 = vld [vmem:[%s2363] sm:$0xf]
      %v2365 = vld [vmem:[%s2363 + $0x4] sm:$0xf]
      %v2366 = vld [vmem:[%s2363 + $0x8] sm:$0xf]
      %v2367 = vld [vmem:[%s2363 + $0xc] sm:$0xf]
      %v2368 = vld [vmem:[%s2363 + $0x10] sm:$0xf]
      %v2369 = vld [vmem:[%s2363 + $0x14] sm:$0xf]
      %v2370 = vld [vmem:[%s2363 + $0x18] sm:$0xf]
      %v2371 = vld [vmem:[%s2363 + $0x1c] sm:$0xf]
      %v2372 = vld [vmem:[%s2363 + $0x20] sm:$0xf]
      %v2373 = vld [vmem:[%s2363 + $0x24] sm:$0xf]
      %v2374 = vld [vmem:[%s2363 + $0x28] sm:$0xf]
      %v2375 = vld [vmem:[%s2363 + $0x2c] sm:$0xf]
      %v2376 = vld [vmem:[%s2363 + $0x30] sm:$0xf]
      %v2377 = vld [vmem:[%s2363 + $0x34] sm:$0xf]
      %v2378 = vld [vmem:[%s2363 + $0x38] sm:$0xf]
      %v2379 = vld [vmem:[%s2363 + $0x3c] sm:$0xf]
      %v2417 = vunpack.c.l.b16 %v2326
      %v2418 = vunpack.c.l.b16 %v2327
      %v2419 = vunpack.c.l.b16 %v2328
      %v2420 = vunpack.c.l.b16 %v2329
      %v2421 = vunpack.c.l.b16 %v2330
      %v2422 = vunpack.c.l.b16 %v2331
      %v2423 = vunpack.c.l.b16 %v2332
      %v2424 = vunpack.c.l.b16 %v2333
      %v2425 = vunpack.c.l.b16 %v2334
      %v2426 = vunpack.c.l.b16 %v2335
      %v2427 = vunpack.c.l.b16 %v2336
      %v2428 = vunpack.c.l.b16 %v2337
      %v2429 = vunpack.c.l.b16 %v2338
      %v2430 = vunpack.c.l.b16 %v2339
      %v2431 = vunpack.c.l.b16 %v2340
      %v2432 = vunpack.c.l.b16 %v2341
      %v2433 = vunpack.c.l.b16 %v2342
      %v2434 = vunpack.c.l.b16 %v2343
      %v2435 = vunpack.c.l.b16 %v2344
      %v2436 = vunpack.c.l.b16 %v2345
      %v2437 = vunpack.c.l.b16 %v2346
      %v2438 = vunpack.c.l.b16 %v2347
      %v2439 = vunpack.c.l.b16 %v2348
      %v2440 = vunpack.c.l.b16 %v2349
      %v2441 = vunpack.c.l.b16 %v2350
      %v2442 = vunpack.c.l.b16 %v2351
      %v2443 = vunpack.c.l.b16 %v2352
      %v2444 = vunpack.c.l.b16 %v2353
      %v2445 = vunpack.c.l.b16 %v2354
      %v2446 = vunpack.c.l.b16 %v2355
      %v2447 = vunpack.c.l.b16 %v2356
      %v2448 = vunpack.c.l.b16 %v2357
      %v2449 = vunpack.c.l.b16 %v2358
      %v2450 = vunpack.c.l.b16 %v2359
      %v2451 = vunpack.c.l.b16 %v2360
      %v2452 = vunpack.c.l.b16 %v2361
      %v2453 = vunpack.c.l.b16 %v2362
      %v2454 = vpack.c.b16 %v2418, %v2417
      %v2455 = vpack.c.b16 %v2420, %v2419
      %v2456 = vpack.c.b16 %v2422, %v2421
      %v2457 = vpack.c.b16 %v2424, %v2423
      %v2458 = vpack.c.b16 %v2426, %v2425
      %v2459 = vpack.c.b16 %v2428, %v2427
      %v2460 = vpack.c.b16 %v2430, %v2429
      %v2461 = vpack.c.b16 %v2432, %v2431
      %v2462 = vpack.c.b16 %v2434, %v2433
      %v2463 = vpack.c.b16 %v2436, %v2435
      %v2464 = vpack.c.b16 %v2438, %v2437
      %v2465 = vpack.c.b16 %v2440, %v2439
      %v2466 = vpack.c.b16 %v2442, %v2441
      %v2467 = vpack.c.b16 %v2444, %v2443
      %v2468 = vpack.c.b16 %v2446, %v2445
      %v2469 = vpack.c.b16 %v2448, %v2447
      %v2470 = vpack.c.b16 %v2450, %v2449
      %v2471 = vpack.c.b16 %v2452, %v2451
      %v2472 = vpack.c.b16 %v2453, %v2453
      %vm2473 = vsmask.f32 6400
      %v2475 = vshrl.u32 %v2454, 16
      %v2477 = vrot.slane %v2475, 1
      %v2478 = vshll.u32 %v2454, 16
      %v2480 = vrot.slane %v2478, 2
      %v2481 = vor.u32 %v2477, %v2480
      %v2483 = vshrl.u32 %v2455, 16
      %v2485 = vrot.slane %v2483, 1
      %v2486 = vshll.u32 %v2455, 16
      %v2488 = vrot.slane %v2486, 2
      %v2489 = vor.u32 %v2485, %v2488
      %v2490 = vsel %vm2473, %v2481, %v2489
      %v2492 = vshrl.u32 %v2456, 16
      %v2494 = vrot.slane %v2492, 1
      %v2495 = vshll.u32 %v2456, 16
      %v2497 = vrot.slane %v2495, 2
      %v2498 = vor.u32 %v2494, %v2497
      %v2499 = vsel %vm2473, %v2489, %v2498
      %v2501 = vshrl.u32 %v2457, 16
      %v2503 = vrot.slane %v2501, 1
      %v2504 = vshll.u32 %v2457, 16
      %v2506 = vrot.slane %v2504, 2
      %v2507 = vor.u32 %v2503, %v2506
      %v2508 = vsel %vm2473, %v2498, %v2507
      %v2510 = vshrl.u32 %v2458, 16
      %v2512 = vrot.slane %v2510, 1
      %v2513 = vshll.u32 %v2458, 16
      %v2515 = vrot.slane %v2513, 2
      %v2516 = vor.u32 %v2512, %v2515
      %v2517 = vsel %vm2473, %v2507, %v2516
      %v2519 = vshrl.u32 %v2459, 16
      %v2521 = vrot.slane %v2519, 1
      %v2522 = vshll.u32 %v2459, 16
      %v2524 = vrot.slane %v2522, 2
      %v2525 = vor.u32 %v2521, %v2524
      %v2526 = vsel %vm2473, %v2516, %v2525
      %v2528 = vshrl.u32 %v2460, 16
      %v2530 = vrot.slane %v2528, 1
      %v2531 = vshll.u32 %v2460, 16
      %v2533 = vrot.slane %v2531, 2
      %v2534 = vor.u32 %v2530, %v2533
      %v2535 = vsel %vm2473, %v2525, %v2534
      %v2537 = vshrl.u32 %v2461, 16
      %v2539 = vrot.slane %v2537, 1
      %v2540 = vshll.u32 %v2461, 16
      %v2542 = vrot.slane %v2540, 2
      %v2543 = vor.u32 %v2539, %v2542
      %v2544 = vsel %vm2473, %v2534, %v2543
      %v2546 = vshrl.u32 %v2462, 16
      %v2548 = vrot.slane %v2546, 1
      %v2549 = vshll.u32 %v2462, 16
      %v2551 = vrot.slane %v2549, 2
      %v2552 = vor.u32 %v2548, %v2551
      %v2553 = vsel %vm2473, %v2543, %v2552
      %v2555 = vshrl.u32 %v2463, 16
      %v2557 = vrot.slane %v2555, 1
      %v2558 = vshll.u32 %v2463, 16
      %v2560 = vrot.slane %v2558, 2
      %v2561 = vor.u32 %v2557, %v2560
      %v2562 = vsel %vm2473, %v2552, %v2561
      %v2564 = vshrl.u32 %v2464, 16
      %v2566 = vrot.slane %v2564, 1
      %v2567 = vshll.u32 %v2464, 16
      %v2569 = vrot.slane %v2567, 2
      %v2570 = vor.u32 %v2566, %v2569
      %v2571 = vsel %vm2473, %v2561, %v2570
      %v2573 = vshrl.u32 %v2465, 16
      %v2575 = vrot.slane %v2573, 1
      %v2576 = vshll.u32 %v2465, 16
      %v2578 = vrot.slane %v2576, 2
      %v2579 = vor.u32 %v2575, %v2578
      %v2580 = vsel %vm2473, %v2570, %v2579
      %v2582 = vshrl.u32 %v2466, 16
      %v2584 = vrot.slane %v2582, 1
      %v2585 = vshll.u32 %v2466, 16
      %v2587 = vrot.slane %v2585, 2
      %v2588 = vor.u32 %v2584, %v2587
      %v2589 = vsel %vm2473, %v2579, %v2588
      %v2591 = vshrl.u32 %v2467, 16
      %v2593 = vrot.slane %v2591, 1
      %v2594 = vshll.u32 %v2467, 16
      %v2596 = vrot.slane %v2594, 2
      %v2597 = vor.u32 %v2593, %v2596
      %v2598 = vsel %vm2473, %v2588, %v2597
      %v2600 = vshrl.u32 %v2468, 16
      %v2602 = vrot.slane %v2600, 1
      %v2603 = vshll.u32 %v2468, 16
      %v2605 = vrot.slane %v2603, 2
      %v2606 = vor.u32 %v2602, %v2605
      %v2607 = vsel %vm2473, %v2597, %v2606
      %v2609 = vshrl.u32 %v2469, 16
      %v2611 = vrot.slane %v2609, 1
      %v2612 = vshll.u32 %v2469, 16
      %v2614 = vrot.slane %v2612, 2
      %v2615 = vor.u32 %v2611, %v2614
      %v2616 = vsel %vm2473, %v2606, %v2615
      %v2618 = vshrl.u32 %v2470, 16
      %v2620 = vrot.slane %v2618, 1
      %v2621 = vshll.u32 %v2470, 16
      %v2623 = vrot.slane %v2621, 2
      %v2624 = vor.u32 %v2620, %v2623
      %v2625 = vsel %vm2473, %v2615, %v2624
      %v2627 = vshrl.u32 %v2471, 16
      %v2629 = vrot.slane %v2627, 1
      %v2630 = vshll.u32 %v2471, 16
      %v2632 = vrot.slane %v2630, 2
      %v2633 = vor.u32 %v2629, %v2632
      %v2634 = vsel %vm2473, %v2624, %v2633
      %v2636 = vshll.u32 %v2472, 16
      %v2638 = vrot.slane %v2636, 2
      %v2639 = vsel %vm2473, %v2633, %v2638
      %v2674 = vunpack.c.l.b16 %v2364
      %v2675 = vunpack.c.l.b16 %v2365
      %v2676 = vunpack.c.l.b16 %v2366
      %v2677 = vunpack.c.l.b16 %v2367
      %v2678 = vunpack.c.l.b16 %v2368
      %v2679 = vunpack.c.l.b16 %v2369
      %v2680 = vunpack.c.l.b16 %v2370
      %v2681 = vunpack.c.l.b16 %v2371
      %v2682 = vunpack.c.l.b16 %v2372
      %v2683 = vunpack.c.l.b16 %v2373
      %v2684 = vunpack.c.l.b16 %v2374
      %v2685 = vunpack.c.l.b16 %v2375
      %v2686 = vunpack.c.l.b16 %v2376
      %v2687 = vunpack.c.l.b16 %v2377
      %v2688 = vunpack.c.l.b16 %v2378
      %v2689 = vunpack.c.l.b16 %v2379
      %v2690 = vpack.c.b16 %v2675, %v2674
      %v2691 = vpack.c.b16 %v2677, %v2676
      %v2692 = vpack.c.b16 %v2679, %v2678
      %v2693 = vpack.c.b16 %v2681, %v2680
      %v2694 = vpack.c.b16 %v2683, %v2682
      %v2695 = vpack.c.b16 %v2685, %v2684
      %v2696 = vpack.c.b16 %v2687, %v2686
      %v2697 = vpack.c.b16 %v2689, %v2688
      %2706 = vmatprep.subr.bf16.mxu0 0
      %2707 = vmatpush1.bf16.msra.mxu0 %v2697
      %2708 = vmatprep.subr.bf16.mxu0 0
      %2709 = vmatpush1.bf16.msra.mxu0 %v2696
      %2710 = vmatprep.subr.bf16.mxu0 0
      %2711 = vmatpush1.bf16.msra.mxu0 %v2695
      %2712 = vmatprep.subr.bf16.mxu0 0
      %2713 = vmatpush1.bf16.msra.mxu0 %v2694
      %2714 = vmatprep.subr.bf16.mxu0 0
      %2715 = vmatpush1.bf16.msra.mxu0 %v2693
      %2716 = vmatprep.subr.bf16.mxu0 0
      %2717 = vmatpush1.bf16.msra.mxu0 %v2692
      %2718 = vmatprep.subr.bf16.mxu0 0
      %2719 = vmatpush1.bf16.msra.mxu0 %v2691
      %2720 = vmatprep.subr.bf16.mxu0 0
      %2721 = vmatpush1.bf16.msra.mxu0 %v2690
      %2722 = vmatprep.subr.bf16.mxu0 0
      %2723 = vmatpush2.bf16.msra.mxu0 0
      %2724 = vmatprep.subr.bf16.mxu0 0
      %2725 = vmatpush2.bf16.msra.mxu0 0
      %2726 = vmatprep.subr.bf16.mxu0 0
      %2727 = vmatpush2.bf16.msra.mxu0 0
      %2728 = vmatprep.subr.bf16.mxu0 0
      %2729 = vmatpush2.bf16.msra.mxu0 0
      %2730 = vmatprep.subr.bf16.mxu0 0
      %2731 = vmatpush2.bf16.msra.mxu0 0
      %2732 = vmatprep.subr.bf16.mxu0 0
      %2733 = vmatpush2.bf16.msra.mxu0 0
      %2734 = vmatprep.subr.bf16.mxu0 0
      %2735 = vmatpush2.bf16.msra.mxu0 0
      %2736 = vmatprep.subr.bf16.mxu0 0
      %2737 = vmatpush2.bf16.msra.mxu0 0
      %2738 = vmatprep.mubr.bf16.mxu0 0
      %2739 = vmatmul.mubr.bf16.gmra.mxu0 %v2490
      %v2740 = vpop.f32.mrf.mxu0
      %v2741 = vadd.f32 0.0, %v2740
      %v2742 = vpop.f32.mrf.mxu0
      %v2743 = vpop.f32.mrf.mxu0
      %v2744 = vadd.f32 0.0, %v2743
      %v2745 = vpop.f32.mrf.mxu0
      %2746 = vmatprep.mubr.bf16.mxu0 0
      %2747 = vmatmul.mubr.bf16.gmra.mxu0 %v2499
      %v2748 = vpop.f32.mrf.mxu0
      %v2749 = vadd.f32 0.0, %v2748
      %v2750 = vpop.f32.mrf.mxu0
      %v2751 = vpop.f32.mrf.mxu0
      %v2752 = vadd.f32 0.0, %v2751
      %v2753 = vpop.f32.mrf.mxu0
      %2754 = vmatprep.mubr.bf16.mxu0 0
      %2755 = vmatmul.mubr.bf16.gmra.mxu0 %v2508
      %v2756 = vpop.f32.mrf.mxu0
      %v2757 = vadd.f32 0.0, %v2756
      %v2758 = vpop.f32.mrf.mxu0
      %v2759 = vpop.f32.mrf.mxu0
      %v2760 = vadd.f32 0.0, %v2759
      %v2761 = vpop.f32.mrf.mxu0
      %2762 = vmatprep.mubr.bf16.mxu0 0
      %2763 = vmatmul.mubr.bf16.gmra.mxu0 %v2517
      %v2764 = vpop.f32.mrf.mxu0
      %v2765 = vadd.f32 0.0, %v2764
      %v2766 = vpop.f32.mrf.mxu0
      %v2767 = vpop.f32.mrf.mxu0
      %v2768 = vadd.f32 0.0, %v2767
      %v2769 = vpop.f32.mrf.mxu0
      %2770 = vmatprep.mubr.bf16.mxu0 0
      %2771 = vmatmul.mubr.bf16.gmra.mxu0 %v2526
      %v2772 = vpop.f32.mrf.mxu0
      %v2773 = vadd.f32 0.0, %v2772
      %v2774 = vpop.f32.mrf.mxu0
      %v2775 = vpop.f32.mrf.mxu0
      %v2776 = vadd.f32 0.0, %v2775
      %v2777 = vpop.f32.mrf.mxu0
      %2778 = vmatprep.mubr.bf16.mxu0 0
      %2779 = vmatmul.mubr.bf16.gmra.mxu0 %v2535
      %v2780 = vpop.f32.mrf.mxu0
      %v2781 = vadd.f32 0.0, %v2780
      %v2782 = vpop.f32.mrf.mxu0
      %v2783 = vpop.f32.mrf.mxu0
      %v2784 = vadd.f32 0.0, %v2783
      %v2785 = vpop.f32.mrf.mxu0
      %2786 = vmatprep.mubr.bf16.mxu0 0
      %2787 = vmatmul.mubr.bf16.gmra.mxu0 %v2544
      %v2788 = vpop.f32.mrf.mxu0
      %v2789 = vadd.f32 0.0, %v2788
      %v2790 = vpop.f32.mrf.mxu0
      %v2791 = vpop.f32.mrf.mxu0
      %v2792 = vadd.f32 0.0, %v2791
      %v2793 = vpop.f32.mrf.mxu0
      %2794 = vmatprep.mubr.bf16.mxu0 0
      %2795 = vmatmul.mubr.bf16.gmra.mxu0 %v2553
      %v2796 = vpop.f32.mrf.mxu0
      %v2797 = vadd.f32 0.0, %v2796
      %v2798 = vpop.f32.mrf.mxu0
      %v2799 = vpop.f32.mrf.mxu0
      %v2800 = vadd.f32 0.0, %v2799
      %v2801 = vpop.f32.mrf.mxu0
      %2802 = vmatprep.mubr.bf16.mxu0 0
      %2803 = vmatmul.mubr.bf16.gmra.mxu0 %v2562
      %v2804 = vpop.f32.mrf.mxu0
      %v2805 = vadd.f32 0.0, %v2804
      %v2806 = vpop.f32.mrf.mxu0
      %v2807 = vpop.f32.mrf.mxu0
      %v2808 = vadd.f32 0.0, %v2807
      %v2809 = vpop.f32.mrf.mxu0
      %2810 = vmatprep.mubr.bf16.mxu0 0
      %2811 = vmatmul.mubr.bf16.gmra.mxu0 %v2571
      %v2812 = vpop.f32.mrf.mxu0
      %v2813 = vadd.f32 0.0, %v2812
      %v2814 = vpop.f32.mrf.mxu0
      %v2815 = vpop.f32.mrf.mxu0
      %v2816 = vadd.f32 0.0, %v2815
      %v2817 = vpop.f32.mrf.mxu0
      %2818 = vmatprep.mubr.bf16.mxu0 0
      %2819 = vmatmul.mubr.bf16.gmra.mxu0 %v2580
      %v2820 = vpop.f32.mrf.mxu0
      %v2821 = vadd.f32 0.0, %v2820
      %v2822 = vpop.f32.mrf.mxu0
      %v2823 = vpop.f32.mrf.mxu0
      %v2824 = vadd.f32 0.0, %v2823
      %v2825 = vpop.f32.mrf.mxu0
      %2826 = vmatprep.mubr.bf16.mxu0 0
      %2827 = vmatmul.mubr.bf16.gmra.mxu0 %v2589
      %v2828 = vpop.f32.mrf.mxu0
      %v2829 = vadd.f32 0.0, %v2828
      %v2830 = vpop.f32.mrf.mxu0
      %v2831 = vpop.f32.mrf.mxu0
      %v2832 = vadd.f32 0.0, %v2831
      %v2833 = vpop.f32.mrf.mxu0
      %2834 = vmatprep.mubr.bf16.mxu0 0
      %2835 = vmatmul.mubr.bf16.gmra.mxu0 %v2598
      %v2836 = vpop.f32.mrf.mxu0
      %v2837 = vadd.f32 0.0, %v2836
      %v2838 = vpop.f32.mrf.mxu0
      %v2839 = vpop.f32.mrf.mxu0
      %v2840 = vadd.f32 0.0, %v2839
      %v2841 = vpop.f32.mrf.mxu0
      %2842 = vmatprep.mubr.bf16.mxu0 0
      %2843 = vmatmul.mubr.bf16.gmra.mxu0 %v2607
      %v2844 = vpop.f32.mrf.mxu0
      %v2845 = vadd.f32 0.0, %v2844
      %v2846 = vpop.f32.mrf.mxu0
      %v2847 = vpop.f32.mrf.mxu0
      %v2848 = vadd.f32 0.0, %v2847
      %v2849 = vpop.f32.mrf.mxu0
      %2850 = vmatprep.mubr.bf16.mxu0 0
      %2851 = vmatmul.mubr.bf16.gmra.mxu0 %v2616
      %v2852 = vpop.f32.mrf.mxu0
      %v2853 = vadd.f32 0.0, %v2852
      %v2854 = vpop.f32.mrf.mxu0
      %v2855 = vpop.f32.mrf.mxu0
      %v2856 = vadd.f32 0.0, %v2855
      %v2857 = vpop.f32.mrf.mxu0
      %2858 = vmatprep.mubr.bf16.mxu0 0
      %2859 = vmatmul.mubr.bf16.gmra.mxu0 %v2625
      %v2860 = vpop.f32.mrf.mxu0
      %v2861 = vadd.f32 0.0, %v2860
      %v2862 = vpop.f32.mrf.mxu0
      %v2863 = vpop.f32.mrf.mxu0
      %v2864 = vadd.f32 0.0, %v2863
      %v2865 = vpop.f32.mrf.mxu0
      %2866 = vmatprep.mubr.bf16.mxu0 0
      %2867 = vmatmul.mubr.bf16.gmra.mxu0 %v2634
      %v2868 = vpop.f32.mrf.mxu0
      %v2869 = vadd.f32 0.0, %v2868
      %v2870 = vpop.f32.mrf.mxu0
      %v2871 = vpop.f32.mrf.mxu0
      %v2872 = vadd.f32 0.0, %v2871
      %v2873 = vpop.f32.mrf.mxu0
      %2874 = vmatprep.mubr.bf16.mxu0 0
      %2875 = vmatmul.mubr.bf16.gmra.mxu0 %v2639
      %v2876 = vpop.f32.mrf.mxu0
      %v2877 = vadd.f32 0.0, %v2876
      %v2878 = vpop.f32.mrf.mxu0
      %v2879 = vpop.f32.mrf.mxu0
      %v2880 = vadd.f32 0.0, %v2879
      %v2881 = vpop.f32.mrf.mxu0
      %2882 = vdwg.mxu0
      %v2883 = vadd.f32 %v2290, %v2741
      %v2884 = vadd.f32 %v2291, %v2744
      %v2885 = vadd.f32 %v2292, %v2749
      %v2886 = vadd.f32 %v2293, %v2752
      %v2887 = vadd.f32 %v2294, %v2757
      %v2888 = vadd.f32 %v2295, %v2760
      %v2889 = vadd.f32 %v2296, %v2765
      %v2890 = vadd.f32 %v2297, %v2768
      %v2891 = vadd.f32 %v2298, %v2773
      %v2892 = vadd.f32 %v2299, %v2776
      %v2893 = vadd.f32 %v2300, %v2781
      %v2894 = vadd.f32 %v2301, %v2784
      %v2895 = vadd.f32 %v2302, %v2789
      %v2896 = vadd.f32 %v2303, %v2792
      %v2897 = vadd.f32 %v2304, %v2797
      %v2898 = vadd.f32 %v2305, %v2800
      %v2899 = vadd.f32 %v2306, %v2805
      %v2900 = vadd.f32 %v2307, %v2808
      %v2901 = vadd.f32 %v2308, %v2813
      %v2902 = vadd.f32 %v2309, %v2816
      %v2903 = vadd.f32 %v2310, %v2821
      %v2904 = vadd.f32 %v2311, %v2824
      %v2905 = vadd.f32 %v2312, %v2829
      %v2906 = vadd.f32 %v2313, %v2832
      %v2907 = vadd.f32 %v2314, %v2837
      %v2908 = vadd.f32 %v2315, %v2840
      %v2909 = vadd.f32 %v2316, %v2845
      %v2910 = vadd.f32 %v2317, %v2848
      %v2911 = vadd.f32 %v2318, %v2853
      %v2912 = vadd.f32 %v2319, %v2856
      %v2913 = vadd.f32 %v2320, %v2861
      %v2914 = vadd.f32 %v2321, %v2864
      %v2915 = vadd.f32 %v2322, %v2869
      %v2916 = vadd.f32 %v2323, %v2872
      %v2917 = vadd.f32 %v2324, %v2877
      %v2918 = vadd.f32 %v2325, %v2880
      %2919 = vst [vmem:[#allocation2] sm:$0xff] %v2883
      %2920 = vst [vmem:[#allocation2 + $0x8] sm:$0xff] %v2884
      %2921 = vst [vmem:[#allocation2 + $0x10] sm:$0xff] %v2885
      %2922 = vst [vmem:[#allocation2 + $0x18] sm:$0xff] %v2886
      %2923 = vst [vmem:[#allocation2 + $0x20] sm:$0xff] %v2887
      %2924 = vst [vmem:[#allocation2 + $0x28] sm:$0xff] %v2888
      %2925 = vst [vmem:[#allocation2 + $0x30] sm:$0xff] %v2889
      %2926 = vst [vmem:[#allocation2 + $0x38] sm:$0xff] %v2890
      %2927 = vst [vmem:[#allocation2 + $0x40] sm:$0xff] %v2891
      %2928 = vst [vmem:[#allocation2 + $0x48] sm:$0xff] %v2892
      %2929 = vst [vmem:[#allocation2 + $0x50] sm:$0xff] %v2893
      %2930 = vst [vmem:[#allocation2 + $0x58] sm:$0xff] %v2894
      %2931 = vst [vmem:[#allocation2 + $0x60] sm:$0xff] %v2895
      %2932 = vst [vmem:[#allocation2 + $0x68] sm:$0xff] %v2896
      %2933 = vst [vmem:[#allocation2 + $0x70] sm:$0xff] %v2897
      %2934 = vst [vmem:[#allocation2 + $0x78] sm:$0xff] %v2898
      %2935 = vst [vmem:[#allocation2 + $0x80] sm:$0xff] %v2899
      %2936 = vst [vmem:[#allocation2 + $0x88] sm:$0xff] %v2900
      %2937 = vst [vmem:[#allocation2 + $0x90] sm:$0xff] %v2901
      %2938 = vst [vmem:[#allocation2 + $0x98] sm:$0xff] %v2902
      %2939 = vst [vmem:[#allocation2 + $0xa0] sm:$0xff] %v2903
      %2940 = vst [vmem:[#allocation2 + $0xa8] sm:$0xff] %v2904
      %2941 = vst [vmem:[#allocation2 + $0xb0] sm:$0xff] %v2905
      %2942 = vst [vmem:[#allocation2 + $0xb8] sm:$0xff] %v2906
      %2943 = vst [vmem:[#allocation2 + $0xc0] sm:$0xff] %v2907
      %2944 = vst [vmem:[#allocation2 + $0xc8] sm:$0xff] %v2908
      %2945 = vst [vmem:[#allocation2 + $0xd0] sm:$0xff] %v2909
      %2946 = vst [vmem:[#allocation2 + $0xd8] sm:$0xff] %v2910
      %2947 = vst [vmem:[#allocation2 + $0xe0] sm:$0xff] %v2911
      %2948 = vst [vmem:[#allocation2 + $0xe8] sm:$0xff] %v2912
      %2949 = vst [vmem:[#allocation2 + $0xf0] sm:$0xff] %v2913
      %2950 = vst [vmem:[#allocation2 + $0xf8] sm:$0xff] %v2914
      %2951 = vst [vmem:[#allocation2 + $0x100] sm:$0xff] %v2915
      %2952 = vst [vmem:[#allocation2 + $0x108] sm:$0xff] %v2916
      %2953 = vst [vmem:[#allocation2 + $0x110] sm:$0xff] %v2917
      %2954 = vst [vmem:[#allocation2 + $0x118] sm:$0x3f] %v2918
      %v2955 = vld [vmem:[#allocation2] sm:$0xff]
      %v2956 = vld [vmem:[#allocation2 + $0x8] sm:$0xff]
      %v2957 = vld [vmem:[#allocation2 + $0x10] sm:$0xff]
      %v2958 = vld [vmem:[#allocation2 + $0x18] sm:$0xff]
      %v2959 = vld [vmem:[#allocation2 + $0x20] sm:$0xff]
      %v2960 = vld [vmem:[#allocation2 + $0x28] sm:$0xff]
      %v2961 = vld [vmem:[#allocation2 + $0x30] sm:$0xff]
      %v2962 = vld [vmem:[#allocation2 + $0x38] sm:$0xff]
      %v2963 = vld [vmem:[#allocation2 + $0x40] sm:$0xff]
      %v2964 = vld [vmem:[#allocation2 + $0x48] sm:$0xff]
      %v2965 = vld [vmem:[#allocation2 + $0x50] sm:$0xff]
      %v2966 = vld [vmem:[#allocation2 + $0x58] sm:$0xff]
      %v2967 = vld [vmem:[#allocation2 + $0x60] sm:$0xff]
      %v2968 = vld [vmem:[#allocation2 + $0x68] sm:$0xff]
      %v2969 = vld [vmem:[#allocation2 + $0x70] sm:$0xff]
      %v2970 = vld [vmem:[#allocation2 + $0x78] sm:$0xff]
      %v2971 = vld [vmem:[#allocation2 + $0x80] sm:$0xff]
      %v2972 = vld [vmem:[#allocation2 + $0x88] sm:$0xff]
      %v2973 = vld [vmem:[#allocation2 + $0x90] sm:$0xff]
      %v2974 = vld [vmem:[#allocation2 + $0x98] sm:$0xff]
      %v2975 = vld [vmem:[#allocation2 + $0xa0] sm:$0xff]
      %v2976 = vld [vmem:[#allocation2 + $0xa8] sm:$0xff]
      %v2977 = vld [vmem:[#allocation2 + $0xb0] sm:$0xff]
      %v2978 = vld [vmem:[#allocation2 + $0xb8] sm:$0xff]
      %v2979 = vld [vmem:[#allocation2 + $0xc0] sm:$0xff]
      %v2980 = vld [vmem:[#allocation2 + $0xc8] sm:$0xff]
      %v2981 = vld [vmem:[#allocation2 + $0xd0] sm:$0xff]
      %v2982 = vld [vmem:[#allocation2 + $0xd8] sm:$0xff]
      %v2983 = vld [vmem:[#allocation2 + $0xe0] sm:$0xff]
      %v2984 = vld [vmem:[#allocation2 + $0xe8] sm:$0xff]
      %v2985 = vld [vmem:[#allocation2 + $0xf0] sm:$0xff]
      %v2986 = vld [vmem:[#allocation2 + $0xf8] sm:$0xff]
      %v2987 = vld [vmem:[#allocation2 + $0x100] sm:$0xff]
      %v2988 = vld [vmem:[#allocation2 + $0x108] sm:$0xff]
      %v2989 = vld [vmem:[#allocation2 + $0x110] sm:$0xff]
      %v2990 = vld [vmem:[#allocation2 + $0x118] sm:$0x3f]
      %v2991 = vld [vmem:[%s165 + $0x8] sm:$0xc]
      %v2992 = vld [vmem:[%s165 + $0xc] sm:$0xf]
      %v2993 = vld [vmem:[%s165 + $0x10] sm:$0xf]
      %v2994 = vld [vmem:[%s165 + $0x14] sm:$0xf]
      %v2995 = vld [vmem:[%s165 + $0x18] sm:$0xf]
      %v2996 = vld [vmem:[%s165 + $0x1c] sm:$0xf]
      %v2997 = vld [vmem:[%s165 + $0x20] sm:$0xf]
      %v2998 = vld [vmem:[%s165 + $0x24] sm:$0xf]
      %v2999 = vld [vmem:[%s165 + $0x28] sm:$0xf]
      %v3000 = vld [vmem:[%s165 + $0x2c] sm:$0xf]
      %v3001 = vld [vmem:[%s165 + $0x30] sm:$0xf]
      %v3002 = vld [vmem:[%s165 + $0x34] sm:$0xf]
      %v3003 = vld [vmem:[%s165 + $0x38] sm:$0xf]
      %v3004 = vld [vmem:[%s165 + $0x3c] sm:$0xf]
      %v3005 = vld [vmem:[%s165 + $0x40] sm:$0xf]
      %v3006 = vld [vmem:[%s165 + $0x44] sm:$0xf]
      %v3007 = vld [vmem:[%s165 + $0x48] sm:$0xf]
      %v3008 = vld [vmem:[%s165 + $0x4c] sm:$0xf]
      %v3009 = vld [vmem:[%s165 + $0x50] sm:$0xf]
      %v3010 = vld [vmem:[%s165 + $0x54] sm:$0xf]
      %v3011 = vld [vmem:[%s165 + $0x58] sm:$0xf]
      %v3012 = vld [vmem:[%s165 + $0x5c] sm:$0xf]
      %v3013 = vld [vmem:[%s165 + $0x60] sm:$0xf]
      %v3014 = vld [vmem:[%s165 + $0x64] sm:$0xf]
      %v3015 = vld [vmem:[%s165 + $0x68] sm:$0xf]
      %v3016 = vld [vmem:[%s165 + $0x6c] sm:$0xf]
      %v3017 = vld [vmem:[%s165 + $0x70] sm:$0xf]
      %v3018 = vld [vmem:[%s165 + $0x74] sm:$0xf]
      %v3019 = vld [vmem:[%s165 + $0x78] sm:$0xf]
      %v3020 = vld [vmem:[%s165 + $0x7c] sm:$0xf]
      %v3021 = vld [vmem:[%s165 + $0x80] sm:$0xf]
      %v3022 = vld [vmem:[%s165 + $0x84] sm:$0xf]
      %v3023 = vld [vmem:[%s165 + $0x88] sm:$0xf]
      %v3024 = vld [vmem:[%s165 + $0x8c] sm:$0xf]
      %v3025 = vld [vmem:[%s165 + $0x90] sm:$0xf]
      %v3026 = vld [vmem:[%s165 + $0x94] sm:$0xf]
      %v3027 = vld [vmem:[%s165 + $0x98] sm:$0x1]
      %s3028 = scalar_lea.vmem %s1, 320
      %v3029 = vld [vmem:[%s3028] sm:$0xf]
      %v3030 = vld [vmem:[%s3028 + $0x4] sm:$0xf]
      %v3031 = vld [vmem:[%s3028 + $0x8] sm:$0xf]
      %v3032 = vld [vmem:[%s3028 + $0xc] sm:$0xf]
      %v3033 = vld [vmem:[%s3028 + $0x10] sm:$0xf]
      %v3034 = vld [vmem:[%s3028 + $0x14] sm:$0xf]
      %v3035 = vld [vmem:[%s3028 + $0x18] sm:$0xf]
      %v3036 = vld [vmem:[%s3028 + $0x1c] sm:$0xf]
      %v3037 = vld [vmem:[%s3028 + $0x20] sm:$0xf]
      %v3038 = vld [vmem:[%s3028 + $0x24] sm:$0xf]
      %v3039 = vld [vmem:[%s3028 + $0x28] sm:$0xf]
      %v3040 = vld [vmem:[%s3028 + $0x2c] sm:$0xf]
      %v3041 = vld [vmem:[%s3028 + $0x30] sm:$0xf]
      %v3042 = vld [vmem:[%s3028 + $0x34] sm:$0xf]
      %v3043 = vld [vmem:[%s3028 + $0x38] sm:$0xf]
      %v3044 = vld [vmem:[%s3028 + $0x3c] sm:$0xf]
      %v3082 = vunpack.c.l.b16 %v2991
      %v3083 = vunpack.c.l.b16 %v2992
      %v3084 = vunpack.c.l.b16 %v2993
      %v3085 = vunpack.c.l.b16 %v2994
      %v3086 = vunpack.c.l.b16 %v2995
      %v3087 = vunpack.c.l.b16 %v2996
      %v3088 = vunpack.c.l.b16 %v2997
      %v3089 = vunpack.c.l.b16 %v2998
      %v3090 = vunpack.c.l.b16 %v2999
      %v3091 = vunpack.c.l.b16 %v3000
      %v3092 = vunpack.c.l.b16 %v3001
      %v3093 = vunpack.c.l.b16 %v3002
      %v3094 = vunpack.c.l.b16 %v3003
      %v3095 = vunpack.c.l.b16 %v3004
      %v3096 = vunpack.c.l.b16 %v3005
      %v3097 = vunpack.c.l.b16 %v3006
      %v3098 = vunpack.c.l.b16 %v3007
      %v3099 = vunpack.c.l.b16 %v3008
      %v3100 = vunpack.c.l.b16 %v3009
      %v3101 = vunpack.c.l.b16 %v3010
      %v3102 = vunpack.c.l.b16 %v3011
      %v3103 = vunpack.c.l.b16 %v3012
      %v3104 = vunpack.c.l.b16 %v3013
      %v3105 = vunpack.c.l.b16 %v3014
      %v3106 = vunpack.c.l.b16 %v3015
      %v3107 = vunpack.c.l.b16 %v3016
      %v3108 = vunpack.c.l.b16 %v3017
      %v3109 = vunpack.c.l.b16 %v3018
      %v3110 = vunpack.c.l.b16 %v3019
      %v3111 = vunpack.c.l.b16 %v3020
      %v3112 = vunpack.c.l.b16 %v3021
      %v3113 = vunpack.c.l.b16 %v3022
      %v3114 = vunpack.c.l.b16 %v3023
      %v3115 = vunpack.c.l.b16 %v3024
      %v3116 = vunpack.c.l.b16 %v3025
      %v3117 = vunpack.c.l.b16 %v3026
      %v3118 = vunpack.c.l.b16 %v3027
      %v3119 = vpack.c.b16 %v3083, %v3082
      %v3120 = vpack.c.b16 %v3085, %v3084
      %v3121 = vpack.c.b16 %v3087, %v3086
      %v3122 = vpack.c.b16 %v3089, %v3088
      %v3123 = vpack.c.b16 %v3091, %v3090
      %v3124 = vpack.c.b16 %v3093, %v3092
      %v3125 = vpack.c.b16 %v3095, %v3094
      %v3126 = vpack.c.b16 %v3097, %v3096
      %v3127 = vpack.c.b16 %v3099, %v3098
      %v3128 = vpack.c.b16 %v3101, %v3100
      %v3129 = vpack.c.b16 %v3103, %v3102
      %v3130 = vpack.c.b16 %v3105, %v3104
      %v3131 = vpack.c.b16 %v3107, %v3106
      %v3132 = vpack.c.b16 %v3109, %v3108
      %v3133 = vpack.c.b16 %v3111, %v3110
      %v3134 = vpack.c.b16 %v3113, %v3112
      %v3135 = vpack.c.b16 %v3115, %v3114
      %v3136 = vpack.c.b16 %v3117, %v3116
      %v3137 = vpack.c.b16 %v3118, %v3118
      %vm3138 = vcmask 1045504
      %v3139 = vrot.slane %v3119, 2
      %v3140 = vrot.slane %v3120, 2
      %v3141 = vsel %vm3138, %v3139, %v3140
      %v3142 = vrot.slane %v3121, 2
      %v3143 = vsel %vm3138, %v3140, %v3142
      %v3144 = vrot.slane %v3122, 2
      %v3145 = vsel %vm3138, %v3142, %v3144
      %v3146 = vrot.slane %v3123, 2
      %v3147 = vsel %vm3138, %v3144, %v3146
      %v3148 = vrot.slane %v3124, 2
      %v3149 = vsel %vm3138, %v3146, %v3148
      %v3150 = vrot.slane %v3125, 2
      %v3151 = vsel %vm3138, %v3148, %v3150
      %v3152 = vrot.slane %v3126, 2
      %v3153 = vsel %vm3138, %v3150, %v3152
      %v3154 = vrot.slane %v3127, 2
      %v3155 = vsel %vm3138, %v3152, %v3154
      %v3156 = vrot.slane %v3128, 2
      %v3157 = vsel %vm3138, %v3154, %v3156
      %v3158 = vrot.slane %v3129, 2
      %v3159 = vsel %vm3138, %v3156, %v3158
      %v3160 = vrot.slane %v3130, 2
      %v3161 = vsel %vm3138, %v3158, %v3160
      %v3162 = vrot.slane %v3131, 2
      %v3163 = vsel %vm3138, %v3160, %v3162
      %v3164 = vrot.slane %v3132, 2
      %v3165 = vsel %vm3138, %v3162, %v3164
      %v3166 = vrot.slane %v3133, 2
      %v3167 = vsel %vm3138, %v3164, %v3166
      %v3168 = vrot.slane %v3134, 2
      %v3169 = vsel %vm3138, %v3166, %v3168
      %v3170 = vrot.slane %v3135, 2
      %v3171 = vsel %vm3138, %v3168, %v3170
      %v3172 = vrot.slane %v3136, 2
      %v3173 = vsel %vm3138, %v3170, %v3172
      %v3174 = vrot.slane %v3137, 2
      %v3175 = vsel %vm3138, %v3172, %v3174
      %v3210 = vunpack.c.l.b16 %v3029
      %v3211 = vunpack.c.l.b16 %v3030
      %v3212 = vunpack.c.l.b16 %v3031
      %v3213 = vunpack.c.l.b16 %v3032
      %v3214 = vunpack.c.l.b16 %v3033
      %v3215 = vunpack.c.l.b16 %v3034
      %v3216 = vunpack.c.l.b16 %v3035
      %v3217 = vunpack.c.l.b16 %v3036
      %v3218 = vunpack.c.l.b16 %v3037
      %v3219 = vunpack.c.l.b16 %v3038
      %v3220 = vunpack.c.l.b16 %v3039
      %v3221 = vunpack.c.l.b16 %v3040
      %v3222 = vunpack.c.l.b16 %v3041
      %v3223 = vunpack.c.l.b16 %v3042
      %v3224 = vunpack.c.l.b16 %v3043
      %v3225 = vunpack.c.l.b16 %v3044
      %v3226 = vpack.c.b16 %v3211, %v3210
      %v3227 = vpack.c.b16 %v3213, %v3212
      %v3228 = vpack.c.b16 %v3215, %v3214
      %v3229 = vpack.c.b16 %v3217, %v3216
      %v3230 = vpack.c.b16 %v3219, %v3218
      %v3231 = vpack.c.b16 %v3221, %v3220
      %v3232 = vpack.c.b16 %v3223, %v3222
      %v3233 = vpack.c.b16 %v3225, %v3224
      %3242 = vmatprep.subr.bf16.mxu0 0
      %3243 = vmatpush1.bf16.msra.mxu0 %v3233
      %3244 = vmatprep.subr.bf16.mxu0 0
      %3245 = vmatpush1.bf16.msra.mxu0 %v3232
      %3246 = vmatprep.subr.bf16.mxu0 0
      %3247 = vmatpush1.bf16.msra.mxu0 %v3231
      %3248 = vmatprep.subr.bf16.mxu0 0
      %3249 = vmatpush1.bf16.msra.mxu0 %v3230
      %3250 = vmatprep.subr.bf16.mxu0 0
      %3251 = vmatpush1.bf16.msra.mxu0 %v3229
      %3252 = vmatprep.subr.bf16.mxu0 0
      %3253 = vmatpush1.bf16.msra.mxu0 %v3228
      %3254 = vmatprep.subr.bf16.mxu0 0
      %3255 = vmatpush1.bf16.msra.mxu0 %v3227
      %3256 = vmatprep.subr.bf16.mxu0 0
      %3257 = vmatpush1.bf16.msra.mxu0 %v3226
      %3258 = vmatprep.subr.bf16.mxu0 0
      %3259 = vmatpush2.bf16.msra.mxu0 0
      %3260 = vmatprep.subr.bf16.mxu0 0
      %3261 = vmatpush2.bf16.msra.mxu0 0
      %3262 = vmatprep.subr.bf16.mxu0 0
      %3263 = vmatpush2.bf16.msra.mxu0 0
      %3264 = vmatprep.subr.bf16.mxu0 0
      %3265 = vmatpush2.bf16.msra.mxu0 0
      %3266 = vmatprep.subr.bf16.mxu0 0
      %3267 = vmatpush2.bf16.msra.mxu0 0
      %3268 = vmatprep.subr.bf16.mxu0 0
      %3269 = vmatpush2.bf16.msra.mxu0 0
      %3270 = vmatprep.subr.bf16.mxu0 0
      %3271 = vmatpush2.bf16.msra.mxu0 0
      %3272 = vmatprep.subr.bf16.mxu0 0
      %3273 = vmatpush2.bf16.msra.mxu0 0
      %3274 = vmatprep.mubr.bf16.mxu0 0
      %3275 = vmatmul.mubr.bf16.gmra.mxu0 %v3141
      %v3276 = vpop.f32.mrf.mxu0
      %v3277 = vadd.f32 0.0, %v3276
      %v3278 = vpop.f32.mrf.mxu0
      %v3279 = vpop.f32.mrf.mxu0
      %v3280 = vadd.f32 0.0, %v3279
      %v3281 = vpop.f32.mrf.mxu0
      %3282 = vmatprep.mubr.bf16.mxu0 0
      %3283 = vmatmul.mubr.bf16.gmra.mxu0 %v3143
      %v3284 = vpop.f32.mrf.mxu0
      %v3285 = vadd.f32 0.0, %v3284
      %v3286 = vpop.f32.mrf.mxu0
      %v3287 = vpop.f32.mrf.mxu0
      %v3288 = vadd.f32 0.0, %v3287
      %v3289 = vpop.f32.mrf.mxu0
      %3290 = vmatprep.mubr.bf16.mxu0 0
      %3291 = vmatmul.mubr.bf16.gmra.mxu0 %v3145
      %v3292 = vpop.f32.mrf.mxu0
      %v3293 = vadd.f32 0.0, %v3292
      %v3294 = vpop.f32.mrf.mxu0
      %v3295 = vpop.f32.mrf.mxu0
      %v3296 = vadd.f32 0.0, %v3295
      %v3297 = vpop.f32.mrf.mxu0
      %3298 = vmatprep.mubr.bf16.mxu0 0
      %3299 = vmatmul.mubr.bf16.gmra.mxu0 %v3147
      %v3300 = vpop.f32.mrf.mxu0
      %v3301 = vadd.f32 0.0, %v3300
      %v3302 = vpop.f32.mrf.mxu0
      %v3303 = vpop.f32.mrf.mxu0
      %v3304 = vadd.f32 0.0, %v3303
      %v3305 = vpop.f32.mrf.mxu0
      %3306 = vmatprep.mubr.bf16.mxu0 0
      %3307 = vmatmul.mubr.bf16.gmra.mxu0 %v3149
      %v3308 = vpop.f32.mrf.mxu0
      %v3309 = vadd.f32 0.0, %v3308
      %v3310 = vpop.f32.mrf.mxu0
      %v3311 = vpop.f32.mrf.mxu0
      %v3312 = vadd.f32 0.0, %v3311
      %v3313 = vpop.f32.mrf.mxu0
      %3314 = vmatprep.mubr.bf16.mxu0 0
      %3315 = vmatmul.mubr.bf16.gmra.mxu0 %v3151
      %v3316 = vpop.f32.mrf.mxu0
      %v3317 = vadd.f32 0.0, %v3316
      %v3318 = vpop.f32.mrf.mxu0
      %v3319 = vpop.f32.mrf.mxu0
      %v3320 = vadd.f32 0.0, %v3319
      %v3321 = vpop.f32.mrf.mxu0
      %3322 = vmatprep.mubr.bf16.mxu0 0
      %3323 = vmatmul.mubr.bf16.gmra.mxu0 %v3153
      %v3324 = vpop.f32.mrf.mxu0
      %v3325 = vadd.f32 0.0, %v3324
      %v3326 = vpop.f32.mrf.mxu0
      %v3327 = vpop.f32.mrf.mxu0
      %v3328 = vadd.f32 0.0, %v3327
      %v3329 = vpop.f32.mrf.mxu0
      %3330 = vmatprep.mubr.bf16.mxu0 0
      %3331 = vmatmul.mubr.bf16.gmra.mxu0 %v3155
      %v3332 = vpop.f32.mrf.mxu0
      %v3333 = vadd.f32 0.0, %v3332
      %v3334 = vpop.f32.mrf.mxu0
      %v3335 = vpop.f32.mrf.mxu0
      %v3336 = vadd.f32 0.0, %v3335
      %v3337 = vpop.f32.mrf.mxu0
      %3338 = vmatprep.mubr.bf16.mxu0 0
      %3339 = vmatmul.mubr.bf16.gmra.mxu0 %v3157
      %v3340 = vpop.f32.mrf.mxu0
      %v3341 = vadd.f32 0.0, %v3340
      %v3342 = vpop.f32.mrf.mxu0
      %v3343 = vpop.f32.mrf.mxu0
      %v3344 = vadd.f32 0.0, %v3343
      %v3345 = vpop.f32.mrf.mxu0
      %3346 = vmatprep.mubr.bf16.mxu0 0
      %3347 = vmatmul.mubr.bf16.gmra.mxu0 %v3159
      %v3348 = vpop.f32.mrf.mxu0
      %v3349 = vadd.f32 0.0, %v3348
      %v3350 = vpop.f32.mrf.mxu0
      %v3351 = vpop.f32.mrf.mxu0
      %v3352 = vadd.f32 0.0, %v3351
      %v3353 = vpop.f32.mrf.mxu0
      %3354 = vmatprep.mubr.bf16.mxu0 0
      %3355 = vmatmul.mubr.bf16.gmra.mxu0 %v3161
      %v3356 = vpop.f32.mrf.mxu0
      %v3357 = vadd.f32 0.0, %v3356
      %v3358 = vpop.f32.mrf.mxu0
      %v3359 = vpop.f32.mrf.mxu0
      %v3360 = vadd.f32 0.0, %v3359
      %v3361 = vpop.f32.mrf.mxu0
      %3362 = vmatprep.mubr.bf16.mxu0 0
      %3363 = vmatmul.mubr.bf16.gmra.mxu0 %v3163
      %v3364 = vpop.f32.mrf.mxu0
      %v3365 = vadd.f32 0.0, %v3364
      %v3366 = vpop.f32.mrf.mxu0
      %v3367 = vpop.f32.mrf.mxu0
      %v3368 = vadd.f32 0.0, %v3367
      %v3369 = vpop.f32.mrf.mxu0
      %3370 = vmatprep.mubr.bf16.mxu0 0
      %3371 = vmatmul.mubr.bf16.gmra.mxu0 %v3165
      %v3372 = vpop.f32.mrf.mxu0
      %v3373 = vadd.f32 0.0, %v3372
      %v3374 = vpop.f32.mrf.mxu0
      %v3375 = vpop.f32.mrf.mxu0
      %v3376 = vadd.f32 0.0, %v3375
      %v3377 = vpop.f32.mrf.mxu0
      %3378 = vmatprep.mubr.bf16.mxu0 0
      %3379 = vmatmul.mubr.bf16.gmra.mxu0 %v3167
      %v3380 = vpop.f32.mrf.mxu0
      %v3381 = vadd.f32 0.0, %v3380
      %v3382 = vpop.f32.mrf.mxu0
      %v3383 = vpop.f32.mrf.mxu0
      %v3384 = vadd.f32 0.0, %v3383
      %v3385 = vpop.f32.mrf.mxu0
      %3386 = vmatprep.mubr.bf16.mxu0 0
      %3387 = vmatmul.mubr.bf16.gmra.mxu0 %v3169
      %v3388 = vpop.f32.mrf.mxu0
      %v3389 = vadd.f32 0.0, %v3388
      %v3390 = vpop.f32.mrf.mxu0
      %v3391 = vpop.f32.mrf.mxu0
      %v3392 = vadd.f32 0.0, %v3391
      %v3393 = vpop.f32.mrf.mxu0
      %3394 = vmatprep.mubr.bf16.mxu0 0
      %3395 = vmatmul.mubr.bf16.gmra.mxu0 %v3171
      %v3396 = vpop.f32.mrf.mxu0
      %v3397 = vadd.f32 0.0, %v3396
      %v3398 = vpop.f32.mrf.mxu0
      %v3399 = vpop.f32.mrf.mxu0
      %v3400 = vadd.f32 0.0, %v3399
      %v3401 = vpop.f32.mrf.mxu0
      %3402 = vmatprep.mubr.bf16.mxu0 0
      %3403 = vmatmul.mubr.bf16.gmra.mxu0 %v3173
      %v3404 = vpop.f32.mrf.mxu0
      %v3405 = vadd.f32 0.0, %v3404
      %v3406 = vpop.f32.mrf.mxu0
      %v3407 = vpop.f32.mrf.mxu0
      %v3408 = vadd.f32 0.0, %v3407
      %v3409 = vpop.f32.mrf.mxu0
      %3410 = vmatprep.mubr.bf16.mxu0 0
      %3411 = vmatmul.mubr.bf16.gmra.mxu0 %v3175
      %v3412 = vpop.f32.mrf.mxu0
      %v3413 = vadd.f32 0.0, %v3412
      %v3414 = vpop.f32.mrf.mxu0
      %v3415 = vpop.f32.mrf.mxu0
      %v3416 = vadd.f32 0.0, %v3415
      %v3417 = vpop.f32.mrf.mxu0
      %3418 = vdwg.mxu0
      %v3419 = vadd.f32 %v2955, %v3277
      %v3420 = vadd.f32 %v2956, %v3280
      %v3421 = vadd.f32 %v2957, %v3285
      %v3422 = vadd.f32 %v2958, %v3288
      %v3423 = vadd.f32 %v2959, %v3293
      %v3424 = vadd.f32 %v2960, %v3296
      %v3425 = vadd.f32 %v2961, %v3301
      %v3426 = vadd.f32 %v2962, %v3304
      %v3427 = vadd.f32 %v2963, %v3309
      %v3428 = vadd.f32 %v2964, %v3312
      %v3429 = vadd.f32 %v2965, %v3317
      %v3430 = vadd.f32 %v2966, %v3320
      %v3431 = vadd.f32 %v2967, %v3325
      %v3432 = vadd.f32 %v2968, %v3328
      %v3433 = vadd.f32 %v2969, %v3333
      %v3434 = vadd.f32 %v2970, %v3336
      %v3435 = vadd.f32 %v2971, %v3341
      %v3436 = vadd.f32 %v2972, %v3344
      %v3437 = vadd.f32 %v2973, %v3349
      %v3438 = vadd.f32 %v2974, %v3352
      %v3439 = vadd.f32 %v2975, %v3357
      %v3440 = vadd.f32 %v2976, %v3360
      %v3441 = vadd.f32 %v2977, %v3365
      %v3442 = vadd.f32 %v2978, %v3368
      %v3443 = vadd.f32 %v2979, %v3373
      %v3444 = vadd.f32 %v2980, %v3376
      %v3445 = vadd.f32 %v2981, %v3381
      %v3446 = vadd.f32 %v2982, %v3384
      %v3447 = vadd.f32 %v2983, %v3389
      %v3448 = vadd.f32 %v2984, %v3392
      %v3449 = vadd.f32 %v2985, %v3397
      %v3450 = vadd.f32 %v2986, %v3400
      %v3451 = vadd.f32 %v2987, %v3405
      %v3452 = vadd.f32 %v2988, %v3408
      %v3453 = vadd.f32 %v2989, %v3413
      %v3454 = vadd.f32 %v2990, %v3416
      %3455 = vst [vmem:[#allocation2] sm:$0xff] %v3419
      %3456 = vst [vmem:[#allocation2 + $0x8] sm:$0xff] %v3420
      %3457 = vst [vmem:[#allocation2 + $0x10] sm:$0xff] %v3421
      %3458 = vst [vmem:[#allocation2 + $0x18] sm:$0xff] %v3422
      %3459 = vst [vmem:[#allocation2 + $0x20] sm:$0xff] %v3423
      %3460 = vst [vmem:[#allocation2 + $0x28] sm:$0xff] %v3424
      %3461 = vst [vmem:[#allocation2 + $0x30] sm:$0xff] %v3425
      %3462 = vst [vmem:[#allocation2 + $0x38] sm:$0xff] %v3426
      %3463 = vst [vmem:[#allocation2 + $0x40] sm:$0xff] %v3427
      %3464 = vst [vmem:[#allocation2 + $0x48] sm:$0xff] %v3428
      %3465 = vst [vmem:[#allocation2 + $0x50] sm:$0xff] %v3429
      %3466 = vst [vmem:[#allocation2 + $0x58] sm:$0xff] %v3430
      %3467 = vst [vmem:[#allocation2 + $0x60] sm:$0xff] %v3431
      %3468 = vst [vmem:[#allocation2 + $0x68] sm:$0xff] %v3432
      %3469 = vst [vmem:[#allocation2 + $0x70] sm:$0xff] %v3433
      %3470 = vst [vmem:[#allocation2 + $0x78] sm:$0xff] %v3434
      %3471 = vst [vmem:[#allocation2 + $0x80] sm:$0xff] %v3435
      %3472 = vst [vmem:[#allocation2 + $0x88] sm:$0xff] %v3436
      %3473 = vst [vmem:[#allocation2 + $0x90] sm:$0xff] %v3437
      %3474 = vst [vmem:[#allocation2 + $0x98] sm:$0xff] %v3438
      %3475 = vst [vmem:[#allocation2 + $0xa0] sm:$0xff] %v3439
      %3476 = vst [vmem:[#allocation2 + $0xa8] sm:$0xff] %v3440
      %3477 = vst [vmem:[#allocation2 + $0xb0] sm:$0xff] %v3441
      %3478 = vst [vmem:[#allocation2 + $0xb8] sm:$0xff] %v3442
      %3479 = vst [vmem:[#allocation2 + $0xc0] sm:$0xff] %v3443
      %3480 = vst [vmem:[#allocation2 + $0xc8] sm:$0xff] %v3444
      %3481 = vst [vmem:[#allocation2 + $0xd0] sm:$0xff] %v3445
      %3482 = vst [vmem:[#allocation2 + $0xd8] sm:$0xff] %v3446
      %3483 = vst [vmem:[#allocation2 + $0xe0] sm:$0xff] %v3447
      %3484 = vst [vmem:[#allocation2 + $0xe8] sm:$0xff] %v3448
      %3485 = vst [vmem:[#allocation2 + $0xf0] sm:$0xff] %v3449
      %3486 = vst [vmem:[#allocation2 + $0xf8] sm:$0xff] %v3450
      %3487 = vst [vmem:[#allocation2 + $0x100] sm:$0xff] %v3451
      %3488 = vst [vmem:[#allocation2 + $0x108] sm:$0xff] %v3452
      %3489 = vst [vmem:[#allocation2 + $0x110] sm:$0xff] %v3453
      %3490 = vst [vmem:[#allocation2 + $0x118] sm:$0x3f] %v3454
      %v3491 = vld [vmem:[#allocation2] sm:$0xff]
      %v3492 = vld [vmem:[#allocation2 + $0x8] sm:$0xff]
      %v3493 = vld [vmem:[#allocation2 + $0x10] sm:$0xff]
      %v3494 = vld [vmem:[#allocation2 + $0x18] sm:$0xff]
      %v3495 = vld [vmem:[#allocation2 + $0x20] sm:$0xff]
      %v3496 = vld [vmem:[#allocation2 + $0x28] sm:$0xff]
      %v3497 = vld [vmem:[#allocation2 + $0x30] sm:$0xff]
      %v3498 = vld [vmem:[#allocation2 + $0x38] sm:$0xff]
      %v3499 = vld [vmem:[#allocation2 + $0x40] sm:$0xff]
      %v3500 = vld [vmem:[#allocation2 + $0x48] sm:$0xff]
      %v3501 = vld [vmem:[#allocation2 + $0x50] sm:$0xff]
      %v3502 = vld [vmem:[#allocation2 + $0x58] sm:$0xff]
      %v3503 = vld [vmem:[#allocation2 + $0x60] sm:$0xff]
      %v3504 = vld [vmem:[#allocation2 + $0x68] sm:$0xff]
      %v3505 = vld [vmem:[#allocation2 + $0x70] sm:$0xff]
      %v3506 = vld [vmem:[#allocation2 + $0x78] sm:$0xff]
      %v3507 = vld [vmem:[#allocation2 + $0x80] sm:$0xff]
      %v3508 = vld [vmem:[#allocation2 + $0x88] sm:$0xff]
      %v3509 = vld [vmem:[#allocation2 + $0x90] sm:$0xff]
      %v3510 = vld [vmem:[#allocation2 + $0x98] sm:$0xff]
      %v3511 = vld [vmem:[#allocation2 + $0xa0] sm:$0xff]
      %v3512 = vld [vmem:[#allocation2 + $0xa8] sm:$0xff]
      %v3513 = vld [vmem:[#allocation2 + $0xb0] sm:$0xff]
      %v3514 = vld [vmem:[#allocation2 + $0xb8] sm:$0xff]
      %v3515 = vld [vmem:[#allocation2 + $0xc0] sm:$0xff]
      %v3516 = vld [vmem:[#allocation2 + $0xc8] sm:$0xff]
      %v3517 = vld [vmem:[#allocation2 + $0xd0] sm:$0xff]
      %v3518 = vld [vmem:[#allocation2 + $0xd8] sm:$0xff]
      %v3519 = vld [vmem:[#allocation2 + $0xe0] sm:$0xff]
      %v3520 = vld [vmem:[#allocation2 + $0xe8] sm:$0xff]
      %v3521 = vld [vmem:[#allocation2 + $0xf0] sm:$0xff]
      %v3522 = vld [vmem:[#allocation2 + $0xf8] sm:$0xff]
      %v3523 = vld [vmem:[#allocation2 + $0x100] sm:$0xff]
      %v3524 = vld [vmem:[#allocation2 + $0x108] sm:$0xff]
      %v3525 = vld [vmem:[#allocation2 + $0x110] sm:$0xff]
      %v3526 = vld [vmem:[#allocation2 + $0x118] sm:$0x3f]
      %v3527 = vld [vmem:[%s165 + $0x10] sm:$0xc]
      %v3528 = vld [vmem:[%s165 + $0x14] sm:$0xf]
      %v3529 = vld [vmem:[%s165 + $0x18] sm:$0xf]
      %v3530 = vld [vmem:[%s165 + $0x1c] sm:$0xf]
      %v3531 = vld [vmem:[%s165 + $0x20] sm:$0xf]
      %v3532 = vld [vmem:[%s165 + $0x24] sm:$0xf]
      %v3533 = vld [vmem:[%s165 + $0x28] sm:$0xf]
      %v3534 = vld [vmem:[%s165 + $0x2c] sm:$0xf]
      %v3535 = vld [vmem:[%s165 + $0x30] sm:$0xf]
      %v3536 = vld [vmem:[%s165 + $0x34] sm:$0xf]
      %v3537 = vld [vmem:[%s165 + $0x38] sm:$0xf]
      %v3538 = vld [vmem:[%s165 + $0x3c] sm:$0xf]
      %v3539 = vld [vmem:[%s165 + $0x40] sm:$0xf]
      %v3540 = vld [vmem:[%s165 + $0x44] sm:$0xf]
      %v3541 = vld [vmem:[%s165 + $0x48] sm:$0xf]
      %v3542 = vld [vmem:[%s165 + $0x4c] sm:$0xf]
      %v3543 = vld [vmem:[%s165 + $0x50] sm:$0xf]
      %v3544 = vld [vmem:[%s165 + $0x54] sm:$0xf]
      %v3545 = vld [vmem:[%s165 + $0x58] sm:$0xf]
      %v3546 = vld [vmem:[%s165 + $0x5c] sm:$0xf]
      %v3547 = vld [vmem:[%s165 + $0x60] sm:$0xf]
      %v3548 = vld [vmem:[%s165 + $0x64] sm:$0xf]
      %v3549 = vld [vmem:[%s165 + $0x68] sm:$0xf]
      %v3550 = vld [vmem:[%s165 + $0x6c] sm:$0xf]
      %v3551 = vld [vmem:[%s165 + $0x70] sm:$0xf]
      %v3552 = vld [vmem:[%s165 + $0x74] sm:$0xf]
      %v3553 = vld [vmem:[%s165 + $0x78] sm:$0xf]
      %v3554 = vld [vmem:[%s165 + $0x7c] sm:$0xf]
      %v3555 = vld [vmem:[%s165 + $0x80] sm:$0xf]
      %v3556 = vld [vmem:[%s165 + $0x84] sm:$0xf]
      %v3557 = vld [vmem:[%s165 + $0x88] sm:$0xf]
      %v3558 = vld [vmem:[%s165 + $0x8c] sm:$0xf]
      %v3559 = vld [vmem:[%s165 + $0x90] sm:$0xf]
      %v3560 = vld [vmem:[%s165 + $0x94] sm:$0xf]
      %v3561 = vld [vmem:[%s165 + $0x98] sm:$0xf]
      %v3562 = vld [vmem:[%s165 + $0x9c] sm:$0xf]
      %v3563 = vld [vmem:[%s165 + $0xa0] sm:$0x1]
      %s3564 = scalar_lea.vmem %s1, 384
      %v3565 = vld [vmem:[%s3564] sm:$0xf]
      %v3566 = vld [vmem:[%s3564 + $0x4] sm:$0xf]
      %v3567 = vld [vmem:[%s3564 + $0x8] sm:$0xf]
      %v3568 = vld [vmem:[%s3564 + $0xc] sm:$0xf]
      %v3569 = vld [vmem:[%s3564 + $0x10] sm:$0xf]
      %v3570 = vld [vmem:[%s3564 + $0x14] sm:$0xf]
      %v3571 = vld [vmem:[%s3564 + $0x18] sm:$0xf]
      %v3572 = vld [vmem:[%s3564 + $0x1c] sm:$0xf]
      %v3573 = vld [vmem:[%s3564 + $0x20] sm:$0xf]
      %v3574 = vld [vmem:[%s3564 + $0x24] sm:$0xf]
      %v3575 = vld [vmem:[%s3564 + $0x28] sm:$0xf]
      %v3576 = vld [vmem:[%s3564 + $0x2c] sm:$0xf]
      %v3577 = vld [vmem:[%s3564 + $0x30] sm:$0xf]
      %v3578 = vld [vmem:[%s3564 + $0x34] sm:$0xf]
      %v3579 = vld [vmem:[%s3564 + $0x38] sm:$0xf]
      %v3580 = vld [vmem:[%s3564 + $0x3c] sm:$0xf]
      %v3618 = vunpack.c.l.b16 %v3527
      %v3619 = vunpack.c.l.b16 %v3528
      %v3620 = vunpack.c.l.b16 %v3529
      %v3621 = vunpack.c.l.b16 %v3530
      %v3622 = vunpack.c.l.b16 %v3531
      %v3623 = vunpack.c.l.b16 %v3532
      %v3624 = vunpack.c.l.b16 %v3533
      %v3625 = vunpack.c.l.b16 %v3534
      %v3626 = vunpack.c.l.b16 %v3535
      %v3627 = vunpack.c.l.b16 %v3536
      %v3628 = vunpack.c.l.b16 %v3537
      %v3629 = vunpack.c.l.b16 %v3538
      %v3630 = vunpack.c.l.b16 %v3539
      %v3631 = vunpack.c.l.b16 %v3540
      %v3632 = vunpack.c.l.b16 %v3541
      %v3633 = vunpack.c.l.b16 %v3542
      %v3634 = vunpack.c.l.b16 %v3543
      %v3635 = vunpack.c.l.b16 %v3544
      %v3636 = vunpack.c.l.b16 %v3545
      %v3637 = vunpack.c.l.b16 %v3546
      %v3638 = vunpack.c.l.b16 %v3547
      %v3639 = vunpack.c.l.b16 %v3548
      %v3640 = vunpack.c.l.b16 %v3549
      %v3641 = vunpack.c.l.b16 %v3550
      %v3642 = vunpack.c.l.b16 %v3551
      %v3643 = vunpack.c.l.b16 %v3552
      %v3644 = vunpack.c.l.b16 %v3553
      %v3645 = vunpack.c.l.b16 %v3554
      %v3646 = vunpack.c.l.b16 %v3555
      %v3647 = vunpack.c.l.b16 %v3556
      %v3648 = vunpack.c.l.b16 %v3557
      %v3649 = vunpack.c.l.b16 %v3558
      %v3650 = vunpack.c.l.b16 %v3559
      %v3651 = vunpack.c.l.b16 %v3560
      %v3652 = vunpack.c.l.b16 %v3561
      %v3653 = vunpack.c.l.b16 %v3562
      %v3654 = vunpack.c.l.b16 %v3563
      %v3655 = vpack.c.b16 %v3619, %v3618
      %v3656 = vpack.c.b16 %v3621, %v3620
      %v3657 = vpack.c.b16 %v3623, %v3622
      %v3658 = vpack.c.b16 %v3625, %v3624
      %v3659 = vpack.c.b16 %v3627, %v3626
      %v3660 = vpack.c.b16 %v3629, %v3628
      %v3661 = vpack.c.b16 %v3631, %v3630
      %v3662 = vpack.c.b16 %v3633, %v3632
      %v3663 = vpack.c.b16 %v3635, %v3634
      %v3664 = vpack.c.b16 %v3637, %v3636
      %v3665 = vpack.c.b16 %v3639, %v3638
      %v3666 = vpack.c.b16 %v3641, %v3640
      %v3667 = vpack.c.b16 %v3643, %v3642
      %v3668 = vpack.c.b16 %v3645, %v3644
      %v3669 = vpack.c.b16 %v3647, %v3646
      %v3670 = vpack.c.b16 %v3649, %v3648
      %v3671 = vpack.c.b16 %v3651, %v3650
      %v3672 = vpack.c.b16 %v3653, %v3652
      %v3673 = vpack.c.b16 %v3654, %v3654
      %v3674 = vrot.slane %v3655, 2
      %v3675 = vrot.slane %v3656, 2
      %v3676 = vsel %vm3138, %v3674, %v3675
      %v3677 = vrot.slane %v3657, 2
      %v3678 = vsel %vm3138, %v3675, %v3677
      %v3679 = vrot.slane %v3658, 2
      %v3680 = vsel %vm3138, %v3677, %v3679
      %v3681 = vrot.slane %v3659, 2
      %v3682 = vsel %vm3138, %v3679, %v3681
      %v3683 = vrot.slane %v3660, 2
      %v3684 = vsel %vm3138, %v3681, %v3683
      %v3685 = vrot.slane %v3661, 2
      %v3686 = vsel %vm3138, %v3683, %v3685
      %v3687 = vrot.slane %v3662, 2
      %v3688 = vsel %vm3138, %v3685, %v3687
      %v3689 = vrot.slane %v3663, 2
      %v3690 = vsel %vm3138, %v3687, %v3689
      %v3691 = vrot.slane %v3664, 2
      %v3692 = vsel %vm3138, %v3689, %v3691
      %v3693 = vrot.slane %v3665, 2
      %v3694 = vsel %vm3138, %v3691, %v3693
      %v3695 = vrot.slane %v3666, 2
      %v3696 = vsel %vm3138, %v3693, %v3695
      %v3697 = vrot.slane %v3667, 2
      %v3698 = vsel %vm3138, %v3695, %v3697
      %v3699 = vrot.slane %v3668, 2
      %v3700 = vsel %vm3138, %v3697, %v3699
      %v3701 = vrot.slane %v3669, 2
      %v3702 = vsel %vm3138, %v3699, %v3701
      %v3703 = vrot.slane %v3670, 2
      %v3704 = vsel %vm3138, %v3701, %v3703
      %v3705 = vrot.slane %v3671, 2
      %v3706 = vsel %vm3138, %v3703, %v3705
      %v3707 = vrot.slane %v3672, 2
      %v3708 = vsel %vm3138, %v3705, %v3707
      %v3709 = vrot.slane %v3673, 2
      %v3710 = vsel %vm3138, %v3707, %v3709
      %v3745 = vunpack.c.l.b16 %v3565
      %v3746 = vunpack.c.l.b16 %v3566
      %v3747 = vunpack.c.l.b16 %v3567
      %v3748 = vunpack.c.l.b16 %v3568
      %v3749 = vunpack.c.l.b16 %v3569
      %v3750 = vunpack.c.l.b16 %v3570
      %v3751 = vunpack.c.l.b16 %v3571
      %v3752 = vunpack.c.l.b16 %v3572
      %v3753 = vunpack.c.l.b16 %v3573
      %v3754 = vunpack.c.l.b16 %v3574
      %v3755 = vunpack.c.l.b16 %v3575
      %v3756 = vunpack.c.l.b16 %v3576
      %v3757 = vunpack.c.l.b16 %v3577
      %v3758 = vunpack.c.l.b16 %v3578
      %v3759 = vunpack.c.l.b16 %v3579
      %v3760 = vunpack.c.l.b16 %v3580
      %v3761 = vpack.c.b16 %v3746, %v3745
      %v3762 = vpack.c.b16 %v3748, %v3747
      %v3763 = vpack.c.b16 %v3750, %v3749
      %v3764 = vpack.c.b16 %v3752, %v3751
      %v3765 = vpack.c.b16 %v3754, %v3753
      %v3766 = vpack.c.b16 %v3756, %v3755
      %v3767 = vpack.c.b16 %v3758, %v3757
      %v3768 = vpack.c.b16 %v3760, %v3759
      %3777 = vmatprep.subr.bf16.mxu0 0
      %3778 = vmatpush1.bf16.msra.mxu0 %v3768
      %3779 = vmatprep.subr.bf16.mxu0 0
      %3780 = vmatpush1.bf16.msra.mxu0 %v3767
      %3781 = vmatprep.subr.bf16.mxu0 0
      %3782 = vmatpush1.bf16.msra.mxu0 %v3766
      %3783 = vmatprep.subr.bf16.mxu0 0
      %3784 = vmatpush1.bf16.msra.mxu0 %v3765
      %3785 = vmatprep.subr.bf16.mxu0 0
      %3786 = vmatpush1.bf16.msra.mxu0 %v3764
      %3787 = vmatprep.subr.bf16.mxu0 0
      %3788 = vmatpush1.bf16.msra.mxu0 %v3763
      %3789 = vmatprep.subr.bf16.mxu0 0
      %3790 = vmatpush1.bf16.msra.mxu0 %v3762
      %3791 = vmatprep.subr.bf16.mxu0 0
      %3792 = vmatpush1.bf16.msra.mxu0 %v3761
      %3793 = vmatprep.subr.bf16.mxu0 0
      %3794 = vmatpush2.bf16.msra.mxu0 0
      %3795 = vmatprep.subr.bf16.mxu0 0
      %3796 = vmatpush2.bf16.msra.mxu0 0
      %3797 = vmatprep.subr.bf16.mxu0 0
      %3798 = vmatpush2.bf16.msra.mxu0 0
      %3799 = vmatprep.subr.bf16.mxu0 0
      %3800 = vmatpush2.bf16.msra.mxu0 0
      %3801 = vmatprep.subr.bf16.mxu0 0
      %3802 = vmatpush2.bf16.msra.mxu0 0
      %3803 = vmatprep.subr.bf16.mxu0 0
      %3804 = vmatpush2.bf16.msra.mxu0 0
      %3805 = vmatprep.subr.bf16.mxu0 0
      %3806 = vmatpush2.bf16.msra.mxu0 0
      %3807 = vmatprep.subr.bf16.mxu0 0
      %3808 = vmatpush2.bf16.msra.mxu0 0
      %3809 = vmatprep.mubr.bf16.mxu0 0
      %3810 = vmatmul.mubr.bf16.gmra.mxu0 %v3676
      %v3811 = vpop.f32.mrf.mxu0
      %v3812 = vadd.f32 0.0, %v3811
      %v3813 = vpop.f32.mrf.mxu0
      %v3814 = vpop.f32.mrf.mxu0
      %v3815 = vadd.f32 0.0, %v3814
      %v3816 = vpop.f32.mrf.mxu0
      %3817 = vmatprep.mubr.bf16.mxu0 0
      %3818 = vmatmul.mubr.bf16.gmra.mxu0 %v3678
      %v3819 = vpop.f32.mrf.mxu0
      %v3820 = vadd.f32 0.0, %v3819
      %v3821 = vpop.f32.mrf.mxu0
      %v3822 = vpop.f32.mrf.mxu0
      %v3823 = vadd.f32 0.0, %v3822
      %v3824 = vpop.f32.mrf.mxu0
      %3825 = vmatprep.mubr.bf16.mxu0 0
      %3826 = vmatmul.mubr.bf16.gmra.mxu0 %v3680
      %v3827 = vpop.f32.mrf.mxu0
      %v3828 = vadd.f32 0.0, %v3827
      %v3829 = vpop.f32.mrf.mxu0
      %v3830 = vpop.f32.mrf.mxu0
      %v3831 = vadd.f32 0.0, %v3830
      %v3832 = vpop.f32.mrf.mxu0
      %3833 = vmatprep.mubr.bf16.mxu0 0
      %3834 = vmatmul.mubr.bf16.gmra.mxu0 %v3682
      %v3835 = vpop.f32.mrf.mxu0
      %v3836 = vadd.f32 0.0, %v3835
      %v3837 = vpop.f32.mrf.mxu0
      %v3838 = vpop.f32.mrf.mxu0
      %v3839 = vadd.f32 0.0, %v3838
      %v3840 = vpop.f32.mrf.mxu0
      %3841 = vmatprep.mubr.bf16.mxu0 0
      %3842 = vmatmul.mubr.bf16.gmra.mxu0 %v3684
      %v3843 = vpop.f32.mrf.mxu0
      %v3844 = vadd.f32 0.0, %v3843
      %v3845 = vpop.f32.mrf.mxu0
      %v3846 = vpop.f32.mrf.mxu0
      %v3847 = vadd.f32 0.0, %v3846
      %v3848 = vpop.f32.mrf.mxu0
      %3849 = vmatprep.mubr.bf16.mxu0 0
      %3850 = vmatmul.mubr.bf16.gmra.mxu0 %v3686
      %v3851 = vpop.f32.mrf.mxu0
      %v3852 = vadd.f32 0.0, %v3851
      %v3853 = vpop.f32.mrf.mxu0
      %v3854 = vpop.f32.mrf.mxu0
      %v3855 = vadd.f32 0.0, %v3854
      %v3856 = vpop.f32.mrf.mxu0
      %3857 = vmatprep.mubr.bf16.mxu0 0
      %3858 = vmatmul.mubr.bf16.gmra.mxu0 %v3688
      %v3859 = vpop.f32.mrf.mxu0
      %v3860 = vadd.f32 0.0, %v3859
      %v3861 = vpop.f32.mrf.mxu0
      %v3862 = vpop.f32.mrf.mxu0
      %v3863 = vadd.f32 0.0, %v3862
      %v3864 = vpop.f32.mrf.mxu0
      %3865 = vmatprep.mubr.bf16.mxu0 0
      %3866 = vmatmul.mubr.bf16.gmra.mxu0 %v3690
      %v3867 = vpop.f32.mrf.mxu0
      %v3868 = vadd.f32 0.0, %v3867
      %v3869 = vpop.f32.mrf.mxu0
      %v3870 = vpop.f32.mrf.mxu0
      %v3871 = vadd.f32 0.0, %v3870
      %v3872 = vpop.f32.mrf.mxu0
      %3873 = vmatprep.mubr.bf16.mxu0 0
      %3874 = vmatmul.mubr.bf16.gmra.mxu0 %v3692
      %v3875 = vpop.f32.mrf.mxu0
      %v3876 = vadd.f32 0.0, %v3875
      %v3877 = vpop.f32.mrf.mxu0
      %v3878 = vpop.f32.mrf.mxu0
      %v3879 = vadd.f32 0.0, %v3878
      %v3880 = vpop.f32.mrf.mxu0
      %3881 = vmatprep.mubr.bf16.mxu0 0
      %3882 = vmatmul.mubr.bf16.gmra.mxu0 %v3694
      %v3883 = vpop.f32.mrf.mxu0
      %v3884 = vadd.f32 0.0, %v3883
      %v3885 = vpop.f32.mrf.mxu0
      %v3886 = vpop.f32.mrf.mxu0
      %v3887 = vadd.f32 0.0, %v3886
      %v3888 = vpop.f32.mrf.mxu0
      %3889 = vmatprep.mubr.bf16.mxu0 0
      %3890 = vmatmul.mubr.bf16.gmra.mxu0 %v3696
      %v3891 = vpop.f32.mrf.mxu0
      %v3892 = vadd.f32 0.0, %v3891
      %v3893 = vpop.f32.mrf.mxu0
      %v3894 = vpop.f32.mrf.mxu0
      %v3895 = vadd.f32 0.0, %v3894
      %v3896 = vpop.f32.mrf.mxu0
      %3897 = vmatprep.mubr.bf16.mxu0 0
      %3898 = vmatmul.mubr.bf16.gmra.mxu0 %v3698
      %v3899 = vpop.f32.mrf.mxu0
      %v3900 = vadd.f32 0.0, %v3899
      %v3901 = vpop.f32.mrf.mxu0
      %v3902 = vpop.f32.mrf.mxu0
      %v3903 = vadd.f32 0.0, %v3902
      %v3904 = vpop.f32.mrf.mxu0
      %3905 = vmatprep.mubr.bf16.mxu0 0
      %3906 = vmatmul.mubr.bf16.gmra.mxu0 %v3700
      %v3907 = vpop.f32.mrf.mxu0
      %v3908 = vadd.f32 0.0, %v3907
      %v3909 = vpop.f32.mrf.mxu0
      %v3910 = vpop.f32.mrf.mxu0
      %v3911 = vadd.f32 0.0, %v3910
      %v3912 = vpop.f32.mrf.mxu0
      %3913 = vmatprep.mubr.bf16.mxu0 0
      %3914 = vmatmul.mubr.bf16.gmra.mxu0 %v3702
      %v3915 = vpop.f32.mrf.mxu0
      %v3916 = vadd.f32 0.0, %v3915
      %v3917 = vpop.f32.mrf.mxu0
      %v3918 = vpop.f32.mrf.mxu0
      %v3919 = vadd.f32 0.0, %v3918
      %v3920 = vpop.f32.mrf.mxu0
      %3921 = vmatprep.mubr.bf16.mxu0 0
      %3922 = vmatmul.mubr.bf16.gmra.mxu0 %v3704
      %v3923 = vpop.f32.mrf.mxu0
      %v3924 = vadd.f32 0.0, %v3923
      %v3925 = vpop.f32.mrf.mxu0
      %v3926 = vpop.f32.mrf.mxu0
      %v3927 = vadd.f32 0.0, %v3926
      %v3928 = vpop.f32.mrf.mxu0
      %3929 = vmatprep.mubr.bf16.mxu0 0
      %3930 = vmatmul.mubr.bf16.gmra.mxu0 %v3706
      %v3931 = vpop.f32.mrf.mxu0
      %v3932 = vadd.f32 0.0, %v3931
      %v3933 = vpop.f32.mrf.mxu0
      %v3934 = vpop.f32.mrf.mxu0
      %v3935 = vadd.f32 0.0, %v3934
      %v3936 = vpop.f32.mrf.mxu0
      %3937 = vmatprep.mubr.bf16.mxu0 0
      %3938 = vmatmul.mubr.bf16.gmra.mxu0 %v3708
      %v3939 = vpop.f32.mrf.mxu0
      %v3940 = vadd.f32 0.0, %v3939
      %v3941 = vpop.f32.mrf.mxu0
      %v3942 = vpop.f32.mrf.mxu0
      %v3943 = vadd.f32 0.0, %v3942
      %v3944 = vpop.f32.mrf.mxu0
      %3945 = vmatprep.mubr.bf16.mxu0 0
      %3946 = vmatmul.mubr.bf16.gmra.mxu0 %v3710
      %v3947 = vpop.f32.mrf.mxu0
      %v3948 = vadd.f32 0.0, %v3947
      %v3949 = vpop.f32.mrf.mxu0
      %v3950 = vpop.f32.mrf.mxu0
      %v3951 = vadd.f32 0.0, %v3950
      %v3952 = vpop.f32.mrf.mxu0
      %3953 = vdwg.mxu0
      %v3954 = vadd.f32 %v3491, %v3812
      %v3955 = vadd.f32 %v3492, %v3815
      %v3956 = vadd.f32 %v3493, %v3820
      %v3957 = vadd.f32 %v3494, %v3823
      %v3958 = vadd.f32 %v3495, %v3828
      %v3959 = vadd.f32 %v3496, %v3831
      %v3960 = vadd.f32 %v3497, %v3836
      %v3961 = vadd.f32 %v3498, %v3839
      %v3962 = vadd.f32 %v3499, %v3844
      %v3963 = vadd.f32 %v3500, %v3847
      %v3964 = vadd.f32 %v3501, %v3852
      %v3965 = vadd.f32 %v3502, %v3855
      %v3966 = vadd.f32 %v3503, %v3860
      %v3967 = vadd.f32 %v3504, %v3863
      %v3968 = vadd.f32 %v3505, %v3868
      %v3969 = vadd.f32 %v3506, %v3871
      %v3970 = vadd.f32 %v3507, %v3876
      %v3971 = vadd.f32 %v3508, %v3879
      %v3972 = vadd.f32 %v3509, %v3884
      %v3973 = vadd.f32 %v3510, %v3887
      %v3974 = vadd.f32 %v3511, %v3892
      %v3975 = vadd.f32 %v3512, %v3895
      %v3976 = vadd.f32 %v3513, %v3900
      %v3977 = vadd.f32 %v3514, %v3903
      %v3978 = vadd.f32 %v3515, %v3908
      %v3979 = vadd.f32 %v3516, %v3911
      %v3980 = vadd.f32 %v3517, %v3916
      %v3981 = vadd.f32 %v3518, %v3919
      %v3982 = vadd.f32 %v3519, %v3924
      %v3983 = vadd.f32 %v3520, %v3927
      %v3984 = vadd.f32 %v3521, %v3932
      %v3985 = vadd.f32 %v3522, %v3935
      %v3986 = vadd.f32 %v3523, %v3940
      %v3987 = vadd.f32 %v3524, %v3943
      %v3988 = vadd.f32 %v3525, %v3948
      %v3989 = vadd.f32 %v3526, %v3951
      %3990 = vst [vmem:[#allocation2] sm:$0xff] %v3954
      %3991 = vst [vmem:[#allocation2 + $0x8] sm:$0xff] %v3955
      %3992 = vst [vmem:[#allocation2 + $0x10] sm:$0xff] %v3956
      %3993 = vst [vmem:[#allocation2 + $0x18] sm:$0xff] %v3957
      %3994 = vst [vmem:[#allocation2 + $0x20] sm:$0xff] %v3958
      %3995 = vst [vmem:[#allocation2 + $0x28] sm:$0xff] %v3959
      %3996 = vst [vmem:[#allocation2 + $0x30] sm:$0xff] %v3960
      %3997 = vst [vmem:[#allocation2 + $0x38] sm:$0xff] %v3961
      %3998 = vst [vmem:[#allocation2 + $0x40] sm:$0xff] %v3962
      %3999 = vst [vmem:[#allocation2 + $0x48] sm:$0xff] %v3963
      %4000 = vst [vmem:[#allocation2 + $0x50] sm:$0xff] %v3964
      %4001 = vst [vmem:[#allocation2 + $0x58] sm:$0xff] %v3965
      %4002 = vst [vmem:[#allocation2 + $0x60] sm:$0xff] %v3966
      %4003 = vst [vmem:[#allocation2 + $0x68] sm:$0xff] %v3967
      %4004 = vst [vmem:[#allocation2 + $0x70] sm:$0xff] %v3968
      %4005 = vst [vmem:[#allocation2 + $0x78] sm:$0xff] %v3969
      %4006 = vst [vmem:[#allocation2 + $0x80] sm:$0xff] %v3970
      %4007 = vst [vmem:[#allocation2 + $0x88] sm:$0xff] %v3971
      %4008 = vst [vmem:[#allocation2 + $0x90] sm:$0xff] %v3972
      %4009 = vst [vmem:[#allocation2 + $0x98] sm:$0xff] %v3973
      %4010 = vst [vmem:[#allocation2 + $0xa0] sm:$0xff] %v3974
      %4011 = vst [vmem:[#allocation2 + $0xa8] sm:$0xff] %v3975
      %4012 = vst [vmem:[#allocation2 + $0xb0] sm:$0xff] %v3976
      %4013 = vst [vmem:[#allocation2 + $0xb8] sm:$0xff] %v3977
      %4014 = vst [vmem:[#allocation2 + $0xc0] sm:$0xff] %v3978
      %4015 = vst [vmem:[#allocation2 + $0xc8] sm:$0xff] %v3979
      %4016 = vst [vmem:[#allocation2 + $0xd0] sm:$0xff] %v3980
      %4017 = vst [vmem:[#allocation2 + $0xd8] sm:$0xff] %v3981
      %4018 = vst [vmem:[#allocation2 + $0xe0] sm:$0xff] %v3982
      %4019 = vst [vmem:[#allocation2 + $0xe8] sm:$0xff] %v3983
      %4020 = vst [vmem:[#allocation2 + $0xf0] sm:$0xff] %v3984
      %4021 = vst [vmem:[#allocation2 + $0xf8] sm:$0xff] %v3985
      %4022 = vst [vmem:[#allocation2 + $0x100] sm:$0xff] %v3986
      %4023 = vst [vmem:[#allocation2 + $0x108] sm:$0xff] %v3987
      %4024 = vst [vmem:[#allocation2 + $0x110] sm:$0xff] %v3988
      %4025 = vst [vmem:[#allocation2 + $0x118] sm:$0x3f] %v3989
      %v4026 = vld [vmem:[#allocation2] sm:$0xff]
      %v4027 = vld [vmem:[#allocation2 + $0x8] sm:$0xff]
      %v4028 = vld [vmem:[#allocation2 + $0x10] sm:$0xff]
      %v4029 = vld [vmem:[#allocation2 + $0x18] sm:$0xff]
      %v4030 = vld [vmem:[#allocation2 + $0x20] sm:$0xff]
      %v4031 = vld [vmem:[#allocation2 + $0x28] sm:$0xff]
      %v4032 = vld [vmem:[#allocation2 + $0x30] sm:$0xff]
      %v4033 = vld [vmem:[#allocation2 + $0x38] sm:$0xff]
      %v4034 = vld [vmem:[#allocation2 + $0x40] sm:$0xff]
      %v4035 = vld [vmem:[#allocation2 + $0x48] sm:$0xff]
      %v4036 = vld [vmem:[#allocation2 + $0x50] sm:$0xff]
      %v4037 = vld [vmem:[#allocation2 + $0x58] sm:$0xff]
      %v4038 = vld [vmem:[#allocation2 + $0x60] sm:$0xff]
      %v4039 = vld [vmem:[#allocation2 + $0x68] sm:$0xff]
      %v4040 = vld [vmem:[#allocation2 + $0x70] sm:$0xff]
      %v4041 = vld [vmem:[#allocation2 + $0x78] sm:$0xff]
      %v4042 = vld [vmem:[#allocation2 + $0x80] sm:$0xff]
      %v4043 = vld [vmem:[#allocation2 + $0x88] sm:$0xff]
      %v4044 = vld [vmem:[#allocation2 + $0x90] sm:$0xff]
      %v4045 = vld [vmem:[#allocation2 + $0x98] sm:$0xff]
      %v4046 = vld [vmem:[#allocation2 + $0xa0] sm:$0xff]
      %v4047 = vld [vmem:[#allocation2 + $0xa8] sm:$0xff]
      %v4048 = vld [vmem:[#allocation2 + $0xb0] sm:$0xff]
      %v4049 = vld [vmem:[#allocation2 + $0xb8] sm:$0xff]
      %v4050 = vld [vmem:[#allocation2 + $0xc0] sm:$0xff]
      %v4051 = vld [vmem:[#allocation2 + $0xc8] sm:$0xff]
      %v4052 = vld [vmem:[#allocation2 + $0xd0] sm:$0xff]
      %v4053 = vld [vmem:[#allocation2 + $0xd8] sm:$0xff]
      %v4054 = vld [vmem:[#allocation2 + $0xe0] sm:$0xff]
      %v4055 = vld [vmem:[#allocation2 + $0xe8] sm:$0xff]
      %v4056 = vld [vmem:[#allocation2 + $0xf0] sm:$0xff]
      %v4057 = vld [vmem:[#allocation2 + $0xf8] sm:$0xff]
      %v4058 = vld [vmem:[#allocation2 + $0x100] sm:$0xff]
      %v4059 = vld [vmem:[#allocation2 + $0x108] sm:$0xff]
      %v4060 = vld [vmem:[#allocation2 + $0x110] sm:$0xff]
      %v4061 = vld [vmem:[#allocation2 + $0x118] sm:$0x3f]
      %v4062 = vld [vmem:[%s165 + $0x10] sm:$0xc]
      %v4063 = vld [vmem:[%s165 + $0x14] sm:$0xf]
      %v4064 = vld [vmem:[%s165 + $0x18] sm:$0xf]
      %v4065 = vld [vmem:[%s165 + $0x1c] sm:$0xf]
      %v4066 = vld [vmem:[%s165 + $0x20] sm:$0xf]
      %v4067 = vld [vmem:[%s165 + $0x24] sm:$0xf]
      %v4068 = vld [vmem:[%s165 + $0x28] sm:$0xf]
      %v4069 = vld [vmem:[%s165 + $0x2c] sm:$0xf]
      %v4070 = vld [vmem:[%s165 + $0x30] sm:$0xf]
      %v4071 = vld [vmem:[%s165 + $0x34] sm:$0xf]
      %v4072 = vld [vmem:[%s165 + $0x38] sm:$0xf]
      %v4073 = vld [vmem:[%s165 + $0x3c] sm:$0xf]
      %v4074 = vld [vmem:[%s165 + $0x40] sm:$0xf]
      %v4075 = vld [vmem:[%s165 + $0x44] sm:$0xf]
      %v4076 = vld [vmem:[%s165 + $0x48] sm:$0xf]
      %v4077 = vld [vmem:[%s165 + $0x4c] sm:$0xf]
      %v4078 = vld [vmem:[%s165 + $0x50] sm:$0xf]
      %v4079 = vld [vmem:[%s165 + $0x54] sm:$0xf]
      %v4080 = vld [vmem:[%s165 + $0x58] sm:$0xf]
      %v4081 = vld [vmem:[%s165 + $0x5c] sm:$0xf]
      %v4082 = vld [vmem:[%s165 + $0x60] sm:$0xf]
      %v4083 = vld [vmem:[%s165 + $0x64] sm:$0xf]
      %v4084 = vld [vmem:[%s165 + $0x68] sm:$0xf]
      %v4085 = vld [vmem:[%s165 + $0x6c] sm:$0xf]
      %v4086 = vld [vmem:[%s165 + $0x70] sm:$0xf]
      %v4087 = vld [vmem:[%s165 + $0x74] sm:$0xf]
      %v4088 = vld [vmem:[%s165 + $0x78] sm:$0xf]
      %v4089 = vld [vmem:[%s165 + $0x7c] sm:$0xf]
      %v4090 = vld [vmem:[%s165 + $0x80] sm:$0xf]
      %v4091 = vld [vmem:[%s165 + $0x84] sm:$0xf]
      %v4092 = vld [vmem:[%s165 + $0x88] sm:$0xf]
      %v4093 = vld [vmem:[%s165 + $0x8c] sm:$0xf]
      %v4094 = vld [vmem:[%s165 + $0x90] sm:$0xf]
      %v4095 = vld [vmem:[%s165 + $0x94] sm:$0xf]
      %v4096 = vld [vmem:[%s165 + $0x98] sm:$0xf]
      %v4097 = vld [vmem:[%s165 + $0x9c] sm:$0xf]
      %v4098 = vld [vmem:[%s165 + $0xa0] sm:$0x3]
      %s4099 = scalar_lea.vmem %s1, 448
      %v4100 = vld [vmem:[%s4099] sm:$0xf]
      %v4101 = vld [vmem:[%s4099 + $0x4] sm:$0xf]
      %v4102 = vld [vmem:[%s4099 + $0x8] sm:$0xf]
      %v4103 = vld [vmem:[%s4099 + $0xc] sm:$0xf]
      %v4104 = vld [vmem:[%s4099 + $0x10] sm:$0xf]
      %v4105 = vld [vmem:[%s4099 + $0x14] sm:$0xf]
      %v4106 = vld [vmem:[%s4099 + $0x18] sm:$0xf]
      %v4107 = vld [vmem:[%s4099 + $0x1c] sm:$0xf]
      %v4108 = vld [vmem:[%s4099 + $0x20] sm:$0xf]
      %v4109 = vld [vmem:[%s4099 + $0x24] sm:$0xf]
      %v4110 = vld [vmem:[%s4099 + $0x28] sm:$0xf]
      %v4111 = vld [vmem:[%s4099 + $0x2c] sm:$0xf]
      %v4112 = vld [vmem:[%s4099 + $0x30] sm:$0xf]
      %v4113 = vld [vmem:[%s4099 + $0x34] sm:$0xf]
      %v4114 = vld [vmem:[%s4099 + $0x38] sm:$0xf]
      %v4115 = vld [vmem:[%s4099 + $0x3c] sm:$0xf]
      %v4153 = vunpack.c.l.b16 %v4062
      %v4154 = vunpack.c.l.b16 %v4063
      %v4155 = vunpack.c.l.b16 %v4064
      %v4156 = vunpack.c.l.b16 %v4065
      %v4157 = vunpack.c.l.b16 %v4066
      %v4158 = vunpack.c.l.b16 %v4067
      %v4159 = vunpack.c.l.b16 %v4068
      %v4160 = vunpack.c.l.b16 %v4069
      %v4161 = vunpack.c.l.b16 %v4070
      %v4162 = vunpack.c.l.b16 %v4071
      %v4163 = vunpack.c.l.b16 %v4072
      %v4164 = vunpack.c.l.b16 %v4073
      %v4165 = vunpack.c.l.b16 %v4074
      %v4166 = vunpack.c.l.b16 %v4075
      %v4167 = vunpack.c.l.b16 %v4076
      %v4168 = vunpack.c.l.b16 %v4077
      %v4169 = vunpack.c.l.b16 %v4078
      %v4170 = vunpack.c.l.b16 %v4079
      %v4171 = vunpack.c.l.b16 %v4080
      %v4172 = vunpack.c.l.b16 %v4081
      %v4173 = vunpack.c.l.b16 %v4082
      %v4174 = vunpack.c.l.b16 %v4083
      %v4175 = vunpack.c.l.b16 %v4084
      %v4176 = vunpack.c.l.b16 %v4085
      %v4177 = vunpack.c.l.b16 %v4086
      %v4178 = vunpack.c.l.b16 %v4087
      %v4179 = vunpack.c.l.b16 %v4088
      %v4180 = vunpack.c.l.b16 %v4089
      %v4181 = vunpack.c.l.b16 %v4090
      %v4182 = vunpack.c.l.b16 %v4091
      %v4183 = vunpack.c.l.b16 %v4092
      %v4184 = vunpack.c.l.b16 %v4093
      %v4185 = vunpack.c.l.b16 %v4094
      %v4186 = vunpack.c.l.b16 %v4095
      %v4187 = vunpack.c.l.b16 %v4096
      %v4188 = vunpack.c.l.b16 %v4097
      %v4189 = vunpack.c.l.b16 %v4098
      %v4190 = vpack.c.b16 %v4154, %v4153
      %v4191 = vpack.c.b16 %v4156, %v4155
      %v4192 = vpack.c.b16 %v4158, %v4157
      %v4193 = vpack.c.b16 %v4160, %v4159
      %v4194 = vpack.c.b16 %v4162, %v4161
      %v4195 = vpack.c.b16 %v4164, %v4163
      %v4196 = vpack.c.b16 %v4166, %v4165
      %v4197 = vpack.c.b16 %v4168, %v4167
      %v4198 = vpack.c.b16 %v4170, %v4169
      %v4199 = vpack.c.b16 %v4172, %v4171
      %v4200 = vpack.c.b16 %v4174, %v4173
      %v4201 = vpack.c.b16 %v4176, %v4175
      %v4202 = vpack.c.b16 %v4178, %v4177
      %v4203 = vpack.c.b16 %v4180, %v4179
      %v4204 = vpack.c.b16 %v4182, %v4181
      %v4205 = vpack.c.b16 %v4184, %v4183
      %v4206 = vpack.c.b16 %v4186, %v4185
      %v4207 = vpack.c.b16 %v4188, %v4187
      %v4208 = vpack.c.b16 %v4189, %v4189
      %vm4209 = vsmask.f32 5376
      %v4211 = vshrl.u32 %v4190, 16
      %v4213 = vrot.slane %v4211, 2
      %v4214 = vshll.u32 %v4190, 16
      %v4216 = vrot.slane %v4214, 3
      %v4217 = vor.u32 %v4213, %v4216
      %v4219 = vshrl.u32 %v4191, 16
      %v4221 = vrot.slane %v4219, 2
      %v4222 = vshll.u32 %v4191, 16
      %v4224 = vrot.slane %v4222, 3
      %v4225 = vor.u32 %v4221, %v4224
      %v4226 = vsel %vm4209, %v4217, %v4225
      %v4228 = vshrl.u32 %v4192, 16
      %v4230 = vrot.slane %v4228, 2
      %v4231 = vshll.u32 %v4192, 16
      %v4233 = vrot.slane %v4231, 3
      %v4234 = vor.u32 %v4230, %v4233
      %v4235 = vsel %vm4209, %v4225, %v4234
      %v4237 = vshrl.u32 %v4193, 16
      %v4239 = vrot.slane %v4237, 2
      %v4240 = vshll.u32 %v4193, 16
      %v4242 = vrot.slane %v4240, 3
      %v4243 = vor.u32 %v4239, %v4242
      %v4244 = vsel %vm4209, %v4234, %v4243
      %v4246 = vshrl.u32 %v4194, 16
      %v4248 = vrot.slane %v4246, 2
      %v4249 = vshll.u32 %v4194, 16
      %v4251 = vrot.slane %v4249, 3
      %v4252 = vor.u32 %v4248, %v4251
      %v4253 = vsel %vm4209, %v4243, %v4252
      %v4255 = vshrl.u32 %v4195, 16
      %v4257 = vrot.slane %v4255, 2
      %v4258 = vshll.u32 %v4195, 16
      %v4260 = vrot.slane %v4258, 3
      %v4261 = vor.u32 %v4257, %v4260
      %v4262 = vsel %vm4209, %v4252, %v4261
      %v4264 = vshrl.u32 %v4196, 16
      %v4266 = vrot.slane %v4264, 2
      %v4267 = vshll.u32 %v4196, 16
      %v4269 = vrot.slane %v4267, 3
      %v4270 = vor.u32 %v4266, %v4269
      %v4271 = vsel %vm4209, %v4261, %v4270
      %v4273 = vshrl.u32 %v4197, 16
      %v4275 = vrot.slane %v4273, 2
      %v4276 = vshll.u32 %v4197, 16
      %v4278 = vrot.slane %v4276, 3
      %v4279 = vor.u32 %v4275, %v4278
      %v4280 = vsel %vm4209, %v4270, %v4279
      %v4282 = vshrl.u32 %v4198, 16
      %v4284 = vrot.slane %v4282, 2
      %v4285 = vshll.u32 %v4198, 16
      %v4287 = vrot.slane %v4285, 3
      %v4288 = vor.u32 %v4284, %v4287
      %v4289 = vsel %vm4209, %v4279, %v4288
      %v4291 = vshrl.u32 %v4199, 16
      %v4293 = vrot.slane %v4291, 2
      %v4294 = vshll.u32 %v4199, 16
      %v4296 = vrot.slane %v4294, 3
      %v4297 = vor.u32 %v4293, %v4296
      %v4298 = vsel %vm4209, %v4288, %v4297
      %v4300 = vshrl.u32 %v4200, 16
      %v4302 = vrot.slane %v4300, 2
      %v4303 = vshll.u32 %v4200, 16
      %v4305 = vrot.slane %v4303, 3
      %v4306 = vor.u32 %v4302, %v4305
      %v4307 = vsel %vm4209, %v4297, %v4306
      %v4309 = vshrl.u32 %v4201, 16
      %v4311 = vrot.slane %v4309, 2
      %v4312 = vshll.u32 %v4201, 16
      %v4314 = vrot.slane %v4312, 3
      %v4315 = vor.u32 %v4311, %v4314
      %v4316 = vsel %vm4209, %v4306, %v4315
      %v4318 = vshrl.u32 %v4202, 16
      %v4320 = vrot.slane %v4318, 2
      %v4321 = vshll.u32 %v4202, 16
      %v4323 = vrot.slane %v4321, 3
      %v4324 = vor.u32 %v4320, %v4323
      %v4325 = vsel %vm4209, %v4315, %v4324
      %v4327 = vshrl.u32 %v4203, 16
      %v4329 = vrot.slane %v4327, 2
      %v4330 = vshll.u32 %v4203, 16
      %v4332 = vrot.slane %v4330, 3
      %v4333 = vor.u32 %v4329, %v4332
      %v4334 = vsel %vm4209, %v4324, %v4333
      %v4336 = vshrl.u32 %v4204, 16
      %v4338 = vrot.slane %v4336, 2
      %v4339 = vshll.u32 %v4204, 16
      %v4341 = vrot.slane %v4339, 3
      %v4342 = vor.u32 %v4338, %v4341
      %v4343 = vsel %vm4209, %v4333, %v4342
      %v4345 = vshrl.u32 %v4205, 16
      %v4347 = vrot.slane %v4345, 2
      %v4348 = vshll.u32 %v4205, 16
      %v4350 = vrot.slane %v4348, 3
      %v4351 = vor.u32 %v4347, %v4350
      %v4352 = vsel %vm4209, %v4342, %v4351
      %v4354 = vshrl.u32 %v4206, 16
      %v4356 = vrot.slane %v4354, 2
      %v4357 = vshll.u32 %v4206, 16
      %v4359 = vrot.slane %v4357, 3
      %v4360 = vor.u32 %v4356, %v4359
      %v4361 = vsel %vm4209, %v4351, %v4360
      %v4363 = vshrl.u32 %v4207, 16
      %v4365 = vrot.slane %v4363, 2
      %v4366 = vshll.u32 %v4207, 16
      %v4368 = vrot.slane %v4366, 3
      %v4369 = vor.u32 %v4365, %v4368
      %v4370 = vsel %vm4209, %v4360, %v4369
      %v4372 = vshrl.u32 %v4208, 16
      %v4374 = vrot.slane %v4372, 2
      %v4375 = vshll.u32 %v4208, 16
      %v4377 = vrot.slane %v4375, 3
      %v4378 = vor.u32 %v4374, %v4377
      %v4379 = vsel %vm4209, %v4369, %v4378
      %v4414 = vunpack.c.l.b16 %v4100
      %v4415 = vunpack.c.l.b16 %v4101
      %v4416 = vunpack.c.l.b16 %v4102
      %v4417 = vunpack.c.l.b16 %v4103
      %v4418 = vunpack.c.l.b16 %v4104
      %v4419 = vunpack.c.l.b16 %v4105
      %v4420 = vunpack.c.l.b16 %v4106
      %v4421 = vunpack.c.l.b16 %v4107
      %v4422 = vunpack.c.l.b16 %v4108
      %v4423 = vunpack.c.l.b16 %v4109
      %v4424 = vunpack.c.l.b16 %v4110
      %v4425 = vunpack.c.l.b16 %v4111
      %v4426 = vunpack.c.l.b16 %v4112
      %v4427 = vunpack.c.l.b16 %v4113
      %v4428 = vunpack.c.l.b16 %v4114
      %v4429 = vunpack.c.l.b16 %v4115
      %v4430 = vpack.c.b16 %v4415, %v4414
      %v4431 = vpack.c.b16 %v4417, %v4416
      %v4432 = vpack.c.b16 %v4419, %v4418
      %v4433 = vpack.c.b16 %v4421, %v4420
      %v4434 = vpack.c.b16 %v4423, %v4422
      %v4435 = vpack.c.b16 %v4425, %v4424
      %v4436 = vpack.c.b16 %v4427, %v4426
      %v4437 = vpack.c.b16 %v4429, %v4428
      %4446 = vmatprep.subr.bf16.mxu0 0
      %4447 = vmatpush1.bf16.msra.mxu0 %v4437
      %4448 = vmatprep.subr.bf16.mxu0 0
      %4449 = vmatpush1.bf16.msra.mxu0 %v4436
      %4450 = vmatprep.subr.bf16.mxu0 0
      %4451 = vmatpush1.bf16.msra.mxu0 %v4435
      %4452 = vmatprep.subr.bf16.mxu0 0
      %4453 = vmatpush1.bf16.msra.mxu0 %v4434
      %4454 = vmatprep.subr.bf16.mxu0 0
      %4455 = vmatpush1.bf16.msra.mxu0 %v4433
      %4456 = vmatprep.subr.bf16.mxu0 0
      %4457 = vmatpush1.bf16.msra.mxu0 %v4432
      %4458 = vmatprep.subr.bf16.mxu0 0
      %4459 = vmatpush1.bf16.msra.mxu0 %v4431
      %4460 = vmatprep.subr.bf16.mxu0 0
      %4461 = vmatpush1.bf16.msra.mxu0 %v4430
      %4462 = vmatprep.subr.bf16.mxu0 0
      %4463 = vmatpush2.bf16.msra.mxu0 0
      %4464 = vmatprep.subr.bf16.mxu0 0
      %4465 = vmatpush2.bf16.msra.mxu0 0
      %4466 = vmatprep.subr.bf16.mxu0 0
      %4467 = vmatpush2.bf16.msra.mxu0 0
      %4468 = vmatprep.subr.bf16.mxu0 0
      %4469 = vmatpush2.bf16.msra.mxu0 0
      %4470 = vmatprep.subr.bf16.mxu0 0
      %4471 = vmatpush2.bf16.msra.mxu0 0
      %4472 = vmatprep.subr.bf16.mxu0 0
      %4473 = vmatpush2.bf16.msra.mxu0 0
      %4474 = vmatprep.subr.bf16.mxu0 0
      %4475 = vmatpush2.bf16.msra.mxu0 0
      %4476 = vmatprep.subr.bf16.mxu0 0
      %4477 = vmatpush2.bf16.msra.mxu0 0
      %4478 = vmatprep.mubr.bf16.mxu0 0
      %4479 = vmatmul.mubr.bf16.gmra.mxu0 %v4226
      %v4480 = vpop.f32.mrf.mxu0
      %v4481 = vadd.f32 0.0, %v4480
      %v4482 = vpop.f32.mrf.mxu0
      %v4483 = vpop.f32.mrf.mxu0
      %v4484 = vadd.f32 0.0, %v4483
      %v4485 = vpop.f32.mrf.mxu0
      %4486 = vmatprep.mubr.bf16.mxu0 0
      %4487 = vmatmul.mubr.bf16.gmra.mxu0 %v4235
      %v4488 = vpop.f32.mrf.mxu0
      %v4489 = vadd.f32 0.0, %v4488
      %v4490 = vpop.f32.mrf.mxu0
      %v4491 = vpop.f32.mrf.mxu0
      %v4492 = vadd.f32 0.0, %v4491
      %v4493 = vpop.f32.mrf.mxu0
      %4494 = vmatprep.mubr.bf16.mxu0 0
      %4495 = vmatmul.mubr.bf16.gmra.mxu0 %v4244
      %v4496 = vpop.f32.mrf.mxu0
      %v4497 = vadd.f32 0.0, %v4496
      %v4498 = vpop.f32.mrf.mxu0
      %v4499 = vpop.f32.mrf.mxu0
      %v4500 = vadd.f32 0.0, %v4499
      %v4501 = vpop.f32.mrf.mxu0
      %4502 = vmatprep.mubr.bf16.mxu0 0
      %4503 = vmatmul.mubr.bf16.gmra.mxu0 %v4253
      %v4504 = vpop.f32.mrf.mxu0
      %v4505 = vadd.f32 0.0, %v4504
      %v4506 = vpop.f32.mrf.mxu0
      %v4507 = vpop.f32.mrf.mxu0
      %v4508 = vadd.f32 0.0, %v4507
      %v4509 = vpop.f32.mrf.mxu0
      %4510 = vmatprep.mubr.bf16.mxu0 0
      %4511 = vmatmul.mubr.bf16.gmra.mxu0 %v4262
      %v4512 = vpop.f32.mrf.mxu0
      %v4513 = vadd.f32 0.0, %v4512
      %v4514 = vpop.f32.mrf.mxu0
      %v4515 = vpop.f32.mrf.mxu0
      %v4516 = vadd.f32 0.0, %v4515
      %v4517 = vpop.f32.mrf.mxu0
      %4518 = vmatprep.mubr.bf16.mxu0 0
      %4519 = vmatmul.mubr.bf16.gmra.mxu0 %v4271
      %v4520 = vpop.f32.mrf.mxu0
      %v4521 = vadd.f32 0.0, %v4520
      %v4522 = vpop.f32.mrf.mxu0
      %v4523 = vpop.f32.mrf.mxu0
      %v4524 = vadd.f32 0.0, %v4523
      %v4525 = vpop.f32.mrf.mxu0
      %4526 = vmatprep.mubr.bf16.mxu0 0
      %4527 = vmatmul.mubr.bf16.gmra.mxu0 %v4280
      %v4528 = vpop.f32.mrf.mxu0
      %v4529 = vadd.f32 0.0, %v4528
      %v4530 = vpop.f32.mrf.mxu0
      %v4531 = vpop.f32.mrf.mxu0
      %v4532 = vadd.f32 0.0, %v4531
      %v4533 = vpop.f32.mrf.mxu0
      %4534 = vmatprep.mubr.bf16.mxu0 0
      %4535 = vmatmul.mubr.bf16.gmra.mxu0 %v4289
      %v4536 = vpop.f32.mrf.mxu0
      %v4537 = vadd.f32 0.0, %v4536
      %v4538 = vpop.f32.mrf.mxu0
      %v4539 = vpop.f32.mrf.mxu0
      %v4540 = vadd.f32 0.0, %v4539
      %v4541 = vpop.f32.mrf.mxu0
      %4542 = vmatprep.mubr.bf16.mxu0 0
      %4543 = vmatmul.mubr.bf16.gmra.mxu0 %v4298
      %v4544 = vpop.f32.mrf.mxu0
      %v4545 = vadd.f32 0.0, %v4544
      %v4546 = vpop.f32.mrf.mxu0
      %v4547 = vpop.f32.mrf.mxu0
      %v4548 = vadd.f32 0.0, %v4547
      %v4549 = vpop.f32.mrf.mxu0
      %4550 = vmatprep.mubr.bf16.mxu0 0
      %4551 = vmatmul.mubr.bf16.gmra.mxu0 %v4307
      %v4552 = vpop.f32.mrf.mxu0
      %v4553 = vadd.f32 0.0, %v4552
      %v4554 = vpop.f32.mrf.mxu0
      %v4555 = vpop.f32.mrf.mxu0
      %v4556 = vadd.f32 0.0, %v4555
      %v4557 = vpop.f32.mrf.mxu0
      %4558 = vmatprep.mubr.bf16.mxu0 0
      %4559 = vmatmul.mubr.bf16.gmra.mxu0 %v4316
      %v4560 = vpop.f32.mrf.mxu0
      %v4561 = vadd.f32 0.0, %v4560
      %v4562 = vpop.f32.mrf.mxu0
      %v4563 = vpop.f32.mrf.mxu0
      %v4564 = vadd.f32 0.0, %v4563
      %v4565 = vpop.f32.mrf.mxu0
      %4566 = vmatprep.mubr.bf16.mxu0 0
      %4567 = vmatmul.mubr.bf16.gmra.mxu0 %v4325
      %v4568 = vpop.f32.mrf.mxu0
      %v4569 = vadd.f32 0.0, %v4568
      %v4570 = vpop.f32.mrf.mxu0
      %v4571 = vpop.f32.mrf.mxu0
      %v4572 = vadd.f32 0.0, %v4571
      %v4573 = vpop.f32.mrf.mxu0
      %4574 = vmatprep.mubr.bf16.mxu0 0
      %4575 = vmatmul.mubr.bf16.gmra.mxu0 %v4334
      %v4576 = vpop.f32.mrf.mxu0
      %v4577 = vadd.f32 0.0, %v4576
      %v4578 = vpop.f32.mrf.mxu0
      %v4579 = vpop.f32.mrf.mxu0
      %v4580 = vadd.f32 0.0, %v4579
      %v4581 = vpop.f32.mrf.mxu0
      %4582 = vmatprep.mubr.bf16.mxu0 0
      %4583 = vmatmul.mubr.bf16.gmra.mxu0 %v4343
      %v4584 = vpop.f32.mrf.mxu0
      %v4585 = vadd.f32 0.0, %v4584
      %v4586 = vpop.f32.mrf.mxu0
      %v4587 = vpop.f32.mrf.mxu0
      %v4588 = vadd.f32 0.0, %v4587
      %v4589 = vpop.f32.mrf.mxu0
      %4590 = vmatprep.mubr.bf16.mxu0 0
      %4591 = vmatmul.mubr.bf16.gmra.mxu0 %v4352
      %v4592 = vpop.f32.mrf.mxu0
      %v4593 = vadd.f32 0.0, %v4592
      %v4594 = vpop.f32.mrf.mxu0
      %v4595 = vpop.f32.mrf.mxu0
      %v4596 = vadd.f32 0.0, %v4595
      %v4597 = vpop.f32.mrf.mxu0
      %4598 = vmatprep.mubr.bf16.mxu0 0
      %4599 = vmatmul.mubr.bf16.gmra.mxu0 %v4361
      %v4600 = vpop.f32.mrf.mxu0
      %v4601 = vadd.f32 0.0, %v4600
      %v4602 = vpop.f32.mrf.mxu0
      %v4603 = vpop.f32.mrf.mxu0
      %v4604 = vadd.f32 0.0, %v4603
      %v4605 = vpop.f32.mrf.mxu0
      %4606 = vmatprep.mubr.bf16.mxu0 0
      %4607 = vmatmul.mubr.bf16.gmra.mxu0 %v4370
      %v4608 = vpop.f32.mrf.mxu0
      %v4609 = vadd.f32 0.0, %v4608
      %v4610 = vpop.f32.mrf.mxu0
      %v4611 = vpop.f32.mrf.mxu0
      %v4612 = vadd.f32 0.0, %v4611
      %v4613 = vpop.f32.mrf.mxu0
      %4614 = vmatprep.mubr.bf16.mxu0 0
      %4615 = vmatmul.mubr.bf16.gmra.mxu0 %v4379
      %v4616 = vpop.f32.mrf.mxu0
      %v4617 = vadd.f32 0.0, %v4616
      %v4618 = vpop.f32.mrf.mxu0
      %v4619 = vpop.f32.mrf.mxu0
      %v4620 = vadd.f32 0.0, %v4619
      %v4621 = vpop.f32.mrf.mxu0
      %4622 = vdwg.mxu0
      %v4623 = vadd.f32 %v4026, %v4481
      %v4624 = vadd.f32 %v4027, %v4484
      %v4625 = vadd.f32 %v4028, %v4489
      %v4626 = vadd.f32 %v4029, %v4492
      %v4627 = vadd.f32 %v4030, %v4497
      %v4628 = vadd.f32 %v4031, %v4500
      %v4629 = vadd.f32 %v4032, %v4505
      %v4630 = vadd.f32 %v4033, %v4508
      %v4631 = vadd.f32 %v4034, %v4513
      %v4632 = vadd.f32 %v4035, %v4516
      %v4633 = vadd.f32 %v4036, %v4521
      %v4634 = vadd.f32 %v4037, %v4524
      %v4635 = vadd.f32 %v4038, %v4529
      %v4636 = vadd.f32 %v4039, %v4532
      %v4637 = vadd.f32 %v4040, %v4537
      %v4638 = vadd.f32 %v4041, %v4540
      %v4639 = vadd.f32 %v4042, %v4545
      %v4640 = vadd.f32 %v4043, %v4548
      %v4641 = vadd.f32 %v4044, %v4553
      %v4642 = vadd.f32 %v4045, %v4556
      %v4643 = vadd.f32 %v4046, %v4561
      %v4644 = vadd.f32 %v4047, %v4564
      %v4645 = vadd.f32 %v4048, %v4569
      %v4646 = vadd.f32 %v4049, %v4572
      %v4647 = vadd.f32 %v4050, %v4577
      %v4648 = vadd.f32 %v4051, %v4580
      %v4649 = vadd.f32 %v4052, %v4585
      %v4650 = vadd.f32 %v4053, %v4588
      %v4651 = vadd.f32 %v4054, %v4593
      %v4652 = vadd.f32 %v4055, %v4596
      %v4653 = vadd.f32 %v4056, %v4601
      %v4654 = vadd.f32 %v4057, %v4604
      %v4655 = vadd.f32 %v4058, %v4609
      %v4656 = vadd.f32 %v4059, %v4612
      %v4657 = vadd.f32 %v4060, %v4617
      %v4658 = vadd.f32 %v4061, %v4620
      %4659 = vst [vmem:[#allocation2] sm:$0xff] %v4623
      %4660 = vst [vmem:[#allocation2 + $0x8] sm:$0xff] %v4624
      %4661 = vst [vmem:[#allocation2 + $0x10] sm:$0xff] %v4625
      %4662 = vst [vmem:[#allocation2 + $0x18] sm:$0xff] %v4626
      %4663 = vst [vmem:[#allocation2 + $0x20] sm:$0xff] %v4627
      %4664 = vst [vmem:[#allocation2 + $0x28] sm:$0xff] %v4628
      %4665 = vst [vmem:[#allocation2 + $0x30] sm:$0xff] %v4629
      %4666 = vst [vmem:[#allocation2 + $0x38] sm:$0xff] %v4630
      %4667 = vst [vmem:[#allocation2 + $0x40] sm:$0xff] %v4631
      %4668 = vst [vmem:[#allocation2 + $0x48] sm:$0xff] %v4632
      %4669 = vst [vmem:[#allocation2 + $0x50] sm:$0xff] %v4633
      %4670 = vst [vmem:[#allocation2 + $0x58] sm:$0xff] %v4634
      %4671 = vst [vmem:[#allocation2 + $0x60] sm:$0xff] %v4635
      %4672 = vst [vmem:[#allocation2 + $0x68] sm:$0xff] %v4636
      %4673 = vst [vmem:[#allocation2 + $0x70] sm:$0xff] %v4637
      %4674 = vst [vmem:[#allocation2 + $0x78] sm:$0xff] %v4638
      %4675 = vst [vmem:[#allocation2 + $0x80] sm:$0xff] %v4639
      %4676 = vst [vmem:[#allocation2 + $0x88] sm:$0xff] %v4640
      %4677 = vst [vmem:[#allocation2 + $0x90] sm:$0xff] %v4641
      %4678 = vst [vmem:[#allocation2 + $0x98] sm:$0xff] %v4642
      %4679 = vst [vmem:[#allocation2 + $0xa0] sm:$0xff] %v4643
      %4680 = vst [vmem:[#allocation2 + $0xa8] sm:$0xff] %v4644
      %4681 = vst [vmem:[#allocation2 + $0xb0] sm:$0xff] %v4645
      %4682 = vst [vmem:[#allocation2 + $0xb8] sm:$0xff] %v4646
      %4683 = vst [vmem:[#allocation2 + $0xc0] sm:$0xff] %v4647
      %4684 = vst [vmem:[#allocation2 + $0xc8] sm:$0xff] %v4648
      %4685 = vst [vmem:[#allocation2 + $0xd0] sm:$0xff] %v4649
      %4686 = vst [vmem:[#allocation2 + $0xd8] sm:$0xff] %v4650
      %4687 = vst [vmem:[#allocation2 + $0xe0] sm:$0xff] %v4651
      %4688 = vst [vmem:[#allocation2 + $0xe8] sm:$0xff] %v4652
      %4689 = vst [vmem:[#allocation2 + $0xf0] sm:$0xff] %v4653
      %4690 = vst [vmem:[#allocation2 + $0xf8] sm:$0xff] %v4654
      %4691 = vst [vmem:[#allocation2 + $0x100] sm:$0xff] %v4655
      %4692 = vst [vmem:[#allocation2 + $0x108] sm:$0xff] %v4656
      %4693 = vst [vmem:[#allocation2 + $0x110] sm:$0xff] %v4657
      %4694 = vst [vmem:[#allocation2 + $0x118] sm:$0x3f] %v4658
      %v4695 = vld [vmem:[#allocation2] sm:$0xff]
      %v4696 = vld [vmem:[#allocation2 + $0x8] sm:$0xff]
      %v4697 = vld [vmem:[#allocation2 + $0x10] sm:$0xff]
      %v4698 = vld [vmem:[#allocation2 + $0x18] sm:$0xff]
      %v4699 = vld [vmem:[#allocation2 + $0x20] sm:$0xff]
      %v4700 = vld [vmem:[#allocation2 + $0x28] sm:$0xff]
      %v4701 = vld [vmem:[#allocation2 + $0x30] sm:$0xff]
      %v4702 = vld [vmem:[#allocation2 + $0x38] sm:$0xff]
      %v4703 = vld [vmem:[#allocation2 + $0x40] sm:$0xff]
      %v4704 = vld [vmem:[#allocation2 + $0x48] sm:$0xff]
      %v4705 = vld [vmem:[#allocation2 + $0x50] sm:$0xff]
      %v4706 = vld [vmem:[#allocation2 + $0x58] sm:$0xff]
      %v4707 = vld [vmem:[#allocation2 + $0x60] sm:$0xff]
      %v4708 = vld [vmem:[#allocation2 + $0x68] sm:$0xff]
      %v4709 = vld [vmem:[#allocation2 + $0x70] sm:$0xff]
      %v4710 = vld [vmem:[#allocation2 + $0x78] sm:$0xff]
      %v4711 = vld [vmem:[#allocation2 + $0x80] sm:$0xff]
      %v4712 = vld [vmem:[#allocation2 + $0x88] sm:$0xff]
      %v4713 = vld [vmem:[#allocation2 + $0x90] sm:$0xff]
      %v4714 = vld [vmem:[#allocation2 + $0x98] sm:$0xff]
      %v4715 = vld [vmem:[#allocation2 + $0xa0] sm:$0xff]
      %v4716 = vld [vmem:[#allocation2 + $0xa8] sm:$0xff]
      %v4717 = vld [vmem:[#allocation2 + $0xb0] sm:$0xff]
      %v4718 = vld [vmem:[#allocation2 + $0xb8] sm:$0xff]
      %v4719 = vld [vmem:[#allocation2 + $0xc0] sm:$0xff]
      %v4720 = vld [vmem:[#allocation2 + $0xc8] sm:$0xff]
      %v4721 = vld [vmem:[#allocation2 + $0xd0] sm:$0xff]
      %v4722 = vld [vmem:[#allocation2 + $0xd8] sm:$0xff]
      %v4723 = vld [vmem:[#allocation2 + $0xe0] sm:$0xff]
      %v4724 = vld [vmem:[#allocation2 + $0xe8] sm:$0xff]
      %v4725 = vld [vmem:[#allocation2 + $0xf0] sm:$0xff]
      %v4726 = vld [vmem:[#allocation2 + $0xf8] sm:$0xff]
      %v4727 = vld [vmem:[#allocation2 + $0x100] sm:$0xff]
      %v4728 = vld [vmem:[#allocation2 + $0x108] sm:$0xff]
      %v4729 = vld [vmem:[#allocation2 + $0x110] sm:$0xff]
      %v4730 = vld [vmem:[#allocation2 + $0x118] sm:$0x3f]
      %v4731 = vld [vmem:[%s165 + $0x10] sm:$0x8]
      %v4732 = vld [vmem:[%s165 + $0x14] sm:$0xf]
      %v4733 = vld [vmem:[%s165 + $0x18] sm:$0xf]
      %v4734 = vld [vmem:[%s165 + $0x1c] sm:$0xf]
      %v4735 = vld [vmem:[%s165 + $0x20] sm:$0xf]
      %v4736 = vld [vmem:[%s165 + $0x24] sm:$0xf]
      %v4737 = vld [vmem:[%s165 + $0x28] sm:$0xf]
      %v4738 = vld [vmem:[%s165 + $0x2c] sm:$0xf]
      %v4739 = vld [vmem:[%s165 + $0x30] sm:$0xf]
      %v4740 = vld [vmem:[%s165 + $0x34] sm:$0xf]
      %v4741 = vld [vmem:[%s165 + $0x38] sm:$0xf]
      %v4742 = vld [vmem:[%s165 + $0x3c] sm:$0xf]
      %v4743 = vld [vmem:[%s165 + $0x40] sm:$0xf]
      %v4744 = vld [vmem:[%s165 + $0x44] sm:$0xf]
      %v4745 = vld [vmem:[%s165 + $0x48] sm:$0xf]
      %v4746 = vld [vmem:[%s165 + $0x4c] sm:$0xf]
      %v4747 = vld [vmem:[%s165 + $0x50] sm:$0xf]
      %v4748 = vld [vmem:[%s165 + $0x54] sm:$0xf]
      %v4749 = vld [vmem:[%s165 + $0x58] sm:$0xf]
      %v4750 = vld [vmem:[%s165 + $0x5c] sm:$0xf]
      %v4751 = vld [vmem:[%s165 + $0x60] sm:$0xf]
      %v4752 = vld [vmem:[%s165 + $0x64] sm:$0xf]
      %v4753 = vld [vmem:[%s165 + $0x68] sm:$0xf]
      %v4754 = vld [vmem:[%s165 + $0x6c] sm:$0xf]
      %v4755 = vld [vmem:[%s165 + $0x70] sm:$0xf]
      %v4756 = vld [vmem:[%s165 + $0x74] sm:$0xf]
      %v4757 = vld [vmem:[%s165 + $0x78] sm:$0xf]
      %v4758 = vld [vmem:[%s165 + $0x7c] sm:$0xf]
      %v4759 = vld [vmem:[%s165 + $0x80] sm:$0xf]
      %v4760 = vld [vmem:[%s165 + $0x84] sm:$0xf]
      %v4761 = vld [vmem:[%s165 + $0x88] sm:$0xf]
      %v4762 = vld [vmem:[%s165 + $0x8c] sm:$0xf]
      %v4763 = vld [vmem:[%s165 + $0x90] sm:$0xf]
      %v4764 = vld [vmem:[%s165 + $0x94] sm:$0xf]
      %v4765 = vld [vmem:[%s165 + $0x98] sm:$0xf]
      %v4766 = vld [vmem:[%s165 + $0x9c] sm:$0xf]
      %v4767 = vld [vmem:[%s165 + $0xa0] sm:$0x3]
      %s4768 = scalar_lea.vmem %s1, 512
      %v4769 = vld [vmem:[%s4768] sm:$0xf]
      %v4770 = vld [vmem:[%s4768 + $0x4] sm:$0xf]
      %v4771 = vld [vmem:[%s4768 + $0x8] sm:$0xf]
      %v4772 = vld [vmem:[%s4768 + $0xc] sm:$0xf]
      %v4773 = vld [vmem:[%s4768 + $0x10] sm:$0xf]
      %v4774 = vld [vmem:[%s4768 + $0x14] sm:$0xf]
      %v4775 = vld [vmem:[%s4768 + $0x18] sm:$0xf]
      %v4776 = vld [vmem:[%s4768 + $0x1c] sm:$0xf]
      %v4777 = vld [vmem:[%s4768 + $0x20] sm:$0xf]
      %v4778 = vld [vmem:[%s4768 + $0x24] sm:$0xf]
      %v4779 = vld [vmem:[%s4768 + $0x28] sm:$0xf]
      %v4780 = vld [vmem:[%s4768 + $0x2c] sm:$0xf]
      %v4781 = vld [vmem:[%s4768 + $0x30] sm:$0xf]
      %v4782 = vld [vmem:[%s4768 + $0x34] sm:$0xf]
      %v4783 = vld [vmem:[%s4768 + $0x38] sm:$0xf]
      %v4784 = vld [vmem:[%s4768 + $0x3c] sm:$0xf]
      %v4822 = vunpack.c.l.b16 %v4731
      %v4823 = vunpack.c.l.b16 %v4732
      %v4824 = vunpack.c.l.b16 %v4733
      %v4825 = vunpack.c.l.b16 %v4734
      %v4826 = vunpack.c.l.b16 %v4735
      %v4827 = vunpack.c.l.b16 %v4736
      %v4828 = vunpack.c.l.b16 %v4737
      %v4829 = vunpack.c.l.b16 %v4738
      %v4830 = vunpack.c.l.b16 %v4739
      %v4831 = vunpack.c.l.b16 %v4740
      %v4832 = vunpack.c.l.b16 %v4741
      %v4833 = vunpack.c.l.b16 %v4742
      %v4834 = vunpack.c.l.b16 %v4743
      %v4835 = vunpack.c.l.b16 %v4744
      %v4836 = vunpack.c.l.b16 %v4745
      %v4837 = vunpack.c.l.b16 %v4746
      %v4838 = vunpack.c.l.b16 %v4747
      %v4839 = vunpack.c.l.b16 %v4748
      %v4840 = vunpack.c.l.b16 %v4749
      %v4841 = vunpack.c.l.b16 %v4750
      %v4842 = vunpack.c.l.b16 %v4751
      %v4843 = vunpack.c.l.b16 %v4752
      %v4844 = vunpack.c.l.b16 %v4753
      %v4845 = vunpack.c.l.b16 %v4754
      %v4846 = vunpack.c.l.b16 %v4755
      %v4847 = vunpack.c.l.b16 %v4756
      %v4848 = vunpack.c.l.b16 %v4757
      %v4849 = vunpack.c.l.b16 %v4758
      %v4850 = vunpack.c.l.b16 %v4759
      %v4851 = vunpack.c.l.b16 %v4760
      %v4852 = vunpack.c.l.b16 %v4761
      %v4853 = vunpack.c.l.b16 %v4762
      %v4854 = vunpack.c.l.b16 %v4763
      %v4855 = vunpack.c.l.b16 %v4764
      %v4856 = vunpack.c.l.b16 %v4765
      %v4857 = vunpack.c.l.b16 %v4766
      %v4858 = vunpack.c.l.b16 %v4767
      %v4859 = vpack.c.b16 %v4823, %v4822
      %v4860 = vpack.c.b16 %v4825, %v4824
      %v4861 = vpack.c.b16 %v4827, %v4826
      %v4862 = vpack.c.b16 %v4829, %v4828
      %v4863 = vpack.c.b16 %v4831, %v4830
      %v4864 = vpack.c.b16 %v4833, %v4832
      %v4865 = vpack.c.b16 %v4835, %v4834
      %v4866 = vpack.c.b16 %v4837, %v4836
      %v4867 = vpack.c.b16 %v4839, %v4838
      %v4868 = vpack.c.b16 %v4841, %v4840
      %v4869 = vpack.c.b16 %v4843, %v4842
      %v4870 = vpack.c.b16 %v4845, %v4844
      %v4871 = vpack.c.b16 %v4847, %v4846
      %v4872 = vpack.c.b16 %v4849, %v4848
      %v4873 = vpack.c.b16 %v4851, %v4850
      %v4874 = vpack.c.b16 %v4853, %v4852
      %v4875 = vpack.c.b16 %v4855, %v4854
      %v4876 = vpack.c.b16 %v4857, %v4856
      %v4877 = vpack.c.b16 %v4858, %v4858
      %vm4878 = vcmask 1044480
      %v4879 = vrot.slane %v4859, 3
      %v4880 = vrot.slane %v4860, 3
      %v4881 = vsel %vm4878, %v4879, %v4880
      %v4882 = vrot.slane %v4861, 3
      %v4883 = vsel %vm4878, %v4880, %v4882
      %v4884 = vrot.slane %v4862, 3
      %v4885 = vsel %vm4878, %v4882, %v4884
      %v4886 = vrot.slane %v4863, 3
      %v4887 = vsel %vm4878, %v4884, %v4886
      %v4888 = vrot.slane %v4864, 3
      %v4889 = vsel %vm4878, %v4886, %v4888
      %v4890 = vrot.slane %v4865, 3
      %v4891 = vsel %vm4878, %v4888, %v4890
      %v4892 = vrot.slane %v4866, 3
      %v4893 = vsel %vm4878, %v4890, %v4892
      %v4894 = vrot.slane %v4867, 3
      %v4895 = vsel %vm4878, %v4892, %v4894
      %v4896 = vrot.slane %v4868, 3
      %v4897 = vsel %vm4878, %v4894, %v4896
      %v4898 = vrot.slane %v4869, 3
      %v4899 = vsel %vm4878, %v4896, %v4898
      %v4900 = vrot.slane %v4870, 3
      %v4901 = vsel %vm4878, %v4898, %v4900
      %v4902 = vrot.slane %v4871, 3
      %v4903 = vsel %vm4878, %v4900, %v4902
      %v4904 = vrot.slane %v4872, 3
      %v4905 = vsel %vm4878, %v4902, %v4904
      %v4906 = vrot.slane %v4873, 3
      %v4907 = vsel %vm4878, %v4904, %v4906
      %v4908 = vrot.slane %v4874, 3
      %v4909 = vsel %vm4878, %v4906, %v4908
      %v4910 = vrot.slane %v4875, 3
      %v4911 = vsel %vm4878, %v4908, %v4910
      %v4912 = vrot.slane %v4876, 3
      %v4913 = vsel %vm4878, %v4910, %v4912
      %v4914 = vrot.slane %v4877, 3
      %v4915 = vsel %vm4878, %v4912, %v4914
      %v4950 = vunpack.c.l.b16 %v4769
      %v4951 = vunpack.c.l.b16 %v4770
      %v4952 = vunpack.c.l.b16 %v4771
      %v4953 = vunpack.c.l.b16 %v4772
      %v4954 = vunpack.c.l.b16 %v4773
      %v4955 = vunpack.c.l.b16 %v4774
      %v4956 = vunpack.c.l.b16 %v4775
      %v4957 = vunpack.c.l.b16 %v4776
      %v4958 = vunpack.c.l.b16 %v4777
      %v4959 = vunpack.c.l.b16 %v4778
      %v4960 = vunpack.c.l.b16 %v4779
      %v4961 = vunpack.c.l.b16 %v4780
      %v4962 = vunpack.c.l.b16 %v4781
      %v4963 = vunpack.c.l.b16 %v4782
      %v4964 = vunpack.c.l.b16 %v4783
      %v4965 = vunpack.c.l.b16 %v4784
      %v4966 = vpack.c.b16 %v4951, %v4950
      %v4967 = vpack.c.b16 %v4953, %v4952
      %v4968 = vpack.c.b16 %v4955, %v4954
      %v4969 = vpack.c.b16 %v4957, %v4956
      %v4970 = vpack.c.b16 %v4959, %v4958
      %v4971 = vpack.c.b16 %v4961, %v4960
      %v4972 = vpack.c.b16 %v4963, %v4962
      %v4973 = vpack.c.b16 %v4965, %v4964
      %4982 = vmatprep.subr.bf16.mxu0 0
      %4983 = vmatpush1.bf16.msra.mxu0 %v4973
      %4984 = vmatprep.subr.bf16.mxu0 0
      %4985 = vmatpush1.bf16.msra.mxu0 %v4972
      %4986 = vmatprep.subr.bf16.mxu0 0
      %4987 = vmatpush1.bf16.msra.mxu0 %v4971
      %4988 = vmatprep.subr.bf16.mxu0 0
      %4989 = vmatpush1.bf16.msra.mxu0 %v4970
      %4990 = vmatprep.subr.bf16.mxu0 0
      %4991 = vmatpush1.bf16.msra.mxu0 %v4969
      %4992 = vmatprep.subr.bf16.mxu0 0
      %4993 = vmatpush1.bf16.msra.mxu0 %v4968
      %4994 = vmatprep.subr.bf16.mxu0 0
      %4995 = vmatpush1.bf16.msra.mxu0 %v4967
      %4996 = vmatprep.subr.bf16.mxu0 0
      %4997 = vmatpush1.bf16.msra.mxu0 %v4966
      %4998 = vmatprep.subr.bf16.mxu0 0
      %4999 = vmatpush2.bf16.msra.mxu0 0
      %5000 = vmatprep.subr.bf16.mxu0 0
      %5001 = vmatpush2.bf16.msra.mxu0 0
      %5002 = vmatprep.subr.bf16.mxu0 0
      %5003 = vmatpush2.bf16.msra.mxu0 0
      %5004 = vmatprep.subr.bf16.mxu0 0
      %5005 = vmatpush2.bf16.msra.mxu0 0
      %5006 = vmatprep.subr.bf16.mxu0 0
      %5007 = vmatpush2.bf16.msra.mxu0 0
      %5008 = vmatprep.subr.bf16.mxu0 0
      %5009 = vmatpush2.bf16.msra.mxu0 0
      %5010 = vmatprep.subr.bf16.mxu0 0
      %5011 = vmatpush2.bf16.msra.mxu0 0
      %5012 = vmatprep.subr.bf16.mxu0 0
      %5013 = vmatpush2.bf16.msra.mxu0 0
      %5014 = vmatprep.mubr.bf16.mxu0 0
      %5015 = vmatmul.mubr.bf16.gmra.mxu0 %v4881
      %v5016 = vpop.f32.mrf.mxu0
      %v5017 = vadd.f32 0.0, %v5016
      %v5018 = vpop.f32.mrf.mxu0
      %v5019 = vpop.f32.mrf.mxu0
      %v5020 = vadd.f32 0.0, %v5019
      %v5021 = vpop.f32.mrf.mxu0
      %5022 = vmatprep.mubr.bf16.mxu0 0
      %5023 = vmatmul.mubr.bf16.gmra.mxu0 %v4883
      %v5024 = vpop.f32.mrf.mxu0
      %v5025 = vadd.f32 0.0, %v5024
      %v5026 = vpop.f32.mrf.mxu0
      %v5027 = vpop.f32.mrf.mxu0
      %v5028 = vadd.f32 0.0, %v5027
      %v5029 = vpop.f32.mrf.mxu0
      %5030 = vmatprep.mubr.bf16.mxu0 0
      %5031 = vmatmul.mubr.bf16.gmra.mxu0 %v4885
      %v5032 = vpop.f32.mrf.mxu0
      %v5033 = vadd.f32 0.0, %v5032
      %v5034 = vpop.f32.mrf.mxu0
      %v5035 = vpop.f32.mrf.mxu0
      %v5036 = vadd.f32 0.0, %v5035
      %v5037 = vpop.f32.mrf.mxu0
      %5038 = vmatprep.mubr.bf16.mxu0 0
      %5039 = vmatmul.mubr.bf16.gmra.mxu0 %v4887
      %v5040 = vpop.f32.mrf.mxu0
      %v5041 = vadd.f32 0.0, %v5040
      %v5042 = vpop.f32.mrf.mxu0
      %v5043 = vpop.f32.mrf.mxu0
      %v5044 = vadd.f32 0.0, %v5043
      %v5045 = vpop.f32.mrf.mxu0
      %5046 = vmatprep.mubr.bf16.mxu0 0
      %5047 = vmatmul.mubr.bf16.gmra.mxu0 %v4889
      %v5048 = vpop.f32.mrf.mxu0
      %v5049 = vadd.f32 0.0, %v5048
      %v5050 = vpop.f32.mrf.mxu0
      %v5051 = vpop.f32.mrf.mxu0
      %v5052 = vadd.f32 0.0, %v5051
      %v5053 = vpop.f32.mrf.mxu0
      %5054 = vmatprep.mubr.bf16.mxu0 0
      %5055 = vmatmul.mubr.bf16.gmra.mxu0 %v4891
      %v5056 = vpop.f32.mrf.mxu0
      %v5057 = vadd.f32 0.0, %v5056
      %v5058 = vpop.f32.mrf.mxu0
      %v5059 = vpop.f32.mrf.mxu0
      %v5060 = vadd.f32 0.0, %v5059
      %v5061 = vpop.f32.mrf.mxu0
      %5062 = vmatprep.mubr.bf16.mxu0 0
      %5063 = vmatmul.mubr.bf16.gmra.mxu0 %v4893
      %v5064 = vpop.f32.mrf.mxu0
      %v5065 = vadd.f32 0.0, %v5064
      %v5066 = vpop.f32.mrf.mxu0
      %v5067 = vpop.f32.mrf.mxu0
      %v5068 = vadd.f32 0.0, %v5067
      %v5069 = vpop.f32.mrf.mxu0
      %5070 = vmatprep.mubr.bf16.mxu0 0
      %5071 = vmatmul.mubr.bf16.gmra.mxu0 %v4895
      %v5072 = vpop.f32.mrf.mxu0
      %v5073 = vadd.f32 0.0, %v5072
      %v5074 = vpop.f32.mrf.mxu0
      %v5075 = vpop.f32.mrf.mxu0
      %v5076 = vadd.f32 0.0, %v5075
      %v5077 = vpop.f32.mrf.mxu0
      %5078 = vmatprep.mubr.bf16.mxu0 0
      %5079 = vmatmul.mubr.bf16.gmra.mxu0 %v4897
      %v5080 = vpop.f32.mrf.mxu0
      %v5081 = vadd.f32 0.0, %v5080
      %v5082 = vpop.f32.mrf.mxu0
      %v5083 = vpop.f32.mrf.mxu0
      %v5084 = vadd.f32 0.0, %v5083
      %v5085 = vpop.f32.mrf.mxu0
      %5086 = vmatprep.mubr.bf16.mxu0 0
      %5087 = vmatmul.mubr.bf16.gmra.mxu0 %v4899
      %v5088 = vpop.f32.mrf.mxu0
      %v5089 = vadd.f32 0.0, %v5088
      %v5090 = vpop.f32.mrf.mxu0
      %v5091 = vpop.f32.mrf.mxu0
      %v5092 = vadd.f32 0.0, %v5091
      %v5093 = vpop.f32.mrf.mxu0
      %5094 = vmatprep.mubr.bf16.mxu0 0
      %5095 = vmatmul.mubr.bf16.gmra.mxu0 %v4901
      %v5096 = vpop.f32.mrf.mxu0
      %v5097 = vadd.f32 0.0, %v5096
      %v5098 = vpop.f32.mrf.mxu0
      %v5099 = vpop.f32.mrf.mxu0
      %v5100 = vadd.f32 0.0, %v5099
      %v5101 = vpop.f32.mrf.mxu0
      %5102 = vmatprep.mubr.bf16.mxu0 0
      %5103 = vmatmul.mubr.bf16.gmra.mxu0 %v4903
      %v5104 = vpop.f32.mrf.mxu0
      %v5105 = vadd.f32 0.0, %v5104
      %v5106 = vpop.f32.mrf.mxu0
      %v5107 = vpop.f32.mrf.mxu0
      %v5108 = vadd.f32 0.0, %v5107
      %v5109 = vpop.f32.mrf.mxu0
      %5110 = vmatprep.mubr.bf16.mxu0 0
      %5111 = vmatmul.mubr.bf16.gmra.mxu0 %v4905
      %v5112 = vpop.f32.mrf.mxu0
      %v5113 = vadd.f32 0.0, %v5112
      %v5114 = vpop.f32.mrf.mxu0
      %v5115 = vpop.f32.mrf.mxu0
      %v5116 = vadd.f32 0.0, %v5115
      %v5117 = vpop.f32.mrf.mxu0
      %5118 = vmatprep.mubr.bf16.mxu0 0
      %5119 = vmatmul.mubr.bf16.gmra.mxu0 %v4907
      %v5120 = vpop.f32.mrf.mxu0
      %v5121 = vadd.f32 0.0, %v5120
      %v5122 = vpop.f32.mrf.mxu0
      %v5123 = vpop.f32.mrf.mxu0
      %v5124 = vadd.f32 0.0, %v5123
      %v5125 = vpop.f32.mrf.mxu0
      %5126 = vmatprep.mubr.bf16.mxu0 0
      %5127 = vmatmul.mubr.bf16.gmra.mxu0 %v4909
      %v5128 = vpop.f32.mrf.mxu0
      %v5129 = vadd.f32 0.0, %v5128
      %v5130 = vpop.f32.mrf.mxu0
      %v5131 = vpop.f32.mrf.mxu0
      %v5132 = vadd.f32 0.0, %v5131
      %v5133 = vpop.f32.mrf.mxu0
      %5134 = vmatprep.mubr.bf16.mxu0 0
      %5135 = vmatmul.mubr.bf16.gmra.mxu0 %v4911
      %v5136 = vpop.f32.mrf.mxu0
      %v5137 = vadd.f32 0.0, %v5136
      %v5138 = vpop.f32.mrf.mxu0
      %v5139 = vpop.f32.mrf.mxu0
      %v5140 = vadd.f32 0.0, %v5139
      %v5141 = vpop.f32.mrf.mxu0
      %5142 = vmatprep.mubr.bf16.mxu0 0
      %5143 = vmatmul.mubr.bf16.gmra.mxu0 %v4913
      %v5144 = vpop.f32.mrf.mxu0
      %v5145 = vadd.f32 0.0, %v5144
      %v5146 = vpop.f32.mrf.mxu0
      %v5147 = vpop.f32.mrf.mxu0
      %v5148 = vadd.f32 0.0, %v5147
      %v5149 = vpop.f32.mrf.mxu0
      %5150 = vmatprep.mubr.bf16.mxu0 0
      %5151 = vmatmul.mubr.bf16.gmra.mxu0 %v4915
      %v5152 = vpop.f32.mrf.mxu0
      %v5153 = vadd.f32 0.0, %v5152
      %v5154 = vpop.f32.mrf.mxu0
      %v5155 = vpop.f32.mrf.mxu0
      %v5156 = vadd.f32 0.0, %v5155
      %v5157 = vpop.f32.mrf.mxu0
      %5158 = vdwg.mxu0
      %v5159 = vadd.f32 %v4695, %v5017
      %v5160 = vadd.f32 %v4696, %v5020
      %v5161 = vadd.f32 %v4697, %v5025
      %v5162 = vadd.f32 %v4698, %v5028
      %v5163 = vadd.f32 %v4699, %v5033
      %v5164 = vadd.f32 %v4700, %v5036
      %v5165 = vadd.f32 %v4701, %v5041
      %v5166 = vadd.f32 %v4702, %v5044
      %v5167 = vadd.f32 %v4703, %v5049
      %v5168 = vadd.f32 %v4704, %v5052
      %v5169 = vadd.f32 %v4705, %v5057
      %v5170 = vadd.f32 %v4706, %v5060
      %v5171 = vadd.f32 %v4707, %v5065
      %v5172 = vadd.f32 %v4708, %v5068
      %v5173 = vadd.f32 %v4709, %v5073
      %v5174 = vadd.f32 %v4710, %v5076
      %v5175 = vadd.f32 %v4711, %v5081
      %v5176 = vadd.f32 %v4712, %v5084
      %v5177 = vadd.f32 %v4713, %v5089
      %v5178 = vadd.f32 %v4714, %v5092
      %v5179 = vadd.f32 %v4715, %v5097
      %v5180 = vadd.f32 %v4716, %v5100
      %v5181 = vadd.f32 %v4717, %v5105
      %v5182 = vadd.f32 %v4718, %v5108
      %v5183 = vadd.f32 %v4719, %v5113
      %v5184 = vadd.f32 %v4720, %v5116
      %v5185 = vadd.f32 %v4721, %v5121
      %v5186 = vadd.f32 %v4722, %v5124
      %v5187 = vadd.f32 %v4723, %v5129
      %v5188 = vadd.f32 %v4724, %v5132
      %v5189 = vadd.f32 %v4725, %v5137
      %v5190 = vadd.f32 %v4726, %v5140
      %v5191 = vadd.f32 %v4727, %v5145
      %v5192 = vadd.f32 %v4728, %v5148
      %v5193 = vadd.f32 %v4729, %v5153
      %v5194 = vadd.f32 %v4730, %v5156
      %5195 = vst [vmem:[#allocation2] sm:$0xff] %v5159
      %5196 = vst [vmem:[#allocation2 + $0x8] sm:$0xff] %v5160
      %5197 = vst [vmem:[#allocation2 + $0x10] sm:$0xff] %v5161
      %5198 = vst [vmem:[#allocation2 + $0x18] sm:$0xff] %v5162
      %5199 = vst [vmem:[#allocation2 + $0x20] sm:$0xff] %v5163
      %5200 = vst [vmem:[#allocation2 + $0x28] sm:$0xff] %v5164
      %5201 = vst [vmem:[#allocation2 + $0x30] sm:$0xff] %v5165
      %5202 = vst [vmem:[#allocation2 + $0x38] sm:$0xff] %v5166
      %5203 = vst [vmem:[#allocation2 + $0x40] sm:$0xff] %v5167
      %5204 = vst [vmem:[#allocation2 + $0x48] sm:$0xff] %v5168
      %5205 = vst [vmem:[#allocation2 + $0x50] sm:$0xff] %v5169
      %5206 = vst [vmem:[#allocation2 + $0x58] sm:$0xff] %v5170
      %5207 = vst [vmem:[#allocation2 + $0x60] sm:$0xff] %v5171
      %5208 = vst [vmem:[#allocation2 + $0x68] sm:$0xff] %v5172
      %5209 = vst [vmem:[#allocation2 + $0x70] sm:$0xff] %v5173
      %5210 = vst [vmem:[#allocation2 + $0x78] sm:$0xff] %v5174
      %5211 = vst [vmem:[#allocation2 + $0x80] sm:$0xff] %v5175
      %5212 = vst [vmem:[#allocation2 + $0x88] sm:$0xff] %v5176
      %5213 = vst [vmem:[#allocation2 + $0x90] sm:$0xff] %v5177
      %5214 = vst [vmem:[#allocation2 + $0x98] sm:$0xff] %v5178
      %5215 = vst [vmem:[#allocation2 + $0xa0] sm:$0xff] %v5179
      %5216 = vst [vmem:[#allocation2 + $0xa8] sm:$0xff] %v5180
      %5217 = vst [vmem:[#allocation2 + $0xb0] sm:$0xff] %v5181
      %5218 = vst [vmem:[#allocation2 + $0xb8] sm:$0xff] %v5182
      %5219 = vst [vmem:[#allocation2 + $0xc0] sm:$0xff] %v5183
      %5220 = vst [vmem:[#allocation2 + $0xc8] sm:$0xff] %v5184
      %5221 = vst [vmem:[#allocation2 + $0xd0] sm:$0xff] %v5185
      %5222 = vst [vmem:[#allocation2 + $0xd8] sm:$0xff] %v5186
      %5223 = vst [vmem:[#allocation2 + $0xe0] sm:$0xff] %v5187
      %5224 = vst [vmem:[#allocation2 + $0xe8] sm:$0xff] %v5188
      %5225 = vst [vmem:[#allocation2 + $0xf0] sm:$0xff] %v5189
      %5226 = vst [vmem:[#allocation2 + $0xf8] sm:$0xff] %v5190
      %5227 = vst [vmem:[#allocation2 + $0x100] sm:$0xff] %v5191
      %5228 = vst [vmem:[#allocation2 + $0x108] sm:$0xff] %v5192
      %5229 = vst [vmem:[#allocation2 + $0x110] sm:$0xff] %v5193
      %5230 = vst [vmem:[#allocation2 + $0x118] sm:$0x3f] %v5194
      %v5231 = vld [vmem:[%s2] sm:$0x1]
      %v5232 = vld [vmem:[#allocation2] sm:$0xff]
      %v5233 = vld [vmem:[#allocation2 + $0x8] sm:$0xff]
      %v5235 = vlaneseq
      %v5236 = vshrl.u32 %v5235, 7
      %v5237 = vsub.s32 0, %v5236
      %v5238 = vrot.slane %v5231, %v5237
      %v5240 = vadd.f32 %v5232, %v5238
      %v5241 = vadd.f32 %v5233, %v5238
      %v5242 = vmax.f32 %v5240, 0.0
      %v5243 = vmax.f32 %v5241, 0.0
      %v5244 = vpack.c.bf16 %v5243, %v5242
      %v5246 = vunpack.c.l.b16 %v5244
      %v5247 = vunpack.c.h.b16 %v5244
      %v5248 = vpack.c.b16 %v5246, %v5246
      %v5249 = vpack.c.b16 %v5247, %v5247
      %5252 = vst [vmem:[%s170] sm:$0xf] %v5248
      %5253 = vst [vmem:[%s170 + $0x4] sm:$0xf] %v5249
      %v5254 = vld [vmem:[#allocation2 + $0x12] sm:$0xff]
      %v5255 = vld [vmem:[#allocation2 + $0x1a] sm:$0xff]
      %v5256 = vadd.f32 %v5254, %v5238
      %v5257 = vadd.f32 %v5255, %v5238
      %v5258 = vmax.f32 %v5256, 0.0
      %v5259 = vmax.f32 %v5257, 0.0
      %v5260 = vpack.c.bf16 %v5259, %v5258
      %v5262 = vunpack.c.l.b16 %v5260
      %v5263 = vunpack.c.h.b16 %v5260
      %v5264 = vpack.c.b16 %v5262, %v5262
      %v5265 = vpack.c.b16 %v5263, %v5263
      %s5268 = scalar_lea.vmem %s170, 8
      %5269 = vst [vmem:[%s5268] sm:$0xf] %v5264
      %5270 = vst [vmem:[%s5268 + $0x4] sm:$0xf] %v5265
      %v5271 = vld [vmem:[#allocation2 + $0x24] sm:$0xff]
      %v5272 = vld [vmem:[#allocation2 + $0x2c] sm:$0xff]
      %v5273 = vadd.f32 %v5271, %v5238
      %v5274 = vadd.f32 %v5272, %v5238
      %v5275 = vmax.f32 %v5273, 0.0
      %v5276 = vmax.f32 %v5274, 0.0
      %v5277 = vpack.c.bf16 %v5276, %v5275
      %v5279 = vunpack.c.l.b16 %v5277
      %v5280 = vunpack.c.h.b16 %v5277
      %v5281 = vpack.c.b16 %v5279, %v5279
      %v5282 = vpack.c.b16 %v5280, %v5280
      %s5285 = scalar_lea.vmem %s170, 16
      %5286 = vst [vmem:[%s5285] sm:$0xf] %v5281
      %5287 = vst [vmem:[%s5285 + $0x4] sm:$0xf] %v5282
      %v5288 = vld [vmem:[#allocation2 + $0x36] sm:$0xff]
      %v5289 = vld [vmem:[#allocation2 + $0x3e] sm:$0xff]
      %v5290 = vadd.f32 %v5288, %v5238
      %v5291 = vadd.f32 %v5289, %v5238
      %v5292 = vmax.f32 %v5290, 0.0
      %v5293 = vmax.f32 %v5291, 0.0
      %v5294 = vpack.c.bf16 %v5293, %v5292
      %v5296 = vunpack.c.l.b16 %v5294
      %v5297 = vunpack.c.h.b16 %v5294
      %v5298 = vpack.c.b16 %v5296, %v5296
      %v5299 = vpack.c.b16 %v5297, %v5297
      %s5302 = scalar_lea.vmem %s170, 24
      %5303 = vst [vmem:[%s5302] sm:$0xf] %v5298
      %5304 = vst [vmem:[%s5302 + $0x4] sm:$0xf] %v5299
      %v5305 = vld [vmem:[#allocation2 + $0x48] sm:$0xff]
      %v5306 = vld [vmem:[#allocation2 + $0x50] sm:$0xff]
      %v5307 = vadd.f32 %v5305, %v5238
      %v5308 = vadd.f32 %v5306, %v5238
      %v5309 = vmax.f32 %v5307, 0.0
      %v5310 = vmax.f32 %v5308, 0.0
      %v5311 = vpack.c.bf16 %v5310, %v5309
      %v5313 = vunpack.c.l.b16 %v5311
      %v5314 = vunpack.c.h.b16 %v5311
      %v5315 = vpack.c.b16 %v5313, %v5313
      %v5316 = vpack.c.b16 %v5314, %v5314
      %s5319 = scalar_lea.vmem %s170, 32
      %5320 = vst [vmem:[%s5319] sm:$0xf] %v5315
      %5321 = vst [vmem:[%s5319 + $0x4] sm:$0xf] %v5316
      %v5322 = vld [vmem:[#allocation2 + $0x5a] sm:$0xff]
      %v5323 = vld [vmem:[#allocation2 + $0x62] sm:$0xff]
      %v5324 = vadd.f32 %v5322, %v5238
      %v5325 = vadd.f32 %v5323, %v5238
      %v5326 = vmax.f32 %v5324, 0.0
      %v5327 = vmax.f32 %v5325, 0.0
      %v5328 = vpack.c.bf16 %v5327, %v5326
      %v5330 = vunpack.c.l.b16 %v5328
      %v5331 = vunpack.c.h.b16 %v5328
      %v5332 = vpack.c.b16 %v5330, %v5330
      %v5333 = vpack.c.b16 %v5331, %v5331
      %s5336 = scalar_lea.vmem %s170, 40
      %5337 = vst [vmem:[%s5336] sm:$0xf] %v5332
      %5338 = vst [vmem:[%s5336 + $0x4] sm:$0xf] %v5333
      %v5339 = vld [vmem:[#allocation2 + $0x6c] sm:$0xff]
      %v5340 = vld [vmem:[#allocation2 + $0x74] sm:$0xff]
      %v5341 = vadd.f32 %v5339, %v5238
      %v5342 = vadd.f32 %v5340, %v5238
      %v5343 = vmax.f32 %v5341, 0.0
      %v5344 = vmax.f32 %v5342, 0.0
      %v5345 = vpack.c.bf16 %v5344, %v5343
      %v5347 = vunpack.c.l.b16 %v5345
      %v5348 = vunpack.c.h.b16 %v5345
      %v5349 = vpack.c.b16 %v5347, %v5347
      %v5350 = vpack.c.b16 %v5348, %v5348
      %s5353 = scalar_lea.vmem %s170, 48
      %5354 = vst [vmem:[%s5353] sm:$0xf] %v5349
      %5355 = vst [vmem:[%s5353 + $0x4] sm:$0xf] %v5350
      %v5356 = vld [vmem:[#allocation2 + $0x7e] sm:$0xff]
      %v5357 = vld [vmem:[#allocation2 + $0x86] sm:$0xff]
      %v5358 = vadd.f32 %v5356, %v5238
      %v5359 = vadd.f32 %v5357, %v5238
      %v5360 = vmax.f32 %v5358, 0.0
      %v5361 = vmax.f32 %v5359, 0.0
      %v5362 = vpack.c.bf16 %v5361, %v5360
      %v5364 = vunpack.c.l.b16 %v5362
      %v5365 = vunpack.c.h.b16 %v5362
      %v5366 = vpack.c.b16 %v5364, %v5364
      %v5367 = vpack.c.b16 %v5365, %v5365
      %s5370 = scalar_lea.vmem %s170, 56
      %5371 = vst [vmem:[%s5370] sm:$0xf] %v5366
      %5372 = vst [vmem:[%s5370 + $0x4] sm:$0xf] %v5367
      %v5373 = vld [vmem:[#allocation2 + $0x90] sm:$0xff]
      %v5374 = vld [vmem:[#allocation2 + $0x98] sm:$0xff]
      %v5375 = vadd.f32 %v5373, %v5238
      %v5376 = vadd.f32 %v5374, %v5238
      %v5377 = vmax.f32 %v5375, 0.0
      %v5378 = vmax.f32 %v5376, 0.0
      %v5379 = vpack.c.bf16 %v5378, %v5377
      %v5381 = vunpack.c.l.b16 %v5379
      %v5382 = vunpack.c.h.b16 %v5379
      %v5383 = vpack.c.b16 %v5381, %v5381
      %v5384 = vpack.c.b16 %v5382, %v5382
      %s5387 = scalar_lea.vmem %s170, 64
      %5388 = vst [vmem:[%s5387] sm:$0xf] %v5383
      %5389 = vst [vmem:[%s5387 + $0x4] sm:$0xf] %v5384
      %v5390 = vld [vmem:[#allocation2 + $0xa2] sm:$0xff]
      %v5391 = vld [vmem:[#allocation2 + $0xaa] sm:$0xff]
      %v5392 = vadd.f32 %v5390, %v5238
      %v5393 = vadd.f32 %v5391, %v5238
      %v5394 = vmax.f32 %v5392, 0.0
      %v5395 = vmax.f32 %v5393, 0.0
      %v5396 = vpack.c.bf16 %v5395, %v5394
      %v5398 = vunpack.c.l.b16 %v5396
      %v5399 = vunpack.c.h.b16 %v5396
      %v5400 = vpack.c.b16 %v5398, %v5398
      %v5401 = vpack.c.b16 %v5399, %v5399
      %s5404 = scalar_lea.vmem %s170, 72
      %5405 = vst [vmem:[%s5404] sm:$0xf] %v5400
      %5406 = vst [vmem:[%s5404 + $0x4] sm:$0xf] %v5401
      %v5407 = vld [vmem:[#allocation2 + $0xb4] sm:$0xff]
      %v5408 = vld [vmem:[#allocation2 + $0xbc] sm:$0xff]
      %v5409 = vadd.f32 %v5407, %v5238
      %v5410 = vadd.f32 %v5408, %v5238
      %v5411 = vmax.f32 %v5409, 0.0
      %v5412 = vmax.f32 %v5410, 0.0
      %v5413 = vpack.c.bf16 %v5412, %v5411
      %v5415 = vunpack.c.l.b16 %v5413
      %v5416 = vunpack.c.h.b16 %v5413
      %v5417 = vpack.c.b16 %v5415, %v5415
      %v5418 = vpack.c.b16 %v5416, %v5416
      %s5421 = scalar_lea.vmem %s170, 80
      %5422 = vst [vmem:[%s5421] sm:$0xf] %v5417
      %5423 = vst [vmem:[%s5421 + $0x4] sm:$0xf] %v5418
      %v5424 = vld [vmem:[#allocation2 + $0xc6] sm:$0xff]
      %v5425 = vld [vmem:[#allocation2 + $0xce] sm:$0xff]
      %v5426 = vadd.f32 %v5424, %v5238
      %v5427 = vadd.f32 %v5425, %v5238
      %v5428 = vmax.f32 %v5426, 0.0
      %v5429 = vmax.f32 %v5427, 0.0
      %v5430 = vpack.c.bf16 %v5429, %v5428
      %v5432 = vunpack.c.l.b16 %v5430
      %v5433 = vunpack.c.h.b16 %v5430
      %v5434 = vpack.c.b16 %v5432, %v5432
      %v5435 = vpack.c.b16 %v5433, %v5433
      %s5438 = scalar_lea.vmem %s170, 88
      %5439 = vst [vmem:[%s5438] sm:$0xf] %v5434
      %5440 = vst [vmem:[%s5438 + $0x4] sm:$0xf] %v5435
      %v5441 = vld [vmem:[#allocation2 + $0xd8] sm:$0xff]
      %v5442 = vld [vmem:[#allocation2 + $0xe0] sm:$0xff]
      %v5443 = vadd.f32 %v5441, %v5238
      %v5444 = vadd.f32 %v5442, %v5238
      %v5445 = vmax.f32 %v5443, 0.0
      %v5446 = vmax.f32 %v5444, 0.0
      %v5447 = vpack.c.bf16 %v5446, %v5445
      %v5449 = vunpack.c.l.b16 %v5447
      %v5450 = vunpack.c.h.b16 %v5447
      %v5451 = vpack.c.b16 %v5449, %v5449
      %v5452 = vpack.c.b16 %v5450, %v5450
      %s5455 = scalar_lea.vmem %s170, 96
      %5456 = vst [vmem:[%s5455] sm:$0xf] %v5451
      %5457 = vst [vmem:[%s5455 + $0x4] sm:$0xf] %v5452
      %v5458 = vld [vmem:[#allocation2 + $0xea] sm:$0xff]
      %v5459 = vld [vmem:[#allocation2 + $0xf2] sm:$0xff]
      %v5460 = vadd.f32 %v5458, %v5238
      %v5461 = vadd.f32 %v5459, %v5238
      %v5462 = vmax.f32 %v5460, 0.0
      %v5463 = vmax.f32 %v5461, 0.0
      %v5464 = vpack.c.bf16 %v5463, %v5462
      %v5466 = vunpack.c.l.b16 %v5464
      %v5467 = vunpack.c.h.b16 %v5464
      %v5468 = vpack.c.b16 %v5466, %v5466
      %v5469 = vpack.c.b16 %v5467, %v5467
      %s5472 = scalar_lea.vmem %s170, 104
      %5473 = vst [vmem:[%s5472] sm:$0xf] %v5468
      %5474 = vst [vmem:[%s5472 + $0x4] sm:$0xf] %v5469
      %v5475 = vld [vmem:[#allocation2 + $0xfc] sm:$0xff]
      %v5476 = vld [vmem:[#allocation2 + $0x104] sm:$0xff]
      %v5477 = vadd.f32 %v5475, %v5238
      %v5478 = vadd.f32 %v5476, %v5238
      %v5479 = vmax.f32 %v5477, 0.0
      %v5480 = vmax.f32 %v5478, 0.0
      %v5481 = vpack.c.bf16 %v5480, %v5479
      %v5483 = vunpack.c.l.b16 %v5481
      %v5484 = vunpack.c.h.b16 %v5481
      %v5485 = vpack.c.b16 %v5483, %v5483
      %v5486 = vpack.c.b16 %v5484, %v5484
      %s5489 = scalar_lea.vmem %s170, 112
      %5490 = vst [vmem:[%s5489] sm:$0xf] %v5485
      %5491 = vst [vmem:[%s5489 + $0x4] sm:$0xf] %v5486
      %v5492 = vld [vmem:[#allocation2 + $0x10e] sm:$0xff]
      %v5493 = vld [vmem:[#allocation2 + $0x116] sm:$0xff]
      %v5494 = vadd.f32 %v5492, %v5238
      %v5495 = vadd.f32 %v5493, %v5238
      %v5496 = vmax.f32 %v5494, 0.0
      %v5497 = vmax.f32 %v5495, 0.0
      %v5498 = vpack.c.bf16 %v5497, %v5496
      %v5500 = vunpack.c.l.b16 %v5498
      %v5501 = vunpack.c.h.b16 %v5498
      %v5502 = vpack.c.b16 %v5500, %v5500
      %v5503 = vpack.c.b16 %v5501, %v5501
      %s5506 = scalar_lea.vmem %s170, 120
      %5507 = vst [vmem:[%s5506] sm:$0xf] %v5502
      %5508 = vst [vmem:[%s5506 + $0x4] sm:$0xf] %v5503
      %p5509 = scmp.lt.s32.totalorder %s14, 1
      %s5510 = scalar_select %p5509, %s14, 1
      %s5511 = smul.addr %s5510, 32
      %s5512 = smul.addr %s5511, 4
      %s5513 = scalar_lea.vmem %s3, %s5512
      // Predicated region
      $region33: #{basic_block_forward.3} parent=31 // pred_check
        %p5514 = pneg %p100
      $region34: #{basic_block_forward.3} parent=31 // pred_check_branch
        %5516 = sbr.rel (%p5514) target = $region36
      $region35: #{basic_block_forward.3} parent=31 // pred_region
        _
      $region36: #{basic_block_forward.3} parent=31 // pred_fallthru
        _
    $region32: #{basic_block_forward.3} parent=5 // pred_fallthru
      _
    %p5517 = scmp.le.s32.totalorder 2, %s9
    // Predicated region
    $region37: #{basic_block_forward.3} parent=5 // pred_check
      %p5518 = pneg %p5517
    $region38: #{basic_block_forward.3} parent=5 // pred_check_branch
      %5520 = sbr.rel (%p5518) target = $region40
    $region39: #{basic_block_forward.3} parent=5 // pred_region
      %s5521 = ssub.s32 %s9, 2
      // Predicated region
      $region41: #{basic_block_forward.3} parent=39 // pred_check
        %p5522 = pneg %p106
      $region42: #{basic_block_forward.3} parent=39 // pred_check_branch
        %5524 = sbr.rel (%p5522) target = $region44
      $region43: #{basic_block_forward.3} parent=39 // pred_region
        %p5525 = scmp.lt.s32.totalorder %s15, 1
        %s5526 = scalar_select %p5525, %s15, 1
        %s5527 = smul.addr %s5526, 32
        %s5528 = smul.addr %s5527, 4
        %s5529 = scalar_lea.vmem %s3, %s5528
      $region44: #{basic_block_forward.3} parent=39 // pred_fallthru
        _
    $region40: #{basic_block_forward.3} parent=5 // pred_fallthru
      _
  $region6: #{basic_block_forward.3} parent=0 // loop_footer
    %s13 = sadd.s32 1, %s9
  $region7: #{basic_block_forward.3} parent=0 // loop_footer_branch
    %8 = sbr.rel target = $region3
  $region8: #{basic_block_forward.3} parent=0 // loop_exit
    _

</llo_original>
